<compile_context>
chip_gen: v7x
topology: tpu7x:2x2x1
jax: 0.10.0
libtpu: 0.0.40
codegen_flags: <defaults>
</compile_context>

<pallas_src>
import functools

import numpy as np
import jax
import jax.numpy as jnp
from jax.experimental import pallas as pl
from jax.experimental.pallas import tpu as pltpu


# ----------------------------------------------------------------------------
# Host-side constants (computed once at parameter-prep time)
# ----------------------------------------------------------------------------

def _conv_masks(B, H, W):
    """mask[r, t] = 1 if tap t of output pixel r stays inside its image."""
    BHW = B * H * W
    m = np.zeros((BHW, 9), np.float32)
    for r in range(BHW):
        i = (r // W) % H
        j = r % W
        for kh in range(3):
            for kw in range(3):
                if 0 <= i + kh - 1 < H and 0 <= j + kw - 1 < W:
                    m[r, kh * 3 + kw] = 1.0
    return m


def _batch_sum(B, HW):
    """S[b, r] = 1 iff flattened row r belongs to batch b (sums per batch)."""
    s = np.zeros((B, B * HW), np.float32)
    for b in range(B):
        s[b, b * HW:(b + 1) * HW] = 1.0
    return s


# ----------------------------------------------------------------------------
# The fused Pallas kernel
# ----------------------------------------------------------------------------

def _fused_forward_kernel(*refs, num_blocks, board_w):
    W = board_w
    PAD = W + 1                                        # max |tap shift| = W + 1

    # ---- unpack refs: inputs, outputs, scratch (positional) ----
    (x_taps_ref, masks_ref, bsum_ref, w_stem_ref, b_stem_ref) = refs[:5]
    pos = 5
    blocks = [refs[pos + 4 * i: pos + 4 * i + 4] for i in range(num_blocks)]
    pos += 4 * num_blocks
    (wp_ref, bp_ref, vt0_ref, vt1_ref, bfc_ref,
     wv_ref, bv_ref, wfc1_ref, b1v_ref, wfc2_ref, b2v_ref) = refs[pos:pos + 11]
    pos += 11
    logits_ref, value_ref, padbuf, tapbuf = refs[pos:pos + 4]

    BHW = x_taps_ref.shape[0]
    F = padbuf.shape[1]                                # tower channel count
    shifts = [(kh - 1) * W + (kw - 1) for kh in range(3) for kw in range(3)]

    masks = masks_ref[...]                             # (BHW, 9)
    bsum = bsum_ref[...]                               # (B, BHW)

    # Zero the padded activation buffer once; its border rows are never
    # written again (interior is fully overwritten before every conv).
    padbuf[...] = jnp.zeros_like(padbuf)

    def conv3x3(act, w_ref, b_ref):
        """act: (BHW, F) -> (BHW, F): in-kernel im2col + single K=9F matmul."""
        padbuf[PAD:PAD + BHW, :] = act
        for t, s in enumerate(shifts):
            # Shifted tap = sublane-shifted activation; mask kills pixels that
            # wrapped across an image row / batch boundary (zero conv padding).
            tapbuf[:, t * F:(t + 1) * F] = (
                padbuf[PAD + s: PAD + s + BHW, :] * masks[:, t:t + 1])
        return jnp.dot(tapbuf[...], w_ref[...],
                       preferred_element_type=jnp.float32) + b_ref[...]

    # ---- stem: conv_init (3x3) + folded bn_init + relu ----
    # Stem im2col (Cin=2) is prepared host-side; everything else is in-kernel.
    y = jnp.maximum(
        jnp.dot(x_taps_ref[...], w_stem_ref[...],
                preferred_element_type=jnp.float32) + b_stem_ref[...], 0.0)

    # ---- residual tower ----
    for (w1, b1, w2, b2) in blocks:
        h = jnp.maximum(conv3x3(y, w1, b1), 0.0)
        # TODO(synk): Dropout(0.1) is identity in eval mode (no train-mode RNG).
        y = jnp.maximum(conv3x3(h, w2, b2) + y, 0.0)

    # ---- policy head: 1x1 conv (+bn, relu) fused with FC (no transposes) ----
    p = jnp.maximum(
        jnp.dot(y, wp_ref[...], preferred_element_type=jnp.float32)
        + bp_ref[...], 0.0)                                       # (BHW, 2)
    g = p[:, 0:1] * vt0_ref[...] + p[:, 1:2] * vt1_ref[...]       # (BHW, P)
    logits_ref[...] = (jnp.dot(bsum, g, preferred_element_type=jnp.float32)
                       + bfc_ref[...])                            # (B, P)

    # ---- value head: 1x1 conv (+bn, relu) + fc1 + relu + fc2 + tanh ----
    v = jnp.maximum(
        jnp.dot(y, wv_ref[...], preferred_element_type=jnp.float32)
        + bv_ref[...], 0.0)                                       # (BHW, 1)
    h1 = jnp.maximum(
        jnp.dot(bsum, v * wfc1_ref[...],
                preferred_element_type=jnp.float32) + b1v_ref[...], 0.0)
    # TODO(synk): value_drop Dropout(0.1) is identity in eval mode.
    value_ref[...] = jnp.tanh(
        jnp.dot(h1, wfc2_ref[...], preferred_element_type=jnp.float32)
        + b2v_ref[...])                                           # (B, 1)


# ----------------------------------------------------------------------------
# Parameter initialization (synthetic, mirrors the torch module structure)
# ----------------------------------------------------------------------------

def init_params(key, *, in_ch=2, filters=128, num_blocks=2, H=5, W=5,
                policy_size=25, value_hidden=128):
    keys = iter(jax.random.split(key, 64))

    def nrm(shape, s=0.1):
        return s * jax.random.normal(next(keys), shape, jnp.float32)

    def bn(c):
        gamma = 1.0 + 0.1 * jax.random.normal(next(keys), (c,), jnp.float32)
        beta = 0.1 * jax.random.normal(next(keys), (c,), jnp.float32)
        mean = 0.1 * jax.random.normal(next(keys), (c,), jnp.float32)
        var = 0.5 + jnp.abs(jax.random.normal(next(keys), (c,), jnp.float32))
        return (gamma, beta, mean, var)

    params = {
        "conv_init_w": nrm((3, 3, in_ch, filters)),           # HWIO
        "bn_init": bn(filters),
        "blocks": [],
        "policy_conv_w": nrm((filters, 2)),
        "policy_conv_b": nrm((2,)),
        "policy_bn": bn(2),
        "policy_fc_w": nrm((2 * H * W, policy_size)),         # (in, out)
        "policy_fc_b": nrm((policy_size,)),
        "value_conv_w": nrm((filters, 1)),
        "value_conv_b": nrm((1,)),
        "value_bn": bn(1),
        "value_fc1_w": nrm((H * W, value_hidden)),
        "value_fc1_b": nrm((value_hidden,)),
        "value_fc2_w": nrm((value_hidden, 1)),
        "value_fc2_b": nrm((1,)),
    }
    for _ in range(num_blocks):
        params["blocks"].append({
            "w1": nrm((3, 3, filters, filters)), "bn1": bn(filters),
            "w2": nrm((3, 3, filters, filters)), "bn2": bn(filters),
        })
    return params


# ----------------------------------------------------------------------------
# One-time parameter preparation (BN folding, FC pre-tiling, constants)
# ----------------------------------------------------------------------------

def prepare_params(params, *, batch_size, board_size=(5, 5), eps=1e-5):
    H, W = board_size
    HW = H * W
    B = batch_size
    F = params["conv_init_w"].shape[-1]
    cin = params["conv_init_w"].shape[2]

    def fold(bn):
        gamma, beta, mean, var = bn
        scale = gamma / jnp.sqrt(var + eps)
        return scale, beta - mean * scale

    s0, b0 = fold(params["bn_init"])
    prep = {
        "masks": jnp.asarray(_conv_masks(B, H, W)),
        "bsum": jnp.asarray(_batch_sum(B, HW)),
        "w_stem": params["conv_init_w"].reshape(9 * cin, F) * s0[None, :],
        "b_stem": b0.reshape(1, F),
        "blocks": [],
    }
    for blk in params["blocks"]:
        s1, b1 = fold(blk["bn1"])
        s2, b2 = fold(blk["bn2"])
        prep["blocks"].append((
            blk["w1"].reshape(9 * F, F) * s1[None, :], b1.reshape(1, F),
            blk["w2"].reshape(9 * F, F) * s2[None, :], b2.reshape(1, F)))

    ps, pb = fold(params["policy_bn"])
    prep["wp"] = params["policy_conv_w"] * ps[None, :]          # (F, 2)
    prep["bp"] = (params["policy_conv_b"] * ps + pb).reshape(1, -1)
    wfc = params["policy_fc_w"]                                 # (2*HW, P)
    prep["vt0"] = jnp.tile(wfc[:HW, :], (B, 1))                 # (B*HW, P)
    prep["vt1"] = jnp.tile(wfc[HW:2 * HW, :], (B, 1))
    prep["bfc"] = params["policy_fc_b"].reshape(1, -1)

    vs, vb = fold(params["value_bn"])
    prep["wv"] = params["value_conv_w"] * vs[None, :]           # (F, 1)
    prep["bv"] = (params["value_conv_b"] * vs + vb).reshape(1, -1)
    prep["wfc1"] = jnp.tile(params["value_fc1_w"], (B, 1))      # (B*HW, 128)
    prep["b1v"] = params["value_fc1_b"].reshape(1, -1)
    prep["wfc2"] = params["value_fc2_w"]                        # (128, 1)
    prep["b2v"] = params["value_fc2_b"].reshape(1, -1)
    return prep


# ----------------------------------------------------------------------------
# Forward pass (thin wrapper: stem im2col + one pallas_call)
# ----------------------------------------------------------------------------

def _stem_im2col(x_nchw):
    """3x3 same-padding taps of the 2-channel input: -> (B*H*W, 9*Cin)."""
    B, C, H, W = x_nchw.shape
    x = jnp.transpose(x_nchw, (0, 2, 3, 1)).astype(jnp.float32)
    xp = jnp.pad(x, ((0, 0), (1, 1), (1, 1), (0, 0)))
    cols = [xp[:, kh:kh + H, kw:kw + W, :]
            for kh in range(3) for kw in range(3)]
    return jnp.concatenate(cols, axis=-1).reshape(B * H * W, 9 * C)


def alphazero_forward(prepared, x_nchw):
    B, _, H, W = x_nchw.shape
    BHW = B * H * W
    PAD = W + 1
    F = prepared["w_stem"].shape[1]
    P = prepared["bfc"].shape[1]
    num_blocks = len(prepared["blocks"])

    operands = [_stem_im2col(x_nchw), prepared["masks"], prepared["bsum"],
                prepared["w_stem"], prepared["b_stem"]]
    for blk in prepared["blocks"]:
        operands.extend(blk)
    operands.extend(prepared[k] for k in
                    ("wp", "bp", "vt0", "vt1", "bfc",
                     "wv", "bv", "wfc1", "b1v", "wfc2", "b2v"))

    kernel = functools.partial(_fused_forward_kernel,
                               num_blocks=num_blocks, board_w=W)
    vmem = pl.BlockSpec(memory_space=pltpu.MemorySpace.VMEM)
    logits, value = pl.pallas_call(
        kernel,
        out_shape=(jax.ShapeDtypeStruct((B, P), jnp.float32),
                   jax.ShapeDtypeStruct((B, 1), jnp.float32)),
        in_specs=[vmem] * len(operands),
        out_specs=(vmem, vmem),
        scratch_shapes=[
            pltpu.VMEM((BHW + 2 * PAD, F), jnp.float32),   # zero-bordered act
            pltpu.VMEM((BHW, 9 * F), jnp.float32),         # packed conv taps
        ],
    )(*operands)
    return logits, value


# ----------------------------------------------------------------------------
# Pure-JAX reference (mirrors the PyTorch module, eval mode) for validation
# ----------------------------------------------------------------------------

def reference_forward(params, x_nchw, eps=1e-5):
    def bn(t, p):
        gamma, beta, mean, var = p
        return (t - mean) * (gamma / jnp.sqrt(var + eps)) + beta

    def conv3x3(t, w):
        return jax.lax.conv_general_dilated(
            t, w, window_strides=(1, 1), padding="SAME",
            dimension_numbers=("NHWC", "HWIO", "NHWC"))

    B = x_nchw.shape[0]
    x = jnp.transpose(x_nchw, (0, 2, 3, 1)).astype(jnp.float32)
    y = jax.nn.relu(bn(conv3x3(x, params["conv_init_w"]), params["bn_init"]))
    for blk in params["blocks"]:
        h = jax.nn.relu(bn(conv3x3(y, blk["w1"]), blk["bn1"]))
        y = jax.nn.relu(bn(conv3x3(h, blk["w2"]), blk["bn2"]) + y)
    p = jax.nn.relu(bn(jnp.einsum("bhwc,cf->bhwf", y, params["policy_conv_w"])
                       + params["policy_conv_b"], params["policy_bn"]))
    p = jnp.transpose(p, (0, 3, 1, 2)).reshape(B, -1)      # NCHW flatten order
    logits = p @ params["policy_fc_w"] + params["policy_fc_b"]
    v = jax.nn.relu(bn(jnp.einsum("bhwc,cf->bhwf", y, params["value_conv_w"])
                       + params["value_conv_b"], params["value_bn"]))
    v = v.reshape(B, -1)
    v = jax.nn.relu(v @ params["value_fc1_w"] + params["value_fc1_b"])
    value = jnp.tanh(v @ params["value_fc2_w"] + params["value_fc2_b"])
    return logits, value


# ----------------------------------------------------------------------------

if __name__ == "__main__":
    key = jax.random.PRNGKey(0)
    kp, kx = jax.random.split(key)

    B, IN_CH, H, W = 2, 2, 5, 5
    FILTERS, NUM_BLOCKS, POLICY_SIZE = 128, 2, 25

    params = init_params(kp, in_ch=IN_CH, filters=FILTERS,
                         num_blocks=NUM_BLOCKS, H=H, W=W,
                         policy_size=POLICY_SIZE)
    prepared = prepare_params(params, batch_size=B, board_size=(H, W))
    x = jax.random.normal(kx, (B, IN_CH, H, W), jnp.float32)   # NCHW input

    fwd = jax.jit(alphazero_forward)
    logits, value = fwd(prepared, x)
    logits = jax.block_until_ready(logits)
    value = jax.block_until_ready(value)

    assert logits.shape == (B, POLICY_SIZE) and logits.dtype == jnp.float32
    assert value.shape == (B, 1) and value.dtype == jnp.float32
    assert bool(jnp.all(jnp.isfinite(logits))) and bool(jnp.all(jnp.isfinite(value)))
    assert bool(jnp.all(jnp.abs(value) <= 1.0))               # tanh range

    # numerical check against a pure-JAX reference of the torch module
    ref_logits, ref_value = reference_forward(params, x)
    assert float(jnp.max(jnp.abs(logits - ref_logits))) < 5e-2
    assert float(jnp.max(jnp.abs(value - ref_value))) < 5e-2

    print("KERNEL_OK")
</pallas_src>

<mosaic_0001>
module attributes {stable_mosaic.version = 11 : i64} {
  func.func @_fused_forward_kernel(%arg0: memref<50x18xf32, #tpu.memory_space<vmem>>, %arg1: memref<50x9xf32, #tpu.memory_space<vmem>>, %arg2: memref<2x50xf32, #tpu.memory_space<vmem>>, %arg3: memref<18x128xf32, #tpu.memory_space<vmem>>, %arg4: memref<1x128xf32, #tpu.memory_space<vmem>>, %arg5: memref<1152x128xf32, #tpu.memory_space<vmem>>, %arg6: memref<1x128xf32, #tpu.memory_space<vmem>>, %arg7: memref<1152x128xf32, #tpu.memory_space<vmem>>, %arg8: memref<1x128xf32, #tpu.memory_space<vmem>>, %arg9: memref<1152x128xf32, #tpu.memory_space<vmem>>, %arg10: memref<1x128xf32, #tpu.memory_space<vmem>>, %arg11: memref<1152x128xf32, #tpu.memory_space<vmem>>, %arg12: memref<1x128xf32, #tpu.memory_space<vmem>>, %arg13: memref<128x2xf32, #tpu.memory_space<vmem>>, %arg14: memref<1x2xf32, #tpu.memory_space<vmem>>, %arg15: memref<50x25xf32, #tpu.memory_space<vmem>>, %arg16: memref<50x25xf32, #tpu.memory_space<vmem>>, %arg17: memref<1x25xf32, #tpu.memory_space<vmem>>, %arg18: memref<128x1xf32, #tpu.memory_space<vmem>>, %arg19: memref<1x1xf32, #tpu.memory_space<vmem>>, %arg20: memref<50x128xf32, #tpu.memory_space<vmem>>, %arg21: memref<1x128xf32, #tpu.memory_space<vmem>>, %arg22: memref<128x1xf32, #tpu.memory_space<vmem>>, %arg23: memref<1x1xf32, #tpu.memory_space<vmem>>, %arg24: memref<2x25xf32, #tpu.memory_space<vmem>>, %arg25: memref<2x1xf32, #tpu.memory_space<vmem>>, %arg26: memref<62x128xf32, #tpu.memory_space<vmem>>, %arg27: memref<50x1152xf32, #tpu.memory_space<vmem>>) attributes {dimension_semantics = [], scalar_prefetch = 0 : i64, scratch_operands = 2 : i64, tpu.core_type = #tpu.core_type<tc>} {
    %c0 = arith.constant 0 : index
    %c0_0 = arith.constant 0 : index
    %0 = vector.load %arg1[%c0, %c0_0] : memref<50x9xf32, #tpu.memory_space<vmem>>, vector<50x9xf32>
    %c0_1 = arith.constant 0 : index
    %c0_2 = arith.constant 0 : index
    %1 = vector.load %arg2[%c0_1, %c0_2] : memref<2x50xf32, #tpu.memory_space<vmem>>, vector<2x50xf32>
    %cst = arith.constant 0.000000e+00 : f32
    %2 = vector.broadcast %cst : f32 to vector<62x128xf32>
    %c0_3 = arith.constant 0 : index
    %c0_4 = arith.constant 0 : index
    %3 = vector.load %arg26[%c0_3, %c0_4] : memref<62x128xf32, #tpu.memory_space<vmem>>, vector<62x128xf32>
    tpu.vector_store %arg26[%c0_3, %c0_4], %2 {strides = array<i32>} : memref<62x128xf32, #tpu.memory_space<vmem>>, vector<62x128xf32>,
    %c0_5 = arith.constant 0 : index
    %c0_6 = arith.constant 0 : index
    %4 = vector.load %arg0[%c0_5, %c0_6] : memref<50x18xf32, #tpu.memory_space<vmem>>, vector<50x18xf32>
    %c0_7 = arith.constant 0 : index
    %c0_8 = arith.constant 0 : index
    %5 = vector.load %arg3[%c0_7, %c0_8] : memref<18x128xf32, #tpu.memory_space<vmem>>, vector<18x128xf32>
    %cst_9 = arith.constant dense<0.000000e+00> : vector<50x128xf32>
    %6 = tpu.matmul %4, %5, %cst_9 {dimension_numbers = #tpu.dot_dimension_numbers<[1], [0], [0], [1], [0, 0, 1, 1], [], []>} : vector<50x18xf32>, vector<18x128xf32>, vector<50x128xf32> -> vector<50x128xf32>
    %c0_10 = arith.constant 0 : index
    %c0_11 = arith.constant 0 : index
    %7 = vector.load %arg4[%c0_10, %c0_11] : memref<1x128xf32, #tpu.memory_space<vmem>>, vector<1x128xf32>
    %8 = vector.broadcast %7 : vector<1x128xf32> to vector<50x128xf32>
    %9 = arith.addf %6, %8 : vector<50x128xf32>
    %cst_12 = arith.constant 0.000000e+00 : f32
    %10 = vector.broadcast %cst_12 : f32 to vector<50x128xf32>
    %11 = arith.maximumf %9, %10 : vector<50x128xf32>
    %c6 = arith.constant 6 : index
    %c0_13 = arith.constant 0 : index
    %12 = vector.load %arg26[%c6, %c0_13] : memref<62x128xf32, #tpu.memory_space<vmem>>, vector<50x128xf32>
    tpu.vector_store %arg26[%c6, %c0_13], %11 {strides = array<i32>} : memref<62x128xf32, #tpu.memory_space<vmem>>, vector<50x128xf32>,
    %c0_14 = arith.constant 0 : index
    %c0_15 = arith.constant 0 : index
    %13 = vector.load %arg26[%c0_14, %c0_15] : memref<62x128xf32, #tpu.memory_space<vmem>>, vector<50x128xf32>
    %14 = vector.extract_strided_slice %0 {offsets = [0, 0], sizes = [50, 1], strides = [1, 1]} : vector<50x9xf32> to vector<50x1xf32>
    %15 = vector.broadcast %14 : vector<50x1xf32> to vector<50x128xf32>
    %16 = arith.mulf %13, %15 : vector<50x128xf32>
    %c0_16 = arith.constant 0 : index
    %c0_17 = arith.constant 0 : index
    %17 = vector.load %arg27[%c0_16, %c0_17] : memref<50x1152xf32, #tpu.memory_space<vmem>>, vector<50x128xf32>
    tpu.vector_store %arg27[%c0_16, %c0_17], %16 {strides = array<i32>} : memref<50x1152xf32, #tpu.memory_space<vmem>>, vector<50x128xf32>,
    %c1 = arith.constant 1 : index
    %c0_18 = arith.constant 0 : index
    %18 = vector.load %arg26[%c1, %c0_18] : memref<62x128xf32, #tpu.memory_space<vmem>>, vector<50x128xf32>
    %19 = vector.extract_strided_slice %0 {offsets = [0, 1], sizes = [50, 1], strides = [1, 1]} : vector<50x9xf32> to vector<50x1xf32>
    %20 = vector.broadcast %19 : vector<50x1xf32> to vector<50x128xf32>
    %21 = arith.mulf %18, %20 : vector<50x128xf32>
    %c0_19 = arith.constant 0 : index
    %c128 = arith.constant 128 : index
    %22 = vector.load %arg27[%c0_19, %c128] : memref<50x1152xf32, #tpu.memory_space<vmem>>, vector<50x128xf32>
    tpu.vector_store %arg27[%c0_19, %c128], %21 {strides = array<i32>} : memref<50x1152xf32, #tpu.memory_space<vmem>>, vector<50x128xf32>,
    %c2 = arith.constant 2 : index
    %c0_20 = arith.constant 0 : index
    %23 = vector.load %arg26[%c2, %c0_20] : memref<62x128xf32, #tpu.memory_space<vmem>>, vector<50x128xf32>
    %24 = vector.extract_strided_slice %0 {offsets = [0, 2], sizes = [50, 1], strides = [1, 1]} : vector<50x9xf32> to vector<50x1xf32>
    %25 = vector.broadcast %24 : vector<50x1xf32> to vector<50x128xf32>
    %26 = arith.mulf %23, %25 : vector<50x128xf32>
    %c0_21 = arith.constant 0 : index
    %c256 = arith.constant 256 : index
    %27 = vector.load %arg27[%c0_21, %c256] : memref<50x1152xf32, #tpu.memory_space<vmem>>, vector<50x128xf32>
    tpu.vector_store %arg27[%c0_21, %c256], %26 {strides = array<i32>} : memref<50x1152xf32, #tpu.memory_space<vmem>>, vector<50x128xf32>,
    %c5 = arith.constant 5 : index
    %c0_22 = arith.constant 0 : index
    %28 = vector.load %arg26[%c5, %c0_22] : memref<62x128xf32, #tpu.memory_space<vmem>>, vector<50x128xf32>
    %29 = vector.extract_strided_slice %0 {offsets = [0, 3], sizes = [50, 1], strides = [1, 1]} : vector<50x9xf32> to vector<50x1xf32>
    %30 = vector.broadcast %29 : vector<50x1xf32> to vector<50x128xf32>
    %31 = arith.mulf %28, %30 : vector<50x128xf32>
    %c0_23 = arith.constant 0 : index
    %c384 = arith.constant 384 : index
    %32 = vector.load %arg27[%c0_23, %c384] : memref<50x1152xf32, #tpu.memory_space<vmem>>, vector<50x128xf32>
    tpu.vector_store %arg27[%c0_23, %c384], %31 {strides = array<i32>} : memref<50x1152xf32, #tpu.memory_space<vmem>>, vector<50x128xf32>,
    %c6_24 = arith.constant 6 : index
    %c0_25 = arith.constant 0 : index
    %33 = vector.load %arg26[%c6_24, %c0_25] : memref<62x128xf32, #tpu.memory_space<vmem>>, vector<50x128xf32>
    %34 = vector.extract_strided_slice %0 {offsets = [0, 4], sizes = [50, 1], strides = [1, 1]} : vector<50x9xf32> to vector<50x1xf32>
    %35 = vector.broadcast %34 : vector<50x1xf32> to vector<50x128xf32>
    %36 = arith.mulf %33, %35 : vector<50x128xf32>
    %c0_26 = arith.constant 0 : index
    %c512 = arith.constant 512 : index
    %37 = vector.load %arg27[%c0_26, %c512] : memref<50x1152xf32, #tpu.memory_space<vmem>>, vector<50x128xf32>
    tpu.vector_store %arg27[%c0_26, %c512], %36 {strides = array<i32>} : memref<50x1152xf32, #tpu.memory_space<vmem>>, vector<50x128xf32>,
    %c7 = arith.constant 7 : index
    %c0_27 = arith.constant 0 : index
    %38 = vector.load %arg26[%c7, %c0_27] : memref<62x128xf32, #tpu.memory_space<vmem>>, vector<50x128xf32>
    %39 = vector.extract_strided_slice %0 {offsets = [0, 5], sizes = [50, 1], strides = [1, 1]} : vector<50x9xf32> to vector<50x1xf32>
    %40 = vector.broadcast %39 : vector<50x1xf32> to vector<50x128xf32>
    %41 = arith.mulf %38, %40 : vector<50x128xf32>
    %c0_28 = arith.constant 0 : index
    %c640 = arith.constant 640 : index
    %42 = vector.load %arg27[%c0_28, %c640] : memref<50x1152xf32, #tpu.memory_space<vmem>>, vector<50x128xf32>
    tpu.vector_store %arg27[%c0_28, %c640], %41 {strides = array<i32>} : memref<50x1152xf32, #tpu.memory_space<vmem>>, vector<50x128xf32>,
    %c10 = arith.constant 10 : index
    %c0_29 = arith.constant 0 : index
    %43 = vector.load %arg26[%c10, %c0_29] : memref<62x128xf32, #tpu.memory_space<vmem>>, vector<50x128xf32>
    %44 = vector.extract_strided_slice %0 {offsets = [0, 6], sizes = [50, 1], strides = [1, 1]} : vector<50x9xf32> to vector<50x1xf32>
    %45 = vector.broadcast %44 : vector<50x1xf32> to vector<50x128xf32>
    %46 = arith.mulf %43, %45 : vector<50x128xf32>
    %c0_30 = arith.constant 0 : index
    %c768 = arith.constant 768 : index
    %47 = vector.load %arg27[%c0_30, %c768] : memref<50x1152xf32, #tpu.memory_space<vmem>>, vector<50x128xf32>
    tpu.vector_store %arg27[%c0_30, %c768], %46 {strides = array<i32>} : memref<50x1152xf32, #tpu.memory_space<vmem>>, vector<50x128xf32>,
    %c11 = arith.constant 11 : index
    %c0_31 = arith.constant 0 : index
    %48 = vector.load %arg26[%c11, %c0_31] : memref<62x128xf32, #tpu.memory_space<vmem>>, vector<50x128xf32>
    %49 = vector.extract_strided_slice %0 {offsets = [0, 7], sizes = [50, 1], strides = [1, 1]} : vector<50x9xf32> to vector<50x1xf32>
    %50 = vector.broadcast %49 : vector<50x1xf32> to vector<50x128xf32>
    %51 = arith.mulf %48, %50 : vector<50x128xf32>
    %c0_32 = arith.constant 0 : index
    %c896 = arith.constant 896 : index
    %52 = vector.load %arg27[%c0_32, %c896] : memref<50x1152xf32, #tpu.memory_space<vmem>>, vector<50x128xf32>
    tpu.vector_store %arg27[%c0_32, %c896], %51 {strides = array<i32>} : memref<50x1152xf32, #tpu.memory_space<vmem>>, vector<50x128xf32>,
    %c12 = arith.constant 12 : index
    %c0_33 = arith.constant 0 : index
    %53 = vector.load %arg26[%c12, %c0_33] : memref<62x128xf32, #tpu.memory_space<vmem>>, vector<50x128xf32>
    %54 = vector.extract_strided_slice %0 {offsets = [0, 8], sizes = [50, 1], strides = [1, 1]} : vector<50x9xf32> to vector<50x1xf32>
    %55 = vector.broadcast %54 : vector<50x1xf32> to vector<50x128xf32>
    %56 = arith.mulf %53, %55 : vector<50x128xf32>
    %c0_34 = arith.constant 0 : index
    %c1024 = arith.constant 1024 : index
    %57 = vector.load %arg27[%c0_34, %c1024] : memref<50x1152xf32, #tpu.memory_space<vmem>>, vector<50x128xf32>
    tpu.vector_store %arg27[%c0_34, %c1024], %56 {strides = array<i32>} : memref<50x1152xf32, #tpu.memory_space<vmem>>, vector<50x128xf32>,
    %c0_35 = arith.constant 0 : index
    %c0_36 = arith.constant 0 : index
    %58 = vector.load %arg27[%c0_35, %c0_36] : memref<50x1152xf32, #tpu.memory_space<vmem>>, vector<50x1152xf32>
    %c0_37 = arith.constant 0 : index
    %c0_38 = arith.constant 0 : index
    %59 = vector.load %arg5[%c0_37, %c0_38] : memref<1152x128xf32, #tpu.memory_space<vmem>>, vector<1152x128xf32>
    %cst_39 = arith.constant dense<0.000000e+00> : vector<50x128xf32>
    %60 = tpu.matmul %58, %59, %cst_39 {dimension_numbers = #tpu.dot_dimension_numbers<[1], [0], [0], [1], [0, 0, 1, 1], [], []>} : vector<50x1152xf32>, vector<1152x128xf32>, vector<50x128xf32> -> vector<50x128xf32>
    %c0_40 = arith.constant 0 : index
    %c0_41 = arith.constant 0 : index
    %61 = vector.load %arg6[%c0_40, %c0_41] : memref<1x128xf32, #tpu.memory_space<vmem>>, vector<1x128xf32>
    %62 = vector.broadcast %61 : vector<1x128xf32> to vector<50x128xf32>
    %63 = arith.addf %60, %62 : vector<50x128xf32>
    %cst_42 = arith.constant 0.000000e+00 : f32
    %64 = vector.broadcast %cst_42 : f32 to vector<50x128xf32>
    %65 = arith.maximumf %63, %64 : vector<50x128xf32>
    %c6_43 = arith.constant 6 : index
    %c0_44 = arith.constant 0 : index
    %66 = vector.load %arg26[%c6_43, %c0_44] : memref<62x128xf32, #tpu.memory_space<vmem>>, vector<50x128xf32>
    tpu.vector_store %arg26[%c6_43, %c0_44], %65 {strides = array<i32>} : memref<62x128xf32, #tpu.memory_space<vmem>>, vector<50x128xf32>,
    %c0_45 = arith.constant 0 : index
    %c0_46 = arith.constant 0 : index
    %67 = vector.load %arg26[%c0_45, %c0_46] : memref<62x128xf32, #tpu.memory_space<vmem>>, vector<50x128xf32>
    %68 = vector.extract_strided_slice %0 {offsets = [0, 0], sizes = [50, 1], strides = [1, 1]} : vector<50x9xf32> to vector<50x1xf32>
    %69 = vector.broadcast %68 : vector<50x1xf32> to vector<50x128xf32>
    %70 = arith.mulf %67, %69 : vector<50x128xf32>
    %c0_47 = arith.constant 0 : index
    %c0_48 = arith.constant 0 : index
    %71 = vector.load %arg27[%c0_47, %c0_48] : memref<50x1152xf32, #tpu.memory_space<vmem>>, vector<50x128xf32>
    tpu.vector_store %arg27[%c0_47, %c0_48], %70 {strides = array<i32>} : memref<50x1152xf32, #tpu.memory_space<vmem>>, vector<50x128xf32>,
    %c1_49 = arith.constant 1 : index
    %c0_50 = arith.constant 0 : index
    %72 = vector.load %arg26[%c1_49, %c0_50] : memref<62x128xf32, #tpu.memory_space<vmem>>, vector<50x128xf32>
    %73 = vector.extract_strided_slice %0 {offsets = [0, 1], sizes = [50, 1], strides = [1, 1]} : vector<50x9xf32> to vector<50x1xf32>
    %74 = vector.broadcast %73 : vector<50x1xf32> to vector<50x128xf32>
    %75 = arith.mulf %72, %74 : vector<50x128xf32>
    %c0_51 = arith.constant 0 : index
    %c128_52 = arith.constant 128 : index
    %76 = vector.load %arg27[%c0_51, %c128_52] : memref<50x1152xf32, #tpu.memory_space<vmem>>, vector<50x128xf32>
    tpu.vector_store %arg27[%c0_51, %c128_52], %75 {strides = array<i32>} : memref<50x1152xf32, #tpu.memory_space<vmem>>, vector<50x128xf32>,
    %c2_53 = arith.constant 2 : index
    %c0_54 = arith.constant 0 : index
    %77 = vector.load %arg26[%c2_53, %c0_54] : memref<62x128xf32, #tpu.memory_space<vmem>>, vector<50x128xf32>
    %78 = vector.extract_strided_slice %0 {offsets = [0, 2], sizes = [50, 1], strides = [1, 1]} : vector<50x9xf32> to vector<50x1xf32>
    %79 = vector.broadcast %78 : vector<50x1xf32> to vector<50x128xf32>
    %80 = arith.mulf %77, %79 : vector<50x128xf32>
    %c0_55 = arith.constant 0 : index
    %c256_56 = arith.constant 256 : index
    %81 = vector.load %arg27[%c0_55, %c256_56] : memref<50x1152xf32, #tpu.memory_space<vmem>>, vector<50x128xf32>
    tpu.vector_store %arg27[%c0_55, %c256_56], %80 {strides = array<i32>} : memref<50x1152xf32, #tpu.memory_space<vmem>>, vector<50x128xf32>,
    %c5_57 = arith.constant 5 : index
    %c0_58 = arith.constant 0 : index
    %82 = vector.load %arg26[%c5_57, %c0_58] : memref<62x128xf32, #tpu.memory_space<vmem>>, vector<50x128xf32>
    %83 = vector.extract_strided_slice %0 {offsets = [0, 3], sizes = [50, 1], strides = [1, 1]} : vector<50x9xf32> to vector<50x1xf32>
    %84 = vector.broadcast %83 : vector<50x1xf32> to vector<50x128xf32>
    %85 = arith.mulf %82, %84 : vector<50x128xf32>
    %c0_59 = arith.constant 0 : index
    %c384_60 = arith.constant 384 : index
    %86 = vector.load %arg27[%c0_59, %c384_60] : memref<50x1152xf32, #tpu.memory_space<vmem>>, vector<50x128xf32>
    tpu.vector_store %arg27[%c0_59, %c384_60], %85 {strides = array<i32>} : memref<50x1152xf32, #tpu.memory_space<vmem>>, vector<50x128xf32>,
    %c6_61 = arith.constant 6 : index
    %c0_62 = arith.constant 0 : index
    %87 = vector.load %arg26[%c6_61, %c0_62] : memref<62x128xf32, #tpu.memory_space<vmem>>, vector<50x128xf32>
    %88 = vector.extract_strided_slice %0 {offsets = [0, 4], sizes = [50, 1], strides = [1, 1]} : vector<50x9xf32> to vector<50x1xf32>
    %89 = vector.broadcast %88 : vector<50x1xf32> to vector<50x128xf32>
    %90 = arith.mulf %87, %89 : vector<50x128xf32>
    %c0_63 = arith.constant 0 : index
    %c512_64 = arith.constant 512 : index
    %91 = vector.load %arg27[%c0_63, %c512_64] : memref<50x1152xf32, #tpu.memory_space<vmem>>, vector<50x128xf32>
    tpu.vector_store %arg27[%c0_63, %c512_64], %90 {strides = array<i32>} : memref<50x1152xf32, #tpu.memory_space<vmem>>, vector<50x128xf32>,
    %c7_65 = arith.constant 7 : index
    %c0_66 = arith.constant 0 : index
    %92 = vector.load %arg26[%c7_65, %c0_66] : memref<62x128xf32, #tpu.memory_space<vmem>>, vector<50x128xf32>
    %93 = vector.extract_strided_slice %0 {offsets = [0, 5], sizes = [50, 1], strides = [1, 1]} : vector<50x9xf32> to vector<50x1xf32>
    %94 = vector.broadcast %93 : vector<50x1xf32> to vector<50x128xf32>
    %95 = arith.mulf %92, %94 : vector<50x128xf32>
    %c0_67 = arith.constant 0 : index
    %c640_68 = arith.constant 640 : index
    %96 = vector.load %arg27[%c0_67, %c640_68] : memref<50x1152xf32, #tpu.memory_space<vmem>>, vector<50x128xf32>
    tpu.vector_store %arg27[%c0_67, %c640_68], %95 {strides = array<i32>} : memref<50x1152xf32, #tpu.memory_space<vmem>>, vector<50x128xf32>,
    %c10_69 = arith.constant 10 : index
    %c0_70 = arith.constant 0 : index
    %97 = vector.load %arg26[%c10_69, %c0_70] : memref<62x128xf32, #tpu.memory_space<vmem>>, vector<50x128xf32>
    %98 = vector.extract_strided_slice %0 {offsets = [0, 6], sizes = [50, 1], strides = [1, 1]} : vector<50x9xf32> to vector<50x1xf32>
    %99 = vector.broadcast %98 : vector<50x1xf32> to vector<50x128xf32>
    %100 = arith.mulf %97, %99 : vector<50x128xf32>
    %c0_71 = arith.constant 0 : index
    %c768_72 = arith.constant 768 : index
    %101 = vector.load %arg27[%c0_71, %c768_72] : memref<50x1152xf32, #tpu.memory_space<vmem>>, vector<50x128xf32>
    tpu.vector_store %arg27[%c0_71, %c768_72], %100 {strides = array<i32>} : memref<50x1152xf32, #tpu.memory_space<vmem>>, vector<50x128xf32>,
    %c11_73 = arith.constant 11 : index
    %c0_74 = arith.constant 0 : index
    %102 = vector.load %arg26[%c11_73, %c0_74] : memref<62x128xf32, #tpu.memory_space<vmem>>, vector<50x128xf32>
    %103 = vector.extract_strided_slice %0 {offsets = [0, 7], sizes = [50, 1], strides = [1, 1]} : vector<50x9xf32> to vector<50x1xf32>
    %104 = vector.broadcast %103 : vector<50x1xf32> to vector<50x128xf32>
    %105 = arith.mulf %102, %104 : vector<50x128xf32>
    %c0_75 = arith.constant 0 : index
    %c896_76 = arith.constant 896 : index
    %106 = vector.load %arg27[%c0_75, %c896_76] : memref<50x1152xf32, #tpu.memory_space<vmem>>, vector<50x128xf32>
    tpu.vector_store %arg27[%c0_75, %c896_76], %105 {strides = array<i32>} : memref<50x1152xf32, #tpu.memory_space<vmem>>, vector<50x128xf32>,
    %c12_77 = arith.constant 12 : index
    %c0_78 = arith.constant 0 : index
    %107 = vector.load %arg26[%c12_77, %c0_78] : memref<62x128xf32, #tpu.memory_space<vmem>>, vector<50x128xf32>
    %108 = vector.extract_strided_slice %0 {offsets = [0, 8], sizes = [50, 1], strides = [1, 1]} : vector<50x9xf32> to vector<50x1xf32>
    %109 = vector.broadcast %108 : vector<50x1xf32> to vector<50x128xf32>
    %110 = arith.mulf %107, %109 : vector<50x128xf32>
    %c0_79 = arith.constant 0 : index
    %c1024_80 = arith.constant 1024 : index
    %111 = vector.load %arg27[%c0_79, %c1024_80] : memref<50x1152xf32, #tpu.memory_space<vmem>>, vector<50x128xf32>
    tpu.vector_store %arg27[%c0_79, %c1024_80], %110 {strides = array<i32>} : memref<50x1152xf32, #tpu.memory_space<vmem>>, vector<50x128xf32>,
    %c0_81 = arith.constant 0 : index
    %c0_82 = arith.constant 0 : index
    %112 = vector.load %arg27[%c0_81, %c0_82] : memref<50x1152xf32, #tpu.memory_space<vmem>>, vector<50x1152xf32>
    %c0_83 = arith.constant 0 : index
    %c0_84 = arith.constant 0 : index
    %113 = vector.load %arg7[%c0_83, %c0_84] : memref<1152x128xf32, #tpu.memory_space<vmem>>, vector<1152x128xf32>
    %cst_85 = arith.constant dense<0.000000e+00> : vector<50x128xf32>
    %114 = tpu.matmul %112, %113, %cst_85 {dimension_numbers = #tpu.dot_dimension_numbers<[1], [0], [0], [1], [0, 0, 1, 1], [], []>} : vector<50x1152xf32>, vector<1152x128xf32>, vector<50x128xf32> -> vector<50x128xf32>
    %c0_86 = arith.constant 0 : index
    %c0_87 = arith.constant 0 : index
    %115 = vector.load %arg8[%c0_86, %c0_87] : memref<1x128xf32, #tpu.memory_space<vmem>>, vector<1x128xf32>
    %116 = vector.broadcast %115 : vector<1x128xf32> to vector<50x128xf32>
    %117 = arith.addf %114, %116 : vector<50x128xf32>
    %118 = arith.addf %117, %11 : vector<50x128xf32>
    %cst_88 = arith.constant 0.000000e+00 : f32
    %119 = vector.broadcast %cst_88 : f32 to vector<50x128xf32>
    %120 = arith.maximumf %118, %119 : vector<50x128xf32>
    %c6_89 = arith.constant 6 : index
    %c0_90 = arith.constant 0 : index
    %121 = vector.load %arg26[%c6_89, %c0_90] : memref<62x128xf32, #tpu.memory_space<vmem>>, vector<50x128xf32>
    tpu.vector_store %arg26[%c6_89, %c0_90], %120 {strides = array<i32>} : memref<62x128xf32, #tpu.memory_space<vmem>>, vector<50x128xf32>,
    %c0_91 = arith.constant 0 : index
    %c0_92 = arith.constant 0 : index
    %122 = vector.load %arg26[%c0_91, %c0_92] : memref<62x128xf32, #tpu.memory_space<vmem>>, vector<50x128xf32>
    %123 = vector.extract_strided_slice %0 {offsets = [0, 0], sizes = [50, 1], strides = [1, 1]} : vector<50x9xf32> to vector<50x1xf32>
    %124 = vector.broadcast %123 : vector<50x1xf32> to vector<50x128xf32>
    %125 = arith.mulf %122, %124 : vector<50x128xf32>
    %c0_93 = arith.constant 0 : index
    %c0_94 = arith.constant 0 : index
    %126 = vector.load %arg27[%c0_93, %c0_94] : memref<50x1152xf32, #tpu.memory_space<vmem>>, vector<50x128xf32>
    tpu.vector_store %arg27[%c0_93, %c0_94], %125 {strides = array<i32>} : memref<50x1152xf32, #tpu.memory_space<vmem>>, vector<50x128xf32>,
    %c1_95 = arith.constant 1 : index
    %c0_96 = arith.constant 0 : index
    %127 = vector.load %arg26[%c1_95, %c0_96] : memref<62x128xf32, #tpu.memory_space<vmem>>, vector<50x128xf32>
    %128 = vector.extract_strided_slice %0 {offsets = [0, 1], sizes = [50, 1], strides = [1, 1]} : vector<50x9xf32> to vector<50x1xf32>
    %129 = vector.broadcast %128 : vector<50x1xf32> to vector<50x128xf32>
    %130 = arith.mulf %127, %129 : vector<50x128xf32>
    %c0_97 = arith.constant 0 : index
    %c128_98 = arith.constant 128 : index
    %131 = vector.load %arg27[%c0_97, %c128_98] : memref<50x1152xf32, #tpu.memory_space<vmem>>, vector<50x128xf32>
    tpu.vector_store %arg27[%c0_97, %c128_98], %130 {strides = array<i32>} : memref<50x1152xf32, #tpu.memory_space<vmem>>, vector<50x128xf32>,
    %c2_99 = arith.constant 2 : index
    %c0_100 = arith.constant 0 : index
    %132 = vector.load %arg26[%c2_99, %c0_100] : memref<62x128xf32, #tpu.memory_space<vmem>>, vector<50x128xf32>
    %133 = vector.extract_strided_slice %0 {offsets = [0, 2], sizes = [50, 1], strides = [1, 1]} : vector<50x9xf32> to vector<50x1xf32>
    %134 = vector.broadcast %133 : vector<50x1xf32> to vector<50x128xf32>
    %135 = arith.mulf %132, %134 : vector<50x128xf32>
    %c0_101 = arith.constant 0 : index
    %c256_102 = arith.constant 256 : index
    %136 = vector.load %arg27[%c0_101, %c256_102] : memref<50x1152xf32, #tpu.memory_space<vmem>>, vector<50x128xf32>
    tpu.vector_store %arg27[%c0_101, %c256_102], %135 {strides = array<i32>} : memref<50x1152xf32, #tpu.memory_space<vmem>>, vector<50x128xf32>,
    %c5_103 = arith.constant 5 : index
    %c0_104 = arith.constant 0 : index
    %137 = vector.load %arg26[%c5_103, %c0_104] : memref<62x128xf32, #tpu.memory_space<vmem>>, vector<50x128xf32>
    %138 = vector.extract_strided_slice %0 {offsets = [0, 3], sizes = [50, 1], strides = [1, 1]} : vector<50x9xf32> to vector<50x1xf32>
    %139 = vector.broadcast %138 : vector<50x1xf32> to vector<50x128xf32>
    %140 = arith.mulf %137, %139 : vector<50x128xf32>
    %c0_105 = arith.constant 0 : index
    %c384_106 = arith.constant 384 : index
    %141 = vector.load %arg27[%c0_105, %c384_106] : memref<50x1152xf32, #tpu.memory_space<vmem>>, vector<50x128xf32>
    tpu.vector_store %arg27[%c0_105, %c384_106], %140 {strides = array<i32>} : memref<50x1152xf32, #tpu.memory_space<vmem>>, vector<50x128xf32>,
    %c6_107 = arith.constant 6 : index
    %c0_108 = arith.constant 0 : index
    %142 = vector.load %arg26[%c6_107, %c0_108] : memref<62x128xf32, #tpu.memory_space<vmem>>, vector<50x128xf32>
    %143 = vector.extract_strided_slice %0 {offsets = [0, 4], sizes = [50, 1], strides = [1, 1]} : vector<50x9xf32> to vector<50x1xf32>
    %144 = vector.broadcast %143 : vector<50x1xf32> to vector<50x128xf32>
    %145 = arith.mulf %142, %144 : vector<50x128xf32>
    %c0_109 = arith.constant 0 : index
    %c512_110 = arith.constant 512 : index
    %146 = vector.load %arg27[%c0_109, %c512_110] : memref<50x1152xf32, #tpu.memory_space<vmem>>, vector<50x128xf32>
    tpu.vector_store %arg27[%c0_109, %c512_110], %145 {strides = array<i32>} : memref<50x1152xf32, #tpu.memory_space<vmem>>, vector<50x128xf32>,
    %c7_111 = arith.constant 7 : index
    %c0_112 = arith.constant 0 : index
    %147 = vector.load %arg26[%c7_111, %c0_112] : memref<62x128xf32, #tpu.memory_space<vmem>>, vector<50x128xf32>
    %148 = vector.extract_strided_slice %0 {offsets = [0, 5], sizes = [50, 1], strides = [1, 1]} : vector<50x9xf32> to vector<50x1xf32>
    %149 = vector.broadcast %148 : vector<50x1xf32> to vector<50x128xf32>
    %150 = arith.mulf %147, %149 : vector<50x128xf32>
    %c0_113 = arith.constant 0 : index
    %c640_114 = arith.constant 640 : index
    %151 = vector.load %arg27[%c0_113, %c640_114] : memref<50x1152xf32, #tpu.memory_space<vmem>>, vector<50x128xf32>
    tpu.vector_store %arg27[%c0_113, %c640_114], %150 {strides = array<i32>} : memref<50x1152xf32, #tpu.memory_space<vmem>>, vector<50x128xf32>,
    %c10_115 = arith.constant 10 : index
    %c0_116 = arith.constant 0 : index
    %152 = vector.load %arg26[%c10_115, %c0_116] : memref<62x128xf32, #tpu.memory_space<vmem>>, vector<50x128xf32>
    %153 = vector.extract_strided_slice %0 {offsets = [0, 6], sizes = [50, 1], strides = [1, 1]} : vector<50x9xf32> to vector<50x1xf32>
    %154 = vector.broadcast %153 : vector<50x1xf32> to vector<50x128xf32>
    %155 = arith.mulf %152, %154 : vector<50x128xf32>
    %c0_117 = arith.constant 0 : index
    %c768_118 = arith.constant 768 : index
    %156 = vector.load %arg27[%c0_117, %c768_118] : memref<50x1152xf32, #tpu.memory_space<vmem>>, vector<50x128xf32>
    tpu.vector_store %arg27[%c0_117, %c768_118], %155 {strides = array<i32>} : memref<50x1152xf32, #tpu.memory_space<vmem>>, vector<50x128xf32>,
    %c11_119 = arith.constant 11 : index
    %c0_120 = arith.constant 0 : index
    %157 = vector.load %arg26[%c11_119, %c0_120] : memref<62x128xf32, #tpu.memory_space<vmem>>, vector<50x128xf32>
    %158 = vector.extract_strided_slice %0 {offsets = [0, 7], sizes = [50, 1], strides = [1, 1]} : vector<50x9xf32> to vector<50x1xf32>
    %159 = vector.broadcast %158 : vector<50x1xf32> to vector<50x128xf32>
    %160 = arith.mulf %157, %159 : vector<50x128xf32>
    %c0_121 = arith.constant 0 : index
    %c896_122 = arith.constant 896 : index
    %161 = vector.load %arg27[%c0_121, %c896_122] : memref<50x1152xf32, #tpu.memory_space<vmem>>, vector<50x128xf32>
    tpu.vector_store %arg27[%c0_121, %c896_122], %160 {strides = array<i32>} : memref<50x1152xf32, #tpu.memory_space<vmem>>, vector<50x128xf32>,
    %c12_123 = arith.constant 12 : index
    %c0_124 = arith.constant 0 : index
    %162 = vector.load %arg26[%c12_123, %c0_124] : memref<62x128xf32, #tpu.memory_space<vmem>>, vector<50x128xf32>
    %163 = vector.extract_strided_slice %0 {offsets = [0, 8], sizes = [50, 1], strides = [1, 1]} : vector<50x9xf32> to vector<50x1xf32>
    %164 = vector.broadcast %163 : vector<50x1xf32> to vector<50x128xf32>
    %165 = arith.mulf %162, %164 : vector<50x128xf32>
    %c0_125 = arith.constant 0 : index
    %c1024_126 = arith.constant 1024 : index
    %166 = vector.load %arg27[%c0_125, %c1024_126] : memref<50x1152xf32, #tpu.memory_space<vmem>>, vector<50x128xf32>
    tpu.vector_store %arg27[%c0_125, %c1024_126], %165 {strides = array<i32>} : memref<50x1152xf32, #tpu.memory_space<vmem>>, vector<50x128xf32>,
    %c0_127 = arith.constant 0 : index
    %c0_128 = arith.constant 0 : index
    %167 = vector.load %arg27[%c0_127, %c0_128] : memref<50x1152xf32, #tpu.memory_space<vmem>>, vector<50x1152xf32>
    %c0_129 = arith.constant 0 : index
    %c0_130 = arith.constant 0 : index
    %168 = vector.load %arg9[%c0_129, %c0_130] : memref<1152x128xf32, #tpu.memory_space<vmem>>, vector<1152x128xf32>
    %cst_131 = arith.constant dense<0.000000e+00> : vector<50x128xf32>
    %169 = tpu.matmul %167, %168, %cst_131 {dimension_numbers = #tpu.dot_dimension_numbers<[1], [0], [0], [1], [0, 0, 1, 1], [], []>} : vector<50x1152xf32>, vector<1152x128xf32>, vector<50x128xf32> -> vector<50x128xf32>
    %c0_132 = arith.constant 0 : index
    %c0_133 = arith.constant 0 : index
    %170 = vector.load %arg10[%c0_132, %c0_133] : memref<1x128xf32, #tpu.memory_space<vmem>>, vector<1x128xf32>
    %171 = vector.broadcast %170 : vector<1x128xf32> to vector<50x128xf32>
    %172 = arith.addf %169, %171 : vector<50x128xf32>
    %cst_134 = arith.constant 0.000000e+00 : f32
    %173 = vector.broadcast %cst_134 : f32 to vector<50x128xf32>
    %174 = arith.maximumf %172, %173 : vector<50x128xf32>
    %c6_135 = arith.constant 6 : index
    %c0_136 = arith.constant 0 : index
    %175 = vector.load %arg26[%c6_135, %c0_136] : memref<62x128xf32, #tpu.memory_space<vmem>>, vector<50x128xf32>
    tpu.vector_store %arg26[%c6_135, %c0_136], %174 {strides = array<i32>} : memref<62x128xf32, #tpu.memory_space<vmem>>, vector<50x128xf32>,
    %c0_137 = arith.constant 0 : index
    %c0_138 = arith.constant 0 : index
    %176 = vector.load %arg26[%c0_137, %c0_138] : memref<62x128xf32, #tpu.memory_space<vmem>>, vector<50x128xf32>
    %177 = vector.extract_strided_slice %0 {offsets = [0, 0], sizes = [50, 1], strides = [1, 1]} : vector<50x9xf32> to vector<50x1xf32>
    %178 = vector.broadcast %177 : vector<50x1xf32> to vector<50x128xf32>
    %179 = arith.mulf %176, %178 : vector<50x128xf32>
    %c0_139 = arith.constant 0 : index
    %c0_140 = arith.constant 0 : index
    %180 = vector.load %arg27[%c0_139, %c0_140] : memref<50x1152xf32, #tpu.memory_space<vmem>>, vector<50x128xf32>
    tpu.vector_store %arg27[%c0_139, %c0_140], %179 {strides = array<i32>} : memref<50x1152xf32, #tpu.memory_space<vmem>>, vector<50x128xf32>,
    %c1_141 = arith.constant 1 : index
    %c0_142 = arith.constant 0 : index
    %181 = vector.load %arg26[%c1_141, %c0_142] : memref<62x128xf32, #tpu.memory_space<vmem>>, vector<50x128xf32>
    %182 = vector.extract_strided_slice %0 {offsets = [0, 1], sizes = [50, 1], strides = [1, 1]} : vector<50x9xf32> to vector<50x1xf32>
    %183 = vector.broadcast %182 : vector<50x1xf32> to vector<50x128xf32>
    %184 = arith.mulf %181, %183 : vector<50x128xf32>
    %c0_143 = arith.constant 0 : index
    %c128_144 = arith.constant 128 : index
    %185 = vector.load %arg27[%c0_143, %c128_144] : memref<50x1152xf32, #tpu.memory_space<vmem>>, vector<50x128xf32>
    tpu.vector_store %arg27[%c0_143, %c128_144], %184 {strides = array<i32>} : memref<50x1152xf32, #tpu.memory_space<vmem>>, vector<50x128xf32>,
    %c2_145 = arith.constant 2 : index
    %c0_146 = arith.constant 0 : index
    %186 = vector.load %arg26[%c2_145, %c0_146] : memref<62x128xf32, #tpu.memory_space<vmem>>, vector<50x128xf32>
    %187 = vector.extract_strided_slice %0 {offsets = [0, 2], sizes = [50, 1], strides = [1, 1]} : vector<50x9xf32> to vector<50x1xf32>
    %188 = vector.broadcast %187 : vector<50x1xf32> to vector<50x128xf32>
    %189 = arith.mulf %186, %188 : vector<50x128xf32>
    %c0_147 = arith.constant 0 : index
    %c256_148 = arith.constant 256 : index
    %190 = vector.load %arg27[%c0_147, %c256_148] : memref<50x1152xf32, #tpu.memory_space<vmem>>, vector<50x128xf32>
    tpu.vector_store %arg27[%c0_147, %c256_148], %189 {strides = array<i32>} : memref<50x1152xf32, #tpu.memory_space<vmem>>, vector<50x128xf32>,
    %c5_149 = arith.constant 5 : index
    %c0_150 = arith.constant 0 : index
    %191 = vector.load %arg26[%c5_149, %c0_150] : memref<62x128xf32, #tpu.memory_space<vmem>>, vector<50x128xf32>
    %192 = vector.extract_strided_slice %0 {offsets = [0, 3], sizes = [50, 1], strides = [1, 1]} : vector<50x9xf32> to vector<50x1xf32>
    %193 = vector.broadcast %192 : vector<50x1xf32> to vector<50x128xf32>
    %194 = arith.mulf %191, %193 : vector<50x128xf32>
    %c0_151 = arith.constant 0 : index
    %c384_152 = arith.constant 384 : index
    %195 = vector.load %arg27[%c0_151, %c384_152] : memref<50x1152xf32, #tpu.memory_space<vmem>>, vector<50x128xf32>
    tpu.vector_store %arg27[%c0_151, %c384_152], %194 {strides = array<i32>} : memref<50x1152xf32, #tpu.memory_space<vmem>>, vector<50x128xf32>,
    %c6_153 = arith.constant 6 : index
    %c0_154 = arith.constant 0 : index
    %196 = vector.load %arg26[%c6_153, %c0_154] : memref<62x128xf32, #tpu.memory_space<vmem>>, vector<50x128xf32>
    %197 = vector.extract_strided_slice %0 {offsets = [0, 4], sizes = [50, 1], strides = [1, 1]} : vector<50x9xf32> to vector<50x1xf32>
    %198 = vector.broadcast %197 : vector<50x1xf32> to vector<50x128xf32>
    %199 = arith.mulf %196, %198 : vector<50x128xf32>
    %c0_155 = arith.constant 0 : index
    %c512_156 = arith.constant 512 : index
    %200 = vector.load %arg27[%c0_155, %c512_156] : memref<50x1152xf32, #tpu.memory_space<vmem>>, vector<50x128xf32>
    tpu.vector_store %arg27[%c0_155, %c512_156], %199 {strides = array<i32>} : memref<50x1152xf32, #tpu.memory_space<vmem>>, vector<50x128xf32>,
    %c7_157 = arith.constant 7 : index
    %c0_158 = arith.constant 0 : index
    %201 = vector.load %arg26[%c7_157, %c0_158] : memref<62x128xf32, #tpu.memory_space<vmem>>, vector<50x128xf32>
    %202 = vector.extract_strided_slice %0 {offsets = [0, 5], sizes = [50, 1], strides = [1, 1]} : vector<50x9xf32> to vector<50x1xf32>
    %203 = vector.broadcast %202 : vector<50x1xf32> to vector<50x128xf32>
    %204 = arith.mulf %201, %203 : vector<50x128xf32>
    %c0_159 = arith.constant 0 : index
    %c640_160 = arith.constant 640 : index
    %205 = vector.load %arg27[%c0_159, %c640_160] : memref<50x1152xf32, #tpu.memory_space<vmem>>, vector<50x128xf32>
    tpu.vector_store %arg27[%c0_159, %c640_160], %204 {strides = array<i32>} : memref<50x1152xf32, #tpu.memory_space<vmem>>, vector<50x128xf32>,
    %c10_161 = arith.constant 10 : index
    %c0_162 = arith.constant 0 : index
    %206 = vector.load %arg26[%c10_161, %c0_162] : memref<62x128xf32, #tpu.memory_space<vmem>>, vector<50x128xf32>
    %207 = vector.extract_strided_slice %0 {offsets = [0, 6], sizes = [50, 1], strides = [1, 1]} : vector<50x9xf32> to vector<50x1xf32>
    %208 = vector.broadcast %207 : vector<50x1xf32> to vector<50x128xf32>
    %209 = arith.mulf %206, %208 : vector<50x128xf32>
    %c0_163 = arith.constant 0 : index
    %c768_164 = arith.constant 768 : index
    %210 = vector.load %arg27[%c0_163, %c768_164] : memref<50x1152xf32, #tpu.memory_space<vmem>>, vector<50x128xf32>
    tpu.vector_store %arg27[%c0_163, %c768_164], %209 {strides = array<i32>} : memref<50x1152xf32, #tpu.memory_space<vmem>>, vector<50x128xf32>,
    %c11_165 = arith.constant 11 : index
    %c0_166 = arith.constant 0 : index
    %211 = vector.load %arg26[%c11_165, %c0_166] : memref<62x128xf32, #tpu.memory_space<vmem>>, vector<50x128xf32>
    %212 = vector.extract_strided_slice %0 {offsets = [0, 7], sizes = [50, 1], strides = [1, 1]} : vector<50x9xf32> to vector<50x1xf32>
    %213 = vector.broadcast %212 : vector<50x1xf32> to vector<50x128xf32>
    %214 = arith.mulf %211, %213 : vector<50x128xf32>
    %c0_167 = arith.constant 0 : index
    %c896_168 = arith.constant 896 : index
    %215 = vector.load %arg27[%c0_167, %c896_168] : memref<50x1152xf32, #tpu.memory_space<vmem>>, vector<50x128xf32>
    tpu.vector_store %arg27[%c0_167, %c896_168], %214 {strides = array<i32>} : memref<50x1152xf32, #tpu.memory_space<vmem>>, vector<50x128xf32>,
    %c12_169 = arith.constant 12 : index
    %c0_170 = arith.constant 0 : index
    %216 = vector.load %arg26[%c12_169, %c0_170] : memref<62x128xf32, #tpu.memory_space<vmem>>, vector<50x128xf32>
    %217 = vector.extract_strided_slice %0 {offsets = [0, 8], sizes = [50, 1], strides = [1, 1]} : vector<50x9xf32> to vector<50x1xf32>
    %218 = vector.broadcast %217 : vector<50x1xf32> to vector<50x128xf32>
    %219 = arith.mulf %216, %218 : vector<50x128xf32>
    %c0_171 = arith.constant 0 : index
    %c1024_172 = arith.constant 1024 : index
    %220 = vector.load %arg27[%c0_171, %c1024_172] : memref<50x1152xf32, #tpu.memory_space<vmem>>, vector<50x128xf32>
    tpu.vector_store %arg27[%c0_171, %c1024_172], %219 {strides = array<i32>} : memref<50x1152xf32, #tpu.memory_space<vmem>>, vector<50x128xf32>,
    %c0_173 = arith.constant 0 : index
    %c0_174 = arith.constant 0 : index
    %221 = vector.load %arg27[%c0_173, %c0_174] : memref<50x1152xf32, #tpu.memory_space<vmem>>, vector<50x1152xf32>
    %c0_175 = arith.constant 0 : index
    %c0_176 = arith.constant 0 : index
    %222 = vector.load %arg11[%c0_175, %c0_176] : memref<1152x128xf32, #tpu.memory_space<vmem>>, vector<1152x128xf32>
    %cst_177 = arith.constant dense<0.000000e+00> : vector<50x128xf32>
    %223 = tpu.matmul %221, %222, %cst_177 {dimension_numbers = #tpu.dot_dimension_numbers<[1], [0], [0], [1], [0, 0, 1, 1], [], []>} : vector<50x1152xf32>, vector<1152x128xf32>, vector<50x128xf32> -> vector<50x128xf32>
    %c0_178 = arith.constant 0 : index
    %c0_179 = arith.constant 0 : index
    %224 = vector.load %arg12[%c0_178, %c0_179] : memref<1x128xf32, #tpu.memory_space<vmem>>, vector<1x128xf32>
    %225 = vector.broadcast %224 : vector<1x128xf32> to vector<50x128xf32>
    %226 = arith.addf %223, %225 : vector<50x128xf32>
    %227 = arith.addf %226, %120 : vector<50x128xf32>
    %cst_180 = arith.constant 0.000000e+00 : f32
    %228 = vector.broadcast %cst_180 : f32 to vector<50x128xf32>
    %229 = arith.maximumf %227, %228 : vector<50x128xf32>
    %c0_181 = arith.constant 0 : index
    %c0_182 = arith.constant 0 : index
    %230 = vector.load %arg13[%c0_181, %c0_182] : memref<128x2xf32, #tpu.memory_space<vmem>>, vector<128x2xf32>
    %cst_183 = arith.constant dense<0.000000e+00> : vector<50x2xf32>
    %231 = tpu.matmul %229, %230, %cst_183 {dimension_numbers = #tpu.dot_dimension_numbers<[1], [0], [0], [1], [0, 0, 1, 1], [], []>} : vector<50x128xf32>, vector<128x2xf32>, vector<50x2xf32> -> vector<50x2xf32>
    %c0_184 = arith.constant 0 : index
    %c0_185 = arith.constant 0 : index
    %232 = vector.load %arg14[%c0_184, %c0_185] : memref<1x2xf32, #tpu.memory_space<vmem>>, vector<1x2xf32>
    %233 = vector.broadcast %232 : vector<1x2xf32> to vector<50x2xf32>
    %234 = arith.addf %231, %233 : vector<50x2xf32>
    %cst_186 = arith.constant 0.000000e+00 : f32
    %235 = vector.broadcast %cst_186 : f32 to vector<50x2xf32>
    %236 = arith.maximumf %234, %235 : vector<50x2xf32>
    %237 = vector.extract_strided_slice %236 {offsets = [0, 0], sizes = [50, 1], strides = [1, 1]} : vector<50x2xf32> to vector<50x1xf32>
    %c0_187 = arith.constant 0 : index
    %c0_188 = arith.constant 0 : index
    %238 = vector.load %arg15[%c0_187, %c0_188] : memref<50x25xf32, #tpu.memory_space<vmem>>, vector<50x25xf32>
    %239 = vector.broadcast %237 : vector<50x1xf32> to vector<50x25xf32>
    %240 = arith.mulf %239, %238 : vector<50x25xf32>
    %241 = vector.extract_strided_slice %236 {offsets = [0, 1], sizes = [50, 1], strides = [1, 1]} : vector<50x2xf32> to vector<50x1xf32>
    %c0_189 = arith.constant 0 : index
    %c0_190 = arith.constant 0 : index
    %242 = vector.load %arg16[%c0_189, %c0_190] : memref<50x25xf32, #tpu.memory_space<vmem>>, vector<50x25xf32>
    %243 = vector.broadcast %241 : vector<50x1xf32> to vector<50x25xf32>
    %244 = arith.mulf %243, %242 : vector<50x25xf32>
    %245 = arith.addf %240, %244 : vector<50x25xf32>
    %cst_191 = arith.constant dense<0.000000e+00> : vector<2x25xf32>
    %246 = tpu.matmul %1, %245, %cst_191 {dimension_numbers = #tpu.dot_dimension_numbers<[1], [0], [0], [1], [0, 0, 1, 1], [], []>} : vector<2x50xf32>, vector<50x25xf32>, vector<2x25xf32> -> vector<2x25xf32>
    %c0_192 = arith.constant 0 : index
    %c0_193 = arith.constant 0 : index
    %247 = vector.load %arg17[%c0_192, %c0_193] : memref<1x25xf32, #tpu.memory_space<vmem>>, vector<1x25xf32>
    %248 = vector.broadcast %247 : vector<1x25xf32> to vector<2x25xf32>
    %249 = arith.addf %246, %248 : vector<2x25xf32>
    %c0_194 = arith.constant 0 : index
    %c0_195 = arith.constant 0 : index
    %250 = vector.load %arg24[%c0_194, %c0_195] : memref<2x25xf32, #tpu.memory_space<vmem>>, vector<2x25xf32>
    tpu.vector_store %arg24[%c0_194, %c0_195], %249 {strides = array<i32>} : memref<2x25xf32, #tpu.memory_space<vmem>>, vector<2x25xf32>,
    %c0_196 = arith.constant 0 : index
    %c0_197 = arith.constant 0 : index
    %251 = vector.load %arg18[%c0_196, %c0_197] : memref<128x1xf32, #tpu.memory_space<vmem>>, vector<128x1xf32>
    %cst_198 = arith.constant dense<0.000000e+00> : vector<50x1xf32>
    %252 = tpu.matmul %229, %251, %cst_198 {dimension_numbers = #tpu.dot_dimension_numbers<[1], [0], [0], [1], [0, 0, 1, 1], [], []>} : vector<50x128xf32>, vector<128x1xf32>, vector<50x1xf32> -> vector<50x1xf32>
    %c0_199 = arith.constant 0 : index
    %c0_200 = arith.constant 0 : index
    %253 = vector.load %arg19[%c0_199, %c0_200] : memref<1x1xf32, #tpu.memory_space<vmem>>, vector<1x1xf32>
    %254 = vector.broadcast %253 : vector<1x1xf32> to vector<50x1xf32>
    %255 = arith.addf %252, %254 : vector<50x1xf32>
    %cst_201 = arith.constant 0.000000e+00 : f32
    %256 = vector.broadcast %cst_201 : f32 to vector<50x1xf32>
    %257 = arith.maximumf %255, %256 : vector<50x1xf32>
    %c0_202 = arith.constant 0 : index
    %c0_203 = arith.constant 0 : index
    %258 = vector.load %arg20[%c0_202, %c0_203] : memref<50x128xf32, #tpu.memory_space<vmem>>, vector<50x128xf32>
    %259 = vector.broadcast %257 : vector<50x1xf32> to vector<50x128xf32>
    %260 = arith.mulf %259, %258 : vector<50x128xf32>
    %cst_204 = arith.constant dense<0.000000e+00> : vector<2x128xf32>
    %261 = tpu.matmul %1, %260, %cst_204 {dimension_numbers = #tpu.dot_dimension_numbers<[1], [0], [0], [1], [0, 0, 1, 1], [], []>} : vector<2x50xf32>, vector<50x128xf32>, vector<2x128xf32> -> vector<2x128xf32>
    %c0_205 = arith.constant 0 : index
    %c0_206 = arith.constant 0 : index
    %262 = vector.load %arg21[%c0_205, %c0_206] : memref<1x128xf32, #tpu.memory_space<vmem>>, vector<1x128xf32>
    %263 = vector.broadcast %262 : vector<1x128xf32> to vector<2x128xf32>
    %264 = arith.addf %261, %263 : vector<2x128xf32>
    %cst_207 = arith.constant 0.000000e+00 : f32
    %265 = vector.broadcast %cst_207 : f32 to vector<2x128xf32>
    %266 = arith.maximumf %264, %265 : vector<2x128xf32>
    %c0_208 = arith.constant 0 : index
    %c0_209 = arith.constant 0 : index
    %267 = vector.load %arg22[%c0_208, %c0_209] : memref<128x1xf32, #tpu.memory_space<vmem>>, vector<128x1xf32>
    %cst_210 = arith.constant dense<0.000000e+00> : vector<2x1xf32>
    %268 = tpu.matmul %266, %267, %cst_210 {dimension_numbers = #tpu.dot_dimension_numbers<[1], [0], [0], [1], [0, 0, 1, 1], [], []>} : vector<2x128xf32>, vector<128x1xf32>, vector<2x1xf32> -> vector<2x1xf32>
    %c0_211 = arith.constant 0 : index
    %c0_212 = arith.constant 0 : index
    %269 = vector.load %arg23[%c0_211, %c0_212] : memref<1x1xf32, #tpu.memory_space<vmem>>, vector<1x1xf32>
    %270 = vector.broadcast %269 : vector<1x1xf32> to vector<2x1xf32>
    %271 = arith.addf %268, %270 : vector<2x1xf32>
    %272 = math.tanh %271 : vector<2x1xf32>
    %c0_213 = arith.constant 0 : index
    %c0_214 = arith.constant 0 : index
    %273 = vector.load %arg25[%c0_213, %c0_214] : memref<2x1xf32, #tpu.memory_space<vmem>>, vector<2x1xf32>
    tpu.vector_store %arg25[%c0_213, %c0_214], %272 {strides = array<i32>} : memref<2x1xf32, #tpu.memory_space<vmem>>, vector<2x1xf32>,
    return
  }
}

</mosaic_0001>

<llo_original>
// kernel: alphazero_forward.1
$region0: #{alphazero_forward.1}
  #allocation0 [shape = 'u32[]', space=smem, size = 0x4, offset = 0x4, fixed_abs, tag = 'smem constant byte address 0x4 - core index']
  #allocation1 [shape = 'u32[144,128]{1,0:T(1,128)}', space=vmem, size = 0x12000, scoped, tag = 'internal scratch']
  #allocation2 [shape = 'f32[62,128]{1,0:T(8,128)}', space=vmem, size = 0x8000, scoped, tag = 'scratch operand']
  #allocation3 [shape = 'f32[50,1152]{1,0:T(8,128)}', space=vmem, size = 0x3f000, scoped, tag = 'scratch operand']
  #allocation4 [shape = 'f32[1,1]{1,0:T(1,128)S(1)}', space=vmem, size = 0x200, scoped, tag = 'scoped memory for alphazero_forward.1']
  #allocation5 [shape = 'f32[1,1]{1,0:T(1,128)S(1)}', space=vmem, size = 0x200, scoped, tag = 'scoped memory for alphazero_forward.1']
  %s0 = inlined_call_operand.vmem [shape: f32[50,18], index: 0, kind: input, shape index: {}]
  %s1 = inlined_call_operand.vmem [shape: f32[50,9], index: 1, kind: input, shape index: {}]
  %s2 = inlined_call_operand.vmem [shape: f32[2,50], index: 2, kind: input, shape index: {}]
  %s3 = inlined_call_operand.vmem [shape: f32[18,128], index: 3, kind: input, shape index: {}]
  %s4 = inlined_call_operand.vmem [shape: f32[1,128], index: 4, kind: input, shape index: {}]
  %s5 = inlined_call_operand.vmem [shape: f32[1152,128], index: 5, kind: input, shape index: {}]
  %s6 = inlined_call_operand.vmem [shape: f32[1,128], index: 6, kind: input, shape index: {}]
  %s7 = inlined_call_operand.hbm [shape: f32[1152,128], index: 7, kind: input, shape index: {}]
  %s8 = inlined_call_operand.vmem [shape: f32[1,128], index: 8, kind: input, shape index: {}]
  %s9 = inlined_call_operand.hbm [shape: f32[1152,128], index: 9, kind: input, shape index: {}]
  %s10 = inlined_call_operand.vmem [shape: f32[1,128], index: 10, kind: input, shape index: {}]
  %s11 = inlined_call_operand.hbm [shape: f32[1152,128], index: 11, kind: input, shape index: {}]
  %s12 = inlined_call_operand.vmem [shape: f32[1,128], index: 12, kind: input, shape index: {}]
  %s13 = inlined_call_operand.vmem [shape: f32[128,2], index: 13, kind: input, shape index: {}]
  %s14 = inlined_call_operand.vmem [shape: f32[1,2], index: 14, kind: input, shape index: {}]
  %s15 = inlined_call_operand.vmem [shape: f32[50,25], index: 15, kind: input, shape index: {}]
  %s16 = inlined_call_operand.vmem [shape: f32[50,25], index: 16, kind: input, shape index: {}]
  %s17 = inlined_call_operand.vmem [shape: f32[1,25], index: 17, kind: input, shape index: {}]
  %s18 = inlined_call_operand.vmem [shape: f32[128,1], index: 18, kind: input, shape index: {}]
  %s19 = inlined_call_operand.<no memory space> [shape: f32[1,1], index: 19, kind: input, shape index: {}]
  %s20 = inlined_call_operand.vmem [shape: f32[50,128], index: 20, kind: input, shape index: {}]
  %s21 = inlined_call_operand.vmem [shape: f32[1,128], index: 21, kind: input, shape index: {}]
  %s22 = inlined_call_operand.vmem [shape: f32[128,1], index: 22, kind: input, shape index: {}]
  %s23 = inlined_call_operand.<no memory space> [shape: f32[1,1], index: 23, kind: input, shape index: {}]
  %s24 = inlined_call_operand.hbm [shape: f32[2,25], index: 24, kind: output, shape index: {0}]
  %s25 = inlined_call_operand.vmem [shape: f32[2,1], index: 25, kind: output, shape index: {1}]
  %26 = xla_tuple %s24, %s25
  %s27 = sld [smem:[#allocation0]]
  $region126: #{alphazero_forward.1} parent=0
    _
  %s29 = ssub.s32 1, %s27
  %s30 = scalar_select 0, %s29, %s27
  %v31 = vstv %s19
  %32 = vst [vmem:[#allocation4] sm:$0x1] %v31
  %v33 = vstv %s23
  %34 = vst [vmem:[#allocation5] sm:$0x1] %v33
  $region1: #{alphazero_forward.1} parent=0
    #allocation6 [shape = 'u8[589824]{0}', space=vmem, size = 0x90000, scoped, tag = 'input window, operand 7, single buffered']
    #allocation7 [shape = 's32[1]{0}', space=sflag, size = 0x4, scoped, tag = 'scoped memory for alphazero_forward.1']
    #allocation8 [shape = 's32[1]{0}', space=sflag, size = 0x4, scoped, tag = 'scoped memory for alphazero_forward.1']
    #allocation9 [shape = 'u8[589824]{0}', space=vmem, size = 0x90000, scoped, tag = 'input window, operand 9, single buffered']
    #allocation10 [shape = 's32[1]{0}', space=sflag, size = 0x4, scoped, tag = 'scoped memory for alphazero_forward.1']
    #allocation11 [shape = 'u8[589824]{0}', space=vmem, size = 0x90000, scoped, tag = 'input window, operand 11, single buffered']
    #allocation12 [shape = 'u8[1024]{0}', space=vmem, size = 0x400, scoped, tag = 'output window, operand 0, single buffered']
    %35 = vsyncpa [#allocation7], 0
    %36 = vsyncpa [#allocation10], 0
    %37 = vsyncpa [#allocation8], 0
    // Predicated region
    $region2: #{alphazero_forward.1} parent=1 // pred_check
      _
    $region3: #{alphazero_forward.1} parent=1 // pred_check_branch
      %39 = sbr.rel (0) target = $region5
    $region4: #{alphazero_forward.1} parent=1 // pred_region
      _
    $region5: #{alphazero_forward.1} parent=1 // pred_fallthru
      _
    // Predicated region
    $region6: #{alphazero_forward.1} parent=1 // pred_check
      _
    $region7: #{alphazero_forward.1} parent=1 // pred_check_branch
      %41 = sbr.rel (0) target = $region9
    $region8: #{alphazero_forward.1} parent=1 // pred_region
      _
    $region9: #{alphazero_forward.1} parent=1 // pred_fallthru
      _
    // Predicated region
    $region10: #{alphazero_forward.1} parent=1 // pred_check
      _
    $region11: #{alphazero_forward.1} parent=1 // pred_check_branch
      %43 = sbr.rel (0) target = $region13
    $region12: #{alphazero_forward.1} parent=1 // pred_region
      _
    $region13: #{alphazero_forward.1} parent=1 // pred_fallthru
      _
    // Predicated region
    $region14: #{alphazero_forward.1} parent=1 // pred_check
      _
    $region15: #{alphazero_forward.1} parent=1 // pred_check_branch
      %45 = sbr.rel (0) target = $region17
    $region16: #{alphazero_forward.1} parent=1 // pred_region
      _
    $region17: #{alphazero_forward.1} parent=1 // pred_fallthru
      _
    // Predicated region
    $region18: #{alphazero_forward.1} parent=1 // pred_check
      _
    $region19: #{alphazero_forward.1} parent=1 // pred_check_branch
      %47 = sbr.rel (0) target = $region21
    $region20: #{alphazero_forward.1} parent=1 // pred_region
      _
    $region21: #{alphazero_forward.1} parent=1 // pred_fallthru
      _
    // Predicated region
    $region22: #{alphazero_forward.1} parent=1 // pred_check
      _
    $region23: #{alphazero_forward.1} parent=1 // pred_check_branch
      %49 = sbr.rel (0) target = $region25
    $region24: #{alphazero_forward.1} parent=1 // pred_region
      _
    $region25: #{alphazero_forward.1} parent=1 // pred_fallthru
      _
    // Predicated region
    $region26: #{alphazero_forward.1} parent=1 // pred_check
      _
    $region27: #{alphazero_forward.1} parent=1 // pred_check_branch
      %51 = sbr.rel (0) target = $region29
    $region28: #{alphazero_forward.1} parent=1 // pred_region
      _
    $region29: #{alphazero_forward.1} parent=1 // pred_fallthru
      _
    // Predicated region
    $region30: #{alphazero_forward.1} parent=1 // pred_check
      _
    $region31: #{alphazero_forward.1} parent=1 // pred_check_branch
      %53 = sbr.rel (0) target = $region33
    $region32: #{alphazero_forward.1} parent=1 // pred_region
      %s55 = ssub.s32 18432, 18432
      %56 = vsyncadd [#allocation7], %s55
      %s57 = sshll.u32 [#allocation6], 4
      %s58 = int_to_ptr.vmem [resolvable:$true] %s57
      %63 = dma.hbm_to_vmem [thread:$0]  %s7, 18432, %s58, [#allocation7], 128, 128, 8
    $region33: #{alphazero_forward.1} parent=1 // pred_fallthru
      _
    // Predicated region
    $region34: #{alphazero_forward.1} parent=1 // pred_check
      _
    $region35: #{alphazero_forward.1} parent=1 // pred_check_branch
      %65 = sbr.rel (0) target = $region37
    $region36: #{alphazero_forward.1} parent=1 // pred_region
      _
    $region37: #{alphazero_forward.1} parent=1 // pred_fallthru
      _
    // Predicated region
    $region38: #{alphazero_forward.1} parent=1 // pred_check
      _
    $region39: #{alphazero_forward.1} parent=1 // pred_check_branch
      %67 = sbr.rel (0) target = $region41
    $region40: #{alphazero_forward.1} parent=1 // pred_region
      %s69 = ssub.s32 18432, 18432
      %70 = vsyncadd [#allocation10], %s69
      %s71 = sshll.u32 [#allocation9], 4
      %s72 = int_to_ptr.vmem [resolvable:$true] %s71
      %77 = dma.hbm_to_vmem [thread:$0]  %s9, 18432, %s72, [#allocation10], 128, 128, 8
    $region41: #{alphazero_forward.1} parent=1 // pred_fallthru
      _
    // Predicated region
    $region42: #{alphazero_forward.1} parent=1 // pred_check
      _
    $region43: #{alphazero_forward.1} parent=1 // pred_check_branch
      %79 = sbr.rel (0) target = $region45
    $region44: #{alphazero_forward.1} parent=1 // pred_region
      _
    $region45: #{alphazero_forward.1} parent=1 // pred_fallthru
      _
    // Predicated region
    $region46: #{alphazero_forward.1} parent=1 // pred_check
      _
    $region47: #{alphazero_forward.1} parent=1 // pred_check_branch
      %81 = sbr.rel (0) target = $region49
    $region48: #{alphazero_forward.1} parent=1 // pred_region
      %s83 = ssub.s32 18432, 18432
      %84 = vsyncadd [#allocation10], %s83
      %s85 = sshll.u32 [#allocation11], 4
      %s86 = int_to_ptr.vmem [resolvable:$true] %s85
      %91 = dma.hbm_to_vmem [thread:$0]  %s11, 18432, %s86, [#allocation10], 128, 128, 8
    $region49: #{alphazero_forward.1} parent=1 // pred_fallthru
      _
    // Predicated region
    $region50: #{alphazero_forward.1} parent=1 // pred_check
      _
    $region51: #{alphazero_forward.1} parent=1 // pred_check_branch
      %93 = sbr.rel (0) target = $region53
    $region52: #{alphazero_forward.1} parent=1 // pred_region
      _
    $region53: #{alphazero_forward.1} parent=1 // pred_fallthru
      _
    // Predicated region
    $region54: #{alphazero_forward.1} parent=1 // pred_check
      _
    $region55: #{alphazero_forward.1} parent=1 // pred_check_branch
      %95 = sbr.rel (0) target = $region57
    $region56: #{alphazero_forward.1} parent=1 // pred_region
      _
    $region57: #{alphazero_forward.1} parent=1 // pred_fallthru
      _
    // Predicated region
    $region58: #{alphazero_forward.1} parent=1 // pred_check
      _
    $region59: #{alphazero_forward.1} parent=1 // pred_check_branch
      %97 = sbr.rel (0) target = $region61
    $region60: #{alphazero_forward.1} parent=1 // pred_region
      _
    $region61: #{alphazero_forward.1} parent=1 // pred_fallthru
      _
    // Predicated region
    $region62: #{alphazero_forward.1} parent=1 // pred_check
      _
    $region63: #{alphazero_forward.1} parent=1 // pred_check_branch
      %99 = sbr.rel (0) target = $region65
    $region64: #{alphazero_forward.1} parent=1 // pred_region
      _
    $region65: #{alphazero_forward.1} parent=1 // pred_fallthru
      _
    // Predicated region
    $region66: #{alphazero_forward.1} parent=1 // pred_check
      _
    $region67: #{alphazero_forward.1} parent=1 // pred_check_branch
      %101 = sbr.rel (0) target = $region69
    $region68: #{alphazero_forward.1} parent=1 // pred_region
      _
    $region69: #{alphazero_forward.1} parent=1 // pred_fallthru
      _
    // Predicated region
    $region70: #{alphazero_forward.1} parent=1 // pred_check
      _
    $region71: #{alphazero_forward.1} parent=1 // pred_check_branch
      %103 = sbr.rel (0) target = $region73
    $region72: #{alphazero_forward.1} parent=1 // pred_region
      _
    $region73: #{alphazero_forward.1} parent=1 // pred_fallthru
      _
    // Predicated region
    $region74: #{alphazero_forward.1} parent=1 // pred_check
      _
    $region75: #{alphazero_forward.1} parent=1 // pred_check_branch
      %105 = sbr.rel (0) target = $region77
    $region76: #{alphazero_forward.1} parent=1 // pred_region
      _
    $region77: #{alphazero_forward.1} parent=1 // pred_fallthru
      _
    // Predicated region
    $region78: #{alphazero_forward.1} parent=1 // pred_check
      _
    $region79: #{alphazero_forward.1} parent=1 // pred_check_branch
      %107 = sbr.rel (0) target = $region81
    $region80: #{alphazero_forward.1} parent=1 // pred_region
      _
    $region81: #{alphazero_forward.1} parent=1 // pred_fallthru
      _
    // Predicated region
    $region82: #{alphazero_forward.1} parent=1 // pred_check
      _
    $region83: #{alphazero_forward.1} parent=1 // pred_check_branch
      %109 = sbr.rel (0) target = $region85
    $region84: #{alphazero_forward.1} parent=1 // pred_region
      _
    $region85: #{alphazero_forward.1} parent=1 // pred_fallthru
      _
    // Predicated region
    $region86: #{alphazero_forward.1} parent=1 // pred_check
      _
    $region87: #{alphazero_forward.1} parent=1 // pred_check_branch
      %111 = sbr.rel (0) target = $region89
    $region88: #{alphazero_forward.1} parent=1 // pred_region
      _
    $region89: #{alphazero_forward.1} parent=1 // pred_fallthru
      _
    // Predicated region
    $region90: #{alphazero_forward.1} parent=1 // pred_check
      _
    $region91: #{alphazero_forward.1} parent=1 // pred_check_branch
      %113 = sbr.rel (0) target = $region93
    $region92: #{alphazero_forward.1} parent=1 // pred_region
      _
    $region93: #{alphazero_forward.1} parent=1 // pred_fallthru
      _
    // Predicated region
    $region94: #{alphazero_forward.1} parent=1 // pred_check
      _
    $region95: #{alphazero_forward.1} parent=1 // pred_check_branch
      %115 = sbr.rel (0) target = $region97
    $region96: #{alphazero_forward.1} parent=1 // pred_region
      _
    $region97: #{alphazero_forward.1} parent=1 // pred_fallthru
      _
    // Predicated region
    $region98: #{alphazero_forward.1} parent=1 // pred_check
      _
    $region99: #{alphazero_forward.1} parent=1 // pred_check_branch
      %117 = sbr.rel (0) target = $region101
    $region100: #{alphazero_forward.1} parent=1 // pred_region
      %118 = dma.done [#allocation7], 18432
    $region101: #{alphazero_forward.1} parent=1 // pred_fallthru
      _
    // Predicated region
    $region102: #{alphazero_forward.1} parent=1 // pred_check
      _
    $region103: #{alphazero_forward.1} parent=1 // pred_check_branch
      %120 = sbr.rel (0) target = $region105
    $region104: #{alphazero_forward.1} parent=1 // pred_region
      %121 = dma.done [#allocation10], 18432
    $region105: #{alphazero_forward.1} parent=1 // pred_fallthru
      _
    // Predicated region
    $region106: #{alphazero_forward.1} parent=1 // pred_check
      _
    $region107: #{alphazero_forward.1} parent=1 // pred_check_branch
      %123 = sbr.rel (0) target = $region109
    $region108: #{alphazero_forward.1} parent=1 // pred_region
      %124 = dma.done [#allocation10], 18432
    $region109: #{alphazero_forward.1} parent=1 // pred_fallthru
      _
    %v125 = vld [vmem:[%s1] sm:$0xff]
    %v126 = vld [vmem:[%s1 + $0x8] sm:$0xff]
    %v127 = vld [vmem:[%s1 + $0x10] sm:$0xff]
    %v128 = vld [vmem:[%s1 + $0x18] sm:$0xff]
    %v129 = vld [vmem:[%s1 + $0x20] sm:$0xff]
    %v130 = vld [vmem:[%s1 + $0x28] sm:$0xff]
    %v131 = vld [vmem:[%s1 + $0x30] sm:$0x3]
    %v132 = vld [vmem:[%s2] sm:$0x3]
    %133 = vst [vmem:[#allocation2] sm:$0xff] 0.0
    %134 = vst [vmem:[#allocation2 + $0x8] sm:$0xff] 0.0
    %135 = vst [vmem:[#allocation2 + $0x10] sm:$0xff] 0.0
    %136 = vst [vmem:[#allocation2 + $0x18] sm:$0xff] 0.0
    %137 = vst [vmem:[#allocation2 + $0x20] sm:$0xff] 0.0
    %138 = vst [vmem:[#allocation2 + $0x28] sm:$0xff] 0.0
    %139 = vst [vmem:[#allocation2 + $0x30] sm:$0xff] 0.0
    %140 = vst [vmem:[#allocation2 + $0x38] sm:$0x3f] 0.0
    %v141 = vld [vmem:[%s0] sm:$0xff]
    %v142 = vld [vmem:[%s0 + $0x8] sm:$0xff]
    %v143 = vld [vmem:[%s0 + $0x10] sm:$0xff]
    %v144 = vld [vmem:[%s0 + $0x18] sm:$0xff]
    %v145 = vld [vmem:[%s0 + $0x20] sm:$0xff]
    %v146 = vld [vmem:[%s0 + $0x28] sm:$0xff]
    %v147 = vld [vmem:[%s0 + $0x30] sm:$0x3]
    %v148 = vld [vmem:[%s3] sm:$0xff]
    %v149 = vld [vmem:[%s3 + $0x8] sm:$0xff]
    %v150 = vld [vmem:[%s3 + $0x10] sm:$0x3]
    %v151 = vld [vmem:[%s4] sm:$0x1]
    %v153 = vlaneseq
    %v154 = vshrl.u32 %v153, 7
    %v155 = vsub.s32 0, %v154
    %v156 = vrot.slane %v151, %v155
    %vm158 = vcmask 146432
    %v160 = vsel %vm158, %v141, 0
    %v163 = vsel %vm158, %v142, 0
    %v166 = vsel %vm158, %v143, 0
    %v169 = vsel %vm158, %v144, 0
    %v172 = vsel %vm158, %v145, 0
    %v175 = vsel %vm158, %v146, 0
    %v178 = vsel %vm158, %v147, 0
    %vm180 = vcmask 1041408
    %v182 = vsel %vm180, %v150, 0
    %184 = vmatprep.subr.mxu0 0.0
    %185 = vmatpush1.msra.mxu0 %v148
    %186 = vmatprep.subr.mxu0 0.0
    %187 = vmatpush1.msra.mxu0 %v149
    %188 = vmatprep.subr.mxu0 0.0
    %189 = vmatpush1.msra.mxu0 %v182
    %190 = vmatprep.subr.mxu0 0.0
    %191 = vmatpush1.msra.mxu0 0.0
    %192 = vmatprep.subr.mxu0 0.0
    %193 = vmatpush1.msra.mxu0 0.0
    %194 = vmatprep.subr.mxu0 0.0
    %195 = vmatpush1.msra.mxu0 0.0
    %196 = vmatprep.subr.mxu0 0.0
    %197 = vmatpush1.msra.mxu0 0.0
    %198 = vmatprep.subr.mxu0 0.0
    %199 = vmatpush1.msra.mxu0 0.0
    %200 = vmatprep.subr.mxu0 0.0
    %201 = vmatpush1.msra.mxu0 0.0
    %202 = vmatprep.subr.mxu0 0.0
    %203 = vmatpush1.msra.mxu0 0.0
    %204 = vmatprep.subr.mxu0 0.0
    %205 = vmatpush1.msra.mxu0 0.0
    %206 = vmatprep.subr.mxu0 0.0
    %207 = vmatpush1.msra.mxu0 0.0
    %208 = vmatprep.subr.mxu0 0.0
    %209 = vmatpush1.msra.mxu0 0.0
    %210 = vmatprep.subr.mxu0 0.0
    %211 = vmatpush1.msra.mxu0 0.0
    %212 = vmatprep.subr.mxu0 0.0
    %213 = vmatpush1.msra.mxu0 0.0
    %214 = vmatprep.subr.mxu0 0.0
    %215 = vmatpush1.msra.mxu0 0.0
    %216 = vmatprep.subr.mxu0 0.0
    %217 = vmatpush1.msra.mxu0 0.0
    %218 = vmatprep.subr.mxu0 0.0
    %219 = vmatpush1.msra.mxu0 0.0
    %220 = vmatprep.subr.mxu0 0.0
    %221 = vmatpush1.msra.mxu0 0.0
    %222 = vmatprep.subr.mxu0 0.0
    %223 = vmatpush1.msra.mxu0 0.0
    %224 = vmatprep.subr.mxu0 0.0
    %225 = vmatpush1.msra.mxu0 0.0
    %226 = vmatprep.subr.mxu0 0.0
    %227 = vmatpush1.msra.mxu0 0.0
    %228 = vmatprep.subr.mxu0 0.0
    %229 = vmatpush1.msra.mxu0 0.0
    %230 = vmatprep.subr.mxu0 0.0
    %231 = vmatpush1.msra.mxu0 0.0
    %232 = vmatprep.subr.mxu0 0.0
    %233 = vmatpush1.msra.mxu0 0.0
    %234 = vmatprep.subr.mxu0 0.0
    %235 = vmatpush1.msra.mxu0 0.0
    %236 = vmatprep.subr.mxu0 0.0
    %237 = vmatpush1.msra.mxu0 0.0
    %238 = vmatprep.subr.mxu0 0.0
    %239 = vmatpush1.msra.mxu0 0.0
    %240 = vmatprep.subr.mxu0 0.0
    %241 = vmatpush1.msra.mxu0 0.0
    %242 = vmatprep.subr.mxu0 0.0
    %243 = vmatpush1.msra.mxu0 0.0
    %244 = vmatprep.subr.mxu0 0.0
    %245 = vmatpush1.msra.mxu0 0.0
    %246 = vmatprep.subr.mxu0 0.0
    %247 = vmatpush1.msra.mxu0 0.0
    %248 = vmatprep.mubr.f32.mxu0 0.0
    %249 = vmatmul.mubr.f32.gmra.mrb[0].mxu0 %v160
    %v250 = vpop.f32.mrb[0].mxu0
    %v251 = vadd.f32 %v156, %v250
    %v252 = vpop.f32.mrb[0].mxu0
    %253 = vmatprep.mubr.f32.mxu0 0.0
    %254 = vmatmul.mubr.f32.gmra.mrb[0].mxu0 %v163
    %v255 = vpop.f32.mrb[0].mxu0
    %v256 = vadd.f32 %v156, %v255
    %v257 = vpop.f32.mrb[0].mxu0
    %258 = vmatprep.mubr.f32.mxu0 0.0
    %259 = vmatmul.mubr.f32.gmra.mrb[0].mxu0 %v166
    %v260 = vpop.f32.mrb[0].mxu0
    %v261 = vadd.f32 %v156, %v260
    %v262 = vpop.f32.mrb[0].mxu0
    %263 = vmatprep.mubr.f32.mxu0 0.0
    %264 = vmatmul.mubr.f32.gmra.mrb[0].mxu0 %v169
    %v265 = vpop.f32.mrb[0].mxu0
    %v266 = vadd.f32 %v156, %v265
    %v267 = vpop.f32.mrb[0].mxu0
    %268 = vmatprep.mubr.f32.mxu0 0.0
    %269 = vmatmul.mubr.f32.gmra.mrb[0].mxu0 %v172
    %v270 = vpop.f32.mrb[0].mxu0
    %v271 = vadd.f32 %v156, %v270
    %v272 = vpop.f32.mrb[0].mxu0
    %273 = vmatprep.mubr.f32.mxu0 0.0
    %274 = vmatmul.mubr.f32.gmra.mrb[0].mxu0 %v175
    %v275 = vpop.f32.mrb[0].mxu0
    %v276 = vadd.f32 %v156, %v275
    %v277 = vpop.f32.mrb[0].mxu0
    %278 = vmatprep.mubr.f32.mxu0 0.0
    %279 = vmatmul.mubr.f32.gmra.mrb[0].mxu0 %v178
    %v280 = vpop.f32.mrb[0].mxu0
    %v281 = vadd.f32 %v156, %v280
    %v282 = vpop.f32.mrb[0].mxu0
    %283 = vdwg.mxu0
    %v284 = vmax.f32 %v251, 0.0
    %v285 = vmax.f32 %v256, 0.0
    %v286 = vmax.f32 %v261, 0.0
    %v287 = vmax.f32 %v266, 0.0
    %v288 = vmax.f32 %v271, 0.0
    %v289 = vmax.f32 %v276, 0.0
    %v290 = vmax.f32 %v281, 0.0
    %291 = vst [vmem:[#allocation2 + $0x6] sm:$0xff] %v284
    %292 = vst [vmem:[#allocation2 + $0xe] sm:$0xff] %v285
    %293 = vst [vmem:[#allocation2 + $0x16] sm:$0xff] %v286
    %294 = vst [vmem:[#allocation2 + $0x1e] sm:$0xff] %v287
    %295 = vst [vmem:[#allocation2 + $0x26] sm:$0xff] %v288
    %296 = vst [vmem:[#allocation2 + $0x2e] sm:$0xff] %v289
    %297 = vst [vmem:[#allocation2 + $0x36] sm:$0x3] %v290
    %v298 = vld [vmem:[#allocation2] sm:$0xff]
    %v299 = vld [vmem:[#allocation2 + $0x8] sm:$0xff]
    %v300 = vld [vmem:[#allocation2 + $0x10] sm:$0xff]
    %v301 = vld [vmem:[#allocation2 + $0x18] sm:$0xff]
    %v302 = vld [vmem:[#allocation2 + $0x20] sm:$0xff]
    %v303 = vld [vmem:[#allocation2 + $0x28] sm:$0xff]
    %v304 = vld [vmem:[#allocation2 + $0x30] sm:$0x3]
    %306 = vset.pattern.permute.xlu0 0
    %307 = vperm.xlu0 %306, %v125
    %v308 = vpop.permute.xlu0 %307
    %311 = vset.pattern.permute.xlu0 0
    %312 = vperm.xlu0 %311, %v126
    %v313 = vpop.permute.xlu0 %312
    %316 = vset.pattern.permute.xlu0 0
    %317 = vperm.xlu0 %316, %v127
    %v318 = vpop.permute.xlu0 %317
    %321 = vset.pattern.permute.xlu0 0
    %322 = vperm.xlu0 %321, %v128
    %v323 = vpop.permute.xlu0 %322
    %326 = vset.pattern.permute.xlu0 0
    %327 = vperm.xlu0 %326, %v129
    %v328 = vpop.permute.xlu0 %327
    %331 = vset.pattern.permute.xlu0 0
    %332 = vperm.xlu0 %331, %v130
    %v333 = vpop.permute.xlu0 %332
    %336 = vset.pattern.permute.xlu0 0
    %337 = vperm.xlu0 %336, %v131
    %v338 = vpop.permute.xlu0 %337
    %v340 = vmul.f32 %v298, %v308
    %v341 = vmul.f32 %v299, %v313
    %v342 = vmul.f32 %v300, %v318
    %v343 = vmul.f32 %v301, %v323
    %v344 = vmul.f32 %v302, %v328
    %v345 = vmul.f32 %v303, %v333
    %v346 = vmul.f32 %v304, %v338
    %347 = vst [vmem:[#allocation3] sm:$0xff] %v340
    %348 = vst [vmem:[#allocation3 + $0x48] sm:$0xff] %v341
    %349 = vst [vmem:[#allocation3 + $0x90] sm:$0xff] %v342
    %350 = vst [vmem:[#allocation3 + $0xd8] sm:$0xff] %v343
    %351 = vst [vmem:[#allocation3 + $0x120] sm:$0xff] %v344
    %352 = vst [vmem:[#allocation3 + $0x168] sm:$0xff] %v345
    %353 = vst [vmem:[#allocation3 + $0x1b0] sm:$0x3] %v346
    %v354 = vld [vmem:[#allocation2 + $0x1] sm:$0xff]
    %v355 = vld [vmem:[#allocation2 + $0x9] sm:$0xff]
    %v356 = vld [vmem:[#allocation2 + $0x11] sm:$0xff]
    %v357 = vld [vmem:[#allocation2 + $0x19] sm:$0xff]
    %v358 = vld [vmem:[#allocation2 + $0x21] sm:$0xff]
    %v359 = vld [vmem:[#allocation2 + $0x29] sm:$0xff]
    %v360 = vld [vmem:[#allocation2 + $0x31] sm:$0x3]
    %361 = vset.pattern.permute.xlu0 1
    %362 = vperm.xlu0 %361, %v125
    %v363 = vpop.permute.xlu0 %362
    %365 = vset.pattern.permute.xlu0 1
    %366 = vperm.xlu0 %365, %v126
    %v367 = vpop.permute.xlu0 %366
    %369 = vset.pattern.permute.xlu0 1
    %370 = vperm.xlu0 %369, %v127
    %v371 = vpop.permute.xlu0 %370
    %373 = vset.pattern.permute.xlu0 1
    %374 = vperm.xlu0 %373, %v128
    %v375 = vpop.permute.xlu0 %374
    %377 = vset.pattern.permute.xlu0 1
    %378 = vperm.xlu0 %377, %v129
    %v379 = vpop.permute.xlu0 %378
    %381 = vset.pattern.permute.xlu0 1
    %382 = vperm.xlu0 %381, %v130
    %v383 = vpop.permute.xlu0 %382
    %385 = vset.pattern.permute.xlu0 1
    %386 = vperm.xlu0 %385, %v131
    %v387 = vpop.permute.xlu0 %386
    %v389 = vmul.f32 %v354, %v363
    %v390 = vmul.f32 %v355, %v367
    %v391 = vmul.f32 %v356, %v371
    %v392 = vmul.f32 %v357, %v375
    %v393 = vmul.f32 %v358, %v379
    %v394 = vmul.f32 %v359, %v383
    %v395 = vmul.f32 %v360, %v387
    %396 = vst [vmem:[#allocation3 + $0x8] sm:$0xff] %v389
    %397 = vst [vmem:[#allocation3 + $0x50] sm:$0xff] %v390
    %398 = vst [vmem:[#allocation3 + $0x98] sm:$0xff] %v391
    %399 = vst [vmem:[#allocation3 + $0xe0] sm:$0xff] %v392
    %400 = vst [vmem:[#allocation3 + $0x128] sm:$0xff] %v393
    %401 = vst [vmem:[#allocation3 + $0x170] sm:$0xff] %v394
    %402 = vst [vmem:[#allocation3 + $0x1b8] sm:$0x3] %v395
    %v403 = vld [vmem:[#allocation2 + $0x2] sm:$0xff]
    %v404 = vld [vmem:[#allocation2 + $0xa] sm:$0xff]
    %v405 = vld [vmem:[#allocation2 + $0x12] sm:$0xff]
    %v406 = vld [vmem:[#allocation2 + $0x1a] sm:$0xff]
    %v407 = vld [vmem:[#allocation2 + $0x22] sm:$0xff]
    %v408 = vld [vmem:[#allocation2 + $0x2a] sm:$0xff]
    %v409 = vld [vmem:[#allocation2 + $0x32] sm:$0x3]
    %410 = vset.pattern.permute.xlu0 2
    %411 = vperm.xlu0 %410, %v125
    %v412 = vpop.permute.xlu0 %411
    %414 = vset.pattern.permute.xlu0 2
    %415 = vperm.xlu0 %414, %v126
    %v416 = vpop.permute.xlu0 %415
    %418 = vset.pattern.permute.xlu0 2
    %419 = vperm.xlu0 %418, %v127
    %v420 = vpop.permute.xlu0 %419
    %422 = vset.pattern.permute.xlu0 2
    %423 = vperm.xlu0 %422, %v128
    %v424 = vpop.permute.xlu0 %423
    %426 = vset.pattern.permute.xlu0 2
    %427 = vperm.xlu0 %426, %v129
    %v428 = vpop.permute.xlu0 %427
    %430 = vset.pattern.permute.xlu0 2
    %431 = vperm.xlu0 %430, %v130
    %v432 = vpop.permute.xlu0 %431
    %434 = vset.pattern.permute.xlu0 2
    %435 = vperm.xlu0 %434, %v131
    %v436 = vpop.permute.xlu0 %435
    %v438 = vmul.f32 %v403, %v412
    %v439 = vmul.f32 %v404, %v416
    %v440 = vmul.f32 %v405, %v420
    %v441 = vmul.f32 %v406, %v424
    %v442 = vmul.f32 %v407, %v428
    %v443 = vmul.f32 %v408, %v432
    %v444 = vmul.f32 %v409, %v436
    %445 = vst [vmem:[#allocation3 + $0x10] sm:$0xff] %v438
    %446 = vst [vmem:[#allocation3 + $0x58] sm:$0xff] %v439
    %447 = vst [vmem:[#allocation3 + $0xa0] sm:$0xff] %v440
    %448 = vst [vmem:[#allocation3 + $0xe8] sm:$0xff] %v441
    %449 = vst [vmem:[#allocation3 + $0x130] sm:$0xff] %v442
    %450 = vst [vmem:[#allocation3 + $0x178] sm:$0xff] %v443
    %451 = vst [vmem:[#allocation3 + $0x1c0] sm:$0x3] %v444
    %v452 = vld [vmem:[#allocation2 + $0x5] sm:$0xff]
    %v453 = vld [vmem:[#allocation2 + $0xd] sm:$0xff]
    %v454 = vld [vmem:[#allocation2 + $0x15] sm:$0xff]
    %v455 = vld [vmem:[#allocation2 + $0x1d] sm:$0xff]
    %v456 = vld [vmem:[#allocation2 + $0x25] sm:$0xff]
    %v457 = vld [vmem:[#allocation2 + $0x2d] sm:$0xff]
    %v458 = vld [vmem:[#allocation2 + $0x35] sm:$0x3]
    %459 = vset.pattern.permute.xlu0 3
    %460 = vperm.xlu0 %459, %v125
    %v461 = vpop.permute.xlu0 %460
    %463 = vset.pattern.permute.xlu0 3
    %464 = vperm.xlu0 %463, %v126
    %v465 = vpop.permute.xlu0 %464
    %467 = vset.pattern.permute.xlu0 3
    %468 = vperm.xlu0 %467, %v127
    %v469 = vpop.permute.xlu0 %468
    %471 = vset.pattern.permute.xlu0 3
    %472 = vperm.xlu0 %471, %v128
    %v473 = vpop.permute.xlu0 %472
    %475 = vset.pattern.permute.xlu0 3
    %476 = vperm.xlu0 %475, %v129
    %v477 = vpop.permute.xlu0 %476
    %479 = vset.pattern.permute.xlu0 3
    %480 = vperm.xlu0 %479, %v130
    %v481 = vpop.permute.xlu0 %480
    %483 = vset.pattern.permute.xlu0 3
    %484 = vperm.xlu0 %483, %v131
    %v485 = vpop.permute.xlu0 %484
    %v487 = vmul.f32 %v452, %v461
    %v488 = vmul.f32 %v453, %v465
    %v489 = vmul.f32 %v454, %v469
    %v490 = vmul.f32 %v455, %v473
    %v491 = vmul.f32 %v456, %v477
    %v492 = vmul.f32 %v457, %v481
    %v493 = vmul.f32 %v458, %v485
    %494 = vst [vmem:[#allocation3 + $0x18] sm:$0xff] %v487
    %495 = vst [vmem:[#allocation3 + $0x60] sm:$0xff] %v488
    %496 = vst [vmem:[#allocation3 + $0xa8] sm:$0xff] %v489
    %497 = vst [vmem:[#allocation3 + $0xf0] sm:$0xff] %v490
    %498 = vst [vmem:[#allocation3 + $0x138] sm:$0xff] %v491
    %499 = vst [vmem:[#allocation3 + $0x180] sm:$0xff] %v492
    %500 = vst [vmem:[#allocation3 + $0x1c8] sm:$0x3] %v493
    %v501 = vld [vmem:[#allocation2 + $0x6] sm:$0xff]
    %v502 = vld [vmem:[#allocation2 + $0xe] sm:$0xff]
    %v503 = vld [vmem:[#allocation2 + $0x16] sm:$0xff]
    %v504 = vld [vmem:[#allocation2 + $0x1e] sm:$0xff]
    %v505 = vld [vmem:[#allocation2 + $0x26] sm:$0xff]
    %v506 = vld [vmem:[#allocation2 + $0x2e] sm:$0xff]
    %v507 = vld [vmem:[#allocation2 + $0x36] sm:$0x3]
    %508 = vset.pattern.permute.xlu0 4
    %509 = vperm.xlu0 %508, %v125
    %v510 = vpop.permute.xlu0 %509
    %512 = vset.pattern.permute.xlu0 4
    %513 = vperm.xlu0 %512, %v126
    %v514 = vpop.permute.xlu0 %513
    %516 = vset.pattern.permute.xlu0 4
    %517 = vperm.xlu0 %516, %v127
    %v518 = vpop.permute.xlu0 %517
    %520 = vset.pattern.permute.xlu0 4
    %521 = vperm.xlu0 %520, %v128
    %v522 = vpop.permute.xlu0 %521
    %524 = vset.pattern.permute.xlu0 4
    %525 = vperm.xlu0 %524, %v129
    %v526 = vpop.permute.xlu0 %525
    %528 = vset.pattern.permute.xlu0 4
    %529 = vperm.xlu0 %528, %v130
    %v530 = vpop.permute.xlu0 %529
    %532 = vset.pattern.permute.xlu0 4
    %533 = vperm.xlu0 %532, %v131
    %v534 = vpop.permute.xlu0 %533
    %v536 = vmul.f32 %v501, %v510
    %v537 = vmul.f32 %v502, %v514
    %v538 = vmul.f32 %v503, %v518
    %v539 = vmul.f32 %v504, %v522
    %v540 = vmul.f32 %v505, %v526
    %v541 = vmul.f32 %v506, %v530
    %v542 = vmul.f32 %v507, %v534
    %543 = vst [vmem:[#allocation3 + $0x20] sm:$0xff] %v536
    %544 = vst [vmem:[#allocation3 + $0x68] sm:$0xff] %v537
    %545 = vst [vmem:[#allocation3 + $0xb0] sm:$0xff] %v538
    %546 = vst [vmem:[#allocation3 + $0xf8] sm:$0xff] %v539
    %547 = vst [vmem:[#allocation3 + $0x140] sm:$0xff] %v540
    %548 = vst [vmem:[#allocation3 + $0x188] sm:$0xff] %v541
    %549 = vst [vmem:[#allocation3 + $0x1d0] sm:$0x3] %v542
    %v550 = vld [vmem:[#allocation2 + $0x7] sm:$0xff]
    %v551 = vld [vmem:[#allocation2 + $0xf] sm:$0xff]
    %v552 = vld [vmem:[#allocation2 + $0x17] sm:$0xff]
    %v553 = vld [vmem:[#allocation2 + $0x1f] sm:$0xff]
    %v554 = vld [vmem:[#allocation2 + $0x27] sm:$0xff]
    %v555 = vld [vmem:[#allocation2 + $0x2f] sm:$0xff]
    %v556 = vld [vmem:[#allocation2 + $0x37] sm:$0x3]
    %557 = vset.pattern.permute.xlu0 5
    %558 = vperm.xlu0 %557, %v125
    %v559 = vpop.permute.xlu0 %558
    %561 = vset.pattern.permute.xlu0 5
    %562 = vperm.xlu0 %561, %v126
    %v563 = vpop.permute.xlu0 %562
    %565 = vset.pattern.permute.xlu0 5
    %566 = vperm.xlu0 %565, %v127
    %v567 = vpop.permute.xlu0 %566
    %569 = vset.pattern.permute.xlu0 5
    %570 = vperm.xlu0 %569, %v128
    %v571 = vpop.permute.xlu0 %570
    %573 = vset.pattern.permute.xlu0 5
    %574 = vperm.xlu0 %573, %v129
    %v575 = vpop.permute.xlu0 %574
    %577 = vset.pattern.permute.xlu0 5
    %578 = vperm.xlu0 %577, %v130
    %v579 = vpop.permute.xlu0 %578
    %581 = vset.pattern.permute.xlu0 5
    %582 = vperm.xlu0 %581, %v131
    %v583 = vpop.permute.xlu0 %582
    %v585 = vmul.f32 %v550, %v559
    %v586 = vmul.f32 %v551, %v563
    %v587 = vmul.f32 %v552, %v567
    %v588 = vmul.f32 %v553, %v571
    %v589 = vmul.f32 %v554, %v575
    %v590 = vmul.f32 %v555, %v579
    %v591 = vmul.f32 %v556, %v583
    %592 = vst [vmem:[#allocation3 + $0x28] sm:$0xff] %v585
    %593 = vst [vmem:[#allocation3 + $0x70] sm:$0xff] %v586
    %594 = vst [vmem:[#allocation3 + $0xb8] sm:$0xff] %v587
    %595 = vst [vmem:[#allocation3 + $0x100] sm:$0xff] %v588
    %596 = vst [vmem:[#allocation3 + $0x148] sm:$0xff] %v589
    %597 = vst [vmem:[#allocation3 + $0x190] sm:$0xff] %v590
    %598 = vst [vmem:[#allocation3 + $0x1d8] sm:$0x3] %v591
    %v599 = vld [vmem:[#allocation2 + $0xa] sm:$0xff]
    %v600 = vld [vmem:[#allocation2 + $0x12] sm:$0xff]
    %v601 = vld [vmem:[#allocation2 + $0x1a] sm:$0xff]
    %v602 = vld [vmem:[#allocation2 + $0x22] sm:$0xff]
    %v603 = vld [vmem:[#allocation2 + $0x2a] sm:$0xff]
    %v604 = vld [vmem:[#allocation2 + $0x32] sm:$0xff]
    %v605 = vld [vmem:[#allocation2 + $0x3a] sm:$0x3]
    %606 = vset.pattern.permute.xlu0 6
    %607 = vperm.xlu0 %606, %v125
    %v608 = vpop.permute.xlu0 %607
    %610 = vset.pattern.permute.xlu0 6
    %611 = vperm.xlu0 %610, %v126
    %v612 = vpop.permute.xlu0 %611
    %614 = vset.pattern.permute.xlu0 6
    %615 = vperm.xlu0 %614, %v127
    %v616 = vpop.permute.xlu0 %615
    %618 = vset.pattern.permute.xlu0 6
    %619 = vperm.xlu0 %618, %v128
    %v620 = vpop.permute.xlu0 %619
    %622 = vset.pattern.permute.xlu0 6
    %623 = vperm.xlu0 %622, %v129
    %v624 = vpop.permute.xlu0 %623
    %626 = vset.pattern.permute.xlu0 6
    %627 = vperm.xlu0 %626, %v130
    %v628 = vpop.permute.xlu0 %627
    %630 = vset.pattern.permute.xlu0 6
    %631 = vperm.xlu0 %630, %v131
    %v632 = vpop.permute.xlu0 %631
    %v634 = vmul.f32 %v599, %v608
    %v635 = vmul.f32 %v600, %v612
    %v636 = vmul.f32 %v601, %v616
    %v637 = vmul.f32 %v602, %v620
    %v638 = vmul.f32 %v603, %v624
    %v639 = vmul.f32 %v604, %v628
    %v640 = vmul.f32 %v605, %v632
    %641 = vst [vmem:[#allocation3 + $0x30] sm:$0xff] %v634
    %642 = vst [vmem:[#allocation3 + $0x78] sm:$0xff] %v635
    %643 = vst [vmem:[#allocation3 + $0xc0] sm:$0xff] %v636
    %644 = vst [vmem:[#allocation3 + $0x108] sm:$0xff] %v637
    %645 = vst [vmem:[#allocation3 + $0x150] sm:$0xff] %v638
    %646 = vst [vmem:[#allocation3 + $0x198] sm:$0xff] %v639
    %647 = vst [vmem:[#allocation3 + $0x1e0] sm:$0x3] %v640
    %v648 = vld [vmem:[#allocation2 + $0xb] sm:$0xff]
    %v649 = vld [vmem:[#allocation2 + $0x13] sm:$0xff]
    %v650 = vld [vmem:[#allocation2 + $0x1b] sm:$0xff]
    %v651 = vld [vmem:[#allocation2 + $0x23] sm:$0xff]
    %v652 = vld [vmem:[#allocation2 + $0x2b] sm:$0xff]
    %v653 = vld [vmem:[#allocation2 + $0x33] sm:$0xff]
    %v654 = vld [vmem:[#allocation2 + $0x3b] sm:$0x3]
    %655 = vset.pattern.permute.xlu0 7
    %656 = vperm.xlu0 %655, %v125
    %v657 = vpop.permute.xlu0 %656
    %659 = vset.pattern.permute.xlu0 7
    %660 = vperm.xlu0 %659, %v126
    %v661 = vpop.permute.xlu0 %660
    %663 = vset.pattern.permute.xlu0 7
    %664 = vperm.xlu0 %663, %v127
    %v665 = vpop.permute.xlu0 %664
    %667 = vset.pattern.permute.xlu0 7
    %668 = vperm.xlu0 %667, %v128
    %v669 = vpop.permute.xlu0 %668
    %671 = vset.pattern.permute.xlu0 7
    %672 = vperm.xlu0 %671, %v129
    %v673 = vpop.permute.xlu0 %672
    %675 = vset.pattern.permute.xlu0 7
    %676 = vperm.xlu0 %675, %v130
    %v677 = vpop.permute.xlu0 %676
    %679 = vset.pattern.permute.xlu0 7
    %680 = vperm.xlu0 %679, %v131
    %v681 = vpop.permute.xlu0 %680
    %v683 = vmul.f32 %v648, %v657
    %v684 = vmul.f32 %v649, %v661
    %v685 = vmul.f32 %v650, %v665
    %v686 = vmul.f32 %v651, %v669
    %v687 = vmul.f32 %v652, %v673
    %v688 = vmul.f32 %v653, %v677
    %v689 = vmul.f32 %v654, %v681
    %690 = vst [vmem:[#allocation3 + $0x38] sm:$0xff] %v683
    %691 = vst [vmem:[#allocation3 + $0x80] sm:$0xff] %v684
    %692 = vst [vmem:[#allocation3 + $0xc8] sm:$0xff] %v685
    %693 = vst [vmem:[#allocation3 + $0x110] sm:$0xff] %v686
    %694 = vst [vmem:[#allocation3 + $0x158] sm:$0xff] %v687
    %695 = vst [vmem:[#allocation3 + $0x1a0] sm:$0xff] %v688
    %696 = vst [vmem:[#allocation3 + $0x1e8] sm:$0x3] %v689
    %v697 = vld [vmem:[#allocation2 + $0xc] sm:$0xff]
    %v698 = vld [vmem:[#allocation2 + $0x14] sm:$0xff]
    %v699 = vld [vmem:[#allocation2 + $0x1c] sm:$0xff]
    %v700 = vld [vmem:[#allocation2 + $0x24] sm:$0xff]
    %v701 = vld [vmem:[#allocation2 + $0x2c] sm:$0xff]
    %v702 = vld [vmem:[#allocation2 + $0x34] sm:$0xff]
    %v703 = vld [vmem:[#allocation2 + $0x3c] sm:$0x3]
    %704 = vset.pattern.permute.xlu0 8
    %705 = vperm.xlu0 %704, %v125
    %v706 = vpop.permute.xlu0 %705
    %708 = vset.pattern.permute.xlu0 8
    %709 = vperm.xlu0 %708, %v126
    %v710 = vpop.permute.xlu0 %709
    %712 = vset.pattern.permute.xlu0 8
    %713 = vperm.xlu0 %712, %v127
    %v714 = vpop.permute.xlu0 %713
    %716 = vset.pattern.permute.xlu0 8
    %717 = vperm.xlu0 %716, %v128
    %v718 = vpop.permute.xlu0 %717
    %720 = vset.pattern.permute.xlu0 8
    %721 = vperm.xlu0 %720, %v129
    %v722 = vpop.permute.xlu0 %721
    %724 = vset.pattern.permute.xlu0 8
    %725 = vperm.xlu0 %724, %v130
    %v726 = vpop.permute.xlu0 %725
    %728 = vset.pattern.permute.xlu0 8
    %729 = vperm.xlu0 %728, %v131
    %v730 = vpop.permute.xlu0 %729
    %v732 = vmul.f32 %v697, %v706
    %v733 = vmul.f32 %v698, %v710
    %v734 = vmul.f32 %v699, %v714
    %v735 = vmul.f32 %v700, %v718
    %v736 = vmul.f32 %v701, %v722
    %v737 = vmul.f32 %v702, %v726
    %v738 = vmul.f32 %v703, %v730
    %739 = vst [vmem:[#allocation3 + $0x40] sm:$0xff] %v732
    %740 = vst [vmem:[#allocation3 + $0x88] sm:$0xff] %v733
    %741 = vst [vmem:[#allocation3 + $0xd0] sm:$0xff] %v734
    %742 = vst [vmem:[#allocation3 + $0x118] sm:$0xff] %v735
    %743 = vst [vmem:[#allocation3 + $0x160] sm:$0xff] %v736
    %744 = vst [vmem:[#allocation3 + $0x1a8] sm:$0xff] %v737
    %745 = vst [vmem:[#allocation3 + $0x1f0] sm:$0x3] %v738
    %v746 = vld [vmem:[#allocation3] sm:$0xff]
    %v747 = vld [vmem:[#allocation3 + $0x8] sm:$0xff]
    %v748 = vld [vmem:[#allocation3 + $0x10] sm:$0xff]
    %v749 = vld [vmem:[#allocation3 + $0x18] sm:$0xff]
    %v750 = vld [vmem:[#allocation3 + $0x20] sm:$0xff]
    %v751 = vld [vmem:[#allocation3 + $0x28] sm:$0xff]
    %v752 = vld [vmem:[#allocation3 + $0x30] sm:$0xff]
    %v753 = vld [vmem:[#allocation3 + $0x38] sm:$0xff]
    %v754 = vld [vmem:[#allocation3 + $0x40] sm:$0xff]
    %v755 = vld [vmem:[#allocation3 + $0x48] sm:$0xff]
    %v756 = vld [vmem:[#allocation3 + $0x50] sm:$0xff]
    %v757 = vld [vmem:[#allocation3 + $0x58] sm:$0xff]
    %v758 = vld [vmem:[#allocation3 + $0x60] sm:$0xff]
    %v759 = vld [vmem:[#allocation3 + $0x68] sm:$0xff]
    %v760 = vld [vmem:[#allocation3 + $0x70] sm:$0xff]
    %v761 = vld [vmem:[#allocation3 + $0x78] sm:$0xff]
    %v762 = vld [vmem:[#allocation3 + $0x80] sm:$0xff]
    %v763 = vld [vmem:[#allocation3 + $0x88] sm:$0xff]
    %v764 = vld [vmem:[#allocation3 + $0x90] sm:$0xff]
    %v765 = vld [vmem:[#allocation3 + $0x98] sm:$0xff]
    %v766 = vld [vmem:[#allocation3 + $0xa0] sm:$0xff]
    %v767 = vld [vmem:[#allocation3 + $0xa8] sm:$0xff]
    %v768 = vld [vmem:[#allocation3 + $0xb0] sm:$0xff]
    %v769 = vld [vmem:[#allocation3 + $0xb8] sm:$0xff]
    %v770 = vld [vmem:[#allocation3 + $0xc0] sm:$0xff]
    %v771 = vld [vmem:[#allocation3 + $0xc8] sm:$0xff]
    %v772 = vld [vmem:[#allocation3 + $0xd0] sm:$0xff]
    %v773 = vld [vmem:[#allocation3 + $0xd8] sm:$0xff]
    %v774 = vld [vmem:[#allocation3 + $0xe0] sm:$0xff]
    %v775 = vld [vmem:[#allocation3 + $0xe8] sm:$0xff]
    %v776 = vld [vmem:[#allocation3 + $0xf0] sm:$0xff]
    %v777 = vld [vmem:[#allocation3 + $0xf8] sm:$0xff]
    %v778 = vld [vmem:[#allocation3 + $0x100] sm:$0xff]
    %v779 = vld [vmem:[#allocation3 + $0x108] sm:$0xff]
    %v780 = vld [vmem:[#allocation3 + $0x110] sm:$0xff]
    %v781 = vld [vmem:[#allocation3 + $0x118] sm:$0xff]
    %v782 = vld [vmem:[#allocation3 + $0x120] sm:$0xff]
    %v783 = vld [vmem:[#allocation3 + $0x128] sm:$0xff]
    %v784 = vld [vmem:[#allocation3 + $0x130] sm:$0xff]
    %v785 = vld [vmem:[#allocation3 + $0x138] sm:$0xff]
    %v786 = vld [vmem:[#allocation3 + $0x140] sm:$0xff]
    %v787 = vld [vmem:[#allocation3 + $0x148] sm:$0xff]
    %v788 = vld [vmem:[#allocation3 + $0x150] sm:$0xff]
    %v789 = vld [vmem:[#allocation3 + $0x158] sm:$0xff]
    %v790 = vld [vmem:[#allocation3 + $0x160] sm:$0xff]
    %v791 = vld [vmem:[#allocation3 + $0x168] sm:$0xff]
    %v792 = vld [vmem:[#allocation3 + $0x170] sm:$0xff]
    %v793 = vld [vmem:[#allocation3 + $0x178] sm:$0xff]
    %v794 = vld [vmem:[#allocation3 + $0x180] sm:$0xff]
    %v795 = vld [vmem:[#allocation3 + $0x188] sm:$0xff]
    %v796 = vld [vmem:[#allocation3 + $0x190] sm:$0xff]
    %v797 = vld [vmem:[#allocation3 + $0x198] sm:$0xff]
    %v798 = vld [vmem:[#allocation3 + $0x1a0] sm:$0xff]
    %v799 = vld [vmem:[#allocation3 + $0x1a8] sm:$0xff]
    %v800 = vld [vmem:[#allocation3 + $0x1b0] sm:$0x3]
    %v801 = vld [vmem:[#allocation3 + $0x1b8] sm:$0x3]
    %v802 = vld [vmem:[#allocation3 + $0x1c0] sm:$0x3]
    %v803 = vld [vmem:[#allocation3 + $0x1c8] sm:$0x3]
    %v804 = vld [vmem:[#allocation3 + $0x1d0] sm:$0x3]
    %v805 = vld [vmem:[#allocation3 + $0x1d8] sm:$0x3]
    %v806 = vld [vmem:[#allocation3 + $0x1e0] sm:$0x3]
    %v807 = vld [vmem:[#allocation3 + $0x1e8] sm:$0x3]
    %v808 = vld [vmem:[#allocation3 + $0x1f0] sm:$0x3]
    %v809 = vld [vmem:[%s5] sm:$0xff]
    %v810 = vld [vmem:[%s5 + $0x8] sm:$0xff]
    %v811 = vld [vmem:[%s5 + $0x10] sm:$0xff]
    %v812 = vld [vmem:[%s5 + $0x18] sm:$0xff]
    %v813 = vld [vmem:[%s5 + $0x20] sm:$0xff]
    %v814 = vld [vmem:[%s5 + $0x28] sm:$0xff]
    %v815 = vld [vmem:[%s5 + $0x30] sm:$0xff]
    %v816 = vld [vmem:[%s5 + $0x38] sm:$0xff]
    %v817 = vld [vmem:[%s5 + $0x40] sm:$0xff]
    %v818 = vld [vmem:[%s5 + $0x48] sm:$0xff]
    %v819 = vld [vmem:[%s5 + $0x50] sm:$0xff]
    %v820 = vld [vmem:[%s5 + $0x58] sm:$0xff]
    %v821 = vld [vmem:[%s5 + $0x60] sm:$0xff]
    %v822 = vld [vmem:[%s5 + $0x68] sm:$0xff]
    %v823 = vld [vmem:[%s5 + $0x70] sm:$0xff]
    %v824 = vld [vmem:[%s5 + $0x78] sm:$0xff]
    %v825 = vld [vmem:[%s5 + $0x80] sm:$0xff]
    %v826 = vld [vmem:[%s5 + $0x88] sm:$0xff]
    %v827 = vld [vmem:[%s5 + $0x90] sm:$0xff]
    %v828 = vld [vmem:[%s5 + $0x98] sm:$0xff]
    %v829 = vld [vmem:[%s5 + $0xa0] sm:$0xff]
    %v830 = vld [vmem:[%s5 + $0xa8] sm:$0xff]
    %v831 = vld [vmem:[%s5 + $0xb0] sm:$0xff]
    %v832 = vld [vmem:[%s5 + $0xb8] sm:$0xff]
    %v833 = vld [vmem:[%s5 + $0xc0] sm:$0xff]
    %v834 = vld [vmem:[%s5 + $0xc8] sm:$0xff]
    %v835 = vld [vmem:[%s5 + $0xd0] sm:$0xff]
    %v836 = vld [vmem:[%s5 + $0xd8] sm:$0xff]
    %v837 = vld [vmem:[%s5 + $0xe0] sm:$0xff]
    %v838 = vld [vmem:[%s5 + $0xe8] sm:$0xff]
    %v839 = vld [vmem:[%s5 + $0xf0] sm:$0xff]
    %v840 = vld [vmem:[%s5 + $0xf8] sm:$0xff]
    %v841 = vld [vmem:[%s5 + $0x100] sm:$0xff]
    %v842 = vld [vmem:[%s5 + $0x108] sm:$0xff]
    %v843 = vld [vmem:[%s5 + $0x110] sm:$0xff]
    %v844 = vld [vmem:[%s5 + $0x118] sm:$0xff]
    %v845 = vld [vmem:[%s5 + $0x120] sm:$0xff]
    %v846 = vld [vmem:[%s5 + $0x128] sm:$0xff]
    %v847 = vld [vmem:[%s5 + $0x130] sm:$0xff]
    %v848 = vld [vmem:[%s5 + $0x138] sm:$0xff]
    %v849 = vld [vmem:[%s5 + $0x140] sm:$0xff]
    %v850 = vld [vmem:[%s5 + $0x148] sm:$0xff]
    %v851 = vld [vmem:[%s5 + $0x150] sm:$0xff]
    %v852 = vld [vmem:[%s5 + $0x158] sm:$0xff]
    %v853 = vld [vmem:[%s5 + $0x160] sm:$0xff]
    %v854 = vld [vmem:[%s5 + $0x168] sm:$0xff]
    %v855 = vld [vmem:[%s5 + $0x170] sm:$0xff]
    %v856 = vld [vmem:[%s5 + $0x178] sm:$0xff]
    %v857 = vld [vmem:[%s5 + $0x180] sm:$0xff]
    %v858 = vld [vmem:[%s5 + $0x188] sm:$0xff]
    %v859 = vld [vmem:[%s5 + $0x190] sm:$0xff]
    %v860 = vld [vmem:[%s5 + $0x198] sm:$0xff]
    %v861 = vld [vmem:[%s5 + $0x1a0] sm:$0xff]
    %v862 = vld [vmem:[%s5 + $0x1a8] sm:$0xff]
    %v863 = vld [vmem:[%s5 + $0x1b0] sm:$0xff]
    %v864 = vld [vmem:[%s5 + $0x1b8] sm:$0xff]
    %v865 = vld [vmem:[%s5 + $0x1c0] sm:$0xff]
    %v866 = vld [vmem:[%s5 + $0x1c8] sm:$0xff]
    %v867 = vld [vmem:[%s5 + $0x1d0] sm:$0xff]
    %v868 = vld [vmem:[%s5 + $0x1d8] sm:$0xff]
    %v869 = vld [vmem:[%s5 + $0x1e0] sm:$0xff]
    %v870 = vld [vmem:[%s5 + $0x1e8] sm:$0xff]
    %v871 = vld [vmem:[%s5 + $0x1f0] sm:$0xff]
    %v872 = vld [vmem:[%s5 + $0x1f8] sm:$0xff]
    %v873 = vld [vmem:[%s5 + $0x200] sm:$0xff]
    %v874 = vld [vmem:[%s5 + $0x208] sm:$0xff]
    %v875 = vld [vmem:[%s5 + $0x210] sm:$0xff]
    %v876 = vld [vmem:[%s5 + $0x218] sm:$0xff]
    %v877 = vld [vmem:[%s5 + $0x220] sm:$0xff]
    %v878 = vld [vmem:[%s5 + $0x228] sm:$0xff]
    %v879 = vld [vmem:[%s5 + $0x230] sm:$0xff]
    %v880 = vld [vmem:[%s5 + $0x238] sm:$0xff]
    %v881 = vld [vmem:[%s5 + $0x240] sm:$0xff]
    %v882 = vld [vmem:[%s5 + $0x248] sm:$0xff]
    %v883 = vld [vmem:[%s5 + $0x250] sm:$0xff]
    %v884 = vld [vmem:[%s5 + $0x258] sm:$0xff]
    %v885 = vld [vmem:[%s5 + $0x260] sm:$0xff]
    %v886 = vld [vmem:[%s5 + $0x268] sm:$0xff]
    %v887 = vld [vmem:[%s5 + $0x270] sm:$0xff]
    %v888 = vld [vmem:[%s5 + $0x278] sm:$0xff]
    %v889 = vld [vmem:[%s5 + $0x280] sm:$0xff]
    %v890 = vld [vmem:[%s5 + $0x288] sm:$0xff]
    %v891 = vld [vmem:[%s5 + $0x290] sm:$0xff]
    %v892 = vld [vmem:[%s5 + $0x298] sm:$0xff]
    %v893 = vld [vmem:[%s5 + $0x2a0] sm:$0xff]
    %v894 = vld [vmem:[%s5 + $0x2a8] sm:$0xff]
    %v895 = vld [vmem:[%s5 + $0x2b0] sm:$0xff]
    %v896 = vld [vmem:[%s5 + $0x2b8] sm:$0xff]
    %v897 = vld [vmem:[%s5 + $0x2c0] sm:$0xff]
    %v898 = vld [vmem:[%s5 + $0x2c8] sm:$0xff]
    %v899 = vld [vmem:[%s5 + $0x2d0] sm:$0xff]
    %v900 = vld [vmem:[%s5 + $0x2d8] sm:$0xff]
    %v901 = vld [vmem:[%s5 + $0x2e0] sm:$0xff]
    %v902 = vld [vmem:[%s5 + $0x2e8] sm:$0xff]
    %v903 = vld [vmem:[%s5 + $0x2f0] sm:$0xff]
    %v904 = vld [vmem:[%s5 + $0x2f8] sm:$0xff]
    %v905 = vld [vmem:[%s5 + $0x300] sm:$0xff]
    %v906 = vld [vmem:[%s5 + $0x308] sm:$0xff]
    %v907 = vld [vmem:[%s5 + $0x310] sm:$0xff]
    %v908 = vld [vmem:[%s5 + $0x318] sm:$0xff]
    %v909 = vld [vmem:[%s5 + $0x320] sm:$0xff]
    %v910 = vld [vmem:[%s5 + $0x328] sm:$0xff]
    %v911 = vld [vmem:[%s5 + $0x330] sm:$0xff]
    %v912 = vld [vmem:[%s5 + $0x338] sm:$0xff]
    %v913 = vld [vmem:[%s5 + $0x340] sm:$0xff]
    %v914 = vld [vmem:[%s5 + $0x348] sm:$0xff]
    %v915 = vld [vmem:[%s5 + $0x350] sm:$0xff]
    %v916 = vld [vmem:[%s5 + $0x358] sm:$0xff]
    %v917 = vld [vmem:[%s5 + $0x360] sm:$0xff]
    %v918 = vld [vmem:[%s5 + $0x368] sm:$0xff]
    %v919 = vld [vmem:[%s5 + $0x370] sm:$0xff]
    %v920 = vld [vmem:[%s5 + $0x378] sm:$0xff]
    %v921 = vld [vmem:[%s5 + $0x380] sm:$0xff]
    %v922 = vld [vmem:[%s5 + $0x388] sm:$0xff]
    %v923 = vld [vmem:[%s5 + $0x390] sm:$0xff]
    %v924 = vld [vmem:[%s5 + $0x398] sm:$0xff]
    %v925 = vld [vmem:[%s5 + $0x3a0] sm:$0xff]
    %v926 = vld [vmem:[%s5 + $0x3a8] sm:$0xff]
    %v927 = vld [vmem:[%s5 + $0x3b0] sm:$0xff]
    %v928 = vld [vmem:[%s5 + $0x3b8] sm:$0xff]
    %v929 = vld [vmem:[%s5 + $0x3c0] sm:$0xff]
    %v930 = vld [vmem:[%s5 + $0x3c8] sm:$0xff]
    %v931 = vld [vmem:[%s5 + $0x3d0] sm:$0xff]
    %v932 = vld [vmem:[%s5 + $0x3d8] sm:$0xff]
    %v933 = vld [vmem:[%s5 + $0x3e0] sm:$0xff]
    %v934 = vld [vmem:[%s5 + $0x3e8] sm:$0xff]
    %v935 = vld [vmem:[%s5 + $0x3f0] sm:$0xff]
    %v936 = vld [vmem:[%s5 + $0x3f8] sm:$0xff]
    %v937 = vld [vmem:[%s5 + $0x400] sm:$0xff]
    %v938 = vld [vmem:[%s5 + $0x408] sm:$0xff]
    %v939 = vld [vmem:[%s5 + $0x410] sm:$0xff]
    %v940 = vld [vmem:[%s5 + $0x418] sm:$0xff]
    %v941 = vld [vmem:[%s5 + $0x420] sm:$0xff]
    %v942 = vld [vmem:[%s5 + $0x428] sm:$0xff]
    %v943 = vld [vmem:[%s5 + $0x430] sm:$0xff]
    %v944 = vld [vmem:[%s5 + $0x438] sm:$0xff]
    %v945 = vld [vmem:[%s5 + $0x440] sm:$0xff]
    %v946 = vld [vmem:[%s5 + $0x448] sm:$0xff]
    %v947 = vld [vmem:[%s5 + $0x450] sm:$0xff]
    %v948 = vld [vmem:[%s5 + $0x458] sm:$0xff]
    %v949 = vld [vmem:[%s5 + $0x460] sm:$0xff]
    %v950 = vld [vmem:[%s5 + $0x468] sm:$0xff]
    %v951 = vld [vmem:[%s5 + $0x470] sm:$0xff]
    %v952 = vld [vmem:[%s5 + $0x478] sm:$0xff]
    %v953 = vld [vmem:[%s6] sm:$0x1]
    %v955 = vlaneseq
    %v956 = vshrl.u32 %v955, 7
    %v957 = vsub.s32 0, %v956
    %v958 = vrot.slane %v953, %v957
    %960 = vmatprep.subr.mxu0 0.0
    %961 = vmatpush1.msra.mxu0 %v809
    %962 = vmatprep.subr.mxu0 0.0
    %963 = vmatpush1.msra.mxu0 %v810
    %964 = vmatprep.subr.mxu0 0.0
    %965 = vmatpush1.msra.mxu0 %v811
    %966 = vmatprep.subr.mxu0 0.0
    %967 = vmatpush1.msra.mxu0 %v812
    %968 = vmatprep.subr.mxu0 0.0
    %969 = vmatpush1.msra.mxu0 %v813
    %970 = vmatprep.subr.mxu0 0.0
    %971 = vmatpush1.msra.mxu0 %v814
    %972 = vmatprep.subr.mxu0 0.0
    %973 = vmatpush1.msra.mxu0 %v815
    %974 = vmatprep.subr.mxu0 0.0
    %975 = vmatpush1.msra.mxu0 %v816
    %976 = vmatprep.subr.mxu0 0.0
    %977 = vmatpush1.msra.mxu0 %v817
    %978 = vmatprep.subr.mxu0 0.0
    %979 = vmatpush1.msra.mxu0 %v818
    %980 = vmatprep.subr.mxu0 0.0
    %981 = vmatpush1.msra.mxu0 %v819
    %982 = vmatprep.subr.mxu0 0.0
    %983 = vmatpush1.msra.mxu0 %v820
    %984 = vmatprep.subr.mxu0 0.0
    %985 = vmatpush1.msra.mxu0 %v821
    %986 = vmatprep.subr.mxu0 0.0
    %987 = vmatpush1.msra.mxu0 %v822
    %988 = vmatprep.subr.mxu0 0.0
    %989 = vmatpush1.msra.mxu0 %v823
    %990 = vmatprep.subr.mxu0 0.0
    %991 = vmatpush1.msra.mxu0 %v824
    %992 = vmatprep.subr.mxu0 0.0
    %993 = vmatpush1.msra.mxu0 %v825
    %994 = vmatprep.subr.mxu0 0.0
    %995 = vmatpush1.msra.mxu0 %v826
    %996 = vmatprep.subr.mxu0 0.0
    %997 = vmatpush1.msra.mxu0 %v827
    %998 = vmatprep.subr.mxu0 0.0
    %999 = vmatpush1.msra.mxu0 %v828
    %1000 = vmatprep.subr.mxu0 0.0
    %1001 = vmatpush1.msra.mxu0 %v829
    %1002 = vmatprep.subr.mxu0 0.0
    %1003 = vmatpush1.msra.mxu0 %v830
    %1004 = vmatprep.subr.mxu0 0.0
    %1005 = vmatpush1.msra.mxu0 %v831
    %1006 = vmatprep.subr.mxu0 0.0
    %1007 = vmatpush1.msra.mxu0 %v832
    %1008 = vmatprep.subr.mxu0 0.0
    %1009 = vmatpush1.msra.mxu0 %v833
    %1010 = vmatprep.subr.mxu0 0.0
    %1011 = vmatpush1.msra.mxu0 %v834
    %1012 = vmatprep.subr.mxu0 0.0
    %1013 = vmatpush1.msra.mxu0 %v835
    %1014 = vmatprep.subr.mxu0 0.0
    %1015 = vmatpush1.msra.mxu0 %v836
    %1016 = vmatprep.subr.mxu0 0.0
    %1017 = vmatpush1.msra.mxu0 %v837
    %1018 = vmatprep.subr.mxu0 0.0
    %1019 = vmatpush1.msra.mxu0 %v838
    %1020 = vmatprep.subr.mxu0 0.0
    %1021 = vmatpush1.msra.mxu0 %v839
    %1022 = vmatprep.subr.mxu0 0.0
    %1023 = vmatpush1.msra.mxu0 %v840
    %1024 = vmatprep.mubr.f32.mxu0 %v747
    %1025 = vmatmul.mubr.f32.gmra.mrb[0].mxu0 %v746
    %v1026 = vpop.f32.mrb[0].mxu0
    %v1027 = vadd.f32 %v958, %v1026
    %v1028 = vpop.f32.mrb[0].mxu0
    %1029 = vmatprep.mubr.f32.mxu0 %v756
    %1030 = vmatmul.mubr.f32.gmra.mrb[0].mxu0 %v755
    %v1031 = vpop.f32.mrb[0].mxu0
    %v1032 = vadd.f32 %v958, %v1031
    %v1033 = vpop.f32.mrb[0].mxu0
    %1034 = vmatprep.mubr.f32.mxu0 %v765
    %1035 = vmatmul.mubr.f32.gmra.mrb[0].mxu0 %v764
    %v1036 = vpop.f32.mrb[0].mxu0
    %v1037 = vadd.f32 %v958, %v1036
    %v1038 = vpop.f32.mrb[0].mxu0
    %1039 = vmatprep.mubr.f32.mxu0 %v774
    %1040 = vmatmul.mubr.f32.gmra.mrb[0].mxu0 %v773
    %v1041 = vpop.f32.mrb[0].mxu0
    %v1042 = vadd.f32 %v958, %v1041
    %v1043 = vpop.f32.mrb[0].mxu0
    %1044 = vmatprep.mubr.f32.mxu0 %v783
    %1045 = vmatmul.mubr.f32.gmra.mrb[0].mxu0 %v782
    %v1046 = vpop.f32.mrb[0].mxu0
    %v1047 = vadd.f32 %v958, %v1046
    %v1048 = vpop.f32.mrb[0].mxu0
    %1049 = vmatprep.mubr.f32.mxu0 %v792
    %1050 = vmatmul.mubr.f32.gmra.mrb[0].mxu0 %v791
    %v1051 = vpop.f32.mrb[0].mxu0
    %v1052 = vadd.f32 %v958, %v1051
    %v1053 = vpop.f32.mrb[0].mxu0
    %1054 = vmatprep.mubr.f32.mxu0 %v801
    %1055 = vmatmul.mubr.f32.gmra.mrb[0].mxu0 %v800
    %v1056 = vpop.f32.mrb[0].mxu0
    %v1057 = vadd.f32 %v958, %v1056
    %v1058 = vpop.f32.mrb[0].mxu0
    %1059 = vdwg.mxu0
    %1060 = vmatprep.subr.mxu0 0.0
    %1061 = vmatpush1.msra.mxu0 %v841
    %1062 = vmatprep.subr.mxu0 0.0
    %1063 = vmatpush1.msra.mxu0 %v842
    %1064 = vmatprep.subr.mxu0 0.0
    %1065 = vmatpush1.msra.mxu0 %v843
    %1066 = vmatprep.subr.mxu0 0.0
    %1067 = vmatpush1.msra.mxu0 %v844
    %1068 = vmatprep.subr.mxu0 0.0
    %1069 = vmatpush1.msra.mxu0 %v845
    %1070 = vmatprep.subr.mxu0 0.0
    %1071 = vmatpush1.msra.mxu0 %v846
    %1072 = vmatprep.subr.mxu0 0.0
    %1073 = vmatpush1.msra.mxu0 %v847
    %1074 = vmatprep.subr.mxu0 0.0
    %1075 = vmatpush1.msra.mxu0 %v848
    %1076 = vmatprep.subr.mxu0 0.0
    %1077 = vmatpush1.msra.mxu0 %v849
    %1078 = vmatprep.subr.mxu0 0.0
    %1079 = vmatpush1.msra.mxu0 %v850
    %1080 = vmatprep.subr.mxu0 0.0
    %1081 = vmatpush1.msra.mxu0 %v851
    %1082 = vmatprep.subr.mxu0 0.0
    %1083 = vmatpush1.msra.mxu0 %v852
    %1084 = vmatprep.subr.mxu0 0.0
    %1085 = vmatpush1.msra.mxu0 %v853
    %1086 = vmatprep.subr.mxu0 0.0
    %1087 = vmatpush1.msra.mxu0 %v854
    %1088 = vmatprep.subr.mxu0 0.0
    %1089 = vmatpush1.msra.mxu0 %v855
    %1090 = vmatprep.subr.mxu0 0.0
    %1091 = vmatpush1.msra.mxu0 %v856
    %1092 = vmatprep.subr.mxu0 0.0
    %1093 = vmatpush1.msra.mxu0 %v857
    %1094 = vmatprep.subr.mxu0 0.0
    %1095 = vmatpush1.msra.mxu0 %v858
    %1096 = vmatprep.subr.mxu0 0.0
    %1097 = vmatpush1.msra.mxu0 %v859
    %1098 = vmatprep.subr.mxu0 0.0
    %1099 = vmatpush1.msra.mxu0 %v860
    %1100 = vmatprep.subr.mxu0 0.0
    %1101 = vmatpush1.msra.mxu0 %v861
    %1102 = vmatprep.subr.mxu0 0.0
    %1103 = vmatpush1.msra.mxu0 %v862
    %1104 = vmatprep.subr.mxu0 0.0
    %1105 = vmatpush1.msra.mxu0 %v863
    %1106 = vmatprep.subr.mxu0 0.0
    %1107 = vmatpush1.msra.mxu0 %v864
    %1108 = vmatprep.subr.mxu0 0.0
    %1109 = vmatpush1.msra.mxu0 %v865
    %1110 = vmatprep.subr.mxu0 0.0
    %1111 = vmatpush1.msra.mxu0 %v866
    %1112 = vmatprep.subr.mxu0 0.0
    %1113 = vmatpush1.msra.mxu0 %v867
    %1114 = vmatprep.subr.mxu0 0.0
    %1115 = vmatpush1.msra.mxu0 %v868
    %1116 = vmatprep.subr.mxu0 0.0
    %1117 = vmatpush1.msra.mxu0 %v869
    %1118 = vmatprep.subr.mxu0 0.0
    %1119 = vmatpush1.msra.mxu0 %v870
    %1120 = vmatprep.subr.mxu0 0.0
    %1121 = vmatpush1.msra.mxu0 %v871
    %1122 = vmatprep.subr.mxu0 0.0
    %1123 = vmatpush1.msra.mxu0 %v872
    %1124 = vmatprep.mubr.f32.mxu0 %v749
    %1125 = vmatmul.mubr.f32.gmra.mrb[0].mxu0 %v748
    %v1126 = vpop.f32.mrb[0].mxu0
    %v1127 = vadd.f32 %v1027, %v1126
    %v1128 = vpop.f32.mrb[0].mxu0
    %1129 = vmatprep.mubr.f32.mxu0 %v758
    %1130 = vmatmul.mubr.f32.gmra.mrb[0].mxu0 %v757
    %v1131 = vpop.f32.mrb[0].mxu0
    %v1132 = vadd.f32 %v1032, %v1131
    %v1133 = vpop.f32.mrb[0].mxu0
    %1134 = vmatprep.mubr.f32.mxu0 %v767
    %1135 = vmatmul.mubr.f32.gmra.mrb[0].mxu0 %v766
    %v1136 = vpop.f32.mrb[0].mxu0
    %v1137 = vadd.f32 %v1037, %v1136
    %v1138 = vpop.f32.mrb[0].mxu0
    %1139 = vmatprep.mubr.f32.mxu0 %v776
    %1140 = vmatmul.mubr.f32.gmra.mrb[0].mxu0 %v775
    %v1141 = vpop.f32.mrb[0].mxu0
    %v1142 = vadd.f32 %v1042, %v1141
    %v1143 = vpop.f32.mrb[0].mxu0
    %1144 = vmatprep.mubr.f32.mxu0 %v785
    %1145 = vmatmul.mubr.f32.gmra.mrb[0].mxu0 %v784
    %v1146 = vpop.f32.mrb[0].mxu0
    %v1147 = vadd.f32 %v1047, %v1146
    %v1148 = vpop.f32.mrb[0].mxu0
    %1149 = vmatprep.mubr.f32.mxu0 %v794
    %1150 = vmatmul.mubr.f32.gmra.mrb[0].mxu0 %v793
    %v1151 = vpop.f32.mrb[0].mxu0
    %v1152 = vadd.f32 %v1052, %v1151
    %v1153 = vpop.f32.mrb[0].mxu0
    %1154 = vmatprep.mubr.f32.mxu0 %v803
    %1155 = vmatmul.mubr.f32.gmra.mrb[0].mxu0 %v802
    %v1156 = vpop.f32.mrb[0].mxu0
    %v1157 = vadd.f32 %v1057, %v1156
    %v1158 = vpop.f32.mrb[0].mxu0
    %1159 = vdwg.mxu0
    %1160 = vmatprep.subr.mxu0 0.0
    %1161 = vmatpush1.msra.mxu0 %v873
    %1162 = vmatprep.subr.mxu0 0.0
    %1163 = vmatpush1.msra.mxu0 %v874
    %1164 = vmatprep.subr.mxu0 0.0
    %1165 = vmatpush1.msra.mxu0 %v875
    %1166 = vmatprep.subr.mxu0 0.0
    %1167 = vmatpush1.msra.mxu0 %v876
    %1168 = vmatprep.subr.mxu0 0.0
    %1169 = vmatpush1.msra.mxu0 %v877
    %1170 = vmatprep.subr.mxu0 0.0
    %1171 = vmatpush1.msra.mxu0 %v878
    %1172 = vmatprep.subr.mxu0 0.0
    %1173 = vmatpush1.msra.mxu0 %v879
    %1174 = vmatprep.subr.mxu0 0.0
    %1175 = vmatpush1.msra.mxu0 %v880
    %1176 = vmatprep.subr.mxu0 0.0
    %1177 = vmatpush1.msra.mxu0 %v881
    %1178 = vmatprep.subr.mxu0 0.0
    %1179 = vmatpush1.msra.mxu0 %v882
    %1180 = vmatprep.subr.mxu0 0.0
    %1181 = vmatpush1.msra.mxu0 %v883
    %1182 = vmatprep.subr.mxu0 0.0
    %1183 = vmatpush1.msra.mxu0 %v884
    %1184 = vmatprep.subr.mxu0 0.0
    %1185 = vmatpush1.msra.mxu0 %v885
    %1186 = vmatprep.subr.mxu0 0.0
    %1187 = vmatpush1.msra.mxu0 %v886
    %1188 = vmatprep.subr.mxu0 0.0
    %1189 = vmatpush1.msra.mxu0 %v887
    %1190 = vmatprep.subr.mxu0 0.0
    %1191 = vmatpush1.msra.mxu0 %v888
    %1192 = vmatprep.subr.mxu0 0.0
    %1193 = vmatpush1.msra.mxu0 %v889
    %1194 = vmatprep.subr.mxu0 0.0
    %1195 = vmatpush1.msra.mxu0 %v890
    %1196 = vmatprep.subr.mxu0 0.0
    %1197 = vmatpush1.msra.mxu0 %v891
    %1198 = vmatprep.subr.mxu0 0.0
    %1199 = vmatpush1.msra.mxu0 %v892
    %1200 = vmatprep.subr.mxu0 0.0
    %1201 = vmatpush1.msra.mxu0 %v893
    %1202 = vmatprep.subr.mxu0 0.0
    %1203 = vmatpush1.msra.mxu0 %v894
    %1204 = vmatprep.subr.mxu0 0.0
    %1205 = vmatpush1.msra.mxu0 %v895
    %1206 = vmatprep.subr.mxu0 0.0
    %1207 = vmatpush1.msra.mxu0 %v896
    %1208 = vmatprep.subr.mxu0 0.0
    %1209 = vmatpush1.msra.mxu0 %v897
    %1210 = vmatprep.subr.mxu0 0.0
    %1211 = vmatpush1.msra.mxu0 %v898
    %1212 = vmatprep.subr.mxu0 0.0
    %1213 = vmatpush1.msra.mxu0 %v899
    %1214 = vmatprep.subr.mxu0 0.0
    %1215 = vmatpush1.msra.mxu0 %v900
    %1216 = vmatprep.subr.mxu0 0.0
    %1217 = vmatpush1.msra.mxu0 %v901
    %1218 = vmatprep.subr.mxu0 0.0
    %1219 = vmatpush1.msra.mxu0 %v902
    %1220 = vmatprep.subr.mxu0 0.0
    %1221 = vmatpush1.msra.mxu0 %v903
    %1222 = vmatprep.subr.mxu0 0.0
    %1223 = vmatpush1.msra.mxu0 %v904
    %1224 = vmatprep.mubr.f32.mxu0 %v751
    %1225 = vmatmul.mubr.f32.gmra.mrb[0].mxu0 %v750
    %v1226 = vpop.f32.mrb[0].mxu0
    %v1227 = vadd.f32 %v1127, %v1226
    %v1228 = vpop.f32.mrb[0].mxu0
    %1229 = vmatprep.mubr.f32.mxu0 %v760
    %1230 = vmatmul.mubr.f32.gmra.mrb[0].mxu0 %v759
    %v1231 = vpop.f32.mrb[0].mxu0
    %v1232 = vadd.f32 %v1132, %v1231
    %v1233 = vpop.f32.mrb[0].mxu0
    %1234 = vmatprep.mubr.f32.mxu0 %v769
    %1235 = vmatmul.mubr.f32.gmra.mrb[0].mxu0 %v768
    %v1236 = vpop.f32.mrb[0].mxu0
    %v1237 = vadd.f32 %v1137, %v1236
    %v1238 = vpop.f32.mrb[0].mxu0
    %1239 = vmatprep.mubr.f32.mxu0 %v778
    %1240 = vmatmul.mubr.f32.gmra.mrb[0].mxu0 %v777
    %v1241 = vpop.f32.mrb[0].mxu0
    %v1242 = vadd.f32 %v1142, %v1241
    %v1243 = vpop.f32.mrb[0].mxu0
    %1244 = vmatprep.mubr.f32.mxu0 %v787
    %1245 = vmatmul.mubr.f32.gmra.mrb[0].mxu0 %v786
    %v1246 = vpop.f32.mrb[0].mxu0
    %v1247 = vadd.f32 %v1147, %v1246
    %v1248 = vpop.f32.mrb[0].mxu0
    %1249 = vmatprep.mubr.f32.mxu0 %v796
    %1250 = vmatmul.mubr.f32.gmra.mrb[0].mxu0 %v795
    %v1251 = vpop.f32.mrb[0].mxu0
    %v1252 = vadd.f32 %v1152, %v1251
    %v1253 = vpop.f32.mrb[0].mxu0
    %1254 = vmatprep.mubr.f32.mxu0 %v805
    %1255 = vmatmul.mubr.f32.gmra.mrb[0].mxu0 %v804
    %v1256 = vpop.f32.mrb[0].mxu0
    %v1257 = vadd.f32 %v1157, %v1256
    %v1258 = vpop.f32.mrb[0].mxu0
    %1259 = vdwg.mxu0
    %1260 = vmatprep.subr.mxu0 0.0
    %1261 = vmatpush1.msra.mxu0 %v905
    %1262 = vmatprep.subr.mxu0 0.0
    %1263 = vmatpush1.msra.mxu0 %v906
    %1264 = vmatprep.subr.mxu0 0.0
    %1265 = vmatpush1.msra.mxu0 %v907
    %1266 = vmatprep.subr.mxu0 0.0
    %1267 = vmatpush1.msra.mxu0 %v908
    %1268 = vmatprep.subr.mxu0 0.0
    %1269 = vmatpush1.msra.mxu0 %v909
    %1270 = vmatprep.subr.mxu0 0.0
    %1271 = vmatpush1.msra.mxu0 %v910
    %1272 = vmatprep.subr.mxu0 0.0
    %1273 = vmatpush1.msra.mxu0 %v911
    %1274 = vmatprep.subr.mxu0 0.0
    %1275 = vmatpush1.msra.mxu0 %v912
    %1276 = vmatprep.subr.mxu0 0.0
    %1277 = vmatpush1.msra.mxu0 %v913
    %1278 = vmatprep.subr.mxu0 0.0
    %1279 = vmatpush1.msra.mxu0 %v914
    %1280 = vmatprep.subr.mxu0 0.0
    %1281 = vmatpush1.msra.mxu0 %v915
    %1282 = vmatprep.subr.mxu0 0.0
    %1283 = vmatpush1.msra.mxu0 %v916
    %1284 = vmatprep.subr.mxu0 0.0
    %1285 = vmatpush1.msra.mxu0 %v917
    %1286 = vmatprep.subr.mxu0 0.0
    %1287 = vmatpush1.msra.mxu0 %v918
    %1288 = vmatprep.subr.mxu0 0.0
    %1289 = vmatpush1.msra.mxu0 %v919
    %1290 = vmatprep.subr.mxu0 0.0
    %1291 = vmatpush1.msra.mxu0 %v920
    %1292 = vmatprep.subr.mxu0 0.0
    %1293 = vmatpush1.msra.mxu0 %v921
    %1294 = vmatprep.subr.mxu0 0.0
    %1295 = vmatpush1.msra.mxu0 %v922
    %1296 = vmatprep.subr.mxu0 0.0
    %1297 = vmatpush1.msra.mxu0 %v923
    %1298 = vmatprep.subr.mxu0 0.0
    %1299 = vmatpush1.msra.mxu0 %v924
    %1300 = vmatprep.subr.mxu0 0.0
    %1301 = vmatpush1.msra.mxu0 %v925
    %1302 = vmatprep.subr.mxu0 0.0
    %1303 = vmatpush1.msra.mxu0 %v926
    %1304 = vmatprep.subr.mxu0 0.0
    %1305 = vmatpush1.msra.mxu0 %v927
    %1306 = vmatprep.subr.mxu0 0.0
    %1307 = vmatpush1.msra.mxu0 %v928
    %1308 = vmatprep.subr.mxu0 0.0
    %1309 = vmatpush1.msra.mxu0 %v929
    %1310 = vmatprep.subr.mxu0 0.0
    %1311 = vmatpush1.msra.mxu0 %v930
    %1312 = vmatprep.subr.mxu0 0.0
    %1313 = vmatpush1.msra.mxu0 %v931
    %1314 = vmatprep.subr.mxu0 0.0
    %1315 = vmatpush1.msra.mxu0 %v932
    %1316 = vmatprep.subr.mxu0 0.0
    %1317 = vmatpush1.msra.mxu0 %v933
    %1318 = vmatprep.subr.mxu0 0.0
    %1319 = vmatpush1.msra.mxu0 %v934
    %1320 = vmatprep.subr.mxu0 0.0
    %1321 = vmatpush1.msra.mxu0 %v935
    %1322 = vmatprep.subr.mxu0 0.0
    %1323 = vmatpush1.msra.mxu0 %v936
    %1324 = vmatprep.mubr.f32.mxu0 %v753
    %1325 = vmatmul.mubr.f32.gmra.mrb[0].mxu0 %v752
    %v1326 = vpop.f32.mrb[0].mxu0
    %v1327 = vadd.f32 %v1227, %v1326
    %v1328 = vpop.f32.mrb[0].mxu0
    %1329 = vmatprep.mubr.f32.mxu0 %v762
    %1330 = vmatmul.mubr.f32.gmra.mrb[0].mxu0 %v761
    %v1331 = vpop.f32.mrb[0].mxu0
    %v1332 = vadd.f32 %v1232, %v1331
    %v1333 = vpop.f32.mrb[0].mxu0
    %1334 = vmatprep.mubr.f32.mxu0 %v771
    %1335 = vmatmul.mubr.f32.gmra.mrb[0].mxu0 %v770
    %v1336 = vpop.f32.mrb[0].mxu0
    %v1337 = vadd.f32 %v1237, %v1336
    %v1338 = vpop.f32.mrb[0].mxu0
    %1339 = vmatprep.mubr.f32.mxu0 %v780
    %1340 = vmatmul.mubr.f32.gmra.mrb[0].mxu0 %v779
    %v1341 = vpop.f32.mrb[0].mxu0
    %v1342 = vadd.f32 %v1242, %v1341
    %v1343 = vpop.f32.mrb[0].mxu0
    %1344 = vmatprep.mubr.f32.mxu0 %v789
    %1345 = vmatmul.mubr.f32.gmra.mrb[0].mxu0 %v788
    %v1346 = vpop.f32.mrb[0].mxu0
    %v1347 = vadd.f32 %v1247, %v1346
    %v1348 = vpop.f32.mrb[0].mxu0
    %1349 = vmatprep.mubr.f32.mxu0 %v798
    %1350 = vmatmul.mubr.f32.gmra.mrb[0].mxu0 %v797
    %v1351 = vpop.f32.mrb[0].mxu0
    %v1352 = vadd.f32 %v1252, %v1351
    %v1353 = vpop.f32.mrb[0].mxu0
    %1354 = vmatprep.mubr.f32.mxu0 %v807
    %1355 = vmatmul.mubr.f32.gmra.mrb[0].mxu0 %v806
    %v1356 = vpop.f32.mrb[0].mxu0
    %v1357 = vadd.f32 %v1257, %v1356
    %v1358 = vpop.f32.mrb[0].mxu0
    %1359 = vdwg.mxu0
    %1360 = vmatprep.subr.mxu0 0.0
    %1361 = vmatpush1.msra.mxu0 %v937
    %1362 = vmatprep.subr.mxu0 0.0
    %1363 = vmatpush1.msra.mxu0 %v938
    %1364 = vmatprep.subr.mxu0 0.0
    %1365 = vmatpush1.msra.mxu0 %v939
    %1366 = vmatprep.subr.mxu0 0.0
    %1367 = vmatpush1.msra.mxu0 %v940
    %1368 = vmatprep.subr.mxu0 0.0
    %1369 = vmatpush1.msra.mxu0 %v941
    %1370 = vmatprep.subr.mxu0 0.0
    %1371 = vmatpush1.msra.mxu0 %v942
    %1372 = vmatprep.subr.mxu0 0.0
    %1373 = vmatpush1.msra.mxu0 %v943
    %1374 = vmatprep.subr.mxu0 0.0
    %1375 = vmatpush1.msra.mxu0 %v944
    %1376 = vmatprep.subr.mxu0 0.0
    %1377 = vmatpush1.msra.mxu0 %v945
    %1378 = vmatprep.subr.mxu0 0.0
    %1379 = vmatpush1.msra.mxu0 %v946
    %1380 = vmatprep.subr.mxu0 0.0
    %1381 = vmatpush1.msra.mxu0 %v947
    %1382 = vmatprep.subr.mxu0 0.0
    %1383 = vmatpush1.msra.mxu0 %v948
    %1384 = vmatprep.subr.mxu0 0.0
    %1385 = vmatpush1.msra.mxu0 %v949
    %1386 = vmatprep.subr.mxu0 0.0
    %1387 = vmatpush1.msra.mxu0 %v950
    %1388 = vmatprep.subr.mxu0 0.0
    %1389 = vmatpush1.msra.mxu0 %v951
    %1390 = vmatprep.subr.mxu0 0.0
    %1391 = vmatpush1.msra.mxu0 %v952
    %1392 = vmatprep.subr.mxu0 0.0
    %1393 = vmatpush1.msra.mxu0 0.0
    %1394 = vmatprep.subr.mxu0 0.0
    %1395 = vmatpush1.msra.mxu0 0.0
    %1396 = vmatprep.subr.mxu0 0.0
    %1397 = vmatpush1.msra.mxu0 0.0
    %1398 = vmatprep.subr.mxu0 0.0
    %1399 = vmatpush1.msra.mxu0 0.0
    %1400 = vmatprep.subr.mxu0 0.0
    %1401 = vmatpush1.msra.mxu0 0.0
    %1402 = vmatprep.subr.mxu0 0.0
    %1403 = vmatpush1.msra.mxu0 0.0
    %1404 = vmatprep.subr.mxu0 0.0
    %1405 = vmatpush1.msra.mxu0 0.0
    %1406 = vmatprep.subr.mxu0 0.0
    %1407 = vmatpush1.msra.mxu0 0.0
    %1408 = vmatprep.subr.mxu0 0.0
    %1409 = vmatpush1.msra.mxu0 0.0
    %1410 = vmatprep.subr.mxu0 0.0
    %1411 = vmatpush1.msra.mxu0 0.0
    %1412 = vmatprep.subr.mxu0 0.0
    %1413 = vmatpush1.msra.mxu0 0.0
    %1414 = vmatprep.subr.mxu0 0.0
    %1415 = vmatpush1.msra.mxu0 0.0
    %1416 = vmatprep.subr.mxu0 0.0
    %1417 = vmatpush1.msra.mxu0 0.0
    %1418 = vmatprep.subr.mxu0 0.0
    %1419 = vmatpush1.msra.mxu0 0.0
    %1420 = vmatprep.subr.mxu0 0.0
    %1421 = vmatpush1.msra.mxu0 0.0
    %1422 = vmatprep.subr.mxu0 0.0
    %1423 = vmatpush1.msra.mxu0 0.0
    %1424 = vmatprep.mubr.f32.mxu0 0.0
    %1425 = vmatmul.mubr.f32.gmra.mrb[0].mxu0 %v754
    %v1426 = vpop.f32.mrb[0].mxu0
    %v1427 = vadd.f32 %v1327, %v1426
    %v1428 = vpop.f32.mrb[0].mxu0
    %1429 = vmatprep.mubr.f32.mxu0 0.0
    %1430 = vmatmul.mubr.f32.gmra.mrb[0].mxu0 %v763
    %v1431 = vpop.f32.mrb[0].mxu0
    %v1432 = vadd.f32 %v1332, %v1431
    %v1433 = vpop.f32.mrb[0].mxu0
    %1434 = vmatprep.mubr.f32.mxu0 0.0
    %1435 = vmatmul.mubr.f32.gmra.mrb[0].mxu0 %v772
    %v1436 = vpop.f32.mrb[0].mxu0
    %v1437 = vadd.f32 %v1337, %v1436
    %v1438 = vpop.f32.mrb[0].mxu0
    %1439 = vmatprep.mubr.f32.mxu0 0.0
    %1440 = vmatmul.mubr.f32.gmra.mrb[0].mxu0 %v781
    %v1441 = vpop.f32.mrb[0].mxu0
    %v1442 = vadd.f32 %v1342, %v1441
    %v1443 = vpop.f32.mrb[0].mxu0
    %1444 = vmatprep.mubr.f32.mxu0 0.0
    %1445 = vmatmul.mubr.f32.gmra.mrb[0].mxu0 %v790
    %v1446 = vpop.f32.mrb[0].mxu0
    %v1447 = vadd.f32 %v1347, %v1446
    %v1448 = vpop.f32.mrb[0].mxu0
    %1449 = vmatprep.mubr.f32.mxu0 0.0
    %1450 = vmatmul.mubr.f32.gmra.mrb[0].mxu0 %v799
    %v1451 = vpop.f32.mrb[0].mxu0
    %v1452 = vadd.f32 %v1352, %v1451
    %v1453 = vpop.f32.mrb[0].mxu0
    %1454 = vmatprep.mubr.f32.mxu0 0.0
    %1455 = vmatmul.mubr.f32.gmra.mrb[0].mxu0 %v808
    %v1456 = vpop.f32.mrb[0].mxu0
    %v1457 = vadd.f32 %v1357, %v1456
    %v1458 = vpop.f32.mrb[0].mxu0
    %1459 = vdwg.mxu0
    %v1460 = vmax.f32 %v1427, 0.0
    %v1461 = vmax.f32 %v1432, 0.0
    %v1462 = vmax.f32 %v1437, 0.0
    %v1463 = vmax.f32 %v1442, 0.0
    %v1464 = vmax.f32 %v1447, 0.0
    %v1465 = vmax.f32 %v1452, 0.0
    %v1466 = vmax.f32 %v1457, 0.0
    %1467 = vst [vmem:[#allocation2 + $0x6] sm:$0xff] %v1460
    %1468 = vst [vmem:[#allocation2 + $0xe] sm:$0xff] %v1461
    %1469 = vst [vmem:[#allocation2 + $0x16] sm:$0xff] %v1462
    %1470 = vst [vmem:[#allocation2 + $0x1e] sm:$0xff] %v1463
    %1471 = vst [vmem:[#allocation2 + $0x26] sm:$0xff] %v1464
    %1472 = vst [vmem:[#allocation2 + $0x2e] sm:$0xff] %v1465
    %1473 = vst [vmem:[#allocation2 + $0x36] sm:$0x3] %v1466
    %v1474 = vld [vmem:[#allocation2] sm:$0xff]
    %v1475 = vld [vmem:[#allocation2 + $0x8] sm:$0xff]
    %v1476 = vld [vmem:[#allocation2 + $0x10] sm:$0xff]
    %v1477 = vld [vmem:[#allocation2 + $0x18] sm:$0xff]
    %v1478 = vld [vmem:[#allocation2 + $0x20] sm:$0xff]
    %v1479 = vld [vmem:[#allocation2 + $0x28] sm:$0xff]
    %v1480 = vld [vmem:[#allocation2 + $0x30] sm:$0x3]
    %v1481 = vmul.f32 %v1474, %v308
    %v1482 = vmul.f32 %v1475, %v313
    %v1483 = vmul.f32 %v1476, %v318
    %v1484 = vmul.f32 %v1477, %v323
    %v1485 = vmul.f32 %v1478, %v328
    %v1486 = vmul.f32 %v1479, %v333
    %v1487 = vmul.f32 %v1480, %v338
    %1488 = vst [vmem:[#allocation3] sm:$0xff] %v1481
    %1489 = vst [vmem:[#allocation3 + $0x48] sm:$0xff] %v1482
    %1490 = vst [vmem:[#allocation3 + $0x90] sm:$0xff] %v1483
    %1491 = vst [vmem:[#allocation3 + $0xd8] sm:$0xff] %v1484
    %1492 = vst [vmem:[#allocation3 + $0x120] sm:$0xff] %v1485
    %1493 = vst [vmem:[#allocation3 + $0x168] sm:$0xff] %v1486
    %1494 = vst [vmem:[#allocation3 + $0x1b0] sm:$0x3] %v1487
    %v1495 = vld [vmem:[#allocation2 + $0x1] sm:$0xff]
    %v1496 = vld [vmem:[#allocation2 + $0x9] sm:$0xff]
    %v1497 = vld [vmem:[#allocation2 + $0x11] sm:$0xff]
    %v1498 = vld [vmem:[#allocation2 + $0x19] sm:$0xff]
    %v1499 = vld [vmem:[#allocation2 + $0x21] sm:$0xff]
    %v1500 = vld [vmem:[#allocation2 + $0x29] sm:$0xff]
    %v1501 = vld [vmem:[#allocation2 + $0x31] sm:$0x3]
    %v1502 = vmul.f32 %v1495, %v363
    %v1503 = vmul.f32 %v1496, %v367
    %v1504 = vmul.f32 %v1497, %v371
    %v1505 = vmul.f32 %v1498, %v375
    %v1506 = vmul.f32 %v1499, %v379
    %v1507 = vmul.f32 %v1500, %v383
    %v1508 = vmul.f32 %v1501, %v387
    %1509 = vst [vmem:[#allocation3 + $0x8] sm:$0xff] %v1502
    %1510 = vst [vmem:[#allocation3 + $0x50] sm:$0xff] %v1503
    %1511 = vst [vmem:[#allocation3 + $0x98] sm:$0xff] %v1504
    %1512 = vst [vmem:[#allocation3 + $0xe0] sm:$0xff] %v1505
    %1513 = vst [vmem:[#allocation3 + $0x128] sm:$0xff] %v1506
    %1514 = vst [vmem:[#allocation3 + $0x170] sm:$0xff] %v1507
    %1515 = vst [vmem:[#allocation3 + $0x1b8] sm:$0x3] %v1508
    %v1516 = vld [vmem:[#allocation2 + $0x2] sm:$0xff]
    %v1517 = vld [vmem:[#allocation2 + $0xa] sm:$0xff]
    %v1518 = vld [vmem:[#allocation2 + $0x12] sm:$0xff]
    %v1519 = vld [vmem:[#allocation2 + $0x1a] sm:$0xff]
    %v1520 = vld [vmem:[#allocation2 + $0x22] sm:$0xff]
    %v1521 = vld [vmem:[#allocation2 + $0x2a] sm:$0xff]
    %v1522 = vld [vmem:[#allocation2 + $0x32] sm:$0x3]
    %v1523 = vmul.f32 %v1516, %v412
    %v1524 = vmul.f32 %v1517, %v416
    %v1525 = vmul.f32 %v1518, %v420
    %v1526 = vmul.f32 %v1519, %v424
    %v1527 = vmul.f32 %v1520, %v428
    %v1528 = vmul.f32 %v1521, %v432
    %v1529 = vmul.f32 %v1522, %v436
    %1530 = vst [vmem:[#allocation3 + $0x10] sm:$0xff] %v1523
    %1531 = vst [vmem:[#allocation3 + $0x58] sm:$0xff] %v1524
    %1532 = vst [vmem:[#allocation3 + $0xa0] sm:$0xff] %v1525
    %1533 = vst [vmem:[#allocation3 + $0xe8] sm:$0xff] %v1526
    %1534 = vst [vmem:[#allocation3 + $0x130] sm:$0xff] %v1527
    %1535 = vst [vmem:[#allocation3 + $0x178] sm:$0xff] %v1528
    %1536 = vst [vmem:[#allocation3 + $0x1c0] sm:$0x3] %v1529
    %v1537 = vld [vmem:[#allocation2 + $0x5] sm:$0xff]
    %v1538 = vld [vmem:[#allocation2 + $0xd] sm:$0xff]
    %v1539 = vld [vmem:[#allocation2 + $0x15] sm:$0xff]
    %v1540 = vld [vmem:[#allocation2 + $0x1d] sm:$0xff]
    %v1541 = vld [vmem:[#allocation2 + $0x25] sm:$0xff]
    %v1542 = vld [vmem:[#allocation2 + $0x2d] sm:$0xff]
    %v1543 = vld [vmem:[#allocation2 + $0x35] sm:$0x3]
    %v1544 = vmul.f32 %v1537, %v461
    %v1545 = vmul.f32 %v1538, %v465
    %v1546 = vmul.f32 %v1539, %v469
    %v1547 = vmul.f32 %v1540, %v473
    %v1548 = vmul.f32 %v1541, %v477
    %v1549 = vmul.f32 %v1542, %v481
    %v1550 = vmul.f32 %v1543, %v485
    %1551 = vst [vmem:[#allocation3 + $0x18] sm:$0xff] %v1544
    %1552 = vst [vmem:[#allocation3 + $0x60] sm:$0xff] %v1545
    %1553 = vst [vmem:[#allocation3 + $0xa8] sm:$0xff] %v1546
    %1554 = vst [vmem:[#allocation3 + $0xf0] sm:$0xff] %v1547
    %1555 = vst [vmem:[#allocation3 + $0x138] sm:$0xff] %v1548
    %1556 = vst [vmem:[#allocation3 + $0x180] sm:$0xff] %v1549
    %1557 = vst [vmem:[#allocation3 + $0x1c8] sm:$0x3] %v1550
    %v1558 = vld [vmem:[#allocation2 + $0x6] sm:$0xff]
    %v1559 = vld [vmem:[#allocation2 + $0xe] sm:$0xff]
    %v1560 = vld [vmem:[#allocation2 + $0x16] sm:$0xff]
    %v1561 = vld [vmem:[#allocation2 + $0x1e] sm:$0xff]
    %v1562 = vld [vmem:[#allocation2 + $0x26] sm:$0xff]
    %v1563 = vld [vmem:[#allocation2 + $0x2e] sm:$0xff]
    %v1564 = vld [vmem:[#allocation2 + $0x36] sm:$0x3]
    %v1565 = vmul.f32 %v1558, %v510
    %v1566 = vmul.f32 %v1559, %v514
    %v1567 = vmul.f32 %v1560, %v518
    %v1568 = vmul.f32 %v1561, %v522
    %v1569 = vmul.f32 %v1562, %v526
    %v1570 = vmul.f32 %v1563, %v530
    %v1571 = vmul.f32 %v1564, %v534
    %1572 = vst [vmem:[#allocation3 + $0x20] sm:$0xff] %v1565
    %1573 = vst [vmem:[#allocation3 + $0x68] sm:$0xff] %v1566
    %1574 = vst [vmem:[#allocation3 + $0xb0] sm:$0xff] %v1567
    %1575 = vst [vmem:[#allocation3 + $0xf8] sm:$0xff] %v1568
    %1576 = vst [vmem:[#allocation3 + $0x140] sm:$0xff] %v1569
    %1577 = vst [vmem:[#allocation3 + $0x188] sm:$0xff] %v1570
    %1578 = vst [vmem:[#allocation3 + $0x1d0] sm:$0x3] %v1571
    %v1579 = vld [vmem:[#allocation2 + $0x7] sm:$0xff]
    %v1580 = vld [vmem:[#allocation2 + $0xf] sm:$0xff]
    %v1581 = vld [vmem:[#allocation2 + $0x17] sm:$0xff]
    %v1582 = vld [vmem:[#allocation2 + $0x1f] sm:$0xff]
    %v1583 = vld [vmem:[#allocation2 + $0x27] sm:$0xff]
    %v1584 = vld [vmem:[#allocation2 + $0x2f] sm:$0xff]
    %v1585 = vld [vmem:[#allocation2 + $0x37] sm:$0x3]
    %v1586 = vmul.f32 %v1579, %v559
    %v1587 = vmul.f32 %v1580, %v563
    %v1588 = vmul.f32 %v1581, %v567
    %v1589 = vmul.f32 %v1582, %v571
    %v1590 = vmul.f32 %v1583, %v575
    %v1591 = vmul.f32 %v1584, %v579
    %v1592 = vmul.f32 %v1585, %v583
    %1593 = vst [vmem:[#allocation3 + $0x28] sm:$0xff] %v1586
    %1594 = vst [vmem:[#allocation3 + $0x70] sm:$0xff] %v1587
    %1595 = vst [vmem:[#allocation3 + $0xb8] sm:$0xff] %v1588
    %1596 = vst [vmem:[#allocation3 + $0x100] sm:$0xff] %v1589
    %1597 = vst [vmem:[#allocation3 + $0x148] sm:$0xff] %v1590
    %1598 = vst [vmem:[#allocation3 + $0x190] sm:$0xff] %v1591
    %1599 = vst [vmem:[#allocation3 + $0x1d8] sm:$0x3] %v1592
    %v1600 = vld [vmem:[#allocation2 + $0xa] sm:$0xff]
    %v1601 = vld [vmem:[#allocation2 + $0x12] sm:$0xff]
    %v1602 = vld [vmem:[#allocation2 + $0x1a] sm:$0xff]
    %v1603 = vld [vmem:[#allocation2 + $0x22] sm:$0xff]
    %v1604 = vld [vmem:[#allocation2 + $0x2a] sm:$0xff]
    %v1605 = vld [vmem:[#allocation2 + $0x32] sm:$0xff]
    %v1606 = vld [vmem:[#allocation2 + $0x3a] sm:$0x3]
    %v1607 = vmul.f32 %v1600, %v608
    %v1608 = vmul.f32 %v1601, %v612
    %v1609 = vmul.f32 %v1602, %v616
    %v1610 = vmul.f32 %v1603, %v620
    %v1611 = vmul.f32 %v1604, %v624
    %v1612 = vmul.f32 %v1605, %v628
    %v1613 = vmul.f32 %v1606, %v632
    %1614 = vst [vmem:[#allocation3 + $0x30] sm:$0xff] %v1607
    %1615 = vst [vmem:[#allocation3 + $0x78] sm:$0xff] %v1608
    %1616 = vst [vmem:[#allocation3 + $0xc0] sm:$0xff] %v1609
    %1617 = vst [vmem:[#allocation3 + $0x108] sm:$0xff] %v1610
    %1618 = vst [vmem:[#allocation3 + $0x150] sm:$0xff] %v1611
    %1619 = vst [vmem:[#allocation3 + $0x198] sm:$0xff] %v1612
    %1620 = vst [vmem:[#allocation3 + $0x1e0] sm:$0x3] %v1613
    %v1621 = vld [vmem:[#allocation2 + $0xb] sm:$0xff]
    %v1622 = vld [vmem:[#allocation2 + $0x13] sm:$0xff]
    %v1623 = vld [vmem:[#allocation2 + $0x1b] sm:$0xff]
    %v1624 = vld [vmem:[#allocation2 + $0x23] sm:$0xff]
    %v1625 = vld [vmem:[#allocation2 + $0x2b] sm:$0xff]
    %v1626 = vld [vmem:[#allocation2 + $0x33] sm:$0xff]
    %v1627 = vld [vmem:[#allocation2 + $0x3b] sm:$0x3]
    %v1628 = vmul.f32 %v1621, %v657
    %v1629 = vmul.f32 %v1622, %v661
    %v1630 = vmul.f32 %v1623, %v665
    %v1631 = vmul.f32 %v1624, %v669
    %v1632 = vmul.f32 %v1625, %v673
    %v1633 = vmul.f32 %v1626, %v677
    %v1634 = vmul.f32 %v1627, %v681
    %1635 = vst [vmem:[#allocation3 + $0x38] sm:$0xff] %v1628
    %1636 = vst [vmem:[#allocation3 + $0x80] sm:$0xff] %v1629
    %1637 = vst [vmem:[#allocation3 + $0xc8] sm:$0xff] %v1630
    %1638 = vst [vmem:[#allocation3 + $0x110] sm:$0xff] %v1631
    %1639 = vst [vmem:[#allocation3 + $0x158] sm:$0xff] %v1632
    %1640 = vst [vmem:[#allocation3 + $0x1a0] sm:$0xff] %v1633
    %1641 = vst [vmem:[#allocation3 + $0x1e8] sm:$0x3] %v1634
    %v1642 = vld [vmem:[#allocation2 + $0xc] sm:$0xff]
    %v1643 = vld [vmem:[#allocation2 + $0x14] sm:$0xff]
    %v1644 = vld [vmem:[#allocation2 + $0x1c] sm:$0xff]
    %v1645 = vld [vmem:[#allocation2 + $0x24] sm:$0xff]
    %v1646 = vld [vmem:[#allocation2 + $0x2c] sm:$0xff]
    %v1647 = vld [vmem:[#allocation2 + $0x34] sm:$0xff]
    %v1648 = vld [vmem:[#allocation2 + $0x3c] sm:$0x3]
    %v1649 = vmul.f32 %v1642, %v706
    %v1650 = vmul.f32 %v1643, %v710
    %v1651 = vmul.f32 %v1644, %v714
    %v1652 = vmul.f32 %v1645, %v718
    %v1653 = vmul.f32 %v1646, %v722
    %v1654 = vmul.f32 %v1647, %v726
    %v1655 = vmul.f32 %v1648, %v730
    %1656 = vst [vmem:[#allocation3 + $0x40] sm:$0xff] %v1649
    %1657 = vst [vmem:[#allocation3 + $0x88] sm:$0xff] %v1650
    %1658 = vst [vmem:[#allocation3 + $0xd0] sm:$0xff] %v1651
    %1659 = vst [vmem:[#allocation3 + $0x118] sm:$0xff] %v1652
    %1660 = vst [vmem:[#allocation3 + $0x160] sm:$0xff] %v1653
    %1661 = vst [vmem:[#allocation3 + $0x1a8] sm:$0xff] %v1654
    %1662 = vst [vmem:[#allocation3 + $0x1f0] sm:$0x3] %v1655
    %v1663 = vld [vmem:[#allocation3] sm:$0xff]
    %v1664 = vld [vmem:[#allocation3 + $0x8] sm:$0xff]
    %v1665 = vld [vmem:[#allocation3 + $0x10] sm:$0xff]
    %v1666 = vld [vmem:[#allocation3 + $0x18] sm:$0xff]
    %v1667 = vld [vmem:[#allocation3 + $0x20] sm:$0xff]
    %v1668 = vld [vmem:[#allocation3 + $0x28] sm:$0xff]
    %v1669 = vld [vmem:[#allocation3 + $0x30] sm:$0xff]
    %v1670 = vld [vmem:[#allocation3 + $0x38] sm:$0xff]
    %v1671 = vld [vmem:[#allocation3 + $0x40] sm:$0xff]
    %v1672 = vld [vmem:[#allocation3 + $0x48] sm:$0xff]
    %v1673 = vld [vmem:[#allocation3 + $0x50] sm:$0xff]
    %v1674 = vld [vmem:[#allocation3 + $0x58] sm:$0xff]
    %v1675 = vld [vmem:[#allocation3 + $0x60] sm:$0xff]
    %v1676 = vld [vmem:[#allocation3 + $0x68] sm:$0xff]
    %v1677 = vld [vmem:[#allocation3 + $0x70] sm:$0xff]
    %v1678 = vld [vmem:[#allocation3 + $0x78] sm:$0xff]
    %v1679 = vld [vmem:[#allocation3 + $0x80] sm:$0xff]
    %v1680 = vld [vmem:[#allocation3 + $0x88] sm:$0xff]
    %v1681 = vld [vmem:[#allocation3 + $0x90] sm:$0xff]
    %v1682 = vld [vmem:[#allocation3 + $0x98] sm:$0xff]
    %v1683 = vld [vmem:[#allocation3 + $0xa0] sm:$0xff]
    %v1684 = vld [vmem:[#allocation3 + $0xa8] sm:$0xff]
    %v1685 = vld [vmem:[#allocation3 + $0xb0] sm:$0xff]
    %v1686 = vld [vmem:[#allocation3 + $0xb8] sm:$0xff]
    %v1687 = vld [vmem:[#allocation3 + $0xc0] sm:$0xff]
    %v1688 = vld [vmem:[#allocation3 + $0xc8] sm:$0xff]
    %v1689 = vld [vmem:[#allocation3 + $0xd0] sm:$0xff]
    %v1690 = vld [vmem:[#allocation3 + $0xd8] sm:$0xff]
    %v1691 = vld [vmem:[#allocation3 + $0xe0] sm:$0xff]
    %v1692 = vld [vmem:[#allocation3 + $0xe8] sm:$0xff]
    %v1693 = vld [vmem:[#allocation3 + $0xf0] sm:$0xff]
    %v1694 = vld [vmem:[#allocation3 + $0xf8] sm:$0xff]
    %v1695 = vld [vmem:[#allocation3 + $0x100] sm:$0xff]
    %v1696 = vld [vmem:[#allocation3 + $0x108] sm:$0xff]
    %v1697 = vld [vmem:[#allocation3 + $0x110] sm:$0xff]
    %v1698 = vld [vmem:[#allocation3 + $0x118] sm:$0xff]
    %v1699 = vld [vmem:[#allocation3 + $0x120] sm:$0xff]
    %v1700 = vld [vmem:[#allocation3 + $0x128] sm:$0xff]
    %v1701 = vld [vmem:[#allocation3 + $0x130] sm:$0xff]
    %v1702 = vld [vmem:[#allocation3 + $0x138] sm:$0xff]
    %v1703 = vld [vmem:[#allocation3 + $0x140] sm:$0xff]
    %v1704 = vld [vmem:[#allocation3 + $0x148] sm:$0xff]
    %v1705 = vld [vmem:[#allocation3 + $0x150] sm:$0xff]
    %v1706 = vld [vmem:[#allocation3 + $0x158] sm:$0xff]
    %v1707 = vld [vmem:[#allocation3 + $0x160] sm:$0xff]
    %v1708 = vld [vmem:[#allocation3 + $0x168] sm:$0xff]
    %v1709 = vld [vmem:[#allocation3 + $0x170] sm:$0xff]
    %v1710 = vld [vmem:[#allocation3 + $0x178] sm:$0xff]
    %v1711 = vld [vmem:[#allocation3 + $0x180] sm:$0xff]
    %v1712 = vld [vmem:[#allocation3 + $0x188] sm:$0xff]
    %v1713 = vld [vmem:[#allocation3 + $0x190] sm:$0xff]
    %v1714 = vld [vmem:[#allocation3 + $0x198] sm:$0xff]
    %v1715 = vld [vmem:[#allocation3 + $0x1a0] sm:$0xff]
    %v1716 = vld [vmem:[#allocation3 + $0x1a8] sm:$0xff]
    %v1717 = vld [vmem:[#allocation3 + $0x1b0] sm:$0x3]
    %v1718 = vld [vmem:[#allocation3 + $0x1b8] sm:$0x3]
    %v1719 = vld [vmem:[#allocation3 + $0x1c0] sm:$0x3]
    %v1720 = vld [vmem:[#allocation3 + $0x1c8] sm:$0x3]
    %v1721 = vld [vmem:[#allocation3 + $0x1d0] sm:$0x3]
    %v1722 = vld [vmem:[#allocation3 + $0x1d8] sm:$0x3]
    %v1723 = vld [vmem:[#allocation3 + $0x1e0] sm:$0x3]
    %v1724 = vld [vmem:[#allocation3 + $0x1e8] sm:$0x3]
    %v1725 = vld [vmem:[#allocation3 + $0x1f0] sm:$0x3]
    %v1726 = vld [vmem:[#allocation6] sm:$0xff]
    %v1727 = vld [vmem:[#allocation6 + $0x8] sm:$0xff]
    %v1728 = vld [vmem:[#allocation6 + $0x10] sm:$0xff]
    %v1729 = vld [vmem:[#allocation6 + $0x18] sm:$0xff]
    %v1730 = vld [vmem:[#allocation6 + $0x20] sm:$0xff]
    %v1731 = vld [vmem:[#allocation6 + $0x28] sm:$0xff]
    %v1732 = vld [vmem:[#allocation6 + $0x30] sm:$0xff]
    %v1733 = vld [vmem:[#allocation6 + $0x38] sm:$0xff]
    %v1734 = vld [vmem:[#allocation6 + $0x40] sm:$0xff]
    %v1735 = vld [vmem:[#allocation6 + $0x48] sm:$0xff]
    %v1736 = vld [vmem:[#allocation6 + $0x50] sm:$0xff]
    %v1737 = vld [vmem:[#allocation6 + $0x58] sm:$0xff]
    %v1738 = vld [vmem:[#allocation6 + $0x60] sm:$0xff]
    %v1739 = vld [vmem:[#allocation6 + $0x68] sm:$0xff]
    %v1740 = vld [vmem:[#allocation6 + $0x70] sm:$0xff]
    %v1741 = vld [vmem:[#allocation6 + $0x78] sm:$0xff]
    %v1742 = vld [vmem:[#allocation6 + $0x80] sm:$0xff]
    %v1743 = vld [vmem:[#allocation6 + $0x88] sm:$0xff]
    %v1744 = vld [vmem:[#allocation6 + $0x90] sm:$0xff]
    %v1745 = vld [vmem:[#allocation6 + $0x98] sm:$0xff]
    %v1746 = vld [vmem:[#allocation6 + $0xa0] sm:$0xff]
    %v1747 = vld [vmem:[#allocation6 + $0xa8] sm:$0xff]
    %v1748 = vld [vmem:[#allocation6 + $0xb0] sm:$0xff]
    %v1749 = vld [vmem:[#allocation6 + $0xb8] sm:$0xff]
    %v1750 = vld [vmem:[#allocation6 + $0xc0] sm:$0xff]
    %v1751 = vld [vmem:[#allocation6 + $0xc8] sm:$0xff]
    %v1752 = vld [vmem:[#allocation6 + $0xd0] sm:$0xff]
    %v1753 = vld [vmem:[#allocation6 + $0xd8] sm:$0xff]
    %v1754 = vld [vmem:[#allocation6 + $0xe0] sm:$0xff]
    %v1755 = vld [vmem:[#allocation6 + $0xe8] sm:$0xff]
    %v1756 = vld [vmem:[#allocation6 + $0xf0] sm:$0xff]
    %v1757 = vld [vmem:[#allocation6 + $0xf8] sm:$0xff]
    %v1758 = vld [vmem:[#allocation6 + $0x100] sm:$0xff]
    %v1759 = vld [vmem:[#allocation6 + $0x108] sm:$0xff]
    %v1760 = vld [vmem:[#allocation6 + $0x110] sm:$0xff]
    %v1761 = vld [vmem:[#allocation6 + $0x118] sm:$0xff]
    %v1762 = vld [vmem:[#allocation6 + $0x120] sm:$0xff]
    %v1763 = vld [vmem:[#allocation6 + $0x128] sm:$0xff]
    %v1764 = vld [vmem:[#allocation6 + $0x130] sm:$0xff]
    %v1765 = vld [vmem:[#allocation6 + $0x138] sm:$0xff]
    %v1766 = vld [vmem:[#allocation6 + $0x140] sm:$0xff]
    %v1767 = vld [vmem:[#allocation6 + $0x148] sm:$0xff]
    %v1768 = vld [vmem:[#allocation6 + $0x150] sm:$0xff]
    %v1769 = vld [vmem:[#allocation6 + $0x158] sm:$0xff]
    %v1770 = vld [vmem:[#allocation6 + $0x160] sm:$0xff]
    %v1771 = vld [vmem:[#allocation6 + $0x168] sm:$0xff]
    %v1772 = vld [vmem:[#allocation6 + $0x170] sm:$0xff]
    %v1773 = vld [vmem:[#allocation6 + $0x178] sm:$0xff]
    %v1774 = vld [vmem:[#allocation6 + $0x180] sm:$0xff]
    %v1775 = vld [vmem:[#allocation6 + $0x188] sm:$0xff]
    %v1776 = vld [vmem:[#allocation6 + $0x190] sm:$0xff]
    %v1777 = vld [vmem:[#allocation6 + $0x198] sm:$0xff]
    %v1778 = vld [vmem:[#allocation6 + $0x1a0] sm:$0xff]
    %v1779 = vld [vmem:[#allocation6 + $0x1a8] sm:$0xff]
    %v1780 = vld [vmem:[#allocation6 + $0x1b0] sm:$0xff]
    %v1781 = vld [vmem:[#allocation6 + $0x1b8] sm:$0xff]
    %v1782 = vld [vmem:[#allocation6 + $0x1c0] sm:$0xff]
    %v1783 = vld [vmem:[#allocation6 + $0x1c8] sm:$0xff]
    %v1784 = vld [vmem:[#allocation6 + $0x1d0] sm:$0xff]
    %v1785 = vld [vmem:[#allocation6 + $0x1d8] sm:$0xff]
    %v1786 = vld [vmem:[#allocation6 + $0x1e0] sm:$0xff]
    %v1787 = vld [vmem:[#allocation6 + $0x1e8] sm:$0xff]
    %v1788 = vld [vmem:[#allocation6 + $0x1f0] sm:$0xff]
    %v1789 = vld [vmem:[#allocation6 + $0x1f8] sm:$0xff]
    %v1790 = vld [vmem:[#allocation6 + $0x200] sm:$0xff]
    %v1791 = vld [vmem:[#allocation6 + $0x208] sm:$0xff]
    %v1792 = vld [vmem:[#allocation6 + $0x210] sm:$0xff]
    %v1793 = vld [vmem:[#allocation6 + $0x218] sm:$0xff]
    %v1794 = vld [vmem:[#allocation6 + $0x220] sm:$0xff]
    %v1795 = vld [vmem:[#allocation6 + $0x228] sm:$0xff]
    %v1796 = vld [vmem:[#allocation6 + $0x230] sm:$0xff]
    %v1797 = vld [vmem:[#allocation6 + $0x238] sm:$0xff]
    %v1798 = vld [vmem:[#allocation6 + $0x240] sm:$0xff]
    %v1799 = vld [vmem:[#allocation6 + $0x248] sm:$0xff]
    %v1800 = vld [vmem:[#allocation6 + $0x250] sm:$0xff]
    %v1801 = vld [vmem:[#allocation6 + $0x258] sm:$0xff]
    %v1802 = vld [vmem:[#allocation6 + $0x260] sm:$0xff]
    %v1803 = vld [vmem:[#allocation6 + $0x268] sm:$0xff]
    %v1804 = vld [vmem:[#allocation6 + $0x270] sm:$0xff]
    %v1805 = vld [vmem:[#allocation6 + $0x278] sm:$0xff]
    %v1806 = vld [vmem:[#allocation6 + $0x280] sm:$0xff]
    %v1807 = vld [vmem:[#allocation6 + $0x288] sm:$0xff]
    %v1808 = vld [vmem:[#allocation6 + $0x290] sm:$0xff]
    %v1809 = vld [vmem:[#allocation6 + $0x298] sm:$0xff]
    %v1810 = vld [vmem:[#allocation6 + $0x2a0] sm:$0xff]
    %v1811 = vld [vmem:[#allocation6 + $0x2a8] sm:$0xff]
    %v1812 = vld [vmem:[#allocation6 + $0x2b0] sm:$0xff]
    %v1813 = vld [vmem:[#allocation6 + $0x2b8] sm:$0xff]
    %v1814 = vld [vmem:[#allocation6 + $0x2c0] sm:$0xff]
    %v1815 = vld [vmem:[#allocation6 + $0x2c8] sm:$0xff]
    %v1816 = vld [vmem:[#allocation6 + $0x2d0] sm:$0xff]
    %v1817 = vld [vmem:[#allocation6 + $0x2d8] sm:$0xff]
    %v1818 = vld [vmem:[#allocation6 + $0x2e0] sm:$0xff]
    %v1819 = vld [vmem:[#allocation6 + $0x2e8] sm:$0xff]
    %v1820 = vld [vmem:[#allocation6 + $0x2f0] sm:$0xff]
    %v1821 = vld [vmem:[#allocation6 + $0x2f8] sm:$0xff]
    %v1822 = vld [vmem:[#allocation6 + $0x300] sm:$0xff]
    %v1823 = vld [vmem:[#allocation6 + $0x308] sm:$0xff]
    %v1824 = vld [vmem:[#allocation6 + $0x310] sm:$0xff]
    %v1825 = vld [vmem:[#allocation6 + $0x318] sm:$0xff]
    %v1826 = vld [vmem:[#allocation6 + $0x320] sm:$0xff]
    %v1827 = vld [vmem:[#allocation6 + $0x328] sm:$0xff]
    %v1828 = vld [vmem:[#allocation6 + $0x330] sm:$0xff]
    %v1829 = vld [vmem:[#allocation6 + $0x338] sm:$0xff]
    %v1830 = vld [vmem:[#allocation6 + $0x340] sm:$0xff]
    %v1831 = vld [vmem:[#allocation6 + $0x348] sm:$0xff]
    %v1832 = vld [vmem:[#allocation6 + $0x350] sm:$0xff]
    %v1833 = vld [vmem:[#allocation6 + $0x358] sm:$0xff]
    %v1834 = vld [vmem:[#allocation6 + $0x360] sm:$0xff]
    %v1835 = vld [vmem:[#allocation6 + $0x368] sm:$0xff]
    %v1836 = vld [vmem:[#allocation6 + $0x370] sm:$0xff]
    %v1837 = vld [vmem:[#allocation6 + $0x378] sm:$0xff]
    %v1838 = vld [vmem:[#allocation6 + $0x380] sm:$0xff]
    %v1839 = vld [vmem:[#allocation6 + $0x388] sm:$0xff]
    %v1840 = vld [vmem:[#allocation6 + $0x390] sm:$0xff]
    %v1841 = vld [vmem:[#allocation6 + $0x398] sm:$0xff]
    %v1842 = vld [vmem:[#allocation6 + $0x3a0] sm:$0xff]
    %v1843 = vld [vmem:[#allocation6 + $0x3a8] sm:$0xff]
    %v1844 = vld [vmem:[#allocation6 + $0x3b0] sm:$0xff]
    %v1845 = vld [vmem:[#allocation6 + $0x3b8] sm:$0xff]
    %v1846 = vld [vmem:[#allocation6 + $0x3c0] sm:$0xff]
    %v1847 = vld [vmem:[#allocation6 + $0x3c8] sm:$0xff]
    %v1848 = vld [vmem:[#allocation6 + $0x3d0] sm:$0xff]
    %v1849 = vld [vmem:[#allocation6 + $0x3d8] sm:$0xff]
    %v1850 = vld [vmem:[#allocation6 + $0x3e0] sm:$0xff]
    %v1851 = vld [vmem:[#allocation6 + $0x3e8] sm:$0xff]
    %v1852 = vld [vmem:[#allocation6 + $0x3f0] sm:$0xff]
    %v1853 = vld [vmem:[#allocation6 + $0x3f8] sm:$0xff]
    %v1854 = vld [vmem:[#allocation6 + $0x400] sm:$0xff]
    %v1855 = vld [vmem:[#allocation6 + $0x408] sm:$0xff]
    %v1856 = vld [vmem:[#allocation6 + $0x410] sm:$0xff]
    %v1857 = vld [vmem:[#allocation6 + $0x418] sm:$0xff]
    %v1858 = vld [vmem:[#allocation6 + $0x420] sm:$0xff]
    %v1859 = vld [vmem:[#allocation6 + $0x428] sm:$0xff]
    %v1860 = vld [vmem:[#allocation6 + $0x430] sm:$0xff]
    %v1861 = vld [vmem:[#allocation6 + $0x438] sm:$0xff]
    %v1862 = vld [vmem:[#allocation6 + $0x440] sm:$0xff]
    %v1863 = vld [vmem:[#allocation6 + $0x448] sm:$0xff]
    %v1864 = vld [vmem:[#allocation6 + $0x450] sm:$0xff]
    %v1865 = vld [vmem:[#allocation6 + $0x458] sm:$0xff]
    %v1866 = vld [vmem:[#allocation6 + $0x460] sm:$0xff]
    %v1867 = vld [vmem:[#allocation6 + $0x468] sm:$0xff]
    %v1868 = vld [vmem:[#allocation6 + $0x470] sm:$0xff]
    %v1869 = vld [vmem:[#allocation6 + $0x478] sm:$0xff]
    %v1870 = vld [vmem:[%s8] sm:$0x1]
    %v1872 = vlaneseq
    %v1873 = vshrl.u32 %v1872, 7
    %v1874 = vsub.s32 0, %v1873
    %v1875 = vrot.slane %v1870, %v1874
    %1877 = vmatprep.subr.mxu0 0.0
    %1878 = vmatpush1.msra.mxu0 %v1726
    %1879 = vmatprep.subr.mxu0 0.0
    %1880 = vmatpush1.msra.mxu0 %v1727
    %1881 = vmatprep.subr.mxu0 0.0
    %1882 = vmatpush1.msra.mxu0 %v1728
    %1883 = vmatprep.subr.mxu0 0.0
    %1884 = vmatpush1.msra.mxu0 %v1729
    %1885 = vmatprep.subr.mxu0 0.0
    %1886 = vmatpush1.msra.mxu0 %v1730
    %1887 = vmatprep.subr.mxu0 0.0
    %1888 = vmatpush1.msra.mxu0 %v1731
    %1889 = vmatprep.subr.mxu0 0.0
    %1890 = vmatpush1.msra.mxu0 %v1732
    %1891 = vmatprep.subr.mxu0 0.0
    %1892 = vmatpush1.msra.mxu0 %v1733
    %1893 = vmatprep.subr.mxu0 0.0
    %1894 = vmatpush1.msra.mxu0 %v1734
    %1895 = vmatprep.subr.mxu0 0.0
    %1896 = vmatpush1.msra.mxu0 %v1735
    %1897 = vmatprep.subr.mxu0 0.0
    %1898 = vmatpush1.msra.mxu0 %v1736
    %1899 = vmatprep.subr.mxu0 0.0
    %1900 = vmatpush1.msra.mxu0 %v1737
    %1901 = vmatprep.subr.mxu0 0.0
    %1902 = vmatpush1.msra.mxu0 %v1738
    %1903 = vmatprep.subr.mxu0 0.0
    %1904 = vmatpush1.msra.mxu0 %v1739
    %1905 = vmatprep.subr.mxu0 0.0
    %1906 = vmatpush1.msra.mxu0 %v1740
    %1907 = vmatprep.subr.mxu0 0.0
    %1908 = vmatpush1.msra.mxu0 %v1741
    %1909 = vmatprep.subr.mxu0 0.0
    %1910 = vmatpush1.msra.mxu0 %v1742
    %1911 = vmatprep.subr.mxu0 0.0
    %1912 = vmatpush1.msra.mxu0 %v1743
    %1913 = vmatprep.subr.mxu0 0.0
    %1914 = vmatpush1.msra.mxu0 %v1744
    %1915 = vmatprep.subr.mxu0 0.0
    %1916 = vmatpush1.msra.mxu0 %v1745
    %1917 = vmatprep.subr.mxu0 0.0
    %1918 = vmatpush1.msra.mxu0 %v1746
    %1919 = vmatprep.subr.mxu0 0.0
    %1920 = vmatpush1.msra.mxu0 %v1747
    %1921 = vmatprep.subr.mxu0 0.0
    %1922 = vmatpush1.msra.mxu0 %v1748
    %1923 = vmatprep.subr.mxu0 0.0
    %1924 = vmatpush1.msra.mxu0 %v1749
    %1925 = vmatprep.subr.mxu0 0.0
    %1926 = vmatpush1.msra.mxu0 %v1750
    %1927 = vmatprep.subr.mxu0 0.0
    %1928 = vmatpush1.msra.mxu0 %v1751
    %1929 = vmatprep.subr.mxu0 0.0
    %1930 = vmatpush1.msra.mxu0 %v1752
    %1931 = vmatprep.subr.mxu0 0.0
    %1932 = vmatpush1.msra.mxu0 %v1753
    %1933 = vmatprep.subr.mxu0 0.0
    %1934 = vmatpush1.msra.mxu0 %v1754
    %1935 = vmatprep.subr.mxu0 0.0
    %1936 = vmatpush1.msra.mxu0 %v1755
    %1937 = vmatprep.subr.mxu0 0.0
    %1938 = vmatpush1.msra.mxu0 %v1756
    %1939 = vmatprep.subr.mxu0 0.0
    %1940 = vmatpush1.msra.mxu0 %v1757
    %1941 = vmatprep.mubr.f32.mxu0 %v1664
    %1942 = vmatmul.mubr.f32.gmra.mrb[0].mxu0 %v1663
    %v1943 = vpop.f32.mrb[0].mxu0
    %v1944 = vadd.f32 %v1875, %v1943
    %v1945 = vpop.f32.mrb[0].mxu0
    %1946 = vmatprep.mubr.f32.mxu0 %v1673
    %1947 = vmatmul.mubr.f32.gmra.mrb[0].mxu0 %v1672
    %v1948 = vpop.f32.mrb[0].mxu0
    %v1949 = vadd.f32 %v1875, %v1948
    %v1950 = vpop.f32.mrb[0].mxu0
    %1951 = vmatprep.mubr.f32.mxu0 %v1682
    %1952 = vmatmul.mubr.f32.gmra.mrb[0].mxu0 %v1681
    %v1953 = vpop.f32.mrb[0].mxu0
    %v1954 = vadd.f32 %v1875, %v1953
    %v1955 = vpop.f32.mrb[0].mxu0
    %1956 = vmatprep.mubr.f32.mxu0 %v1691
    %1957 = vmatmul.mubr.f32.gmra.mrb[0].mxu0 %v1690
    %v1958 = vpop.f32.mrb[0].mxu0
    %v1959 = vadd.f32 %v1875, %v1958
    %v1960 = vpop.f32.mrb[0].mxu0
    %1961 = vmatprep.mubr.f32.mxu0 %v1700
    %1962 = vmatmul.mubr.f32.gmra.mrb[0].mxu0 %v1699
    %v1963 = vpop.f32.mrb[0].mxu0
    %v1964 = vadd.f32 %v1875, %v1963
    %v1965 = vpop.f32.mrb[0].mxu0
    %1966 = vmatprep.mubr.f32.mxu0 %v1709
    %1967 = vmatmul.mubr.f32.gmra.mrb[0].mxu0 %v1708
    %v1968 = vpop.f32.mrb[0].mxu0
    %v1969 = vadd.f32 %v1875, %v1968
    %v1970 = vpop.f32.mrb[0].mxu0
    %1971 = vmatprep.mubr.f32.mxu0 %v1718
    %1972 = vmatmul.mubr.f32.gmra.mrb[0].mxu0 %v1717
    %v1973 = vpop.f32.mrb[0].mxu0
    %v1974 = vadd.f32 %v1875, %v1973
    %v1975 = vpop.f32.mrb[0].mxu0
    %1976 = vdwg.mxu0
    %1977 = vmatprep.subr.mxu0 0.0
    %1978 = vmatpush1.msra.mxu0 %v1758
    %1979 = vmatprep.subr.mxu0 0.0
    %1980 = vmatpush1.msra.mxu0 %v1759
    %1981 = vmatprep.subr.mxu0 0.0
    %1982 = vmatpush1.msra.mxu0 %v1760
    %1983 = vmatprep.subr.mxu0 0.0
    %1984 = vmatpush1.msra.mxu0 %v1761
    %1985 = vmatprep.subr.mxu0 0.0
    %1986 = vmatpush1.msra.mxu0 %v1762
    %1987 = vmatprep.subr.mxu0 0.0
    %1988 = vmatpush1.msra.mxu0 %v1763
    %1989 = vmatprep.subr.mxu0 0.0
    %1990 = vmatpush1.msra.mxu0 %v1764
    %1991 = vmatprep.subr.mxu0 0.0
    %1992 = vmatpush1.msra.mxu0 %v1765
    %1993 = vmatprep.subr.mxu0 0.0
    %1994 = vmatpush1.msra.mxu0 %v1766
    %1995 = vmatprep.subr.mxu0 0.0
    %1996 = vmatpush1.msra.mxu0 %v1767
    %1997 = vmatprep.subr.mxu0 0.0
    %1998 = vmatpush1.msra.mxu0 %v1768
    %1999 = vmatprep.subr.mxu0 0.0
    %2000 = vmatpush1.msra.mxu0 %v1769
    %2001 = vmatprep.subr.mxu0 0.0
    %2002 = vmatpush1.msra.mxu0 %v1770
    %2003 = vmatprep.subr.mxu0 0.0
    %2004 = vmatpush1.msra.mxu0 %v1771
    %2005 = vmatprep.subr.mxu0 0.0
    %2006 = vmatpush1.msra.mxu0 %v1772
    %2007 = vmatprep.subr.mxu0 0.0
    %2008 = vmatpush1.msra.mxu0 %v1773
    %2009 = vmatprep.subr.mxu0 0.0
    %2010 = vmatpush1.msra.mxu0 %v1774
    %2011 = vmatprep.subr.mxu0 0.0
    %2012 = vmatpush1.msra.mxu0 %v1775
    %2013 = vmatprep.subr.mxu0 0.0
    %2014 = vmatpush1.msra.mxu0 %v1776
    %2015 = vmatprep.subr.mxu0 0.0
    %2016 = vmatpush1.msra.mxu0 %v1777
    %2017 = vmatprep.subr.mxu0 0.0
    %2018 = vmatpush1.msra.mxu0 %v1778
    %2019 = vmatprep.subr.mxu0 0.0
    %2020 = vmatpush1.msra.mxu0 %v1779
    %2021 = vmatprep.subr.mxu0 0.0
    %2022 = vmatpush1.msra.mxu0 %v1780
    %2023 = vmatprep.subr.mxu0 0.0
    %2024 = vmatpush1.msra.mxu0 %v1781
    %2025 = vmatprep.subr.mxu0 0.0
    %2026 = vmatpush1.msra.mxu0 %v1782
    %2027 = vmatprep.subr.mxu0 0.0
    %2028 = vmatpush1.msra.mxu0 %v1783
    %2029 = vmatprep.subr.mxu0 0.0
    %2030 = vmatpush1.msra.mxu0 %v1784
    %2031 = vmatprep.subr.mxu0 0.0
    %2032 = vmatpush1.msra.mxu0 %v1785
    %2033 = vmatprep.subr.mxu0 0.0
    %2034 = vmatpush1.msra.mxu0 %v1786
    %2035 = vmatprep.subr.mxu0 0.0
    %2036 = vmatpush1.msra.mxu0 %v1787
    %2037 = vmatprep.subr.mxu0 0.0
    %2038 = vmatpush1.msra.mxu0 %v1788
    %2039 = vmatprep.subr.mxu0 0.0
    %2040 = vmatpush1.msra.mxu0 %v1789
    %2041 = vmatprep.mubr.f32.mxu0 %v1666
    %2042 = vmatmul.mubr.f32.gmra.mrb[0].mxu0 %v1665
    %v2043 = vpop.f32.mrb[0].mxu0
    %v2044 = vadd.f32 %v1944, %v2043
    %v2045 = vpop.f32.mrb[0].mxu0
    %2046 = vmatprep.mubr.f32.mxu0 %v1675
    %2047 = vmatmul.mubr.f32.gmra.mrb[0].mxu0 %v1674
    %v2048 = vpop.f32.mrb[0].mxu0
    %v2049 = vadd.f32 %v1949, %v2048
    %v2050 = vpop.f32.mrb[0].mxu0
    %2051 = vmatprep.mubr.f32.mxu0 %v1684
    %2052 = vmatmul.mubr.f32.gmra.mrb[0].mxu0 %v1683
    %v2053 = vpop.f32.mrb[0].mxu0
    %v2054 = vadd.f32 %v1954, %v2053
    %v2055 = vpop.f32.mrb[0].mxu0
    %2056 = vmatprep.mubr.f32.mxu0 %v1693
    %2057 = vmatmul.mubr.f32.gmra.mrb[0].mxu0 %v1692
    %v2058 = vpop.f32.mrb[0].mxu0
    %v2059 = vadd.f32 %v1959, %v2058
    %v2060 = vpop.f32.mrb[0].mxu0
    %2061 = vmatprep.mubr.f32.mxu0 %v1702
    %2062 = vmatmul.mubr.f32.gmra.mrb[0].mxu0 %v1701
    %v2063 = vpop.f32.mrb[0].mxu0
    %v2064 = vadd.f32 %v1964, %v2063
    %v2065 = vpop.f32.mrb[0].mxu0
    %2066 = vmatprep.mubr.f32.mxu0 %v1711
    %2067 = vmatmul.mubr.f32.gmra.mrb[0].mxu0 %v1710
    %v2068 = vpop.f32.mrb[0].mxu0
    %v2069 = vadd.f32 %v1969, %v2068
    %v2070 = vpop.f32.mrb[0].mxu0
    %2071 = vmatprep.mubr.f32.mxu0 %v1720
    %2072 = vmatmul.mubr.f32.gmra.mrb[0].mxu0 %v1719
    %v2073 = vpop.f32.mrb[0].mxu0
    %v2074 = vadd.f32 %v1974, %v2073
    %v2075 = vpop.f32.mrb[0].mxu0
    %2076 = vdwg.mxu0
    %2077 = vmatprep.subr.mxu0 0.0
    %2078 = vmatpush1.msra.mxu0 %v1790
    %2079 = vmatprep.subr.mxu0 0.0
    %2080 = vmatpush1.msra.mxu0 %v1791
    %2081 = vmatprep.subr.mxu0 0.0
    %2082 = vmatpush1.msra.mxu0 %v1792
    %2083 = vmatprep.subr.mxu0 0.0
    %2084 = vmatpush1.msra.mxu0 %v1793
    %2085 = vmatprep.subr.mxu0 0.0
    %2086 = vmatpush1.msra.mxu0 %v1794
    %2087 = vmatprep.subr.mxu0 0.0
    %2088 = vmatpush1.msra.mxu0 %v1795
    %2089 = vmatprep.subr.mxu0 0.0
    %2090 = vmatpush1.msra.mxu0 %v1796
    %2091 = vmatprep.subr.mxu0 0.0
    %2092 = vmatpush1.msra.mxu0 %v1797
    %2093 = vmatprep.subr.mxu0 0.0
    %2094 = vmatpush1.msra.mxu0 %v1798
    %2095 = vmatprep.subr.mxu0 0.0
    %2096 = vmatpush1.msra.mxu0 %v1799
    %2097 = vmatprep.subr.mxu0 0.0
    %2098 = vmatpush1.msra.mxu0 %v1800
    %2099 = vmatprep.subr.mxu0 0.0
    %2100 = vmatpush1.msra.mxu0 %v1801
    %2101 = vmatprep.subr.mxu0 0.0
    %2102 = vmatpush1.msra.mxu0 %v1802
    %2103 = vmatprep.subr.mxu0 0.0
    %2104 = vmatpush1.msra.mxu0 %v1803
    %2105 = vmatprep.subr.mxu0 0.0
    %2106 = vmatpush1.msra.mxu0 %v1804
    %2107 = vmatprep.subr.mxu0 0.0
    %2108 = vmatpush1.msra.mxu0 %v1805
    %2109 = vmatprep.subr.mxu0 0.0
    %2110 = vmatpush1.msra.mxu0 %v1806
    %2111 = vmatprep.subr.mxu0 0.0
    %2112 = vmatpush1.msra.mxu0 %v1807
    %2113 = vmatprep.subr.mxu0 0.0
    %2114 = vmatpush1.msra.mxu0 %v1808
    %2115 = vmatprep.subr.mxu0 0.0
    %2116 = vmatpush1.msra.mxu0 %v1809
    %2117 = vmatprep.subr.mxu0 0.0
    %2118 = vmatpush1.msra.mxu0 %v1810
    %2119 = vmatprep.subr.mxu0 0.0
    %2120 = vmatpush1.msra.mxu0 %v1811
    %2121 = vmatprep.subr.mxu0 0.0
    %2122 = vmatpush1.msra.mxu0 %v1812
    %2123 = vmatprep.subr.mxu0 0.0
    %2124 = vmatpush1.msra.mxu0 %v1813
    %2125 = vmatprep.subr.mxu0 0.0
    %2126 = vmatpush1.msra.mxu0 %v1814
    %2127 = vmatprep.subr.mxu0 0.0
    %2128 = vmatpush1.msra.mxu0 %v1815
    %2129 = vmatprep.subr.mxu0 0.0
    %2130 = vmatpush1.msra.mxu0 %v1816
    %2131 = vmatprep.subr.mxu0 0.0
    %2132 = vmatpush1.msra.mxu0 %v1817
    %2133 = vmatprep.subr.mxu0 0.0
    %2134 = vmatpush1.msra.mxu0 %v1818
    %2135 = vmatprep.subr.mxu0 0.0
    %2136 = vmatpush1.msra.mxu0 %v1819
    %2137 = vmatprep.subr.mxu0 0.0
    %2138 = vmatpush1.msra.mxu0 %v1820
    %2139 = vmatprep.subr.mxu0 0.0
    %2140 = vmatpush1.msra.mxu0 %v1821
    %2141 = vmatprep.mubr.f32.mxu0 %v1668
    %2142 = vmatmul.mubr.f32.gmra.mrb[0].mxu0 %v1667
    %v2143 = vpop.f32.mrb[0].mxu0
    %v2144 = vadd.f32 %v2044, %v2143
    %v2145 = vpop.f32.mrb[0].mxu0
    %2146 = vmatprep.mubr.f32.mxu0 %v1677
    %2147 = vmatmul.mubr.f32.gmra.mrb[0].mxu0 %v1676
    %v2148 = vpop.f32.mrb[0].mxu0
    %v2149 = vadd.f32 %v2049, %v2148
    %v2150 = vpop.f32.mrb[0].mxu0
    %2151 = vmatprep.mubr.f32.mxu0 %v1686
    %2152 = vmatmul.mubr.f32.gmra.mrb[0].mxu0 %v1685
    %v2153 = vpop.f32.mrb[0].mxu0
    %v2154 = vadd.f32 %v2054, %v2153
    %v2155 = vpop.f32.mrb[0].mxu0
    %2156 = vmatprep.mubr.f32.mxu0 %v1695
    %2157 = vmatmul.mubr.f32.gmra.mrb[0].mxu0 %v1694
    %v2158 = vpop.f32.mrb[0].mxu0
    %v2159 = vadd.f32 %v2059, %v2158
    %v2160 = vpop.f32.mrb[0].mxu0
    %2161 = vmatprep.mubr.f32.mxu0 %v1704
    %2162 = vmatmul.mubr.f32.gmra.mrb[0].mxu0 %v1703
    %v2163 = vpop.f32.mrb[0].mxu0
    %v2164 = vadd.f32 %v2064, %v2163
    %v2165 = vpop.f32.mrb[0].mxu0
    %2166 = vmatprep.mubr.f32.mxu0 %v1713
    %2167 = vmatmul.mubr.f32.gmra.mrb[0].mxu0 %v1712
    %v2168 = vpop.f32.mrb[0].mxu0
    %v2169 = vadd.f32 %v2069, %v2168
    %v2170 = vpop.f32.mrb[0].mxu0
    %2171 = vmatprep.mubr.f32.mxu0 %v1722
    %2172 = vmatmul.mubr.f32.gmra.mrb[0].mxu0 %v1721
    %v2173 = vpop.f32.mrb[0].mxu0
    %v2174 = vadd.f32 %v2074, %v2173
    %v2175 = vpop.f32.mrb[0].mxu0
    %2176 = vdwg.mxu0
    %2177 = vmatprep.subr.mxu0 0.0
    %2178 = vmatpush1.msra.mxu0 %v1822
    %2179 = vmatprep.subr.mxu0 0.0
    %2180 = vmatpush1.msra.mxu0 %v1823
    %2181 = vmatprep.subr.mxu0 0.0
    %2182 = vmatpush1.msra.mxu0 %v1824
    %2183 = vmatprep.subr.mxu0 0.0
    %2184 = vmatpush1.msra.mxu0 %v1825
    %2185 = vmatprep.subr.mxu0 0.0
    %2186 = vmatpush1.msra.mxu0 %v1826
    %2187 = vmatprep.subr.mxu0 0.0
    %2188 = vmatpush1.msra.mxu0 %v1827
    %2189 = vmatprep.subr.mxu0 0.0
    %2190 = vmatpush1.msra.mxu0 %v1828
    %2191 = vmatprep.subr.mxu0 0.0
    %2192 = vmatpush1.msra.mxu0 %v1829
    %2193 = vmatprep.subr.mxu0 0.0
    %2194 = vmatpush1.msra.mxu0 %v1830
    %2195 = vmatprep.subr.mxu0 0.0
    %2196 = vmatpush1.msra.mxu0 %v1831
    %2197 = vmatprep.subr.mxu0 0.0
    %2198 = vmatpush1.msra.mxu0 %v1832
    %2199 = vmatprep.subr.mxu0 0.0
    %2200 = vmatpush1.msra.mxu0 %v1833
    %2201 = vmatprep.subr.mxu0 0.0
    %2202 = vmatpush1.msra.mxu0 %v1834
    %2203 = vmatprep.subr.mxu0 0.0
    %2204 = vmatpush1.msra.mxu0 %v1835
    %2205 = vmatprep.subr.mxu0 0.0
    %2206 = vmatpush1.msra.mxu0 %v1836
    %2207 = vmatprep.subr.mxu0 0.0
    %2208 = vmatpush1.msra.mxu0 %v1837
    %2209 = vmatprep.subr.mxu0 0.0
    %2210 = vmatpush1.msra.mxu0 %v1838
    %2211 = vmatprep.subr.mxu0 0.0
    %2212 = vmatpush1.msra.mxu0 %v1839
    %2213 = vmatprep.subr.mxu0 0.0
    %2214 = vmatpush1.msra.mxu0 %v1840
    %2215 = vmatprep.subr.mxu0 0.0
    %2216 = vmatpush1.msra.mxu0 %v1841
    %2217 = vmatprep.subr.mxu0 0.0
    %2218 = vmatpush1.msra.mxu0 %v1842
    %2219 = vmatprep.subr.mxu0 0.0
    %2220 = vmatpush1.msra.mxu0 %v1843
    %2221 = vmatprep.subr.mxu0 0.0
    %2222 = vmatpush1.msra.mxu0 %v1844
    %2223 = vmatprep.subr.mxu0 0.0
    %2224 = vmatpush1.msra.mxu0 %v1845
    %2225 = vmatprep.subr.mxu0 0.0
    %2226 = vmatpush1.msra.mxu0 %v1846
    %2227 = vmatprep.subr.mxu0 0.0
    %2228 = vmatpush1.msra.mxu0 %v1847
    %2229 = vmatprep.subr.mxu0 0.0
    %2230 = vmatpush1.msra.mxu0 %v1848
    %2231 = vmatprep.subr.mxu0 0.0
    %2232 = vmatpush1.msra.mxu0 %v1849
    %2233 = vmatprep.subr.mxu0 0.0
    %2234 = vmatpush1.msra.mxu0 %v1850
    %2235 = vmatprep.subr.mxu0 0.0
    %2236 = vmatpush1.msra.mxu0 %v1851
    %2237 = vmatprep.subr.mxu0 0.0
    %2238 = vmatpush1.msra.mxu0 %v1852
    %2239 = vmatprep.subr.mxu0 0.0
    %2240 = vmatpush1.msra.mxu0 %v1853
    %2241 = vmatprep.mubr.f32.mxu0 %v1670
    %2242 = vmatmul.mubr.f32.gmra.mrb[0].mxu0 %v1669
    %v2243 = vpop.f32.mrb[0].mxu0
    %v2244 = vadd.f32 %v2144, %v2243
    %v2245 = vpop.f32.mrb[0].mxu0
    %2246 = vmatprep.mubr.f32.mxu0 %v1679
    %2247 = vmatmul.mubr.f32.gmra.mrb[0].mxu0 %v1678
    %v2248 = vpop.f32.mrb[0].mxu0
    %v2249 = vadd.f32 %v2149, %v2248
    %v2250 = vpop.f32.mrb[0].mxu0
    %2251 = vmatprep.mubr.f32.mxu0 %v1688
    %2252 = vmatmul.mubr.f32.gmra.mrb[0].mxu0 %v1687
    %v2253 = vpop.f32.mrb[0].mxu0
    %v2254 = vadd.f32 %v2154, %v2253
    %v2255 = vpop.f32.mrb[0].mxu0
    %2256 = vmatprep.mubr.f32.mxu0 %v1697
    %2257 = vmatmul.mubr.f32.gmra.mrb[0].mxu0 %v1696
    %v2258 = vpop.f32.mrb[0].mxu0
    %v2259 = vadd.f32 %v2159, %v2258
    %v2260 = vpop.f32.mrb[0].mxu0
    %2261 = vmatprep.mubr.f32.mxu0 %v1706
    %2262 = vmatmul.mubr.f32.gmra.mrb[0].mxu0 %v1705
    %v2263 = vpop.f32.mrb[0].mxu0
    %v2264 = vadd.f32 %v2164, %v2263
    %v2265 = vpop.f32.mrb[0].mxu0
    %2266 = vmatprep.mubr.f32.mxu0 %v1715
    %2267 = vmatmul.mubr.f32.gmra.mrb[0].mxu0 %v1714
    %v2268 = vpop.f32.mrb[0].mxu0
    %v2269 = vadd.f32 %v2169, %v2268
    %v2270 = vpop.f32.mrb[0].mxu0
    %2271 = vmatprep.mubr.f32.mxu0 %v1724
    %2272 = vmatmul.mubr.f32.gmra.mrb[0].mxu0 %v1723
    %v2273 = vpop.f32.mrb[0].mxu0
    %v2274 = vadd.f32 %v2174, %v2273
    %v2275 = vpop.f32.mrb[0].mxu0
    %2276 = vdwg.mxu0
    %2277 = vmatprep.subr.mxu0 0.0
    %2278 = vmatpush1.msra.mxu0 %v1854
    %2279 = vmatprep.subr.mxu0 0.0
    %2280 = vmatpush1.msra.mxu0 %v1855
    %2281 = vmatprep.subr.mxu0 0.0
    %2282 = vmatpush1.msra.mxu0 %v1856
    %2283 = vmatprep.subr.mxu0 0.0
    %2284 = vmatpush1.msra.mxu0 %v1857
    %2285 = vmatprep.subr.mxu0 0.0
    %2286 = vmatpush1.msra.mxu0 %v1858
    %2287 = vmatprep.subr.mxu0 0.0
    %2288 = vmatpush1.msra.mxu0 %v1859
    %2289 = vmatprep.subr.mxu0 0.0
    %2290 = vmatpush1.msra.mxu0 %v1860
    %2291 = vmatprep.subr.mxu0 0.0
    %2292 = vmatpush1.msra.mxu0 %v1861
    %2293 = vmatprep.subr.mxu0 0.0
    %2294 = vmatpush1.msra.mxu0 %v1862
    %2295 = vmatprep.subr.mxu0 0.0
    %2296 = vmatpush1.msra.mxu0 %v1863
    %2297 = vmatprep.subr.mxu0 0.0
    %2298 = vmatpush1.msra.mxu0 %v1864
    %2299 = vmatprep.subr.mxu0 0.0
    %2300 = vmatpush1.msra.mxu0 %v1865
    %2301 = vmatprep.subr.mxu0 0.0
    %2302 = vmatpush1.msra.mxu0 %v1866
    %2303 = vmatprep.subr.mxu0 0.0
    %2304 = vmatpush1.msra.mxu0 %v1867
    %2305 = vmatprep.subr.mxu0 0.0
    %2306 = vmatpush1.msra.mxu0 %v1868
    %2307 = vmatprep.subr.mxu0 0.0
    %2308 = vmatpush1.msra.mxu0 %v1869
    %2309 = vmatprep.subr.mxu0 0.0
    %2310 = vmatpush1.msra.mxu0 0.0
    %2311 = vmatprep.subr.mxu0 0.0
    %2312 = vmatpush1.msra.mxu0 0.0
    %2313 = vmatprep.subr.mxu0 0.0
    %2314 = vmatpush1.msra.mxu0 0.0
    %2315 = vmatprep.subr.mxu0 0.0
    %2316 = vmatpush1.msra.mxu0 0.0
    %2317 = vmatprep.subr.mxu0 0.0
    %2318 = vmatpush1.msra.mxu0 0.0
    %2319 = vmatprep.subr.mxu0 0.0
    %2320 = vmatpush1.msra.mxu0 0.0
    %2321 = vmatprep.subr.mxu0 0.0
    %2322 = vmatpush1.msra.mxu0 0.0
    %2323 = vmatprep.subr.mxu0 0.0
    %2324 = vmatpush1.msra.mxu0 0.0
    %2325 = vmatprep.subr.mxu0 0.0
    %2326 = vmatpush1.msra.mxu0 0.0
    %2327 = vmatprep.subr.mxu0 0.0
    %2328 = vmatpush1.msra.mxu0 0.0
    %2329 = vmatprep.subr.mxu0 0.0
    %2330 = vmatpush1.msra.mxu0 0.0
    %2331 = vmatprep.subr.mxu0 0.0
    %2332 = vmatpush1.msra.mxu0 0.0
    %2333 = vmatprep.subr.mxu0 0.0
    %2334 = vmatpush1.msra.mxu0 0.0
    %2335 = vmatprep.subr.mxu0 0.0
    %2336 = vmatpush1.msra.mxu0 0.0
    %2337 = vmatprep.subr.mxu0 0.0
    %2338 = vmatpush1.msra.mxu0 0.0
    %2339 = vmatprep.subr.mxu0 0.0
    %2340 = vmatpush1.msra.mxu0 0.0
    %2341 = vmatprep.mubr.f32.mxu0 0.0
    %2342 = vmatmul.mubr.f32.gmra.mrb[0].mxu0 %v1671
    %v2343 = vpop.f32.mrb[0].mxu0
    %v2344 = vadd.f32 %v2244, %v2343
    %v2345 = vpop.f32.mrb[0].mxu0
    %2346 = vmatprep.mubr.f32.mxu0 0.0
    %2347 = vmatmul.mubr.f32.gmra.mrb[0].mxu0 %v1680
    %v2348 = vpop.f32.mrb[0].mxu0
    %v2349 = vadd.f32 %v2249, %v2348
    %v2350 = vpop.f32.mrb[0].mxu0
    %2351 = vmatprep.mubr.f32.mxu0 0.0
    %2352 = vmatmul.mubr.f32.gmra.mrb[0].mxu0 %v1689
    %v2353 = vpop.f32.mrb[0].mxu0
    %v2354 = vadd.f32 %v2254, %v2353
    %v2355 = vpop.f32.mrb[0].mxu0
    %2356 = vmatprep.mubr.f32.mxu0 0.0
    %2357 = vmatmul.mubr.f32.gmra.mrb[0].mxu0 %v1698
    %v2358 = vpop.f32.mrb[0].mxu0
    %v2359 = vadd.f32 %v2259, %v2358
    %v2360 = vpop.f32.mrb[0].mxu0
    %2361 = vmatprep.mubr.f32.mxu0 0.0
    %2362 = vmatmul.mubr.f32.gmra.mrb[0].mxu0 %v1707
    %v2363 = vpop.f32.mrb[0].mxu0
    %v2364 = vadd.f32 %v2264, %v2363
    %v2365 = vpop.f32.mrb[0].mxu0
    %2366 = vmatprep.mubr.f32.mxu0 0.0
    %2367 = vmatmul.mubr.f32.gmra.mrb[0].mxu0 %v1716
    %v2368 = vpop.f32.mrb[0].mxu0
    %v2369 = vadd.f32 %v2269, %v2368
    %v2370 = vpop.f32.mrb[0].mxu0
    %2371 = vmatprep.mubr.f32.mxu0 0.0
    %2372 = vmatmul.mubr.f32.gmra.mrb[0].mxu0 %v1725
    %v2373 = vpop.f32.mrb[0].mxu0
    %v2374 = vadd.f32 %v2274, %v2373
    %v2375 = vpop.f32.mrb[0].mxu0
    %2376 = vdwg.mxu0
    %v2377 = vadd.f32 %v2344, %v284
    %v2378 = vadd.f32 %v2349, %v285
    %v2379 = vadd.f32 %v2354, %v286
    %v2380 = vadd.f32 %v2359, %v287
    %v2381 = vadd.f32 %v2364, %v288
    %v2382 = vadd.f32 %v2369, %v289
    %v2383 = vadd.f32 %v2374, %v290
    %v2384 = vmax.f32 %v2377, 0.0
    %v2385 = vmax.f32 %v2378, 0.0
    %v2386 = vmax.f32 %v2379, 0.0
    %v2387 = vmax.f32 %v2380, 0.0
    %v2388 = vmax.f32 %v2381, 0.0
    %v2389 = vmax.f32 %v2382, 0.0
    %v2390 = vmax.f32 %v2383, 0.0
    %2391 = vst [vmem:[#allocation2 + $0x6] sm:$0xff] %v2384
    %2392 = vst [vmem:[#allocation2 + $0xe] sm:$0xff] %v2385
    %2393 = vst [vmem:[#allocation2 + $0x16] sm:$0xff] %v2386
    %2394 = vst [vmem:[#allocation2 + $0x1e] sm:$0xff] %v2387
    %2395 = vst [vmem:[#allocation2 + $0x26] sm:$0xff] %v2388
    %2396 = vst [vmem:[#allocation2 + $0x2e] sm:$0xff] %v2389
    %2397 = vst [vmem:[#allocation2 + $0x36] sm:$0x3] %v2390
    %v2398 = vld [vmem:[#allocation2] sm:$0xff]
    %v2399 = vld [vmem:[#allocation2 + $0x8] sm:$0xff]
    %v2400 = vld [vmem:[#allocation2 + $0x10] sm:$0xff]
    %v2401 = vld [vmem:[#allocation2 + $0x18] sm:$0xff]
    %v2402 = vld [vmem:[#allocation2 + $0x20] sm:$0xff]
    %v2403 = vld [vmem:[#allocation2 + $0x28] sm:$0xff]
    %v2404 = vld [vmem:[#allocation2 + $0x30] sm:$0x3]
    %v2405 = vmul.f32 %v2398, %v308
    %v2406 = vmul.f32 %v2399, %v313
    %v2407 = vmul.f32 %v2400, %v318
    %v2408 = vmul.f32 %v2401, %v323
    %v2409 = vmul.f32 %v2402, %v328
    %v2410 = vmul.f32 %v2403, %v333
    %v2411 = vmul.f32 %v2404, %v338
    %2412 = vst [vmem:[#allocation3] sm:$0xff] %v2405
    %2413 = vst [vmem:[#allocation3 + $0x48] sm:$0xff] %v2406
    %2414 = vst [vmem:[#allocation3 + $0x90] sm:$0xff] %v2407
    %2415 = vst [vmem:[#allocation3 + $0xd8] sm:$0xff] %v2408
    %2416 = vst [vmem:[#allocation3 + $0x120] sm:$0xff] %v2409
    %2417 = vst [vmem:[#allocation3 + $0x168] sm:$0xff] %v2410
    %2418 = vst [vmem:[#allocation3 + $0x1b0] sm:$0x3] %v2411
    %v2419 = vld [vmem:[#allocation2 + $0x1] sm:$0xff]
    %v2420 = vld [vmem:[#allocation2 + $0x9] sm:$0xff]
    %v2421 = vld [vmem:[#allocation2 + $0x11] sm:$0xff]
    %v2422 = vld [vmem:[#allocation2 + $0x19] sm:$0xff]
    %v2423 = vld [vmem:[#allocation2 + $0x21] sm:$0xff]
    %v2424 = vld [vmem:[#allocation2 + $0x29] sm:$0xff]
    %v2425 = vld [vmem:[#allocation2 + $0x31] sm:$0x3]
    %v2426 = vmul.f32 %v2419, %v363
    %v2427 = vmul.f32 %v2420, %v367
    %v2428 = vmul.f32 %v2421, %v371
    %v2429 = vmul.f32 %v2422, %v375
    %v2430 = vmul.f32 %v2423, %v379
    %v2431 = vmul.f32 %v2424, %v383
    %v2432 = vmul.f32 %v2425, %v387
    %2433 = vst [vmem:[#allocation3 + $0x8] sm:$0xff] %v2426
    %2434 = vst [vmem:[#allocation3 + $0x50] sm:$0xff] %v2427
    %2435 = vst [vmem:[#allocation3 + $0x98] sm:$0xff] %v2428
    %2436 = vst [vmem:[#allocation3 + $0xe0] sm:$0xff] %v2429
    %2437 = vst [vmem:[#allocation3 + $0x128] sm:$0xff] %v2430
    %2438 = vst [vmem:[#allocation3 + $0x170] sm:$0xff] %v2431
    %2439 = vst [vmem:[#allocation3 + $0x1b8] sm:$0x3] %v2432
    %v2440 = vld [vmem:[#allocation2 + $0x2] sm:$0xff]
    %v2441 = vld [vmem:[#allocation2 + $0xa] sm:$0xff]
    %v2442 = vld [vmem:[#allocation2 + $0x12] sm:$0xff]
    %v2443 = vld [vmem:[#allocation2 + $0x1a] sm:$0xff]
    %v2444 = vld [vmem:[#allocation2 + $0x22] sm:$0xff]
    %v2445 = vld [vmem:[#allocation2 + $0x2a] sm:$0xff]
    %v2446 = vld [vmem:[#allocation2 + $0x32] sm:$0x3]
    %v2447 = vmul.f32 %v2440, %v412
    %v2448 = vmul.f32 %v2441, %v416
    %v2449 = vmul.f32 %v2442, %v420
    %v2450 = vmul.f32 %v2443, %v424
    %v2451 = vmul.f32 %v2444, %v428
    %v2452 = vmul.f32 %v2445, %v432
    %v2453 = vmul.f32 %v2446, %v436
    %2454 = vst [vmem:[#allocation3 + $0x10] sm:$0xff] %v2447
    %2455 = vst [vmem:[#allocation3 + $0x58] sm:$0xff] %v2448
    %2456 = vst [vmem:[#allocation3 + $0xa0] sm:$0xff] %v2449
    %2457 = vst [vmem:[#allocation3 + $0xe8] sm:$0xff] %v2450
    %2458 = vst [vmem:[#allocation3 + $0x130] sm:$0xff] %v2451
    %2459 = vst [vmem:[#allocation3 + $0x178] sm:$0xff] %v2452
    %2460 = vst [vmem:[#allocation3 + $0x1c0] sm:$0x3] %v2453
    %v2461 = vld [vmem:[#allocation2 + $0x5] sm:$0xff]
    %v2462 = vld [vmem:[#allocation2 + $0xd] sm:$0xff]
    %v2463 = vld [vmem:[#allocation2 + $0x15] sm:$0xff]
    %v2464 = vld [vmem:[#allocation2 + $0x1d] sm:$0xff]
    %v2465 = vld [vmem:[#allocation2 + $0x25] sm:$0xff]
    %v2466 = vld [vmem:[#allocation2 + $0x2d] sm:$0xff]
    %v2467 = vld [vmem:[#allocation2 + $0x35] sm:$0x3]
    %v2468 = vmul.f32 %v2461, %v461
    %v2469 = vmul.f32 %v2462, %v465
    %v2470 = vmul.f32 %v2463, %v469
    %v2471 = vmul.f32 %v2464, %v473
    %v2472 = vmul.f32 %v2465, %v477
    %v2473 = vmul.f32 %v2466, %v481
    %v2474 = vmul.f32 %v2467, %v485
    %2475 = vst [vmem:[#allocation3 + $0x18] sm:$0xff] %v2468
    %2476 = vst [vmem:[#allocation3 + $0x60] sm:$0xff] %v2469
    %2477 = vst [vmem:[#allocation3 + $0xa8] sm:$0xff] %v2470
    %2478 = vst [vmem:[#allocation3 + $0xf0] sm:$0xff] %v2471
    %2479 = vst [vmem:[#allocation3 + $0x138] sm:$0xff] %v2472
    %2480 = vst [vmem:[#allocation3 + $0x180] sm:$0xff] %v2473
    %2481 = vst [vmem:[#allocation3 + $0x1c8] sm:$0x3] %v2474
    %v2482 = vld [vmem:[#allocation2 + $0x6] sm:$0xff]
    %v2483 = vld [vmem:[#allocation2 + $0xe] sm:$0xff]
    %v2484 = vld [vmem:[#allocation2 + $0x16] sm:$0xff]
    %v2485 = vld [vmem:[#allocation2 + $0x1e] sm:$0xff]
    %v2486 = vld [vmem:[#allocation2 + $0x26] sm:$0xff]
    %v2487 = vld [vmem:[#allocation2 + $0x2e] sm:$0xff]
    %v2488 = vld [vmem:[#allocation2 + $0x36] sm:$0x3]
    %v2489 = vmul.f32 %v2482, %v510
    %v2490 = vmul.f32 %v2483, %v514
    %v2491 = vmul.f32 %v2484, %v518
    %v2492 = vmul.f32 %v2485, %v522
    %v2493 = vmul.f32 %v2486, %v526
    %v2494 = vmul.f32 %v2487, %v530
    %v2495 = vmul.f32 %v2488, %v534
    %2496 = vst [vmem:[#allocation3 + $0x20] sm:$0xff] %v2489
    %2497 = vst [vmem:[#allocation3 + $0x68] sm:$0xff] %v2490
    %2498 = vst [vmem:[#allocation3 + $0xb0] sm:$0xff] %v2491
    %2499 = vst [vmem:[#allocation3 + $0xf8] sm:$0xff] %v2492
    %2500 = vst [vmem:[#allocation3 + $0x140] sm:$0xff] %v2493
    %2501 = vst [vmem:[#allocation3 + $0x188] sm:$0xff] %v2494
    %2502 = vst [vmem:[#allocation3 + $0x1d0] sm:$0x3] %v2495
    %v2503 = vld [vmem:[#allocation2 + $0x7] sm:$0xff]
    %v2504 = vld [vmem:[#allocation2 + $0xf] sm:$0xff]
    %v2505 = vld [vmem:[#allocation2 + $0x17] sm:$0xff]
    %v2506 = vld [vmem:[#allocation2 + $0x1f] sm:$0xff]
    %v2507 = vld [vmem:[#allocation2 + $0x27] sm:$0xff]
    %v2508 = vld [vmem:[#allocation2 + $0x2f] sm:$0xff]
    %v2509 = vld [vmem:[#allocation2 + $0x37] sm:$0x3]
    %v2510 = vmul.f32 %v2503, %v559
    %v2511 = vmul.f32 %v2504, %v563
    %v2512 = vmul.f32 %v2505, %v567
    %v2513 = vmul.f32 %v2506, %v571
    %v2514 = vmul.f32 %v2507, %v575
    %v2515 = vmul.f32 %v2508, %v579
    %v2516 = vmul.f32 %v2509, %v583
    %2517 = vst [vmem:[#allocation3 + $0x28] sm:$0xff] %v2510
    %2518 = vst [vmem:[#allocation3 + $0x70] sm:$0xff] %v2511
    %2519 = vst [vmem:[#allocation3 + $0xb8] sm:$0xff] %v2512
    %2520 = vst [vmem:[#allocation3 + $0x100] sm:$0xff] %v2513
    %2521 = vst [vmem:[#allocation3 + $0x148] sm:$0xff] %v2514
    %2522 = vst [vmem:[#allocation3 + $0x190] sm:$0xff] %v2515
    %2523 = vst [vmem:[#allocation3 + $0x1d8] sm:$0x3] %v2516
    %v2524 = vld [vmem:[#allocation2 + $0xa] sm:$0xff]
    %v2525 = vld [vmem:[#allocation2 + $0x12] sm:$0xff]
    %v2526 = vld [vmem:[#allocation2 + $0x1a] sm:$0xff]
    %v2527 = vld [vmem:[#allocation2 + $0x22] sm:$0xff]
    %v2528 = vld [vmem:[#allocation2 + $0x2a] sm:$0xff]
    %v2529 = vld [vmem:[#allocation2 + $0x32] sm:$0xff]
    %v2530 = vld [vmem:[#allocation2 + $0x3a] sm:$0x3]
    %v2531 = vmul.f32 %v2524, %v608
    %v2532 = vmul.f32 %v2525, %v612
    %v2533 = vmul.f32 %v2526, %v616
    %v2534 = vmul.f32 %v2527, %v620
    %v2535 = vmul.f32 %v2528, %v624
    %v2536 = vmul.f32 %v2529, %v628
    %v2537 = vmul.f32 %v2530, %v632
    %2538 = vst [vmem:[#allocation3 + $0x30] sm:$0xff] %v2531
    %2539 = vst [vmem:[#allocation3 + $0x78] sm:$0xff] %v2532
    %2540 = vst [vmem:[#allocation3 + $0xc0] sm:$0xff] %v2533
    %2541 = vst [vmem:[#allocation3 + $0x108] sm:$0xff] %v2534
    %2542 = vst [vmem:[#allocation3 + $0x150] sm:$0xff] %v2535
    %2543 = vst [vmem:[#allocation3 + $0x198] sm:$0xff] %v2536
    %2544 = vst [vmem:[#allocation3 + $0x1e0] sm:$0x3] %v2537
    %v2545 = vld [vmem:[#allocation2 + $0xb] sm:$0xff]
    %v2546 = vld [vmem:[#allocation2 + $0x13] sm:$0xff]
    %v2547 = vld [vmem:[#allocation2 + $0x1b] sm:$0xff]
    %v2548 = vld [vmem:[#allocation2 + $0x23] sm:$0xff]
    %v2549 = vld [vmem:[#allocation2 + $0x2b] sm:$0xff]
    %v2550 = vld [vmem:[#allocation2 + $0x33] sm:$0xff]
    %v2551 = vld [vmem:[#allocation2 + $0x3b] sm:$0x3]
    %v2552 = vmul.f32 %v2545, %v657
    %v2553 = vmul.f32 %v2546, %v661
    %v2554 = vmul.f32 %v2547, %v665
    %v2555 = vmul.f32 %v2548, %v669
    %v2556 = vmul.f32 %v2549, %v673
    %v2557 = vmul.f32 %v2550, %v677
    %v2558 = vmul.f32 %v2551, %v681
    %2559 = vst [vmem:[#allocation3 + $0x38] sm:$0xff] %v2552
    %2560 = vst [vmem:[#allocation3 + $0x80] sm:$0xff] %v2553
    %2561 = vst [vmem:[#allocation3 + $0xc8] sm:$0xff] %v2554
    %2562 = vst [vmem:[#allocation3 + $0x110] sm:$0xff] %v2555
    %2563 = vst [vmem:[#allocation3 + $0x158] sm:$0xff] %v2556
    %2564 = vst [vmem:[#allocation3 + $0x1a0] sm:$0xff] %v2557
    %2565 = vst [vmem:[#allocation3 + $0x1e8] sm:$0x3] %v2558
    %v2566 = vld [vmem:[#allocation2 + $0xc] sm:$0xff]
    %v2567 = vld [vmem:[#allocation2 + $0x14] sm:$0xff]
    %v2568 = vld [vmem:[#allocation2 + $0x1c] sm:$0xff]
    %v2569 = vld [vmem:[#allocation2 + $0x24] sm:$0xff]
    %v2570 = vld [vmem:[#allocation2 + $0x2c] sm:$0xff]
    %v2571 = vld [vmem:[#allocation2 + $0x34] sm:$0xff]
    %v2572 = vld [vmem:[#allocation2 + $0x3c] sm:$0x3]
    %v2573 = vmul.f32 %v2566, %v706
    %v2574 = vmul.f32 %v2567, %v710
    %v2575 = vmul.f32 %v2568, %v714
    %v2576 = vmul.f32 %v2569, %v718
    %v2577 = vmul.f32 %v2570, %v722
    %v2578 = vmul.f32 %v2571, %v726
    %v2579 = vmul.f32 %v2572, %v730
    %2580 = vst [vmem:[#allocation3 + $0x40] sm:$0xff] %v2573
    %2581 = vst [vmem:[#allocation3 + $0x88] sm:$0xff] %v2574
    %2582 = vst [vmem:[#allocation3 + $0xd0] sm:$0xff] %v2575
    %2583 = vst [vmem:[#allocation3 + $0x118] sm:$0xff] %v2576
    %2584 = vst [vmem:[#allocation3 + $0x160] sm:$0xff] %v2577
    %2585 = vst [vmem:[#allocation3 + $0x1a8] sm:$0xff] %v2578
    %2586 = vst [vmem:[#allocation3 + $0x1f0] sm:$0x3] %v2579
    %v2587 = vld [vmem:[#allocation3] sm:$0xff]
    %v2588 = vld [vmem:[#allocation3 + $0x8] sm:$0xff]
    %v2589 = vld [vmem:[#allocation3 + $0x10] sm:$0xff]
    %v2590 = vld [vmem:[#allocation3 + $0x18] sm:$0xff]
    %v2591 = vld [vmem:[#allocation3 + $0x20] sm:$0xff]
    %v2592 = vld [vmem:[#allocation3 + $0x28] sm:$0xff]
    %v2593 = vld [vmem:[#allocation3 + $0x30] sm:$0xff]
    %v2594 = vld [vmem:[#allocation3 + $0x38] sm:$0xff]
    %v2595 = vld [vmem:[#allocation3 + $0x40] sm:$0xff]
    %v2596 = vld [vmem:[#allocation3 + $0x48] sm:$0xff]
    %v2597 = vld [vmem:[#allocation3 + $0x50] sm:$0xff]
    %v2598 = vld [vmem:[#allocation3 + $0x58] sm:$0xff]
    %v2599 = vld [vmem:[#allocation3 + $0x60] sm:$0xff]
    %v2600 = vld [vmem:[#allocation3 + $0x68] sm:$0xff]
    %v2601 = vld [vmem:[#allocation3 + $0x70] sm:$0xff]
    %v2602 = vld [vmem:[#allocation3 + $0x78] sm:$0xff]
    %v2603 = vld [vmem:[#allocation3 + $0x80] sm:$0xff]
    %v2604 = vld [vmem:[#allocation3 + $0x88] sm:$0xff]
    %v2605 = vld [vmem:[#allocation3 + $0x90] sm:$0xff]
    %v2606 = vld [vmem:[#allocation3 + $0x98] sm:$0xff]
    %v2607 = vld [vmem:[#allocation3 + $0xa0] sm:$0xff]
    %v2608 = vld [vmem:[#allocation3 + $0xa8] sm:$0xff]
    %v2609 = vld [vmem:[#allocation3 + $0xb0] sm:$0xff]
    %v2610 = vld [vmem:[#allocation3 + $0xb8] sm:$0xff]
    %v2611 = vld [vmem:[#allocation3 + $0xc0] sm:$0xff]
    %v2612 = vld [vmem:[#allocation3 + $0xc8] sm:$0xff]
    %v2613 = vld [vmem:[#allocation3 + $0xd0] sm:$0xff]
    %v2614 = vld [vmem:[#allocation3 + $0xd8] sm:$0xff]
    %v2615 = vld [vmem:[#allocation3 + $0xe0] sm:$0xff]
    %v2616 = vld [vmem:[#allocation3 + $0xe8] sm:$0xff]
    %v2617 = vld [vmem:[#allocation3 + $0xf0] sm:$0xff]
    %v2618 = vld [vmem:[#allocation3 + $0xf8] sm:$0xff]
    %v2619 = vld [vmem:[#allocation3 + $0x100] sm:$0xff]
    %v2620 = vld [vmem:[#allocation3 + $0x108] sm:$0xff]
    %v2621 = vld [vmem:[#allocation3 + $0x110] sm:$0xff]
    %v2622 = vld [vmem:[#allocation3 + $0x118] sm:$0xff]
    %v2623 = vld [vmem:[#allocation3 + $0x120] sm:$0xff]
    %v2624 = vld [vmem:[#allocation3 + $0x128] sm:$0xff]
    %v2625 = vld [vmem:[#allocation3 + $0x130] sm:$0xff]
    %v2626 = vld [vmem:[#allocation3 + $0x138] sm:$0xff]
    %v2627 = vld [vmem:[#allocation3 + $0x140] sm:$0xff]
    %v2628 = vld [vmem:[#allocation3 + $0x148] sm:$0xff]
    %v2629 = vld [vmem:[#allocation3 + $0x150] sm:$0xff]
    %v2630 = vld [vmem:[#allocation3 + $0x158] sm:$0xff]
    %v2631 = vld [vmem:[#allocation3 + $0x160] sm:$0xff]
    %v2632 = vld [vmem:[#allocation3 + $0x168] sm:$0xff]
    %v2633 = vld [vmem:[#allocation3 + $0x170] sm:$0xff]
    %v2634 = vld [vmem:[#allocation3 + $0x178] sm:$0xff]
    %v2635 = vld [vmem:[#allocation3 + $0x180] sm:$0xff]
    %v2636 = vld [vmem:[#allocation3 + $0x188] sm:$0xff]
    %v2637 = vld [vmem:[#allocation3 + $0x190] sm:$0xff]
    %v2638 = vld [vmem:[#allocation3 + $0x198] sm:$0xff]
    %v2639 = vld [vmem:[#allocation3 + $0x1a0] sm:$0xff]
    %v2640 = vld [vmem:[#allocation3 + $0x1a8] sm:$0xff]
    %v2641 = vld [vmem:[#allocation3 + $0x1b0] sm:$0x3]
    %v2642 = vld [vmem:[#allocation3 + $0x1b8] sm:$0x3]
    %v2643 = vld [vmem:[#allocation3 + $0x1c0] sm:$0x3]
    %v2644 = vld [vmem:[#allocation3 + $0x1c8] sm:$0x3]
    %v2645 = vld [vmem:[#allocation3 + $0x1d0] sm:$0x3]
    %v2646 = vld [vmem:[#allocation3 + $0x1d8] sm:$0x3]
    %v2647 = vld [vmem:[#allocation3 + $0x1e0] sm:$0x3]
    %v2648 = vld [vmem:[#allocation3 + $0x1e8] sm:$0x3]
    %v2649 = vld [vmem:[#allocation3 + $0x1f0] sm:$0x3]
    %v2650 = vld [vmem:[#allocation9] sm:$0xff]
    %v2651 = vld [vmem:[#allocation9 + $0x8] sm:$0xff]
    %v2652 = vld [vmem:[#allocation9 + $0x10] sm:$0xff]
    %v2653 = vld [vmem:[#allocation9 + $0x18] sm:$0xff]
    %v2654 = vld [vmem:[#allocation9 + $0x20] sm:$0xff]
    %v2655 = vld [vmem:[#allocation9 + $0x28] sm:$0xff]
    %v2656 = vld [vmem:[#allocation9 + $0x30] sm:$0xff]
    %v2657 = vld [vmem:[#allocation9 + $0x38] sm:$0xff]
    %v2658 = vld [vmem:[#allocation9 + $0x40] sm:$0xff]
    %v2659 = vld [vmem:[#allocation9 + $0x48] sm:$0xff]
    %v2660 = vld [vmem:[#allocation9 + $0x50] sm:$0xff]
    %v2661 = vld [vmem:[#allocation9 + $0x58] sm:$0xff]
    %v2662 = vld [vmem:[#allocation9 + $0x60] sm:$0xff]
    %v2663 = vld [vmem:[#allocation9 + $0x68] sm:$0xff]
    %v2664 = vld [vmem:[#allocation9 + $0x70] sm:$0xff]
    %v2665 = vld [vmem:[#allocation9 + $0x78] sm:$0xff]
    %v2666 = vld [vmem:[#allocation9 + $0x80] sm:$0xff]
    %v2667 = vld [vmem:[#allocation9 + $0x88] sm:$0xff]
    %v2668 = vld [vmem:[#allocation9 + $0x90] sm:$0xff]
    %v2669 = vld [vmem:[#allocation9 + $0x98] sm:$0xff]
    %v2670 = vld [vmem:[#allocation9 + $0xa0] sm:$0xff]
    %v2671 = vld [vmem:[#allocation9 + $0xa8] sm:$0xff]
    %v2672 = vld [vmem:[#allocation9 + $0xb0] sm:$0xff]
    %v2673 = vld [vmem:[#allocation9 + $0xb8] sm:$0xff]
    %v2674 = vld [vmem:[#allocation9 + $0xc0] sm:$0xff]
    %v2675 = vld [vmem:[#allocation9 + $0xc8] sm:$0xff]
    %v2676 = vld [vmem:[#allocation9 + $0xd0] sm:$0xff]
    %v2677 = vld [vmem:[#allocation9 + $0xd8] sm:$0xff]
    %v2678 = vld [vmem:[#allocation9 + $0xe0] sm:$0xff]
    %v2679 = vld [vmem:[#allocation9 + $0xe8] sm:$0xff]
    %v2680 = vld [vmem:[#allocation9 + $0xf0] sm:$0xff]
    %v2681 = vld [vmem:[#allocation9 + $0xf8] sm:$0xff]
    %v2682 = vld [vmem:[#allocation9 + $0x100] sm:$0xff]
    %v2683 = vld [vmem:[#allocation9 + $0x108] sm:$0xff]
    %v2684 = vld [vmem:[#allocation9 + $0x110] sm:$0xff]
    %v2685 = vld [vmem:[#allocation9 + $0x118] sm:$0xff]
    %v2686 = vld [vmem:[#allocation9 + $0x120] sm:$0xff]
    %v2687 = vld [vmem:[#allocation9 + $0x128] sm:$0xff]
    %v2688 = vld [vmem:[#allocation9 + $0x130] sm:$0xff]
    %v2689 = vld [vmem:[#allocation9 + $0x138] sm:$0xff]
    %v2690 = vld [vmem:[#allocation9 + $0x140] sm:$0xff]
    %v2691 = vld [vmem:[#allocation9 + $0x148] sm:$0xff]
    %v2692 = vld [vmem:[#allocation9 + $0x150] sm:$0xff]
    %v2693 = vld [vmem:[#allocation9 + $0x158] sm:$0xff]
    %v2694 = vld [vmem:[#allocation9 + $0x160] sm:$0xff]
    %v2695 = vld [vmem:[#allocation9 + $0x168] sm:$0xff]
    %v2696 = vld [vmem:[#allocation9 + $0x170] sm:$0xff]
    %v2697 = vld [vmem:[#allocation9 + $0x178] sm:$0xff]
    %v2698 = vld [vmem:[#allocation9 + $0x180] sm:$0xff]
    %v2699 = vld [vmem:[#allocation9 + $0x188] sm:$0xff]
    %v2700 = vld [vmem:[#allocation9 + $0x190] sm:$0xff]
    %v2701 = vld [vmem:[#allocation9 + $0x198] sm:$0xff]
    %v2702 = vld [vmem:[#allocation9 + $0x1a0] sm:$0xff]
    %v2703 = vld [vmem:[#allocation9 + $0x1a8] sm:$0xff]
    %v2704 = vld [vmem:[#allocation9 + $0x1b0] sm:$0xff]
    %v2705 = vld [vmem:[#allocation9 + $0x1b8] sm:$0xff]
    %v2706 = vld [vmem:[#allocation9 + $0x1c0] sm:$0xff]
    %v2707 = vld [vmem:[#allocation9 + $0x1c8] sm:$0xff]
    %v2708 = vld [vmem:[#allocation9 + $0x1d0] sm:$0xff]
    %v2709 = vld [vmem:[#allocation9 + $0x1d8] sm:$0xff]
    %v2710 = vld [vmem:[#allocation9 + $0x1e0] sm:$0xff]
    %v2711 = vld [vmem:[#allocation9 + $0x1e8] sm:$0xff]
    %v2712 = vld [vmem:[#allocation9 + $0x1f0] sm:$0xff]
    %v2713 = vld [vmem:[#allocation9 + $0x1f8] sm:$0xff]
    %v2714 = vld [vmem:[#allocation9 + $0x200] sm:$0xff]
    %v2715 = vld [vmem:[#allocation9 + $0x208] sm:$0xff]
    %v2716 = vld [vmem:[#allocation9 + $0x210] sm:$0xff]
    %v2717 = vld [vmem:[#allocation9 + $0x218] sm:$0xff]
    %v2718 = vld [vmem:[#allocation9 + $0x220] sm:$0xff]
    %v2719 = vld [vmem:[#allocation9 + $0x228] sm:$0xff]
    %v2720 = vld [vmem:[#allocation9 + $0x230] sm:$0xff]
    %v2721 = vld [vmem:[#allocation9 + $0x238] sm:$0xff]
    %v2722 = vld [vmem:[#allocation9 + $0x240] sm:$0xff]
    %v2723 = vld [vmem:[#allocation9 + $0x248] sm:$0xff]
    %v2724 = vld [vmem:[#allocation9 + $0x250] sm:$0xff]
    %v2725 = vld [vmem:[#allocation9 + $0x258] sm:$0xff]
    %v2726 = vld [vmem:[#allocation9 + $0x260] sm:$0xff]
    %v2727 = vld [vmem:[#allocation9 + $0x268] sm:$0xff]
    %v2728 = vld [vmem:[#allocation9 + $0x270] sm:$0xff]
    %v2729 = vld [vmem:[#allocation9 + $0x278] sm:$0xff]
    %v2730 = vld [vmem:[#allocation9 + $0x280] sm:$0xff]
    %v2731 = vld [vmem:[#allocation9 + $0x288] sm:$0xff]
    %v2732 = vld [vmem:[#allocation9 + $0x290] sm:$0xff]
    %v2733 = vld [vmem:[#allocation9 + $0x298] sm:$0xff]
    %v2734 = vld [vmem:[#allocation9 + $0x2a0] sm:$0xff]
    %v2735 = vld [vmem:[#allocation9 + $0x2a8] sm:$0xff]
    %v2736 = vld [vmem:[#allocation9 + $0x2b0] sm:$0xff]
    %v2737 = vld [vmem:[#allocation9 + $0x2b8] sm:$0xff]
    %v2738 = vld [vmem:[#allocation9 + $0x2c0] sm:$0xff]
    %v2739 = vld [vmem:[#allocation9 + $0x2c8] sm:$0xff]
    %v2740 = vld [vmem:[#allocation9 + $0x2d0] sm:$0xff]
    %v2741 = vld [vmem:[#allocation9 + $0x2d8] sm:$0xff]
    %v2742 = vld [vmem:[#allocation9 + $0x2e0] sm:$0xff]
    %v2743 = vld [vmem:[#allocation9 + $0x2e8] sm:$0xff]
    %v2744 = vld [vmem:[#allocation9 + $0x2f0] sm:$0xff]
    %v2745 = vld [vmem:[#allocation9 + $0x2f8] sm:$0xff]
    %v2746 = vld [vmem:[#allocation9 + $0x300] sm:$0xff]
    %v2747 = vld [vmem:[#allocation9 + $0x308] sm:$0xff]
    %v2748 = vld [vmem:[#allocation9 + $0x310] sm:$0xff]
    %v2749 = vld [vmem:[#allocation9 + $0x318] sm:$0xff]
    %v2750 = vld [vmem:[#allocation9 + $0x320] sm:$0xff]
    %v2751 = vld [vmem:[#allocation9 + $0x328] sm:$0xff]
    %v2752 = vld [vmem:[#allocation9 + $0x330] sm:$0xff]
    %v2753 = vld [vmem:[#allocation9 + $0x338] sm:$0xff]
    %v2754 = vld [vmem:[#allocation9 + $0x340] sm:$0xff]
    %v2755 = vld [vmem:[#allocation9 + $0x348] sm:$0xff]
    %v2756 = vld [vmem:[#allocation9 + $0x350] sm:$0xff]
    %v2757 = vld [vmem:[#allocation9 + $0x358] sm:$0xff]
    %v2758 = vld [vmem:[#allocation9 + $0x360] sm:$0xff]
    %v2759 = vld [vmem:[#allocation9 + $0x368] sm:$0xff]
    %v2760 = vld [vmem:[#allocation9 + $0x370] sm:$0xff]
    %v2761 = vld [vmem:[#allocation9 + $0x378] sm:$0xff]
    %v2762 = vld [vmem:[#allocation9 + $0x380] sm:$0xff]
    %v2763 = vld [vmem:[#allocation9 + $0x388] sm:$0xff]
    %v2764 = vld [vmem:[#allocation9 + $0x390] sm:$0xff]
    %v2765 = vld [vmem:[#allocation9 + $0x398] sm:$0xff]
    %v2766 = vld [vmem:[#allocation9 + $0x3a0] sm:$0xff]
    %v2767 = vld [vmem:[#allocation9 + $0x3a8] sm:$0xff]
    %v2768 = vld [vmem:[#allocation9 + $0x3b0] sm:$0xff]
    %v2769 = vld [vmem:[#allocation9 + $0x3b8] sm:$0xff]
    %v2770 = vld [vmem:[#allocation9 + $0x3c0] sm:$0xff]
    %v2771 = vld [vmem:[#allocation9 + $0x3c8] sm:$0xff]
    %v2772 = vld [vmem:[#allocation9 + $0x3d0] sm:$0xff]
    %v2773 = vld [vmem:[#allocation9 + $0x3d8] sm:$0xff]
    %v2774 = vld [vmem:[#allocation9 + $0x3e0] sm:$0xff]
    %v2775 = vld [vmem:[#allocation9 + $0x3e8] sm:$0xff]
    %v2776 = vld [vmem:[#allocation9 + $0x3f0] sm:$0xff]
    %v2777 = vld [vmem:[#allocation9 + $0x3f8] sm:$0xff]
    %v2778 = vld [vmem:[#allocation9 + $0x400] sm:$0xff]
    %v2779 = vld [vmem:[#allocation9 + $0x408] sm:$0xff]
    %v2780 = vld [vmem:[#allocation9 + $0x410] sm:$0xff]
    %v2781 = vld [vmem:[#allocation9 + $0x418] sm:$0xff]
    %v2782 = vld [vmem:[#allocation9 + $0x420] sm:$0xff]
    %v2783 = vld [vmem:[#allocation9 + $0x428] sm:$0xff]
    %v2784 = vld [vmem:[#allocation9 + $0x430] sm:$0xff]
    %v2785 = vld [vmem:[#allocation9 + $0x438] sm:$0xff]
    %v2786 = vld [vmem:[#allocation9 + $0x440] sm:$0xff]
    %v2787 = vld [vmem:[#allocation9 + $0x448] sm:$0xff]
    %v2788 = vld [vmem:[#allocation9 + $0x450] sm:$0xff]
    %v2789 = vld [vmem:[#allocation9 + $0x458] sm:$0xff]
    %v2790 = vld [vmem:[#allocation9 + $0x460] sm:$0xff]
    %v2791 = vld [vmem:[#allocation9 + $0x468] sm:$0xff]
    %v2792 = vld [vmem:[#allocation9 + $0x470] sm:$0xff]
    %v2793 = vld [vmem:[#allocation9 + $0x478] sm:$0xff]
    %v2794 = vld [vmem:[%s10] sm:$0x1]
    %v2796 = vlaneseq
    %v2797 = vshrl.u32 %v2796, 7
    %v2798 = vsub.s32 0, %v2797
    %v2799 = vrot.slane %v2794, %v2798
    %2801 = vmatprep.subr.mxu0 0.0
    %2802 = vmatpush1.msra.mxu0 %v2650
    %2803 = vmatprep.subr.mxu0 0.0
    %2804 = vmatpush1.msra.mxu0 %v2651
    %2805 = vmatprep.subr.mxu0 0.0
    %2806 = vmatpush1.msra.mxu0 %v2652
    %2807 = vmatprep.subr.mxu0 0.0
    %2808 = vmatpush1.msra.mxu0 %v2653
    %2809 = vmatprep.subr.mxu0 0.0
    %2810 = vmatpush1.msra.mxu0 %v2654
    %2811 = vmatprep.subr.mxu0 0.0
    %2812 = vmatpush1.msra.mxu0 %v2655
    %2813 = vmatprep.subr.mxu0 0.0
    %2814 = vmatpush1.msra.mxu0 %v2656
    %2815 = vmatprep.subr.mxu0 0.0
    %2816 = vmatpush1.msra.mxu0 %v2657
    %2817 = vmatprep.subr.mxu0 0.0
    %2818 = vmatpush1.msra.mxu0 %v2658
    %2819 = vmatprep.subr.mxu0 0.0
    %2820 = vmatpush1.msra.mxu0 %v2659
    %2821 = vmatprep.subr.mxu0 0.0
    %2822 = vmatpush1.msra.mxu0 %v2660
    %2823 = vmatprep.subr.mxu0 0.0
    %2824 = vmatpush1.msra.mxu0 %v2661
    %2825 = vmatprep.subr.mxu0 0.0
    %2826 = vmatpush1.msra.mxu0 %v2662
    %2827 = vmatprep.subr.mxu0 0.0
    %2828 = vmatpush1.msra.mxu0 %v2663
    %2829 = vmatprep.subr.mxu0 0.0
    %2830 = vmatpush1.msra.mxu0 %v2664
    %2831 = vmatprep.subr.mxu0 0.0
    %2832 = vmatpush1.msra.mxu0 %v2665
    %2833 = vmatprep.subr.mxu0 0.0
    %2834 = vmatpush1.msra.mxu0 %v2666
    %2835 = vmatprep.subr.mxu0 0.0
    %2836 = vmatpush1.msra.mxu0 %v2667
    %2837 = vmatprep.subr.mxu0 0.0
    %2838 = vmatpush1.msra.mxu0 %v2668
    %2839 = vmatprep.subr.mxu0 0.0
    %2840 = vmatpush1.msra.mxu0 %v2669
    %2841 = vmatprep.subr.mxu0 0.0
    %2842 = vmatpush1.msra.mxu0 %v2670
    %2843 = vmatprep.subr.mxu0 0.0
    %2844 = vmatpush1.msra.mxu0 %v2671
    %2845 = vmatprep.subr.mxu0 0.0
    %2846 = vmatpush1.msra.mxu0 %v2672
    %2847 = vmatprep.subr.mxu0 0.0
    %2848 = vmatpush1.msra.mxu0 %v2673
    %2849 = vmatprep.subr.mxu0 0.0
    %2850 = vmatpush1.msra.mxu0 %v2674
    %2851 = vmatprep.subr.mxu0 0.0
    %2852 = vmatpush1.msra.mxu0 %v2675
    %2853 = vmatprep.subr.mxu0 0.0
    %2854 = vmatpush1.msra.mxu0 %v2676
    %2855 = vmatprep.subr.mxu0 0.0
    %2856 = vmatpush1.msra.mxu0 %v2677
    %2857 = vmatprep.subr.mxu0 0.0
    %2858 = vmatpush1.msra.mxu0 %v2678
    %2859 = vmatprep.subr.mxu0 0.0
    %2860 = vmatpush1.msra.mxu0 %v2679
    %2861 = vmatprep.subr.mxu0 0.0
    %2862 = vmatpush1.msra.mxu0 %v2680
    %2863 = vmatprep.subr.mxu0 0.0
    %2864 = vmatpush1.msra.mxu0 %v2681
    %2865 = vmatprep.mubr.f32.mxu0 %v2588
    %2866 = vmatmul.mubr.f32.gmra.mrb[0].mxu0 %v2587
    %v2867 = vpop.f32.mrb[0].mxu0
    %v2868 = vadd.f32 %v2799, %v2867
    %v2869 = vpop.f32.mrb[0].mxu0
    %2870 = vmatprep.mubr.f32.mxu0 %v2597
    %2871 = vmatmul.mubr.f32.gmra.mrb[0].mxu0 %v2596
    %v2872 = vpop.f32.mrb[0].mxu0
    %v2873 = vadd.f32 %v2799, %v2872
    %v2874 = vpop.f32.mrb[0].mxu0
    %2875 = vmatprep.mubr.f32.mxu0 %v2606
    %2876 = vmatmul.mubr.f32.gmra.mrb[0].mxu0 %v2605
    %v2877 = vpop.f32.mrb[0].mxu0
    %v2878 = vadd.f32 %v2799, %v2877
    %v2879 = vpop.f32.mrb[0].mxu0
    %2880 = vmatprep.mubr.f32.mxu0 %v2615
    %2881 = vmatmul.mubr.f32.gmra.mrb[0].mxu0 %v2614
    %v2882 = vpop.f32.mrb[0].mxu0
    %v2883 = vadd.f32 %v2799, %v2882
    %v2884 = vpop.f32.mrb[0].mxu0
    %2885 = vmatprep.mubr.f32.mxu0 %v2624
    %2886 = vmatmul.mubr.f32.gmra.mrb[0].mxu0 %v2623
    %v2887 = vpop.f32.mrb[0].mxu0
    %v2888 = vadd.f32 %v2799, %v2887
    %v2889 = vpop.f32.mrb[0].mxu0
    %2890 = vmatprep.mubr.f32.mxu0 %v2633
    %2891 = vmatmul.mubr.f32.gmra.mrb[0].mxu0 %v2632
    %v2892 = vpop.f32.mrb[0].mxu0
    %v2893 = vadd.f32 %v2799, %v2892
    %v2894 = vpop.f32.mrb[0].mxu0
    %2895 = vmatprep.mubr.f32.mxu0 %v2642
    %2896 = vmatmul.mubr.f32.gmra.mrb[0].mxu0 %v2641
    %v2897 = vpop.f32.mrb[0].mxu0
    %v2898 = vadd.f32 %v2799, %v2897
    %v2899 = vpop.f32.mrb[0].mxu0
    %2900 = vdwg.mxu0
    %2901 = vmatprep.subr.mxu0 0.0
    %2902 = vmatpush1.msra.mxu0 %v2682
    %2903 = vmatprep.subr.mxu0 0.0
    %2904 = vmatpush1.msra.mxu0 %v2683
    %2905 = vmatprep.subr.mxu0 0.0
    %2906 = vmatpush1.msra.mxu0 %v2684
    %2907 = vmatprep.subr.mxu0 0.0
    %2908 = vmatpush1.msra.mxu0 %v2685
    %2909 = vmatprep.subr.mxu0 0.0
    %2910 = vmatpush1.msra.mxu0 %v2686
    %2911 = vmatprep.subr.mxu0 0.0
    %2912 = vmatpush1.msra.mxu0 %v2687
    %2913 = vmatprep.subr.mxu0 0.0
    %2914 = vmatpush1.msra.mxu0 %v2688
    %2915 = vmatprep.subr.mxu0 0.0
    %2916 = vmatpush1.msra.mxu0 %v2689
    %2917 = vmatprep.subr.mxu0 0.0
    %2918 = vmatpush1.msra.mxu0 %v2690
    %2919 = vmatprep.subr.mxu0 0.0
    %2920 = vmatpush1.msra.mxu0 %v2691
    %2921 = vmatprep.subr.mxu0 0.0
    %2922 = vmatpush1.msra.mxu0 %v2692
    %2923 = vmatprep.subr.mxu0 0.0
    %2924 = vmatpush1.msra.mxu0 %v2693
    %2925 = vmatprep.subr.mxu0 0.0
    %2926 = vmatpush1.msra.mxu0 %v2694
    %2927 = vmatprep.subr.mxu0 0.0
    %2928 = vmatpush1.msra.mxu0 %v2695
    %2929 = vmatprep.subr.mxu0 0.0
    %2930 = vmatpush1.msra.mxu0 %v2696
    %2931 = vmatprep.subr.mxu0 0.0
    %2932 = vmatpush1.msra.mxu0 %v2697
    %2933 = vmatprep.subr.mxu0 0.0
    %2934 = vmatpush1.msra.mxu0 %v2698
    %2935 = vmatprep.subr.mxu0 0.0
    %2936 = vmatpush1.msra.mxu0 %v2699
    %2937 = vmatprep.subr.mxu0 0.0
    %2938 = vmatpush1.msra.mxu0 %v2700
    %2939 = vmatprep.subr.mxu0 0.0
    %2940 = vmatpush1.msra.mxu0 %v2701
    %2941 = vmatprep.subr.mxu0 0.0
    %2942 = vmatpush1.msra.mxu0 %v2702
    %2943 = vmatprep.subr.mxu0 0.0
    %2944 = vmatpush1.msra.mxu0 %v2703
    %2945 = vmatprep.subr.mxu0 0.0
    %2946 = vmatpush1.msra.mxu0 %v2704
    %2947 = vmatprep.subr.mxu0 0.0
    %2948 = vmatpush1.msra.mxu0 %v2705
    %2949 = vmatprep.subr.mxu0 0.0
    %2950 = vmatpush1.msra.mxu0 %v2706
    %2951 = vmatprep.subr.mxu0 0.0
    %2952 = vmatpush1.msra.mxu0 %v2707
    %2953 = vmatprep.subr.mxu0 0.0
    %2954 = vmatpush1.msra.mxu0 %v2708
    %2955 = vmatprep.subr.mxu0 0.0
    %2956 = vmatpush1.msra.mxu0 %v2709
    %2957 = vmatprep.subr.mxu0 0.0
    %2958 = vmatpush1.msra.mxu0 %v2710
    %2959 = vmatprep.subr.mxu0 0.0
    %2960 = vmatpush1.msra.mxu0 %v2711
    %2961 = vmatprep.subr.mxu0 0.0
    %2962 = vmatpush1.msra.mxu0 %v2712
    %2963 = vmatprep.subr.mxu0 0.0
    %2964 = vmatpush1.msra.mxu0 %v2713
    %2965 = vmatprep.mubr.f32.mxu0 %v2590
    %2966 = vmatmul.mubr.f32.gmra.mrb[0].mxu0 %v2589
    %v2967 = vpop.f32.mrb[0].mxu0
    %v2968 = vadd.f32 %v2868, %v2967
    %v2969 = vpop.f32.mrb[0].mxu0
    %2970 = vmatprep.mubr.f32.mxu0 %v2599
    %2971 = vmatmul.mubr.f32.gmra.mrb[0].mxu0 %v2598
    %v2972 = vpop.f32.mrb[0].mxu0
    %v2973 = vadd.f32 %v2873, %v2972
    %v2974 = vpop.f32.mrb[0].mxu0
    %2975 = vmatprep.mubr.f32.mxu0 %v2608
    %2976 = vmatmul.mubr.f32.gmra.mrb[0].mxu0 %v2607
    %v2977 = vpop.f32.mrb[0].mxu0
    %v2978 = vadd.f32 %v2878, %v2977
    %v2979 = vpop.f32.mrb[0].mxu0
    %2980 = vmatprep.mubr.f32.mxu0 %v2617
    %2981 = vmatmul.mubr.f32.gmra.mrb[0].mxu0 %v2616
    %v2982 = vpop.f32.mrb[0].mxu0
    %v2983 = vadd.f32 %v2883, %v2982
    %v2984 = vpop.f32.mrb[0].mxu0
    %2985 = vmatprep.mubr.f32.mxu0 %v2626
    %2986 = vmatmul.mubr.f32.gmra.mrb[0].mxu0 %v2625
    %v2987 = vpop.f32.mrb[0].mxu0
    %v2988 = vadd.f32 %v2888, %v2987
    %v2989 = vpop.f32.mrb[0].mxu0
    %2990 = vmatprep.mubr.f32.mxu0 %v2635
    %2991 = vmatmul.mubr.f32.gmra.mrb[0].mxu0 %v2634
    %v2992 = vpop.f32.mrb[0].mxu0
    %v2993 = vadd.f32 %v2893, %v2992
    %v2994 = vpop.f32.mrb[0].mxu0
    %2995 = vmatprep.mubr.f32.mxu0 %v2644
    %2996 = vmatmul.mubr.f32.gmra.mrb[0].mxu0 %v2643
    %v2997 = vpop.f32.mrb[0].mxu0
    %v2998 = vadd.f32 %v2898, %v2997
    %v2999 = vpop.f32.mrb[0].mxu0
    %3000 = vdwg.mxu0
    %3001 = vmatprep.subr.mxu0 0.0
    %3002 = vmatpush1.msra.mxu0 %v2714
    %3003 = vmatprep.subr.mxu0 0.0
    %3004 = vmatpush1.msra.mxu0 %v2715
    %3005 = vmatprep.subr.mxu0 0.0
    %3006 = vmatpush1.msra.mxu0 %v2716
    %3007 = vmatprep.subr.mxu0 0.0
    %3008 = vmatpush1.msra.mxu0 %v2717
    %3009 = vmatprep.subr.mxu0 0.0
    %3010 = vmatpush1.msra.mxu0 %v2718
    %3011 = vmatprep.subr.mxu0 0.0
    %3012 = vmatpush1.msra.mxu0 %v2719
    %3013 = vmatprep.subr.mxu0 0.0
    %3014 = vmatpush1.msra.mxu0 %v2720
    %3015 = vmatprep.subr.mxu0 0.0
    %3016 = vmatpush1.msra.mxu0 %v2721
    %3017 = vmatprep.subr.mxu0 0.0
    %3018 = vmatpush1.msra.mxu0 %v2722
    %3019 = vmatprep.subr.mxu0 0.0
    %3020 = vmatpush1.msra.mxu0 %v2723
    %3021 = vmatprep.subr.mxu0 0.0
    %3022 = vmatpush1.msra.mxu0 %v2724
    %3023 = vmatprep.subr.mxu0 0.0
    %3024 = vmatpush1.msra.mxu0 %v2725
    %3025 = vmatprep.subr.mxu0 0.0
    %3026 = vmatpush1.msra.mxu0 %v2726
    %3027 = vmatprep.subr.mxu0 0.0
    %3028 = vmatpush1.msra.mxu0 %v2727
    %3029 = vmatprep.subr.mxu0 0.0
    %3030 = vmatpush1.msra.mxu0 %v2728
    %3031 = vmatprep.subr.mxu0 0.0
    %3032 = vmatpush1.msra.mxu0 %v2729
    %3033 = vmatprep.subr.mxu0 0.0
    %3034 = vmatpush1.msra.mxu0 %v2730
    %3035 = vmatprep.subr.mxu0 0.0
    %3036 = vmatpush1.msra.mxu0 %v2731
    %3037 = vmatprep.subr.mxu0 0.0
    %3038 = vmatpush1.msra.mxu0 %v2732
    %3039 = vmatprep.subr.mxu0 0.0
    %3040 = vmatpush1.msra.mxu0 %v2733
    %3041 = vmatprep.subr.mxu0 0.0
    %3042 = vmatpush1.msra.mxu0 %v2734
    %3043 = vmatprep.subr.mxu0 0.0
    %3044 = vmatpush1.msra.mxu0 %v2735
    %3045 = vmatprep.subr.mxu0 0.0
    %3046 = vmatpush1.msra.mxu0 %v2736
    %3047 = vmatprep.subr.mxu0 0.0
    %3048 = vmatpush1.msra.mxu0 %v2737
    %3049 = vmatprep.subr.mxu0 0.0
    %3050 = vmatpush1.msra.mxu0 %v2738
    %3051 = vmatprep.subr.mxu0 0.0
    %3052 = vmatpush1.msra.mxu0 %v2739
    %3053 = vmatprep.subr.mxu0 0.0
    %3054 = vmatpush1.msra.mxu0 %v2740
    %3055 = vmatprep.subr.mxu0 0.0
    %3056 = vmatpush1.msra.mxu0 %v2741
    %3057 = vmatprep.subr.mxu0 0.0
    %3058 = vmatpush1.msra.mxu0 %v2742
    %3059 = vmatprep.subr.mxu0 0.0
    %3060 = vmatpush1.msra.mxu0 %v2743
    %3061 = vmatprep.subr.mxu0 0.0
    %3062 = vmatpush1.msra.mxu0 %v2744
    %3063 = vmatprep.subr.mxu0 0.0
    %3064 = vmatpush1.msra.mxu0 %v2745
    %3065 = vmatprep.mubr.f32.mxu0 %v2592
    %3066 = vmatmul.mubr.f32.gmra.mrb[0].mxu0 %v2591
    %v3067 = vpop.f32.mrb[0].mxu0
    %v3068 = vadd.f32 %v2968, %v3067
    %v3069 = vpop.f32.mrb[0].mxu0
    %3070 = vmatprep.mubr.f32.mxu0 %v2601
    %3071 = vmatmul.mubr.f32.gmra.mrb[0].mxu0 %v2600
    %v3072 = vpop.f32.mrb[0].mxu0
    %v3073 = vadd.f32 %v2973, %v3072
    %v3074 = vpop.f32.mrb[0].mxu0
    %3075 = vmatprep.mubr.f32.mxu0 %v2610
    %3076 = vmatmul.mubr.f32.gmra.mrb[0].mxu0 %v2609
    %v3077 = vpop.f32.mrb[0].mxu0
    %v3078 = vadd.f32 %v2978, %v3077
    %v3079 = vpop.f32.mrb[0].mxu0
    %3080 = vmatprep.mubr.f32.mxu0 %v2619
    %3081 = vmatmul.mubr.f32.gmra.mrb[0].mxu0 %v2618
    %v3082 = vpop.f32.mrb[0].mxu0
    %v3083 = vadd.f32 %v2983, %v3082
    %v3084 = vpop.f32.mrb[0].mxu0
    %3085 = vmatprep.mubr.f32.mxu0 %v2628
    %3086 = vmatmul.mubr.f32.gmra.mrb[0].mxu0 %v2627
    %v3087 = vpop.f32.mrb[0].mxu0
    %v3088 = vadd.f32 %v2988, %v3087
    %v3089 = vpop.f32.mrb[0].mxu0
    %3090 = vmatprep.mubr.f32.mxu0 %v2637
    %3091 = vmatmul.mubr.f32.gmra.mrb[0].mxu0 %v2636
    %v3092 = vpop.f32.mrb[0].mxu0
    %v3093 = vadd.f32 %v2993, %v3092
    %v3094 = vpop.f32.mrb[0].mxu0
    %3095 = vmatprep.mubr.f32.mxu0 %v2646
    %3096 = vmatmul.mubr.f32.gmra.mrb[0].mxu0 %v2645
    %v3097 = vpop.f32.mrb[0].mxu0
    %v3098 = vadd.f32 %v2998, %v3097
    %v3099 = vpop.f32.mrb[0].mxu0
    %3100 = vdwg.mxu0
    %3101 = vmatprep.subr.mxu0 0.0
    %3102 = vmatpush1.msra.mxu0 %v2746
    %3103 = vmatprep.subr.mxu0 0.0
    %3104 = vmatpush1.msra.mxu0 %v2747
    %3105 = vmatprep.subr.mxu0 0.0
    %3106 = vmatpush1.msra.mxu0 %v2748
    %3107 = vmatprep.subr.mxu0 0.0
    %3108 = vmatpush1.msra.mxu0 %v2749
    %3109 = vmatprep.subr.mxu0 0.0
    %3110 = vmatpush1.msra.mxu0 %v2750
    %3111 = vmatprep.subr.mxu0 0.0
    %3112 = vmatpush1.msra.mxu0 %v2751
    %3113 = vmatprep.subr.mxu0 0.0
    %3114 = vmatpush1.msra.mxu0 %v2752
    %3115 = vmatprep.subr.mxu0 0.0
    %3116 = vmatpush1.msra.mxu0 %v2753
    %3117 = vmatprep.subr.mxu0 0.0
    %3118 = vmatpush1.msra.mxu0 %v2754
    %3119 = vmatprep.subr.mxu0 0.0
    %3120 = vmatpush1.msra.mxu0 %v2755
    %3121 = vmatprep.subr.mxu0 0.0
    %3122 = vmatpush1.msra.mxu0 %v2756
    %3123 = vmatprep.subr.mxu0 0.0
    %3124 = vmatpush1.msra.mxu0 %v2757
    %3125 = vmatprep.subr.mxu0 0.0
    %3126 = vmatpush1.msra.mxu0 %v2758
    %3127 = vmatprep.subr.mxu0 0.0
    %3128 = vmatpush1.msra.mxu0 %v2759
    %3129 = vmatprep.subr.mxu0 0.0
    %3130 = vmatpush1.msra.mxu0 %v2760
    %3131 = vmatprep.subr.mxu0 0.0
    %3132 = vmatpush1.msra.mxu0 %v2761
    %3133 = vmatprep.subr.mxu0 0.0
    %3134 = vmatpush1.msra.mxu0 %v2762
    %3135 = vmatprep.subr.mxu0 0.0
    %3136 = vmatpush1.msra.mxu0 %v2763
    %3137 = vmatprep.subr.mxu0 0.0
    %3138 = vmatpush1.msra.mxu0 %v2764
    %3139 = vmatprep.subr.mxu0 0.0
    %3140 = vmatpush1.msra.mxu0 %v2765
    %3141 = vmatprep.subr.mxu0 0.0
    %3142 = vmatpush1.msra.mxu0 %v2766
    %3143 = vmatprep.subr.mxu0 0.0
    %3144 = vmatpush1.msra.mxu0 %v2767
    %3145 = vmatprep.subr.mxu0 0.0
    %3146 = vmatpush1.msra.mxu0 %v2768
    %3147 = vmatprep.subr.mxu0 0.0
    %3148 = vmatpush1.msra.mxu0 %v2769
    %3149 = vmatprep.subr.mxu0 0.0
    %3150 = vmatpush1.msra.mxu0 %v2770
    %3151 = vmatprep.subr.mxu0 0.0
    %3152 = vmatpush1.msra.mxu0 %v2771
    %3153 = vmatprep.subr.mxu0 0.0
    %3154 = vmatpush1.msra.mxu0 %v2772
    %3155 = vmatprep.subr.mxu0 0.0
    %3156 = vmatpush1.msra.mxu0 %v2773
    %3157 = vmatprep.subr.mxu0 0.0
    %3158 = vmatpush1.msra.mxu0 %v2774
    %3159 = vmatprep.subr.mxu0 0.0
    %3160 = vmatpush1.msra.mxu0 %v2775
    %3161 = vmatprep.subr.mxu0 0.0
    %3162 = vmatpush1.msra.mxu0 %v2776
    %3163 = vmatprep.subr.mxu0 0.0
    %3164 = vmatpush1.msra.mxu0 %v2777
    %3165 = vmatprep.mubr.f32.mxu0 %v2594
    %3166 = vmatmul.mubr.f32.gmra.mrb[0].mxu0 %v2593
    %v3167 = vpop.f32.mrb[0].mxu0
    %v3168 = vadd.f32 %v3068, %v3167
    %v3169 = vpop.f32.mrb[0].mxu0
    %3170 = vmatprep.mubr.f32.mxu0 %v2603
    %3171 = vmatmul.mubr.f32.gmra.mrb[0].mxu0 %v2602
    %v3172 = vpop.f32.mrb[0].mxu0
    %v3173 = vadd.f32 %v3073, %v3172
    %v3174 = vpop.f32.mrb[0].mxu0
    %3175 = vmatprep.mubr.f32.mxu0 %v2612
    %3176 = vmatmul.mubr.f32.gmra.mrb[0].mxu0 %v2611
    %v3177 = vpop.f32.mrb[0].mxu0
    %v3178 = vadd.f32 %v3078, %v3177
    %v3179 = vpop.f32.mrb[0].mxu0
    %3180 = vmatprep.mubr.f32.mxu0 %v2621
    %3181 = vmatmul.mubr.f32.gmra.mrb[0].mxu0 %v2620
    %v3182 = vpop.f32.mrb[0].mxu0
    %v3183 = vadd.f32 %v3083, %v3182
    %v3184 = vpop.f32.mrb[0].mxu0
    %3185 = vmatprep.mubr.f32.mxu0 %v2630
    %3186 = vmatmul.mubr.f32.gmra.mrb[0].mxu0 %v2629
    %v3187 = vpop.f32.mrb[0].mxu0
    %v3188 = vadd.f32 %v3088, %v3187
    %v3189 = vpop.f32.mrb[0].mxu0
    %3190 = vmatprep.mubr.f32.mxu0 %v2639
    %3191 = vmatmul.mubr.f32.gmra.mrb[0].mxu0 %v2638
    %v3192 = vpop.f32.mrb[0].mxu0
    %v3193 = vadd.f32 %v3093, %v3192
    %v3194 = vpop.f32.mrb[0].mxu0
    %3195 = vmatprep.mubr.f32.mxu0 %v2648
    %3196 = vmatmul.mubr.f32.gmra.mrb[0].mxu0 %v2647
    %v3197 = vpop.f32.mrb[0].mxu0
    %v3198 = vadd.f32 %v3098, %v3197
    %v3199 = vpop.f32.mrb[0].mxu0
    %3200 = vdwg.mxu0
    %3201 = vmatprep.subr.mxu0 0.0
    %3202 = vmatpush1.msra.mxu0 %v2778
    %3203 = vmatprep.subr.mxu0 0.0
    %3204 = vmatpush1.msra.mxu0 %v2779
    %3205 = vmatprep.subr.mxu0 0.0
    %3206 = vmatpush1.msra.mxu0 %v2780
    %3207 = vmatprep.subr.mxu0 0.0
    %3208 = vmatpush1.msra.mxu0 %v2781
    %3209 = vmatprep.subr.mxu0 0.0
    %3210 = vmatpush1.msra.mxu0 %v2782
    %3211 = vmatprep.subr.mxu0 0.0
    %3212 = vmatpush1.msra.mxu0 %v2783
    %3213 = vmatprep.subr.mxu0 0.0
    %3214 = vmatpush1.msra.mxu0 %v2784
    %3215 = vmatprep.subr.mxu0 0.0
    %3216 = vmatpush1.msra.mxu0 %v2785
    %3217 = vmatprep.subr.mxu0 0.0
    %3218 = vmatpush1.msra.mxu0 %v2786
    %3219 = vmatprep.subr.mxu0 0.0
    %3220 = vmatpush1.msra.mxu0 %v2787
    %3221 = vmatprep.subr.mxu0 0.0
    %3222 = vmatpush1.msra.mxu0 %v2788
    %3223 = vmatprep.subr.mxu0 0.0
    %3224 = vmatpush1.msra.mxu0 %v2789
    %3225 = vmatprep.subr.mxu0 0.0
    %3226 = vmatpush1.msra.mxu0 %v2790
    %3227 = vmatprep.subr.mxu0 0.0
    %3228 = vmatpush1.msra.mxu0 %v2791
    %3229 = vmatprep.subr.mxu0 0.0
    %3230 = vmatpush1.msra.mxu0 %v2792
    %3231 = vmatprep.subr.mxu0 0.0
    %3232 = vmatpush1.msra.mxu0 %v2793
    %3233 = vmatprep.subr.mxu0 0.0
    %3234 = vmatpush1.msra.mxu0 0.0
    %3235 = vmatprep.subr.mxu0 0.0
    %3236 = vmatpush1.msra.mxu0 0.0
    %3237 = vmatprep.subr.mxu0 0.0
    %3238 = vmatpush1.msra.mxu0 0.0
    %3239 = vmatprep.subr.mxu0 0.0
    %3240 = vmatpush1.msra.mxu0 0.0
    %3241 = vmatprep.subr.mxu0 0.0
    %3242 = vmatpush1.msra.mxu0 0.0
    %3243 = vmatprep.subr.mxu0 0.0
    %3244 = vmatpush1.msra.mxu0 0.0
    %3245 = vmatprep.subr.mxu0 0.0
    %3246 = vmatpush1.msra.mxu0 0.0
    %3247 = vmatprep.subr.mxu0 0.0
    %3248 = vmatpush1.msra.mxu0 0.0
    %3249 = vmatprep.subr.mxu0 0.0
    %3250 = vmatpush1.msra.mxu0 0.0
    %3251 = vmatprep.subr.mxu0 0.0
    %3252 = vmatpush1.msra.mxu0 0.0
    %3253 = vmatprep.subr.mxu0 0.0
    %3254 = vmatpush1.msra.mxu0 0.0
    %3255 = vmatprep.subr.mxu0 0.0
    %3256 = vmatpush1.msra.mxu0 0.0
    %3257 = vmatprep.subr.mxu0 0.0
    %3258 = vmatpush1.msra.mxu0 0.0
    %3259 = vmatprep.subr.mxu0 0.0
    %3260 = vmatpush1.msra.mxu0 0.0
    %3261 = vmatprep.subr.mxu0 0.0
    %3262 = vmatpush1.msra.mxu0 0.0
    %3263 = vmatprep.subr.mxu0 0.0
    %3264 = vmatpush1.msra.mxu0 0.0
    %3265 = vmatprep.mubr.f32.mxu0 0.0
    %3266 = vmatmul.mubr.f32.gmra.mrb[0].mxu0 %v2595
    %v3267 = vpop.f32.mrb[0].mxu0
    %v3268 = vadd.f32 %v3168, %v3267
    %v3269 = vpop.f32.mrb[0].mxu0
    %3270 = vmatprep.mubr.f32.mxu0 0.0
    %3271 = vmatmul.mubr.f32.gmra.mrb[0].mxu0 %v2604
    %v3272 = vpop.f32.mrb[0].mxu0
    %v3273 = vadd.f32 %v3173, %v3272
    %v3274 = vpop.f32.mrb[0].mxu0
    %3275 = vmatprep.mubr.f32.mxu0 0.0
    %3276 = vmatmul.mubr.f32.gmra.mrb[0].mxu0 %v2613
    %v3277 = vpop.f32.mrb[0].mxu0
    %v3278 = vadd.f32 %v3178, %v3277
    %v3279 = vpop.f32.mrb[0].mxu0
    %3280 = vmatprep.mubr.f32.mxu0 0.0
    %3281 = vmatmul.mubr.f32.gmra.mrb[0].mxu0 %v2622
    %v3282 = vpop.f32.mrb[0].mxu0
    %v3283 = vadd.f32 %v3183, %v3282
    %v3284 = vpop.f32.mrb[0].mxu0
    %3285 = vmatprep.mubr.f32.mxu0 0.0
    %3286 = vmatmul.mubr.f32.gmra.mrb[0].mxu0 %v2631
    %v3287 = vpop.f32.mrb[0].mxu0
    %v3288 = vadd.f32 %v3188, %v3287
    %v3289 = vpop.f32.mrb[0].mxu0
    %3290 = vmatprep.mubr.f32.mxu0 0.0
    %3291 = vmatmul.mubr.f32.gmra.mrb[0].mxu0 %v2640
    %v3292 = vpop.f32.mrb[0].mxu0
    %v3293 = vadd.f32 %v3193, %v3292
    %v3294 = vpop.f32.mrb[0].mxu0
    %3295 = vmatprep.mubr.f32.mxu0 0.0
    %3296 = vmatmul.mubr.f32.gmra.mrb[0].mxu0 %v2649
    %v3297 = vpop.f32.mrb[0].mxu0
    %v3298 = vadd.f32 %v3198, %v3297
    %v3299 = vpop.f32.mrb[0].mxu0
    %3300 = vdwg.mxu0
    %v3301 = vmax.f32 %v3268, 0.0
    %v3302 = vmax.f32 %v3273, 0.0
    %v3303 = vmax.f32 %v3278, 0.0
    %v3304 = vmax.f32 %v3283, 0.0
    %v3305 = vmax.f32 %v3288, 0.0
    %v3306 = vmax.f32 %v3293, 0.0
    %v3307 = vmax.f32 %v3298, 0.0
    %3308 = vst [vmem:[#allocation2 + $0x6] sm:$0xff] %v3301
    %3309 = vst [vmem:[#allocation2 + $0xe] sm:$0xff] %v3302
    %3310 = vst [vmem:[#allocation2 + $0x16] sm:$0xff] %v3303
    %3311 = vst [vmem:[#allocation2 + $0x1e] sm:$0xff] %v3304
    %3312 = vst [vmem:[#allocation2 + $0x26] sm:$0xff] %v3305
    %3313 = vst [vmem:[#allocation2 + $0x2e] sm:$0xff] %v3306
    %3314 = vst [vmem:[#allocation2 + $0x36] sm:$0x3] %v3307
    %v3315 = vld [vmem:[#allocation2] sm:$0xff]
    %v3316 = vld [vmem:[#allocation2 + $0x8] sm:$0xff]
    %v3317 = vld [vmem:[#allocation2 + $0x10] sm:$0xff]
    %v3318 = vld [vmem:[#allocation2 + $0x18] sm:$0xff]
    %v3319 = vld [vmem:[#allocation2 + $0x20] sm:$0xff]
    %v3320 = vld [vmem:[#allocation2 + $0x28] sm:$0xff]
    %v3321 = vld [vmem:[#allocation2 + $0x30] sm:$0x3]
    %v3322 = vmul.f32 %v3315, %v308
    %v3323 = vmul.f32 %v3316, %v313
    %v3324 = vmul.f32 %v3317, %v318
    %v3325 = vmul.f32 %v3318, %v323
    %v3326 = vmul.f32 %v3319, %v328
    %v3327 = vmul.f32 %v3320, %v333
    %v3328 = vmul.f32 %v3321, %v338
    %3329 = vst [vmem:[#allocation3] sm:$0xff] %v3322
    %3330 = vst [vmem:[#allocation3 + $0x48] sm:$0xff] %v3323
    %3331 = vst [vmem:[#allocation3 + $0x90] sm:$0xff] %v3324
    %3332 = vst [vmem:[#allocation3 + $0xd8] sm:$0xff] %v3325
    %3333 = vst [vmem:[#allocation3 + $0x120] sm:$0xff] %v3326
    %3334 = vst [vmem:[#allocation3 + $0x168] sm:$0xff] %v3327
    %3335 = vst [vmem:[#allocation3 + $0x1b0] sm:$0x3] %v3328
    %v3336 = vld [vmem:[#allocation2 + $0x1] sm:$0xff]
    %v3337 = vld [vmem:[#allocation2 + $0x9] sm:$0xff]
    %v3338 = vld [vmem:[#allocation2 + $0x11] sm:$0xff]
    %v3339 = vld [vmem:[#allocation2 + $0x19] sm:$0xff]
    %v3340 = vld [vmem:[#allocation2 + $0x21] sm:$0xff]
    %v3341 = vld [vmem:[#allocation2 + $0x29] sm:$0xff]
    %v3342 = vld [vmem:[#allocation2 + $0x31] sm:$0x3]
    %v3343 = vmul.f32 %v3336, %v363
    %v3344 = vmul.f32 %v3337, %v367
    %v3345 = vmul.f32 %v3338, %v371
    %v3346 = vmul.f32 %v3339, %v375
    %v3347 = vmul.f32 %v3340, %v379
    %v3348 = vmul.f32 %v3341, %v383
    %v3349 = vmul.f32 %v3342, %v387
    %3350 = vst [vmem:[#allocation3 + $0x8] sm:$0xff] %v3343
    %3351 = vst [vmem:[#allocation3 + $0x50] sm:$0xff] %v3344
    %3352 = vst [vmem:[#allocation3 + $0x98] sm:$0xff] %v3345
    %3353 = vst [vmem:[#allocation3 + $0xe0] sm:$0xff] %v3346
    %3354 = vst [vmem:[#allocation3 + $0x128] sm:$0xff] %v3347
    %3355 = vst [vmem:[#allocation3 + $0x170] sm:$0xff] %v3348
    %3356 = vst [vmem:[#allocation3 + $0x1b8] sm:$0x3] %v3349
    %v3357 = vld [vmem:[#allocation2 + $0x2] sm:$0xff]
    %v3358 = vld [vmem:[#allocation2 + $0xa] sm:$0xff]
    %v3359 = vld [vmem:[#allocation2 + $0x12] sm:$0xff]
    %v3360 = vld [vmem:[#allocation2 + $0x1a] sm:$0xff]
    %v3361 = vld [vmem:[#allocation2 + $0x22] sm:$0xff]
    %v3362 = vld [vmem:[#allocation2 + $0x2a] sm:$0xff]
    %v3363 = vld [vmem:[#allocation2 + $0x32] sm:$0x3]
    %v3364 = vmul.f32 %v3357, %v412
    %v3365 = vmul.f32 %v3358, %v416
    %v3366 = vmul.f32 %v3359, %v420
    %v3367 = vmul.f32 %v3360, %v424
    %v3368 = vmul.f32 %v3361, %v428
    %v3369 = vmul.f32 %v3362, %v432
    %v3370 = vmul.f32 %v3363, %v436
    %3371 = vst [vmem:[#allocation3 + $0x10] sm:$0xff] %v3364
    %3372 = vst [vmem:[#allocation3 + $0x58] sm:$0xff] %v3365
    %3373 = vst [vmem:[#allocation3 + $0xa0] sm:$0xff] %v3366
    %3374 = vst [vmem:[#allocation3 + $0xe8] sm:$0xff] %v3367
    %3375 = vst [vmem:[#allocation3 + $0x130] sm:$0xff] %v3368
    %3376 = vst [vmem:[#allocation3 + $0x178] sm:$0xff] %v3369
    %3377 = vst [vmem:[#allocation3 + $0x1c0] sm:$0x3] %v3370
    %v3378 = vld [vmem:[#allocation2 + $0x5] sm:$0xff]
    %v3379 = vld [vmem:[#allocation2 + $0xd] sm:$0xff]
    %v3380 = vld [vmem:[#allocation2 + $0x15] sm:$0xff]
    %v3381 = vld [vmem:[#allocation2 + $0x1d] sm:$0xff]
    %v3382 = vld [vmem:[#allocation2 + $0x25] sm:$0xff]
    %v3383 = vld [vmem:[#allocation2 + $0x2d] sm:$0xff]
    %v3384 = vld [vmem:[#allocation2 + $0x35] sm:$0x3]
    %v3385 = vmul.f32 %v3378, %v461
    %v3386 = vmul.f32 %v3379, %v465
    %v3387 = vmul.f32 %v3380, %v469
    %v3388 = vmul.f32 %v3381, %v473
    %v3389 = vmul.f32 %v3382, %v477
    %v3390 = vmul.f32 %v3383, %v481
    %v3391 = vmul.f32 %v3384, %v485
    %3392 = vst [vmem:[#allocation3 + $0x18] sm:$0xff] %v3385
    %3393 = vst [vmem:[#allocation3 + $0x60] sm:$0xff] %v3386
    %3394 = vst [vmem:[#allocation3 + $0xa8] sm:$0xff] %v3387
    %3395 = vst [vmem:[#allocation3 + $0xf0] sm:$0xff] %v3388
    %3396 = vst [vmem:[#allocation3 + $0x138] sm:$0xff] %v3389
    %3397 = vst [vmem:[#allocation3 + $0x180] sm:$0xff] %v3390
    %3398 = vst [vmem:[#allocation3 + $0x1c8] sm:$0x3] %v3391
    %v3399 = vld [vmem:[#allocation2 + $0x6] sm:$0xff]
    %v3400 = vld [vmem:[#allocation2 + $0xe] sm:$0xff]
    %v3401 = vld [vmem:[#allocation2 + $0x16] sm:$0xff]
    %v3402 = vld [vmem:[#allocation2 + $0x1e] sm:$0xff]
    %v3403 = vld [vmem:[#allocation2 + $0x26] sm:$0xff]
    %v3404 = vld [vmem:[#allocation2 + $0x2e] sm:$0xff]
    %v3405 = vld [vmem:[#allocation2 + $0x36] sm:$0x3]
    %v3406 = vmul.f32 %v3399, %v510
    %v3407 = vmul.f32 %v3400, %v514
    %v3408 = vmul.f32 %v3401, %v518
    %v3409 = vmul.f32 %v3402, %v522
    %v3410 = vmul.f32 %v3403, %v526
    %v3411 = vmul.f32 %v3404, %v530
    %v3412 = vmul.f32 %v3405, %v534
    %3413 = vst [vmem:[#allocation3 + $0x20] sm:$0xff] %v3406
    %3414 = vst [vmem:[#allocation3 + $0x68] sm:$0xff] %v3407
    %3415 = vst [vmem:[#allocation3 + $0xb0] sm:$0xff] %v3408
    %3416 = vst [vmem:[#allocation3 + $0xf8] sm:$0xff] %v3409
    %3417 = vst [vmem:[#allocation3 + $0x140] sm:$0xff] %v3410
    %3418 = vst [vmem:[#allocation3 + $0x188] sm:$0xff] %v3411
    %3419 = vst [vmem:[#allocation3 + $0x1d0] sm:$0x3] %v3412
    %v3420 = vld [vmem:[#allocation2 + $0x7] sm:$0xff]
    %v3421 = vld [vmem:[#allocation2 + $0xf] sm:$0xff]
    %v3422 = vld [vmem:[#allocation2 + $0x17] sm:$0xff]
    %v3423 = vld [vmem:[#allocation2 + $0x1f] sm:$0xff]
    %v3424 = vld [vmem:[#allocation2 + $0x27] sm:$0xff]
    %v3425 = vld [vmem:[#allocation2 + $0x2f] sm:$0xff]
    %v3426 = vld [vmem:[#allocation2 + $0x37] sm:$0x3]
    %v3427 = vmul.f32 %v3420, %v559
    %v3428 = vmul.f32 %v3421, %v563
    %v3429 = vmul.f32 %v3422, %v567
    %v3430 = vmul.f32 %v3423, %v571
    %v3431 = vmul.f32 %v3424, %v575
    %v3432 = vmul.f32 %v3425, %v579
    %v3433 = vmul.f32 %v3426, %v583
    %3434 = vst [vmem:[#allocation3 + $0x28] sm:$0xff] %v3427
    %3435 = vst [vmem:[#allocation3 + $0x70] sm:$0xff] %v3428
    %3436 = vst [vmem:[#allocation3 + $0xb8] sm:$0xff] %v3429
    %3437 = vst [vmem:[#allocation3 + $0x100] sm:$0xff] %v3430
    %3438 = vst [vmem:[#allocation3 + $0x148] sm:$0xff] %v3431
    %3439 = vst [vmem:[#allocation3 + $0x190] sm:$0xff] %v3432
    %3440 = vst [vmem:[#allocation3 + $0x1d8] sm:$0x3] %v3433
    %v3441 = vld [vmem:[#allocation2 + $0xa] sm:$0xff]
    %v3442 = vld [vmem:[#allocation2 + $0x12] sm:$0xff]
    %v3443 = vld [vmem:[#allocation2 + $0x1a] sm:$0xff]
    %v3444 = vld [vmem:[#allocation2 + $0x22] sm:$0xff]
    %v3445 = vld [vmem:[#allocation2 + $0x2a] sm:$0xff]
    %v3446 = vld [vmem:[#allocation2 + $0x32] sm:$0xff]
    %v3447 = vld [vmem:[#allocation2 + $0x3a] sm:$0x3]
    %v3448 = vmul.f32 %v3441, %v608
    %v3449 = vmul.f32 %v3442, %v612
    %v3450 = vmul.f32 %v3443, %v616
    %v3451 = vmul.f32 %v3444, %v620
    %v3452 = vmul.f32 %v3445, %v624
    %v3453 = vmul.f32 %v3446, %v628
    %v3454 = vmul.f32 %v3447, %v632
    %3455 = vst [vmem:[#allocation3 + $0x30] sm:$0xff] %v3448
    %3456 = vst [vmem:[#allocation3 + $0x78] sm:$0xff] %v3449
    %3457 = vst [vmem:[#allocation3 + $0xc0] sm:$0xff] %v3450
    %3458 = vst [vmem:[#allocation3 + $0x108] sm:$0xff] %v3451
    %3459 = vst [vmem:[#allocation3 + $0x150] sm:$0xff] %v3452
    %3460 = vst [vmem:[#allocation3 + $0x198] sm:$0xff] %v3453
    %3461 = vst [vmem:[#allocation3 + $0x1e0] sm:$0x3] %v3454
    %v3462 = vld [vmem:[#allocation2 + $0xb] sm:$0xff]
    %v3463 = vld [vmem:[#allocation2 + $0x13] sm:$0xff]
    %v3464 = vld [vmem:[#allocation2 + $0x1b] sm:$0xff]
    %v3465 = vld [vmem:[#allocation2 + $0x23] sm:$0xff]
    %v3466 = vld [vmem:[#allocation2 + $0x2b] sm:$0xff]
    %v3467 = vld [vmem:[#allocation2 + $0x33] sm:$0xff]
    %v3468 = vld [vmem:[#allocation2 + $0x3b] sm:$0x3]
    %v3469 = vmul.f32 %v3462, %v657
    %v3470 = vmul.f32 %v3463, %v661
    %v3471 = vmul.f32 %v3464, %v665
    %v3472 = vmul.f32 %v3465, %v669
    %v3473 = vmul.f32 %v3466, %v673
    %v3474 = vmul.f32 %v3467, %v677
    %v3475 = vmul.f32 %v3468, %v681
    %3476 = vst [vmem:[#allocation3 + $0x38] sm:$0xff] %v3469
    %3477 = vst [vmem:[#allocation3 + $0x80] sm:$0xff] %v3470
    %3478 = vst [vmem:[#allocation3 + $0xc8] sm:$0xff] %v3471
    %3479 = vst [vmem:[#allocation3 + $0x110] sm:$0xff] %v3472
    %3480 = vst [vmem:[#allocation3 + $0x158] sm:$0xff] %v3473
    %3481 = vst [vmem:[#allocation3 + $0x1a0] sm:$0xff] %v3474
    %3482 = vst [vmem:[#allocation3 + $0x1e8] sm:$0x3] %v3475
    %v3483 = vld [vmem:[#allocation2 + $0xc] sm:$0xff]
    %v3484 = vld [vmem:[#allocation2 + $0x14] sm:$0xff]
    %v3485 = vld [vmem:[#allocation2 + $0x1c] sm:$0xff]
    %v3486 = vld [vmem:[#allocation2 + $0x24] sm:$0xff]
    %v3487 = vld [vmem:[#allocation2 + $0x2c] sm:$0xff]
    %v3488 = vld [vmem:[#allocation2 + $0x34] sm:$0xff]
    %v3489 = vld [vmem:[#allocation2 + $0x3c] sm:$0x3]
    %v3490 = vmul.f32 %v3483, %v706
    %v3491 = vmul.f32 %v3484, %v710
    %v3492 = vmul.f32 %v3485, %v714
    %v3493 = vmul.f32 %v3486, %v718
    %v3494 = vmul.f32 %v3487, %v722
    %v3495 = vmul.f32 %v3488, %v726
    %v3496 = vmul.f32 %v3489, %v730
    %3497 = vst [vmem:[#allocation3 + $0x40] sm:$0xff] %v3490
    %3498 = vst [vmem:[#allocation3 + $0x88] sm:$0xff] %v3491
    %3499 = vst [vmem:[#allocation3 + $0xd0] sm:$0xff] %v3492
    %3500 = vst [vmem:[#allocation3 + $0x118] sm:$0xff] %v3493
    %3501 = vst [vmem:[#allocation3 + $0x160] sm:$0xff] %v3494
    %3502 = vst [vmem:[#allocation3 + $0x1a8] sm:$0xff] %v3495
    %3503 = vst [vmem:[#allocation3 + $0x1f0] sm:$0x3] %v3496
    %v3504 = vld [vmem:[#allocation3] sm:$0xff]
    %v3505 = vld [vmem:[#allocation3 + $0x8] sm:$0xff]
    %v3506 = vld [vmem:[#allocation3 + $0x10] sm:$0xff]
    %v3507 = vld [vmem:[#allocation3 + $0x18] sm:$0xff]
    %v3508 = vld [vmem:[#allocation3 + $0x20] sm:$0xff]
    %v3509 = vld [vmem:[#allocation3 + $0x28] sm:$0xff]
    %v3510 = vld [vmem:[#allocation3 + $0x30] sm:$0xff]
    %v3511 = vld [vmem:[#allocation3 + $0x38] sm:$0xff]
    %v3512 = vld [vmem:[#allocation3 + $0x40] sm:$0xff]
    %v3513 = vld [vmem:[#allocation3 + $0x48] sm:$0xff]
    %v3514 = vld [vmem:[#allocation3 + $0x50] sm:$0xff]
    %v3515 = vld [vmem:[#allocation3 + $0x58] sm:$0xff]
    %v3516 = vld [vmem:[#allocation3 + $0x60] sm:$0xff]
    %v3517 = vld [vmem:[#allocation3 + $0x68] sm:$0xff]
    %v3518 = vld [vmem:[#allocation3 + $0x70] sm:$0xff]
    %v3519 = vld [vmem:[#allocation3 + $0x78] sm:$0xff]
    %v3520 = vld [vmem:[#allocation3 + $0x80] sm:$0xff]
    %v3521 = vld [vmem:[#allocation3 + $0x88] sm:$0xff]
    %v3522 = vld [vmem:[#allocation3 + $0x90] sm:$0xff]
    %v3523 = vld [vmem:[#allocation3 + $0x98] sm:$0xff]
    %v3524 = vld [vmem:[#allocation3 + $0xa0] sm:$0xff]
    %v3525 = vld [vmem:[#allocation3 + $0xa8] sm:$0xff]
    %v3526 = vld [vmem:[#allocation3 + $0xb0] sm:$0xff]
    %v3527 = vld [vmem:[#allocation3 + $0xb8] sm:$0xff]
    %v3528 = vld [vmem:[#allocation3 + $0xc0] sm:$0xff]
    %v3529 = vld [vmem:[#allocation3 + $0xc8] sm:$0xff]
    %v3530 = vld [vmem:[#allocation3 + $0xd0] sm:$0xff]
    %v3531 = vld [vmem:[#allocation3 + $0xd8] sm:$0xff]
    %v3532 = vld [vmem:[#allocation3 + $0xe0] sm:$0xff]
    %v3533 = vld [vmem:[#allocation3 + $0xe8] sm:$0xff]
    %v3534 = vld [vmem:[#allocation3 + $0xf0] sm:$0xff]
    %v3535 = vld [vmem:[#allocation3 + $0xf8] sm:$0xff]
    %v3536 = vld [vmem:[#allocation3 + $0x100] sm:$0xff]
    %v3537 = vld [vmem:[#allocation3 + $0x108] sm:$0xff]
    %v3538 = vld [vmem:[#allocation3 + $0x110] sm:$0xff]
    %v3539 = vld [vmem:[#allocation3 + $0x118] sm:$0xff]
    %v3540 = vld [vmem:[#allocation3 + $0x120] sm:$0xff]
    %v3541 = vld [vmem:[#allocation3 + $0x128] sm:$0xff]
    %v3542 = vld [vmem:[#allocation3 + $0x130] sm:$0xff]
    %v3543 = vld [vmem:[#allocation3 + $0x138] sm:$0xff]
    %v3544 = vld [vmem:[#allocation3 + $0x140] sm:$0xff]
    %v3545 = vld [vmem:[#allocation3 + $0x148] sm:$0xff]
    %v3546 = vld [vmem:[#allocation3 + $0x150] sm:$0xff]
    %v3547 = vld [vmem:[#allocation3 + $0x158] sm:$0xff]
    %v3548 = vld [vmem:[#allocation3 + $0x160] sm:$0xff]
    %v3549 = vld [vmem:[#allocation3 + $0x168] sm:$0xff]
    %v3550 = vld [vmem:[#allocation3 + $0x170] sm:$0xff]
    %v3551 = vld [vmem:[#allocation3 + $0x178] sm:$0xff]
    %v3552 = vld [vmem:[#allocation3 + $0x180] sm:$0xff]
    %v3553 = vld [vmem:[#allocation3 + $0x188] sm:$0xff]
    %v3554 = vld [vmem:[#allocation3 + $0x190] sm:$0xff]
    %v3555 = vld [vmem:[#allocation3 + $0x198] sm:$0xff]
    %v3556 = vld [vmem:[#allocation3 + $0x1a0] sm:$0xff]
    %v3557 = vld [vmem:[#allocation3 + $0x1a8] sm:$0xff]
    %v3558 = vld [vmem:[#allocation3 + $0x1b0] sm:$0x3]
    %v3559 = vld [vmem:[#allocation3 + $0x1b8] sm:$0x3]
    %v3560 = vld [vmem:[#allocation3 + $0x1c0] sm:$0x3]
    %v3561 = vld [vmem:[#allocation3 + $0x1c8] sm:$0x3]
    %v3562 = vld [vmem:[#allocation3 + $0x1d0] sm:$0x3]
    %v3563 = vld [vmem:[#allocation3 + $0x1d8] sm:$0x3]
    %v3564 = vld [vmem:[#allocation3 + $0x1e0] sm:$0x3]
    %v3565 = vld [vmem:[#allocation3 + $0x1e8] sm:$0x3]
    %v3566 = vld [vmem:[#allocation3 + $0x1f0] sm:$0x3]
    %v3567 = vld [vmem:[#allocation11] sm:$0xff]
    %v3568 = vld [vmem:[#allocation11 + $0x8] sm:$0xff]
    %v3569 = vld [vmem:[#allocation11 + $0x10] sm:$0xff]
    %v3570 = vld [vmem:[#allocation11 + $0x18] sm:$0xff]
    %v3571 = vld [vmem:[#allocation11 + $0x20] sm:$0xff]
    %v3572 = vld [vmem:[#allocation11 + $0x28] sm:$0xff]
    %v3573 = vld [vmem:[#allocation11 + $0x30] sm:$0xff]
    %v3574 = vld [vmem:[#allocation11 + $0x38] sm:$0xff]
    %v3575 = vld [vmem:[#allocation11 + $0x40] sm:$0xff]
    %v3576 = vld [vmem:[#allocation11 + $0x48] sm:$0xff]
    %v3577 = vld [vmem:[#allocation11 + $0x50] sm:$0xff]
    %v3578 = vld [vmem:[#allocation11 + $0x58] sm:$0xff]
    %v3579 = vld [vmem:[#allocation11 + $0x60] sm:$0xff]
    %v3580 = vld [vmem:[#allocation11 + $0x68] sm:$0xff]
    %v3581 = vld [vmem:[#allocation11 + $0x70] sm:$0xff]
    %v3582 = vld [vmem:[#allocation11 + $0x78] sm:$0xff]
    %v3583 = vld [vmem:[#allocation11 + $0x80] sm:$0xff]
    %v3584 = vld [vmem:[#allocation11 + $0x88] sm:$0xff]
    %v3585 = vld [vmem:[#allocation11 + $0x90] sm:$0xff]
    %v3586 = vld [vmem:[#allocation11 + $0x98] sm:$0xff]
    %v3587 = vld [vmem:[#allocation11 + $0xa0] sm:$0xff]
    %v3588 = vld [vmem:[#allocation11 + $0xa8] sm:$0xff]
    %v3589 = vld [vmem:[#allocation11 + $0xb0] sm:$0xff]
    %v3590 = vld [vmem:[#allocation11 + $0xb8] sm:$0xff]
    %v3591 = vld [vmem:[#allocation11 + $0xc0] sm:$0xff]
    %v3592 = vld [vmem:[#allocation11 + $0xc8] sm:$0xff]
    %v3593 = vld [vmem:[#allocation11 + $0xd0] sm:$0xff]
    %v3594 = vld [vmem:[#allocation11 + $0xd8] sm:$0xff]
    %v3595 = vld [vmem:[#allocation11 + $0xe0] sm:$0xff]
    %v3596 = vld [vmem:[#allocation11 + $0xe8] sm:$0xff]
    %v3597 = vld [vmem:[#allocation11 + $0xf0] sm:$0xff]
    %v3598 = vld [vmem:[#allocation11 + $0xf8] sm:$0xff]
    %v3599 = vld [vmem:[#allocation11 + $0x100] sm:$0xff]
    %v3600 = vld [vmem:[#allocation11 + $0x108] sm:$0xff]
    %v3601 = vld [vmem:[#allocation11 + $0x110] sm:$0xff]
    %v3602 = vld [vmem:[#allocation11 + $0x118] sm:$0xff]
    %v3603 = vld [vmem:[#allocation11 + $0x120] sm:$0xff]
    %v3604 = vld [vmem:[#allocation11 + $0x128] sm:$0xff]
    %v3605 = vld [vmem:[#allocation11 + $0x130] sm:$0xff]
    %v3606 = vld [vmem:[#allocation11 + $0x138] sm:$0xff]
    %v3607 = vld [vmem:[#allocation11 + $0x140] sm:$0xff]
    %v3608 = vld [vmem:[#allocation11 + $0x148] sm:$0xff]
    %v3609 = vld [vmem:[#allocation11 + $0x150] sm:$0xff]
    %v3610 = vld [vmem:[#allocation11 + $0x158] sm:$0xff]
    %v3611 = vld [vmem:[#allocation11 + $0x160] sm:$0xff]
    %v3612 = vld [vmem:[#allocation11 + $0x168] sm:$0xff]
    %v3613 = vld [vmem:[#allocation11 + $0x170] sm:$0xff]
    %v3614 = vld [vmem:[#allocation11 + $0x178] sm:$0xff]
    %v3615 = vld [vmem:[#allocation11 + $0x180] sm:$0xff]
    %v3616 = vld [vmem:[#allocation11 + $0x188] sm:$0xff]
    %v3617 = vld [vmem:[#allocation11 + $0x190] sm:$0xff]
    %v3618 = vld [vmem:[#allocation11 + $0x198] sm:$0xff]
    %v3619 = vld [vmem:[#allocation11 + $0x1a0] sm:$0xff]
    %v3620 = vld [vmem:[#allocation11 + $0x1a8] sm:$0xff]
    %v3621 = vld [vmem:[#allocation11 + $0x1b0] sm:$0xff]
    %v3622 = vld [vmem:[#allocation11 + $0x1b8] sm:$0xff]
    %v3623 = vld [vmem:[#allocation11 + $0x1c0] sm:$0xff]
    %v3624 = vld [vmem:[#allocation11 + $0x1c8] sm:$0xff]
    %v3625 = vld [vmem:[#allocation11 + $0x1d0] sm:$0xff]
    %v3626 = vld [vmem:[#allocation11 + $0x1d8] sm:$0xff]
    %v3627 = vld [vmem:[#allocation11 + $0x1e0] sm:$0xff]
    %v3628 = vld [vmem:[#allocation11 + $0x1e8] sm:$0xff]
    %v3629 = vld [vmem:[#allocation11 + $0x1f0] sm:$0xff]
    %v3630 = vld [vmem:[#allocation11 + $0x1f8] sm:$0xff]
    %v3631 = vld [vmem:[#allocation11 + $0x200] sm:$0xff]
    %v3632 = vld [vmem:[#allocation11 + $0x208] sm:$0xff]
    %v3633 = vld [vmem:[#allocation11 + $0x210] sm:$0xff]
    %v3634 = vld [vmem:[#allocation11 + $0x218] sm:$0xff]
    %v3635 = vld [vmem:[#allocation11 + $0x220] sm:$0xff]
    %v3636 = vld [vmem:[#allocation11 + $0x228] sm:$0xff]
    %v3637 = vld [vmem:[#allocation11 + $0x230] sm:$0xff]
    %v3638 = vld [vmem:[#allocation11 + $0x238] sm:$0xff]
    %v3639 = vld [vmem:[#allocation11 + $0x240] sm:$0xff]
    %v3640 = vld [vmem:[#allocation11 + $0x248] sm:$0xff]
    %v3641 = vld [vmem:[#allocation11 + $0x250] sm:$0xff]
    %v3642 = vld [vmem:[#allocation11 + $0x258] sm:$0xff]
    %v3643 = vld [vmem:[#allocation11 + $0x260] sm:$0xff]
    %v3644 = vld [vmem:[#allocation11 + $0x268] sm:$0xff]
    %v3645 = vld [vmem:[#allocation11 + $0x270] sm:$0xff]
    %v3646 = vld [vmem:[#allocation11 + $0x278] sm:$0xff]
    %v3647 = vld [vmem:[#allocation11 + $0x280] sm:$0xff]
    %v3648 = vld [vmem:[#allocation11 + $0x288] sm:$0xff]
    %v3649 = vld [vmem:[#allocation11 + $0x290] sm:$0xff]
    %v3650 = vld [vmem:[#allocation11 + $0x298] sm:$0xff]
    %v3651 = vld [vmem:[#allocation11 + $0x2a0] sm:$0xff]
    %v3652 = vld [vmem:[#allocation11 + $0x2a8] sm:$0xff]
    %v3653 = vld [vmem:[#allocation11 + $0x2b0] sm:$0xff]
    %v3654 = vld [vmem:[#allocation11 + $0x2b8] sm:$0xff]
    %v3655 = vld [vmem:[#allocation11 + $0x2c0] sm:$0xff]
    %v3656 = vld [vmem:[#allocation11 + $0x2c8] sm:$0xff]
    %v3657 = vld [vmem:[#allocation11 + $0x2d0] sm:$0xff]
    %v3658 = vld [vmem:[#allocation11 + $0x2d8] sm:$0xff]
    %v3659 = vld [vmem:[#allocation11 + $0x2e0] sm:$0xff]
    %v3660 = vld [vmem:[#allocation11 + $0x2e8] sm:$0xff]
    %v3661 = vld [vmem:[#allocation11 + $0x2f0] sm:$0xff]
    %v3662 = vld [vmem:[#allocation11 + $0x2f8] sm:$0xff]
    %v3663 = vld [vmem:[#allocation11 + $0x300] sm:$0xff]
    %v3664 = vld [vmem:[#allocation11 + $0x308] sm:$0xff]
    %v3665 = vld [vmem:[#allocation11 + $0x310] sm:$0xff]
    %v3666 = vld [vmem:[#allocation11 + $0x318] sm:$0xff]
    %v3667 = vld [vmem:[#allocation11 + $0x320] sm:$0xff]
    %v3668 = vld [vmem:[#allocation11 + $0x328] sm:$0xff]
    %v3669 = vld [vmem:[#allocation11 + $0x330] sm:$0xff]
    %v3670 = vld [vmem:[#allocation11 + $0x338] sm:$0xff]
    %v3671 = vld [vmem:[#allocation11 + $0x340] sm:$0xff]
    %v3672 = vld [vmem:[#allocation11 + $0x348] sm:$0xff]
    %v3673 = vld [vmem:[#allocation11 + $0x350] sm:$0xff]
    %v3674 = vld [vmem:[#allocation11 + $0x358] sm:$0xff]
    %v3675 = vld [vmem:[#allocation11 + $0x360] sm:$0xff]
    %v3676 = vld [vmem:[#allocation11 + $0x368] sm:$0xff]
    %v3677 = vld [vmem:[#allocation11 + $0x370] sm:$0xff]
    %v3678 = vld [vmem:[#allocation11 + $0x378] sm:$0xff]
    %v3679 = vld [vmem:[#allocation11 + $0x380] sm:$0xff]
    %v3680 = vld [vmem:[#allocation11 + $0x388] sm:$0xff]
    %v3681 = vld [vmem:[#allocation11 + $0x390] sm:$0xff]
    %v3682 = vld [vmem:[#allocation11 + $0x398] sm:$0xff]
    %v3683 = vld [vmem:[#allocation11 + $0x3a0] sm:$0xff]
    %v3684 = vld [vmem:[#allocation11 + $0x3a8] sm:$0xff]
    %v3685 = vld [vmem:[#allocation11 + $0x3b0] sm:$0xff]
    %v3686 = vld [vmem:[#allocation11 + $0x3b8] sm:$0xff]
    %v3687 = vld [vmem:[#allocation11 + $0x3c0] sm:$0xff]
    %v3688 = vld [vmem:[#allocation11 + $0x3c8] sm:$0xff]
    %v3689 = vld [vmem:[#allocation11 + $0x3d0] sm:$0xff]
    %v3690 = vld [vmem:[#allocation11 + $0x3d8] sm:$0xff]
    %v3691 = vld [vmem:[#allocation11 + $0x3e0] sm:$0xff]
    %v3692 = vld [vmem:[#allocation11 + $0x3e8] sm:$0xff]
    %v3693 = vld [vmem:[#allocation11 + $0x3f0] sm:$0xff]
    %v3694 = vld [vmem:[#allocation11 + $0x3f8] sm:$0xff]
    %v3695 = vld [vmem:[#allocation11 + $0x400] sm:$0xff]
    %v3696 = vld [vmem:[#allocation11 + $0x408] sm:$0xff]
    %v3697 = vld [vmem:[#allocation11 + $0x410] sm:$0xff]
    %v3698 = vld [vmem:[#allocation11 + $0x418] sm:$0xff]
    %v3699 = vld [vmem:[#allocation11 + $0x420] sm:$0xff]
    %v3700 = vld [vmem:[#allocation11 + $0x428] sm:$0xff]
    %v3701 = vld [vmem:[#allocation11 + $0x430] sm:$0xff]
    %v3702 = vld [vmem:[#allocation11 + $0x438] sm:$0xff]
    %v3703 = vld [vmem:[#allocation11 + $0x440] sm:$0xff]
    %v3704 = vld [vmem:[#allocation11 + $0x448] sm:$0xff]
    %v3705 = vld [vmem:[#allocation11 + $0x450] sm:$0xff]
    %v3706 = vld [vmem:[#allocation11 + $0x458] sm:$0xff]
    %v3707 = vld [vmem:[#allocation11 + $0x460] sm:$0xff]
    %v3708 = vld [vmem:[#allocation11 + $0x468] sm:$0xff]
    %v3709 = vld [vmem:[#allocation11 + $0x470] sm:$0xff]
    %v3710 = vld [vmem:[#allocation11 + $0x478] sm:$0xff]
    %v3711 = vld [vmem:[%s12] sm:$0x1]
    %v3713 = vlaneseq
    %v3714 = vshrl.u32 %v3713, 7
    %v3715 = vsub.s32 0, %v3714
    %v3716 = vrot.slane %v3711, %v3715
    %3718 = vmatprep.subr.mxu0 0.0
    %3719 = vmatpush1.msra.mxu0 %v3567
    %3720 = vmatprep.subr.mxu0 0.0
    %3721 = vmatpush1.msra.mxu0 %v3568
    %3722 = vmatprep.subr.mxu0 0.0
    %3723 = vmatpush1.msra.mxu0 %v3569
    %3724 = vmatprep.subr.mxu0 0.0
    %3725 = vmatpush1.msra.mxu0 %v3570
    %3726 = vmatprep.subr.mxu0 0.0
    %3727 = vmatpush1.msra.mxu0 %v3571
    %3728 = vmatprep.subr.mxu0 0.0
    %3729 = vmatpush1.msra.mxu0 %v3572
    %3730 = vmatprep.subr.mxu0 0.0
    %3731 = vmatpush1.msra.mxu0 %v3573
    %3732 = vmatprep.subr.mxu0 0.0
    %3733 = vmatpush1.msra.mxu0 %v3574
    %3734 = vmatprep.subr.mxu0 0.0
    %3735 = vmatpush1.msra.mxu0 %v3575
    %3736 = vmatprep.subr.mxu0 0.0
    %3737 = vmatpush1.msra.mxu0 %v3576
    %3738 = vmatprep.subr.mxu0 0.0
    %3739 = vmatpush1.msra.mxu0 %v3577
    %3740 = vmatprep.subr.mxu0 0.0
    %3741 = vmatpush1.msra.mxu0 %v3578
    %3742 = vmatprep.subr.mxu0 0.0
    %3743 = vmatpush1.msra.mxu0 %v3579
    %3744 = vmatprep.subr.mxu0 0.0
    %3745 = vmatpush1.msra.mxu0 %v3580
    %3746 = vmatprep.subr.mxu0 0.0
    %3747 = vmatpush1.msra.mxu0 %v3581
    %3748 = vmatprep.subr.mxu0 0.0
    %3749 = vmatpush1.msra.mxu0 %v3582
    %3750 = vmatprep.subr.mxu0 0.0
    %3751 = vmatpush1.msra.mxu0 %v3583
    %3752 = vmatprep.subr.mxu0 0.0
    %3753 = vmatpush1.msra.mxu0 %v3584
    %3754 = vmatprep.subr.mxu0 0.0
    %3755 = vmatpush1.msra.mxu0 %v3585
    %3756 = vmatprep.subr.mxu0 0.0
    %3757 = vmatpush1.msra.mxu0 %v3586
    %3758 = vmatprep.subr.mxu0 0.0
    %3759 = vmatpush1.msra.mxu0 %v3587
    %3760 = vmatprep.subr.mxu0 0.0
    %3761 = vmatpush1.msra.mxu0 %v3588
    %3762 = vmatprep.subr.mxu0 0.0
    %3763 = vmatpush1.msra.mxu0 %v3589
    %3764 = vmatprep.subr.mxu0 0.0
    %3765 = vmatpush1.msra.mxu0 %v3590
    %3766 = vmatprep.subr.mxu0 0.0
    %3767 = vmatpush1.msra.mxu0 %v3591
    %3768 = vmatprep.subr.mxu0 0.0
    %3769 = vmatpush1.msra.mxu0 %v3592
    %3770 = vmatprep.subr.mxu0 0.0
    %3771 = vmatpush1.msra.mxu0 %v3593
    %3772 = vmatprep.subr.mxu0 0.0
    %3773 = vmatpush1.msra.mxu0 %v3594
    %3774 = vmatprep.subr.mxu0 0.0
    %3775 = vmatpush1.msra.mxu0 %v3595
    %3776 = vmatprep.subr.mxu0 0.0
    %3777 = vmatpush1.msra.mxu0 %v3596
    %3778 = vmatprep.subr.mxu0 0.0
    %3779 = vmatpush1.msra.mxu0 %v3597
    %3780 = vmatprep.subr.mxu0 0.0
    %3781 = vmatpush1.msra.mxu0 %v3598
    %3782 = vmatprep.mubr.f32.mxu0 %v3505
    %3783 = vmatmul.mubr.f32.gmra.mrb[0].mxu0 %v3504
    %v3784 = vpop.f32.mrb[0].mxu0
    %v3785 = vadd.f32 %v3716, %v3784
    %v3786 = vpop.f32.mrb[0].mxu0
    %3787 = vmatprep.mubr.f32.mxu0 %v3514
    %3788 = vmatmul.mubr.f32.gmra.mrb[0].mxu0 %v3513
    %v3789 = vpop.f32.mrb[0].mxu0
    %v3790 = vadd.f32 %v3716, %v3789
    %v3791 = vpop.f32.mrb[0].mxu0
    %3792 = vmatprep.mubr.f32.mxu0 %v3523
    %3793 = vmatmul.mubr.f32.gmra.mrb[0].mxu0 %v3522
    %v3794 = vpop.f32.mrb[0].mxu0
    %v3795 = vadd.f32 %v3716, %v3794
    %v3796 = vpop.f32.mrb[0].mxu0
    %3797 = vmatprep.mubr.f32.mxu0 %v3532
    %3798 = vmatmul.mubr.f32.gmra.mrb[0].mxu0 %v3531
    %v3799 = vpop.f32.mrb[0].mxu0
    %v3800 = vadd.f32 %v3716, %v3799
    %v3801 = vpop.f32.mrb[0].mxu0
    %3802 = vmatprep.mubr.f32.mxu0 %v3541
    %3803 = vmatmul.mubr.f32.gmra.mrb[0].mxu0 %v3540
    %v3804 = vpop.f32.mrb[0].mxu0
    %v3805 = vadd.f32 %v3716, %v3804
    %v3806 = vpop.f32.mrb[0].mxu0
    %3807 = vmatprep.mubr.f32.mxu0 %v3550
    %3808 = vmatmul.mubr.f32.gmra.mrb[0].mxu0 %v3549
    %v3809 = vpop.f32.mrb[0].mxu0
    %v3810 = vadd.f32 %v3716, %v3809
    %v3811 = vpop.f32.mrb[0].mxu0
    %3812 = vmatprep.mubr.f32.mxu0 %v3559
    %3813 = vmatmul.mubr.f32.gmra.mrb[0].mxu0 %v3558
    %v3814 = vpop.f32.mrb[0].mxu0
    %v3815 = vadd.f32 %v3716, %v3814
    %v3816 = vpop.f32.mrb[0].mxu0
    %3817 = vdwg.mxu0
    %3818 = vmatprep.subr.mxu0 0.0
    %3819 = vmatpush1.msra.mxu0 %v3599
    %3820 = vmatprep.subr.mxu0 0.0
    %3821 = vmatpush1.msra.mxu0 %v3600
    %3822 = vmatprep.subr.mxu0 0.0
    %3823 = vmatpush1.msra.mxu0 %v3601
    %3824 = vmatprep.subr.mxu0 0.0
    %3825 = vmatpush1.msra.mxu0 %v3602
    %3826 = vmatprep.subr.mxu0 0.0
    %3827 = vmatpush1.msra.mxu0 %v3603
    %3828 = vmatprep.subr.mxu0 0.0
    %3829 = vmatpush1.msra.mxu0 %v3604
    %3830 = vmatprep.subr.mxu0 0.0
    %3831 = vmatpush1.msra.mxu0 %v3605
    %3832 = vmatprep.subr.mxu0 0.0
    %3833 = vmatpush1.msra.mxu0 %v3606
    %3834 = vmatprep.subr.mxu0 0.0
    %3835 = vmatpush1.msra.mxu0 %v3607
    %3836 = vmatprep.subr.mxu0 0.0
    %3837 = vmatpush1.msra.mxu0 %v3608
    %3838 = vmatprep.subr.mxu0 0.0
    %3839 = vmatpush1.msra.mxu0 %v3609
    %3840 = vmatprep.subr.mxu0 0.0
    %3841 = vmatpush1.msra.mxu0 %v3610
    %3842 = vmatprep.subr.mxu0 0.0
    %3843 = vmatpush1.msra.mxu0 %v3611
    %3844 = vmatprep.subr.mxu0 0.0
    %3845 = vmatpush1.msra.mxu0 %v3612
    %3846 = vmatprep.subr.mxu0 0.0
    %3847 = vmatpush1.msra.mxu0 %v3613
    %3848 = vmatprep.subr.mxu0 0.0
    %3849 = vmatpush1.msra.mxu0 %v3614
    %3850 = vmatprep.subr.mxu0 0.0
    %3851 = vmatpush1.msra.mxu0 %v3615
    %3852 = vmatprep.subr.mxu0 0.0
    %3853 = vmatpush1.msra.mxu0 %v3616
    %3854 = vmatprep.subr.mxu0 0.0
    %3855 = vmatpush1.msra.mxu0 %v3617
    %3856 = vmatprep.subr.mxu0 0.0
    %3857 = vmatpush1.msra.mxu0 %v3618
    %3858 = vmatprep.subr.mxu0 0.0
    %3859 = vmatpush1.msra.mxu0 %v3619
    %3860 = vmatprep.subr.mxu0 0.0
    %3861 = vmatpush1.msra.mxu0 %v3620
    %3862 = vmatprep.subr.mxu0 0.0
    %3863 = vmatpush1.msra.mxu0 %v3621
    %3864 = vmatprep.subr.mxu0 0.0
    %3865 = vmatpush1.msra.mxu0 %v3622
    %3866 = vmatprep.subr.mxu0 0.0
    %3867 = vmatpush1.msra.mxu0 %v3623
    %3868 = vmatprep.subr.mxu0 0.0
    %3869 = vmatpush1.msra.mxu0 %v3624
    %3870 = vmatprep.subr.mxu0 0.0
    %3871 = vmatpush1.msra.mxu0 %v3625
    %3872 = vmatprep.subr.mxu0 0.0
    %3873 = vmatpush1.msra.mxu0 %v3626
    %3874 = vmatprep.subr.mxu0 0.0
    %3875 = vmatpush1.msra.mxu0 %v3627
    %3876 = vmatprep.subr.mxu0 0.0
    %3877 = vmatpush1.msra.mxu0 %v3628
    %3878 = vmatprep.subr.mxu0 0.0
    %3879 = vmatpush1.msra.mxu0 %v3629
    %3880 = vmatprep.subr.mxu0 0.0
    %3881 = vmatpush1.msra.mxu0 %v3630
    %3882 = vmatprep.mubr.f32.mxu0 %v3507
    %3883 = vmatmul.mubr.f32.gmra.mrb[0].mxu0 %v3506
    %v3884 = vpop.f32.mrb[0].mxu0
    %v3885 = vadd.f32 %v3785, %v3884
    %v3886 = vpop.f32.mrb[0].mxu0
    %3887 = vmatprep.mubr.f32.mxu0 %v3516
    %3888 = vmatmul.mubr.f32.gmra.mrb[0].mxu0 %v3515
    %v3889 = vpop.f32.mrb[0].mxu0
    %v3890 = vadd.f32 %v3790, %v3889
    %v3891 = vpop.f32.mrb[0].mxu0
    %3892 = vmatprep.mubr.f32.mxu0 %v3525
    %3893 = vmatmul.mubr.f32.gmra.mrb[0].mxu0 %v3524
    %v3894 = vpop.f32.mrb[0].mxu0
    %v3895 = vadd.f32 %v3795, %v3894
    %v3896 = vpop.f32.mrb[0].mxu0
    %3897 = vmatprep.mubr.f32.mxu0 %v3534
    %3898 = vmatmul.mubr.f32.gmra.mrb[0].mxu0 %v3533
    %v3899 = vpop.f32.mrb[0].mxu0
    %v3900 = vadd.f32 %v3800, %v3899
    %v3901 = vpop.f32.mrb[0].mxu0
    %3902 = vmatprep.mubr.f32.mxu0 %v3543
    %3903 = vmatmul.mubr.f32.gmra.mrb[0].mxu0 %v3542
    %v3904 = vpop.f32.mrb[0].mxu0
    %v3905 = vadd.f32 %v3805, %v3904
    %v3906 = vpop.f32.mrb[0].mxu0
    %3907 = vmatprep.mubr.f32.mxu0 %v3552
    %3908 = vmatmul.mubr.f32.gmra.mrb[0].mxu0 %v3551
    %v3909 = vpop.f32.mrb[0].mxu0
    %v3910 = vadd.f32 %v3810, %v3909
    %v3911 = vpop.f32.mrb[0].mxu0
    %3912 = vmatprep.mubr.f32.mxu0 %v3561
    %3913 = vmatmul.mubr.f32.gmra.mrb[0].mxu0 %v3560
    %v3914 = vpop.f32.mrb[0].mxu0
    %v3915 = vadd.f32 %v3815, %v3914
    %v3916 = vpop.f32.mrb[0].mxu0
    %3917 = vdwg.mxu0
    %3918 = vmatprep.subr.mxu0 0.0
    %3919 = vmatpush1.msra.mxu0 %v3631
    %3920 = vmatprep.subr.mxu0 0.0
    %3921 = vmatpush1.msra.mxu0 %v3632
    %3922 = vmatprep.subr.mxu0 0.0
    %3923 = vmatpush1.msra.mxu0 %v3633
    %3924 = vmatprep.subr.mxu0 0.0
    %3925 = vmatpush1.msra.mxu0 %v3634
    %3926 = vmatprep.subr.mxu0 0.0
    %3927 = vmatpush1.msra.mxu0 %v3635
    %3928 = vmatprep.subr.mxu0 0.0
    %3929 = vmatpush1.msra.mxu0 %v3636
    %3930 = vmatprep.subr.mxu0 0.0
    %3931 = vmatpush1.msra.mxu0 %v3637
    %3932 = vmatprep.subr.mxu0 0.0
    %3933 = vmatpush1.msra.mxu0 %v3638
    %3934 = vmatprep.subr.mxu0 0.0
    %3935 = vmatpush1.msra.mxu0 %v3639
    %3936 = vmatprep.subr.mxu0 0.0
    %3937 = vmatpush1.msra.mxu0 %v3640
    %3938 = vmatprep.subr.mxu0 0.0
    %3939 = vmatpush1.msra.mxu0 %v3641
    %3940 = vmatprep.subr.mxu0 0.0
    %3941 = vmatpush1.msra.mxu0 %v3642
    %3942 = vmatprep.subr.mxu0 0.0
    %3943 = vmatpush1.msra.mxu0 %v3643
    %3944 = vmatprep.subr.mxu0 0.0
    %3945 = vmatpush1.msra.mxu0 %v3644
    %3946 = vmatprep.subr.mxu0 0.0
    %3947 = vmatpush1.msra.mxu0 %v3645
    %3948 = vmatprep.subr.mxu0 0.0
    %3949 = vmatpush1.msra.mxu0 %v3646
    %3950 = vmatprep.subr.mxu0 0.0
    %3951 = vmatpush1.msra.mxu0 %v3647
    %3952 = vmatprep.subr.mxu0 0.0
    %3953 = vmatpush1.msra.mxu0 %v3648
    %3954 = vmatprep.subr.mxu0 0.0
    %3955 = vmatpush1.msra.mxu0 %v3649
    %3956 = vmatprep.subr.mxu0 0.0
    %3957 = vmatpush1.msra.mxu0 %v3650
    %3958 = vmatprep.subr.mxu0 0.0
    %3959 = vmatpush1.msra.mxu0 %v3651
    %3960 = vmatprep.subr.mxu0 0.0
    %3961 = vmatpush1.msra.mxu0 %v3652
    %3962 = vmatprep.subr.mxu0 0.0
    %3963 = vmatpush1.msra.mxu0 %v3653
    %3964 = vmatprep.subr.mxu0 0.0
    %3965 = vmatpush1.msra.mxu0 %v3654
    %3966 = vmatprep.subr.mxu0 0.0
    %3967 = vmatpush1.msra.mxu0 %v3655
    %3968 = vmatprep.subr.mxu0 0.0
    %3969 = vmatpush1.msra.mxu0 %v3656
    %3970 = vmatprep.subr.mxu0 0.0
    %3971 = vmatpush1.msra.mxu0 %v3657
    %3972 = vmatprep.subr.mxu0 0.0
    %3973 = vmatpush1.msra.mxu0 %v3658
    %3974 = vmatprep.subr.mxu0 0.0
    %3975 = vmatpush1.msra.mxu0 %v3659
    %3976 = vmatprep.subr.mxu0 0.0
    %3977 = vmatpush1.msra.mxu0 %v3660
    %3978 = vmatprep.subr.mxu0 0.0
    %3979 = vmatpush1.msra.mxu0 %v3661
    %3980 = vmatprep.subr.mxu0 0.0
    %3981 = vmatpush1.msra.mxu0 %v3662
    %3982 = vmatprep.mubr.f32.mxu0 %v3509
    %3983 = vmatmul.mubr.f32.gmra.mrb[0].mxu0 %v3508
    %v3984 = vpop.f32.mrb[0].mxu0
    %v3985 = vadd.f32 %v3885, %v3984
    %v3986 = vpop.f32.mrb[0].mxu0
    %3987 = vmatprep.mubr.f32.mxu0 %v3518
    %3988 = vmatmul.mubr.f32.gmra.mrb[0].mxu0 %v3517
    %v3989 = vpop.f32.mrb[0].mxu0
    %v3990 = vadd.f32 %v3890, %v3989
    %v3991 = vpop.f32.mrb[0].mxu0
    %3992 = vmatprep.mubr.f32.mxu0 %v3527
    %3993 = vmatmul.mubr.f32.gmra.mrb[0].mxu0 %v3526
    %v3994 = vpop.f32.mrb[0].mxu0
    %v3995 = vadd.f32 %v3895, %v3994
    %v3996 = vpop.f32.mrb[0].mxu0
    %3997 = vmatprep.mubr.f32.mxu0 %v3536
    %3998 = vmatmul.mubr.f32.gmra.mrb[0].mxu0 %v3535
    %v3999 = vpop.f32.mrb[0].mxu0
    %v4000 = vadd.f32 %v3900, %v3999
    %v4001 = vpop.f32.mrb[0].mxu0
    %4002 = vmatprep.mubr.f32.mxu0 %v3545
    %4003 = vmatmul.mubr.f32.gmra.mrb[0].mxu0 %v3544
    %v4004 = vpop.f32.mrb[0].mxu0
    %v4005 = vadd.f32 %v3905, %v4004
    %v4006 = vpop.f32.mrb[0].mxu0
    %4007 = vmatprep.mubr.f32.mxu0 %v3554
    %4008 = vmatmul.mubr.f32.gmra.mrb[0].mxu0 %v3553
    %v4009 = vpop.f32.mrb[0].mxu0
    %v4010 = vadd.f32 %v3910, %v4009
    %v4011 = vpop.f32.mrb[0].mxu0
    %4012 = vmatprep.mubr.f32.mxu0 %v3563
    %4013 = vmatmul.mubr.f32.gmra.mrb[0].mxu0 %v3562
    %v4014 = vpop.f32.mrb[0].mxu0
    %v4015 = vadd.f32 %v3915, %v4014
    %v4016 = vpop.f32.mrb[0].mxu0
    %4017 = vdwg.mxu0
    %4018 = vmatprep.subr.mxu0 0.0
    %4019 = vmatpush1.msra.mxu0 %v3663
    %4020 = vmatprep.subr.mxu0 0.0
    %4021 = vmatpush1.msra.mxu0 %v3664
    %4022 = vmatprep.subr.mxu0 0.0
    %4023 = vmatpush1.msra.mxu0 %v3665
    %4024 = vmatprep.subr.mxu0 0.0
    %4025 = vmatpush1.msra.mxu0 %v3666
    %4026 = vmatprep.subr.mxu0 0.0
    %4027 = vmatpush1.msra.mxu0 %v3667
    %4028 = vmatprep.subr.mxu0 0.0
    %4029 = vmatpush1.msra.mxu0 %v3668
    %4030 = vmatprep.subr.mxu0 0.0
    %4031 = vmatpush1.msra.mxu0 %v3669
    %4032 = vmatprep.subr.mxu0 0.0
    %4033 = vmatpush1.msra.mxu0 %v3670
    %4034 = vmatprep.subr.mxu0 0.0
    %4035 = vmatpush1.msra.mxu0 %v3671
    %4036 = vmatprep.subr.mxu0 0.0
    %4037 = vmatpush1.msra.mxu0 %v3672
    %4038 = vmatprep.subr.mxu0 0.0
    %4039 = vmatpush1.msra.mxu0 %v3673
    %4040 = vmatprep.subr.mxu0 0.0
    %4041 = vmatpush1.msra.mxu0 %v3674
    %4042 = vmatprep.subr.mxu0 0.0
    %4043 = vmatpush1.msra.mxu0 %v3675
    %4044 = vmatprep.subr.mxu0 0.0
    %4045 = vmatpush1.msra.mxu0 %v3676
    %4046 = vmatprep.subr.mxu0 0.0
    %4047 = vmatpush1.msra.mxu0 %v3677
    %4048 = vmatprep.subr.mxu0 0.0
    %4049 = vmatpush1.msra.mxu0 %v3678
    %4050 = vmatprep.subr.mxu0 0.0
    %4051 = vmatpush1.msra.mxu0 %v3679
    %4052 = vmatprep.subr.mxu0 0.0
    %4053 = vmatpush1.msra.mxu0 %v3680
    %4054 = vmatprep.subr.mxu0 0.0
    %4055 = vmatpush1.msra.mxu0 %v3681
    %4056 = vmatprep.subr.mxu0 0.0
    %4057 = vmatpush1.msra.mxu0 %v3682
    %4058 = vmatprep.subr.mxu0 0.0
    %4059 = vmatpush1.msra.mxu0 %v3683
    %4060 = vmatprep.subr.mxu0 0.0
    %4061 = vmatpush1.msra.mxu0 %v3684
    %4062 = vmatprep.subr.mxu0 0.0
    %4063 = vmatpush1.msra.mxu0 %v3685
    %4064 = vmatprep.subr.mxu0 0.0
    %4065 = vmatpush1.msra.mxu0 %v3686
    %4066 = vmatprep.subr.mxu0 0.0
    %4067 = vmatpush1.msra.mxu0 %v3687
    %4068 = vmatprep.subr.mxu0 0.0
    %4069 = vmatpush1.msra.mxu0 %v3688
    %4070 = vmatprep.subr.mxu0 0.0
    %4071 = vmatpush1.msra.mxu0 %v3689
    %4072 = vmatprep.subr.mxu0 0.0
    %4073 = vmatpush1.msra.mxu0 %v3690
    %4074 = vmatprep.subr.mxu0 0.0
    %4075 = vmatpush1.msra.mxu0 %v3691
    %4076 = vmatprep.subr.mxu0 0.0
    %4077 = vmatpush1.msra.mxu0 %v3692
    %4078 = vmatprep.subr.mxu0 0.0
    %4079 = vmatpush1.msra.mxu0 %v3693
    %4080 = vmatprep.subr.mxu0 0.0
    %4081 = vmatpush1.msra.mxu0 %v3694
    %4082 = vmatprep.mubr.f32.mxu0 %v3511
    %4083 = vmatmul.mubr.f32.gmra.mrb[0].mxu0 %v3510
    %v4084 = vpop.f32.mrb[0].mxu0
    %v4085 = vadd.f32 %v3985, %v4084
    %v4086 = vpop.f32.mrb[0].mxu0
    %4087 = vmatprep.mubr.f32.mxu0 %v3520
    %4088 = vmatmul.mubr.f32.gmra.mrb[0].mxu0 %v3519
    %v4089 = vpop.f32.mrb[0].mxu0
    %v4090 = vadd.f32 %v3990, %v4089
    %v4091 = vpop.f32.mrb[0].mxu0
    %4092 = vmatprep.mubr.f32.mxu0 %v3529
    %4093 = vmatmul.mubr.f32.gmra.mrb[0].mxu0 %v3528
    %v4094 = vpop.f32.mrb[0].mxu0
    %v4095 = vadd.f32 %v3995, %v4094
    %v4096 = vpop.f32.mrb[0].mxu0
    %4097 = vmatprep.mubr.f32.mxu0 %v3538
    %4098 = vmatmul.mubr.f32.gmra.mrb[0].mxu0 %v3537
    %v4099 = vpop.f32.mrb[0].mxu0
    %v4100 = vadd.f32 %v4000, %v4099
    %v4101 = vpop.f32.mrb[0].mxu0
    %4102 = vmatprep.mubr.f32.mxu0 %v3547
    %4103 = vmatmul.mubr.f32.gmra.mrb[0].mxu0 %v3546
    %v4104 = vpop.f32.mrb[0].mxu0
    %v4105 = vadd.f32 %v4005, %v4104
    %v4106 = vpop.f32.mrb[0].mxu0
    %4107 = vmatprep.mubr.f32.mxu0 %v3556
    %4108 = vmatmul.mubr.f32.gmra.mrb[0].mxu0 %v3555
    %v4109 = vpop.f32.mrb[0].mxu0
    %v4110 = vadd.f32 %v4010, %v4109
    %v4111 = vpop.f32.mrb[0].mxu0
    %4112 = vmatprep.mubr.f32.mxu0 %v3565
    %4113 = vmatmul.mubr.f32.gmra.mrb[0].mxu0 %v3564
    %v4114 = vpop.f32.mrb[0].mxu0
    %v4115 = vadd.f32 %v4015, %v4114
    %v4116 = vpop.f32.mrb[0].mxu0
    %4117 = vdwg.mxu0
    %4118 = vmatprep.subr.mxu0 0.0
    %4119 = vmatpush1.msra.mxu0 %v3695
    %4120 = vmatprep.subr.mxu0 0.0
    %4121 = vmatpush1.msra.mxu0 %v3696
    %4122 = vmatprep.subr.mxu0 0.0
    %4123 = vmatpush1.msra.mxu0 %v3697
    %4124 = vmatprep.subr.mxu0 0.0
    %4125 = vmatpush1.msra.mxu0 %v3698
    %4126 = vmatprep.subr.mxu0 0.0
    %4127 = vmatpush1.msra.mxu0 %v3699
    %4128 = vmatprep.subr.mxu0 0.0
    %4129 = vmatpush1.msra.mxu0 %v3700
    %4130 = vmatprep.subr.mxu0 0.0
    %4131 = vmatpush1.msra.mxu0 %v3701
    %4132 = vmatprep.subr.mxu0 0.0
    %4133 = vmatpush1.msra.mxu0 %v3702
    %4134 = vmatprep.subr.mxu0 0.0
    %4135 = vmatpush1.msra.mxu0 %v3703
    %4136 = vmatprep.subr.mxu0 0.0
    %4137 = vmatpush1.msra.mxu0 %v3704
    %4138 = vmatprep.subr.mxu0 0.0
    %4139 = vmatpush1.msra.mxu0 %v3705
    %4140 = vmatprep.subr.mxu0 0.0
    %4141 = vmatpush1.msra.mxu0 %v3706
    %4142 = vmatprep.subr.mxu0 0.0
    %4143 = vmatpush1.msra.mxu0 %v3707
    %4144 = vmatprep.subr.mxu0 0.0
    %4145 = vmatpush1.msra.mxu0 %v3708
    %4146 = vmatprep.subr.mxu0 0.0
    %4147 = vmatpush1.msra.mxu0 %v3709
    %4148 = vmatprep.subr.mxu0 0.0
    %4149 = vmatpush1.msra.mxu0 %v3710
    %4150 = vmatprep.subr.mxu0 0.0
    %4151 = vmatpush1.msra.mxu0 0.0
    %4152 = vmatprep.subr.mxu0 0.0
    %4153 = vmatpush1.msra.mxu0 0.0
    %4154 = vmatprep.subr.mxu0 0.0
    %4155 = vmatpush1.msra.mxu0 0.0
    %4156 = vmatprep.subr.mxu0 0.0
    %4157 = vmatpush1.msra.mxu0 0.0
    %4158 = vmatprep.subr.mxu0 0.0
    %4159 = vmatpush1.msra.mxu0 0.0
    %4160 = vmatprep.subr.mxu0 0.0
    %4161 = vmatpush1.msra.mxu0 0.0
    %4162 = vmatprep.subr.mxu0 0.0
    %4163 = vmatpush1.msra.mxu0 0.0
    %4164 = vmatprep.subr.mxu0 0.0
    %4165 = vmatpush1.msra.mxu0 0.0
    %4166 = vmatprep.subr.mxu0 0.0
    %4167 = vmatpush1.msra.mxu0 0.0
    %4168 = vmatprep.subr.mxu0 0.0
    %4169 = vmatpush1.msra.mxu0 0.0
    %4170 = vmatprep.subr.mxu0 0.0
    %4171 = vmatpush1.msra.mxu0 0.0
    %4172 = vmatprep.subr.mxu0 0.0
    %4173 = vmatpush1.msra.mxu0 0.0
    %4174 = vmatprep.subr.mxu0 0.0
    %4175 = vmatpush1.msra.mxu0 0.0
    %4176 = vmatprep.subr.mxu0 0.0
    %4177 = vmatpush1.msra.mxu0 0.0
    %4178 = vmatprep.subr.mxu0 0.0
    %4179 = vmatpush1.msra.mxu0 0.0
    %4180 = vmatprep.subr.mxu0 0.0
    %4181 = vmatpush1.msra.mxu0 0.0
    %4182 = vmatprep.mubr.f32.mxu0 0.0
    %4183 = vmatmul.mubr.f32.gmra.mrb[0].mxu0 %v3512
    %v4184 = vpop.f32.mrb[0].mxu0
    %v4185 = vadd.f32 %v4085, %v4184
    %v4186 = vpop.f32.mrb[0].mxu0
    %4187 = vmatprep.mubr.f32.mxu0 0.0
    %4188 = vmatmul.mubr.f32.gmra.mrb[0].mxu0 %v3521
    %v4189 = vpop.f32.mrb[0].mxu0
    %v4190 = vadd.f32 %v4090, %v4189
    %v4191 = vpop.f32.mrb[0].mxu0
    %4192 = vmatprep.mubr.f32.mxu0 0.0
    %4193 = vmatmul.mubr.f32.gmra.mrb[0].mxu0 %v3530
    %v4194 = vpop.f32.mrb[0].mxu0
    %v4195 = vadd.f32 %v4095, %v4194
    %v4196 = vpop.f32.mrb[0].mxu0
    %4197 = vmatprep.mubr.f32.mxu0 0.0
    %4198 = vmatmul.mubr.f32.gmra.mrb[0].mxu0 %v3539
    %v4199 = vpop.f32.mrb[0].mxu0
    %v4200 = vadd.f32 %v4100, %v4199
    %v4201 = vpop.f32.mrb[0].mxu0
    %4202 = vmatprep.mubr.f32.mxu0 0.0
    %4203 = vmatmul.mubr.f32.gmra.mrb[0].mxu0 %v3548
    %v4204 = vpop.f32.mrb[0].mxu0
    %v4205 = vadd.f32 %v4105, %v4204
    %v4206 = vpop.f32.mrb[0].mxu0
    %4207 = vmatprep.mubr.f32.mxu0 0.0
    %4208 = vmatmul.mubr.f32.gmra.mrb[0].mxu0 %v3557
    %v4209 = vpop.f32.mrb[0].mxu0
    %v4210 = vadd.f32 %v4110, %v4209
    %v4211 = vpop.f32.mrb[0].mxu0
    %4212 = vmatprep.mubr.f32.mxu0 0.0
    %4213 = vmatmul.mubr.f32.gmra.mrb[0].mxu0 %v3566
    %v4214 = vpop.f32.mrb[0].mxu0
    %v4215 = vadd.f32 %v4115, %v4214
    %v4216 = vpop.f32.mrb[0].mxu0
    %4217 = vdwg.mxu0
    %v4218 = vadd.f32 %v4185, %v2384
    %v4219 = vadd.f32 %v4190, %v2385
    %v4220 = vadd.f32 %v4195, %v2386
    %v4221 = vadd.f32 %v4200, %v2387
    %v4222 = vadd.f32 %v4205, %v2388
    %v4223 = vadd.f32 %v4210, %v2389
    %v4224 = vadd.f32 %v4215, %v2390
    %v4225 = vmax.f32 %v4218, 0.0
    %v4226 = vmax.f32 %v4219, 0.0
    %v4227 = vmax.f32 %v4220, 0.0
    %v4228 = vmax.f32 %v4221, 0.0
    %v4229 = vmax.f32 %v4222, 0.0
    %v4230 = vmax.f32 %v4223, 0.0
    %v4231 = vmax.f32 %v4224, 0.0
    %v4232 = vld [vmem:[%s13] sm:$0xff]
    %v4233 = vld [vmem:[%s13 + $0x8] sm:$0xff]
    %v4234 = vld [vmem:[%s13 + $0x10] sm:$0xff]
    %v4235 = vld [vmem:[%s13 + $0x18] sm:$0xff]
    %v4236 = vld [vmem:[%s13 + $0x20] sm:$0xff]
    %v4237 = vld [vmem:[%s13 + $0x28] sm:$0xff]
    %v4238 = vld [vmem:[%s13 + $0x30] sm:$0xff]
    %v4239 = vld [vmem:[%s13 + $0x38] sm:$0xff]
    %v4240 = vld [vmem:[%s13 + $0x40] sm:$0xff]
    %v4241 = vld [vmem:[%s13 + $0x48] sm:$0xff]
    %v4242 = vld [vmem:[%s13 + $0x50] sm:$0xff]
    %v4243 = vld [vmem:[%s13 + $0x58] sm:$0xff]
    %v4244 = vld [vmem:[%s13 + $0x60] sm:$0xff]
    %v4245 = vld [vmem:[%s13 + $0x68] sm:$0xff]
    %v4246 = vld [vmem:[%s13 + $0x70] sm:$0xff]
    %v4247 = vld [vmem:[%s13 + $0x78] sm:$0xff]
    %v4248 = vld [vmem:[%s14] sm:$0x1]
    %v4250 = vlaneseq
    %v4251 = vshrl.u32 %v4250, 7
    %v4252 = vsub.s32 0, %v4251
    %v4253 = vrot.slane %v4248, %v4252
    %4255 = vmatprep.subr.mxu0 0.0
    %4256 = vmatpush1.msra.mxu0 %v4232
    %4257 = vmatprep.subr.mxu0 0.0
    %4258 = vmatpush1.msra.mxu0 %v4233
    %4259 = vmatprep.subr.mxu0 0.0
    %4260 = vmatpush1.msra.mxu0 %v4234
    %4261 = vmatprep.subr.mxu0 0.0
    %4262 = vmatpush1.msra.mxu0 %v4235
    %4263 = vmatprep.subr.mxu0 0.0
    %4264 = vmatpush1.msra.mxu0 %v4236
    %4265 = vmatprep.subr.mxu0 0.0
    %4266 = vmatpush1.msra.mxu0 %v4237
    %4267 = vmatprep.subr.mxu0 0.0
    %4268 = vmatpush1.msra.mxu0 %v4238
    %4269 = vmatprep.subr.mxu0 0.0
    %4270 = vmatpush1.msra.mxu0 %v4239
    %4271 = vmatprep.subr.mxu0 0.0
    %4272 = vmatpush1.msra.mxu0 %v4240
    %4273 = vmatprep.subr.mxu0 0.0
    %4274 = vmatpush1.msra.mxu0 %v4241
    %4275 = vmatprep.subr.mxu0 0.0
    %4276 = vmatpush1.msra.mxu0 %v4242
    %4277 = vmatprep.subr.mxu0 0.0
    %4278 = vmatpush1.msra.mxu0 %v4243
    %4279 = vmatprep.subr.mxu0 0.0
    %4280 = vmatpush1.msra.mxu0 %v4244
    %4281 = vmatprep.subr.mxu0 0.0
    %4282 = vmatpush1.msra.mxu0 %v4245
    %4283 = vmatprep.subr.mxu0 0.0
    %4284 = vmatpush1.msra.mxu0 %v4246
    %4285 = vmatprep.subr.mxu0 0.0
    %4286 = vmatpush1.msra.mxu0 %v4247
    %4287 = vmatprep.subr.mxu0 0.0
    %4288 = vmatpush1.msra.mxu0 0.0
    %4289 = vmatprep.subr.mxu0 0.0
    %4290 = vmatpush1.msra.mxu0 0.0
    %4291 = vmatprep.subr.mxu0 0.0
    %4292 = vmatpush1.msra.mxu0 0.0
    %4293 = vmatprep.subr.mxu0 0.0
    %4294 = vmatpush1.msra.mxu0 0.0
    %4295 = vmatprep.subr.mxu0 0.0
    %4296 = vmatpush1.msra.mxu0 0.0
    %4297 = vmatprep.subr.mxu0 0.0
    %4298 = vmatpush1.msra.mxu0 0.0
    %4299 = vmatprep.subr.mxu0 0.0
    %4300 = vmatpush1.msra.mxu0 0.0
    %4301 = vmatprep.subr.mxu0 0.0
    %4302 = vmatpush1.msra.mxu0 0.0
    %4303 = vmatprep.subr.mxu0 0.0
    %4304 = vmatpush1.msra.mxu0 0.0
    %4305 = vmatprep.subr.mxu0 0.0
    %4306 = vmatpush1.msra.mxu0 0.0
    %4307 = vmatprep.subr.mxu0 0.0
    %4308 = vmatpush1.msra.mxu0 0.0
    %4309 = vmatprep.subr.mxu0 0.0
    %4310 = vmatpush1.msra.mxu0 0.0
    %4311 = vmatprep.subr.mxu0 0.0
    %4312 = vmatpush1.msra.mxu0 0.0
    %4313 = vmatprep.subr.mxu0 0.0
    %4314 = vmatpush1.msra.mxu0 0.0
    %4315 = vmatprep.subr.mxu0 0.0
    %4316 = vmatpush1.msra.mxu0 0.0
    %4317 = vmatprep.subr.mxu0 0.0
    %4318 = vmatpush1.msra.mxu0 0.0
    %4319 = vmatprep.mubr.f32.mxu0 0.0
    %4320 = vmatmul.mubr.f32.gmra.mrb[0].mxu0 %v4225
    %v4321 = vpop.f32.mrb[0].mxu0
    %v4322 = vadd.f32 %v4253, %v4321
    %v4323 = vpop.f32.mrb[0].mxu0
    %4324 = vmatprep.mubr.f32.mxu0 0.0
    %4325 = vmatmul.mubr.f32.gmra.mrb[0].mxu0 %v4226
    %v4326 = vpop.f32.mrb[0].mxu0
    %v4327 = vadd.f32 %v4253, %v4326
    %v4328 = vpop.f32.mrb[0].mxu0
    %4329 = vmatprep.mubr.f32.mxu0 0.0
    %4330 = vmatmul.mubr.f32.gmra.mrb[0].mxu0 %v4227
    %v4331 = vpop.f32.mrb[0].mxu0
    %v4332 = vadd.f32 %v4253, %v4331
    %v4333 = vpop.f32.mrb[0].mxu0
    %4334 = vmatprep.mubr.f32.mxu0 0.0
    %4335 = vmatmul.mubr.f32.gmra.mrb[0].mxu0 %v4228
    %v4336 = vpop.f32.mrb[0].mxu0
    %v4337 = vadd.f32 %v4253, %v4336
    %v4338 = vpop.f32.mrb[0].mxu0
    %4339 = vmatprep.mubr.f32.mxu0 0.0
    %4340 = vmatmul.mubr.f32.gmra.mrb[0].mxu0 %v4229
    %v4341 = vpop.f32.mrb[0].mxu0
    %v4342 = vadd.f32 %v4253, %v4341
    %v4343 = vpop.f32.mrb[0].mxu0
    %4344 = vmatprep.mubr.f32.mxu0 0.0
    %4345 = vmatmul.mubr.f32.gmra.mrb[0].mxu0 %v4230
    %v4346 = vpop.f32.mrb[0].mxu0
    %v4347 = vadd.f32 %v4253, %v4346
    %v4348 = vpop.f32.mrb[0].mxu0
    %4349 = vmatprep.mubr.f32.mxu0 0.0
    %4350 = vmatmul.mubr.f32.gmra.mrb[0].mxu0 %v4231
    %v4351 = vpop.f32.mrb[0].mxu0
    %v4352 = vadd.f32 %v4253, %v4351
    %v4353 = vpop.f32.mrb[0].mxu0
    %4354 = vdwg.mxu0
    %v4355 = vmax.f32 %v4322, 0.0
    %v4356 = vmax.f32 %v4327, 0.0
    %v4357 = vmax.f32 %v4332, 0.0
    %v4358 = vmax.f32 %v4337, 0.0
    %v4359 = vmax.f32 %v4342, 0.0
    %v4360 = vmax.f32 %v4347, 0.0
    %v4361 = vmax.f32 %v4352, 0.0
    %v4362 = vld [vmem:[%s15] sm:$0xff]
    %v4363 = vld [vmem:[%s15 + $0x8] sm:$0xff]
    %v4364 = vld [vmem:[%s15 + $0x10] sm:$0xff]
    %v4365 = vld [vmem:[%s15 + $0x18] sm:$0xff]
    %v4366 = vld [vmem:[%s15 + $0x20] sm:$0xff]
    %v4367 = vld [vmem:[%s15 + $0x28] sm:$0xff]
    %v4368 = vld [vmem:[%s15 + $0x30] sm:$0x3]
    %4370 = vset.pattern.permute.xlu0 0
    %4371 = vperm.xlu0 %4370, %v4355
    %v4372 = vpop.permute.xlu0 %4371
    %4375 = vset.pattern.permute.xlu0 0
    %4376 = vperm.xlu0 %4375, %v4356
    %v4377 = vpop.permute.xlu0 %4376
    %4380 = vset.pattern.permute.xlu0 0
    %4381 = vperm.xlu0 %4380, %v4357
    %v4382 = vpop.permute.xlu0 %4381
    %4385 = vset.pattern.permute.xlu0 0
    %4386 = vperm.xlu0 %4385, %v4358
    %v4387 = vpop.permute.xlu0 %4386
    %4390 = vset.pattern.permute.xlu0 0
    %4391 = vperm.xlu0 %4390, %v4359
    %v4392 = vpop.permute.xlu0 %4391
    %4395 = vset.pattern.permute.xlu0 0
    %4396 = vperm.xlu0 %4395, %v4360
    %v4397 = vpop.permute.xlu0 %4396
    %4400 = vset.pattern.permute.xlu0 0
    %4401 = vperm.xlu0 %4400, %v4361
    %v4402 = vpop.permute.xlu0 %4401
    %v4404 = vmul.f32 %v4372, %v4362
    %v4405 = vmul.f32 %v4377, %v4363
    %v4406 = vmul.f32 %v4382, %v4364
    %v4407 = vmul.f32 %v4387, %v4365
    %v4408 = vmul.f32 %v4392, %v4366
    %v4409 = vmul.f32 %v4397, %v4367
    %v4410 = vmul.f32 %v4402, %v4368
    %v4411 = vld [vmem:[%s16] sm:$0xff]
    %v4412 = vld [vmem:[%s16 + $0x8] sm:$0xff]
    %v4413 = vld [vmem:[%s16 + $0x10] sm:$0xff]
    %v4414 = vld [vmem:[%s16 + $0x18] sm:$0xff]
    %v4415 = vld [vmem:[%s16 + $0x20] sm:$0xff]
    %v4416 = vld [vmem:[%s16 + $0x28] sm:$0xff]
    %v4417 = vld [vmem:[%s16 + $0x30] sm:$0x3]
    %4418 = vset.pattern.permute.xlu0 1
    %4419 = vperm.xlu0 %4418, %v4355
    %v4420 = vpop.permute.xlu0 %4419
    %4422 = vset.pattern.permute.xlu0 1
    %4423 = vperm.xlu0 %4422, %v4356
    %v4424 = vpop.permute.xlu0 %4423
    %4426 = vset.pattern.permute.xlu0 1
    %4427 = vperm.xlu0 %4426, %v4357
    %v4428 = vpop.permute.xlu0 %4427
    %4430 = vset.pattern.permute.xlu0 1
    %4431 = vperm.xlu0 %4430, %v4358
    %v4432 = vpop.permute.xlu0 %4431
    %4434 = vset.pattern.permute.xlu0 1
    %4435 = vperm.xlu0 %4434, %v4359
    %v4436 = vpop.permute.xlu0 %4435
    %4438 = vset.pattern.permute.xlu0 1
    %4439 = vperm.xlu0 %4438, %v4360
    %v4440 = vpop.permute.xlu0 %4439
    %4442 = vset.pattern.permute.xlu0 1
    %4443 = vperm.xlu0 %4442, %v4361
    %v4444 = vpop.permute.xlu0 %4443
    %v4446 = vmul.f32 %v4420, %v4411
    %v4447 = vmul.f32 %v4424, %v4412
    %v4448 = vmul.f32 %v4428, %v4413
    %v4449 = vmul.f32 %v4432, %v4414
    %v4450 = vmul.f32 %v4436, %v4415
    %v4451 = vmul.f32 %v4440, %v4416
    %v4452 = vmul.f32 %v4444, %v4417
    %v4453 = vadd.f32 %v4404, %v4446
    %v4454 = vadd.f32 %v4405, %v4447
    %v4455 = vadd.f32 %v4406, %v4448
    %v4456 = vadd.f32 %v4407, %v4449
    %v4457 = vadd.f32 %v4408, %v4450
    %v4458 = vadd.f32 %v4409, %v4451
    %v4459 = vadd.f32 %v4410, %v4452
    %v4460 = vld [vmem:[%s17] sm:$0x1]
    %v4462 = vlaneseq
    %v4463 = vshrl.u32 %v4462, 7
    %v4464 = vsub.s32 0, %v4463
    %v4465 = vrot.slane %v4460, %v4464
    %vm4467 = vcmask 408576
    %v4469 = vsel %vm4467, %v132, 0
    %v4472 = vsel %vm180, %v4459, 0
    %4474 = vmatprep.subr.mxu0 0.0
    %4475 = vmatpush1.msra.mxu0 %v4453
    %4476 = vmatprep.subr.mxu0 0.0
    %4477 = vmatpush1.msra.mxu0 %v4454
    %4478 = vmatprep.subr.mxu0 0.0
    %4479 = vmatpush1.msra.mxu0 %v4455
    %4480 = vmatprep.subr.mxu0 0.0
    %4481 = vmatpush1.msra.mxu0 %v4456
    %4482 = vmatprep.subr.mxu0 0.0
    %4483 = vmatpush1.msra.mxu0 %v4457
    %4484 = vmatprep.subr.mxu0 0.0
    %4485 = vmatpush1.msra.mxu0 %v4458
    %4486 = vmatprep.subr.mxu0 0.0
    %4487 = vmatpush1.msra.mxu0 %v4472
    %4488 = vmatprep.subr.mxu0 0.0
    %4489 = vmatpush1.msra.mxu0 0.0
    %4490 = vmatprep.subr.mxu0 0.0
    %4491 = vmatpush1.msra.mxu0 0.0
    %4492 = vmatprep.subr.mxu0 0.0
    %4493 = vmatpush1.msra.mxu0 0.0
    %4494 = vmatprep.subr.mxu0 0.0
    %4495 = vmatpush1.msra.mxu0 0.0
    %4496 = vmatprep.subr.mxu0 0.0
    %4497 = vmatpush1.msra.mxu0 0.0
    %4498 = vmatprep.subr.mxu0 0.0
    %4499 = vmatpush1.msra.mxu0 0.0
    %4500 = vmatprep.subr.mxu0 0.0
    %4501 = vmatpush1.msra.mxu0 0.0
    %4502 = vmatprep.subr.mxu0 0.0
    %4503 = vmatpush1.msra.mxu0 0.0
    %4504 = vmatprep.subr.mxu0 0.0
    %4505 = vmatpush1.msra.mxu0 0.0
    %4506 = vmatprep.subr.mxu0 0.0
    %4507 = vmatpush1.msra.mxu0 0.0
    %4508 = vmatprep.subr.mxu0 0.0
    %4509 = vmatpush1.msra.mxu0 0.0
    %4510 = vmatprep.subr.mxu0 0.0
    %4511 = vmatpush1.msra.mxu0 0.0
    %4512 = vmatprep.subr.mxu0 0.0
    %4513 = vmatpush1.msra.mxu0 0.0
    %4514 = vmatprep.subr.mxu0 0.0
    %4515 = vmatpush1.msra.mxu0 0.0
    %4516 = vmatprep.subr.mxu0 0.0
    %4517 = vmatpush1.msra.mxu0 0.0
    %4518 = vmatprep.subr.mxu0 0.0
    %4519 = vmatpush1.msra.mxu0 0.0
    %4520 = vmatprep.subr.mxu0 0.0
    %4521 = vmatpush1.msra.mxu0 0.0
    %4522 = vmatprep.subr.mxu0 0.0
    %4523 = vmatpush1.msra.mxu0 0.0
    %4524 = vmatprep.subr.mxu0 0.0
    %4525 = vmatpush1.msra.mxu0 0.0
    %4526 = vmatprep.subr.mxu0 0.0
    %4527 = vmatpush1.msra.mxu0 0.0
    %4528 = vmatprep.subr.mxu0 0.0
    %4529 = vmatpush1.msra.mxu0 0.0
    %4530 = vmatprep.subr.mxu0 0.0
    %4531 = vmatpush1.msra.mxu0 0.0
    %4532 = vmatprep.subr.mxu0 0.0
    %4533 = vmatpush1.msra.mxu0 0.0
    %4534 = vmatprep.subr.mxu0 0.0
    %4535 = vmatpush1.msra.mxu0 0.0
    %4536 = vmatprep.subr.mxu0 0.0
    %4537 = vmatpush1.msra.mxu0 0.0
    %4538 = vmatprep.mubr.f32.mxu0 0.0
    %4539 = vmatmul.mubr.f32.gmra.mrb[0].mxu0 %v4469
    %v4540 = vpop.f32.mrb[0].mxu0
    %v4541 = vadd.f32 %v4465, %v4540
    %v4542 = vpop.f32.mrb[0].mxu0
    %4543 = vdwg.mxu0
    %vm4544 = vcmask 197632
    %4545 = vst.msk [vmem:[#allocation12] sm:$0x3] %vm4544, %v4541
    %v4546 = vld [vmem:[%s18] sm:$0xff]
    %v4547 = vld [vmem:[%s18 + $0x8] sm:$0xff]
    %v4548 = vld [vmem:[%s18 + $0x10] sm:$0xff]
    %v4549 = vld [vmem:[%s18 + $0x18] sm:$0xff]
    %v4550 = vld [vmem:[%s18 + $0x20] sm:$0xff]
    %v4551 = vld [vmem:[%s18 + $0x28] sm:$0xff]
    %v4552 = vld [vmem:[%s18 + $0x30] sm:$0xff]
    %v4553 = vld [vmem:[%s18 + $0x38] sm:$0xff]
    %v4554 = vld [vmem:[%s18 + $0x40] sm:$0xff]
    %v4555 = vld [vmem:[%s18 + $0x48] sm:$0xff]
    %v4556 = vld [vmem:[%s18 + $0x50] sm:$0xff]
    %v4557 = vld [vmem:[%s18 + $0x58] sm:$0xff]
    %v4558 = vld [vmem:[%s18 + $0x60] sm:$0xff]
    %v4559 = vld [vmem:[%s18 + $0x68] sm:$0xff]
    %v4560 = vld [vmem:[%s18 + $0x70] sm:$0xff]
    %v4561 = vld [vmem:[%s18 + $0x78] sm:$0xff]
    %v4562 = vld [vmem:[#allocation4] sm:$0x1]
    %v4564 = vlaneseq
    %v4565 = vshrl.u32 %v4564, 7
    %v4566 = vsub.s32 0, %v4565
    %v4567 = vrot.slane %v4562, %v4566
    %4569 = vmatprep.subr.mxu0 0.0
    %4570 = vmatpush1.msra.mxu0 %v4546
    %4571 = vmatprep.subr.mxu0 0.0
    %4572 = vmatpush1.msra.mxu0 %v4547
    %4573 = vmatprep.subr.mxu0 0.0
    %4574 = vmatpush1.msra.mxu0 %v4548
    %4575 = vmatprep.subr.mxu0 0.0
    %4576 = vmatpush1.msra.mxu0 %v4549
    %4577 = vmatprep.subr.mxu0 0.0
    %4578 = vmatpush1.msra.mxu0 %v4550
    %4579 = vmatprep.subr.mxu0 0.0
    %4580 = vmatpush1.msra.mxu0 %v4551
    %4581 = vmatprep.subr.mxu0 0.0
    %4582 = vmatpush1.msra.mxu0 %v4552
    %4583 = vmatprep.subr.mxu0 0.0
    %4584 = vmatpush1.msra.mxu0 %v4553
    %4585 = vmatprep.subr.mxu0 0.0
    %4586 = vmatpush1.msra.mxu0 %v4554
    %4587 = vmatprep.subr.mxu0 0.0
    %4588 = vmatpush1.msra.mxu0 %v4555
    %4589 = vmatprep.subr.mxu0 0.0
    %4590 = vmatpush1.msra.mxu0 %v4556
    %4591 = vmatprep.subr.mxu0 0.0
    %4592 = vmatpush1.msra.mxu0 %v4557
    %4593 = vmatprep.subr.mxu0 0.0
    %4594 = vmatpush1.msra.mxu0 %v4558
    %4595 = vmatprep.subr.mxu0 0.0
    %4596 = vmatpush1.msra.mxu0 %v4559
    %4597 = vmatprep.subr.mxu0 0.0
    %4598 = vmatpush1.msra.mxu0 %v4560
    %4599 = vmatprep.subr.mxu0 0.0
    %4600 = vmatpush1.msra.mxu0 %v4561
    %4601 = vmatprep.subr.mxu0 0.0
    %4602 = vmatpush1.msra.mxu0 0.0
    %4603 = vmatprep.subr.mxu0 0.0
    %4604 = vmatpush1.msra.mxu0 0.0
    %4605 = vmatprep.subr.mxu0 0.0
    %4606 = vmatpush1.msra.mxu0 0.0
    %4607 = vmatprep.subr.mxu0 0.0
    %4608 = vmatpush1.msra.mxu0 0.0
    %4609 = vmatprep.subr.mxu0 0.0
    %4610 = vmatpush1.msra.mxu0 0.0
    %4611 = vmatprep.subr.mxu0 0.0
    %4612 = vmatpush1.msra.mxu0 0.0
    %4613 = vmatprep.subr.mxu0 0.0
    %4614 = vmatpush1.msra.mxu0 0.0
    %4615 = vmatprep.subr.mxu0 0.0
    %4616 = vmatpush1.msra.mxu0 0.0
    %4617 = vmatprep.subr.mxu0 0.0
    %4618 = vmatpush1.msra.mxu0 0.0
    %4619 = vmatprep.subr.mxu0 0.0
    %4620 = vmatpush1.msra.mxu0 0.0
    %4621 = vmatprep.subr.mxu0 0.0
    %4622 = vmatpush1.msra.mxu0 0.0
    %4623 = vmatprep.subr.mxu0 0.0
    %4624 = vmatpush1.msra.mxu0 0.0
    %4625 = vmatprep.subr.mxu0 0.0
    %4626 = vmatpush1.msra.mxu0 0.0
    %4627 = vmatprep.subr.mxu0 0.0
    %4628 = vmatpush1.msra.mxu0 0.0
    %4629 = vmatprep.subr.mxu0 0.0
    %4630 = vmatpush1.msra.mxu0 0.0
    %4631 = vmatprep.subr.mxu0 0.0
    %4632 = vmatpush1.msra.mxu0 0.0
    %4633 = vmatprep.mubr.f32.mxu0 0.0
    %4634 = vmatmul.mubr.f32.gmra.mrb[0].mxu0 %v4225
    %v4635 = vpop.f32.mrb[0].mxu0
    %v4636 = vadd.f32 %v4567, %v4635
    %v4637 = vpop.f32.mrb[0].mxu0
    %4638 = vmatprep.mubr.f32.mxu0 0.0
    %4639 = vmatmul.mubr.f32.gmra.mrb[0].mxu0 %v4226
    %v4640 = vpop.f32.mrb[0].mxu0
    %v4641 = vadd.f32 %v4567, %v4640
    %v4642 = vpop.f32.mrb[0].mxu0
    %4643 = vmatprep.mubr.f32.mxu0 0.0
    %4644 = vmatmul.mubr.f32.gmra.mrb[0].mxu0 %v4227
    %v4645 = vpop.f32.mrb[0].mxu0
    %v4646 = vadd.f32 %v4567, %v4645
    %v4647 = vpop.f32.mrb[0].mxu0
    %4648 = vmatprep.mubr.f32.mxu0 0.0
    %4649 = vmatmul.mubr.f32.gmra.mrb[0].mxu0 %v4228
    %v4650 = vpop.f32.mrb[0].mxu0
    %v4651 = vadd.f32 %v4567, %v4650
    %v4652 = vpop.f32.mrb[0].mxu0
    %4653 = vmatprep.mubr.f32.mxu0 0.0
    %4654 = vmatmul.mubr.f32.gmra.mrb[0].mxu0 %v4229
    %v4655 = vpop.f32.mrb[0].mxu0
    %v4656 = vadd.f32 %v4567, %v4655
    %v4657 = vpop.f32.mrb[0].mxu0
    %4658 = vmatprep.mubr.f32.mxu0 0.0
    %4659 = vmatmul.mubr.f32.gmra.mrb[0].mxu0 %v4230
    %v4660 = vpop.f32.mrb[0].mxu0
    %v4661 = vadd.f32 %v4567, %v4660
    %v4662 = vpop.f32.mrb[0].mxu0
    %4663 = vmatprep.mubr.f32.mxu0 0.0
    %4664 = vmatmul.mubr.f32.gmra.mrb[0].mxu0 %v4231
    %v4665 = vpop.f32.mrb[0].mxu0
    %v4666 = vadd.f32 %v4567, %v4665
    %v4667 = vpop.f32.mrb[0].mxu0
    %4668 = vdwg.mxu0
    %v4669 = vmax.f32 %v4636, 0.0
    %v4670 = vmax.f32 %v4641, 0.0
    %v4671 = vmax.f32 %v4646, 0.0
    %v4672 = vmax.f32 %v4651, 0.0
    %v4673 = vmax.f32 %v4656, 0.0
    %v4674 = vmax.f32 %v4661, 0.0
    %v4675 = vmax.f32 %v4666, 0.0
    %v4676 = vld [vmem:[%s20] sm:$0xff]
    %v4677 = vld [vmem:[%s20 + $0x8] sm:$0xff]
    %v4678 = vld [vmem:[%s20 + $0x10] sm:$0xff]
    %v4679 = vld [vmem:[%s20 + $0x18] sm:$0xff]
    %v4680 = vld [vmem:[%s20 + $0x20] sm:$0xff]
    %v4681 = vld [vmem:[%s20 + $0x28] sm:$0xff]
    %v4682 = vld [vmem:[%s20 + $0x30] sm:$0x3]
    %4684 = vset.pattern.permute.xlu0 0
    %4685 = vperm.xlu0 %4684, %v4669
    %v4686 = vpop.permute.xlu0 %4685
    %4689 = vset.pattern.permute.xlu0 0
    %4690 = vperm.xlu0 %4689, %v4670
    %v4691 = vpop.permute.xlu0 %4690
    %4694 = vset.pattern.permute.xlu0 0
    %4695 = vperm.xlu0 %4694, %v4671
    %v4696 = vpop.permute.xlu0 %4695
    %4699 = vset.pattern.permute.xlu0 0
    %4700 = vperm.xlu0 %4699, %v4672
    %v4701 = vpop.permute.xlu0 %4700
    %4704 = vset.pattern.permute.xlu0 0
    %4705 = vperm.xlu0 %4704, %v4673
    %v4706 = vpop.permute.xlu0 %4705
    %4709 = vset.pattern.permute.xlu0 0
    %4710 = vperm.xlu0 %4709, %v4674
    %v4711 = vpop.permute.xlu0 %4710
    %4714 = vset.pattern.permute.xlu0 0
    %4715 = vperm.xlu0 %4714, %v4675
    %v4716 = vpop.permute.xlu0 %4715
    %v4718 = vmul.f32 %v4686, %v4676
    %v4719 = vmul.f32 %v4691, %v4677
    %v4720 = vmul.f32 %v4696, %v4678
    %v4721 = vmul.f32 %v4701, %v4679
    %v4722 = vmul.f32 %v4706, %v4680
    %v4723 = vmul.f32 %v4711, %v4681
    %v4724 = vmul.f32 %v4716, %v4682
    %v4725 = vld [vmem:[%s21] sm:$0x1]
    %v4727 = vlaneseq
    %v4728 = vshrl.u32 %v4727, 7
    %v4729 = vsub.s32 0, %v4728
    %v4730 = vrot.slane %v4725, %v4729
    %v4733 = vsel %vm180, %v4724, 0
    %4735 = vmatprep.subr.mxu0 0.0
    %4736 = vmatpush1.msra.mxu0 %v4718
    %4737 = vmatprep.subr.mxu0 0.0
    %4738 = vmatpush1.msra.mxu0 %v4719
    %4739 = vmatprep.subr.mxu0 0.0
    %4740 = vmatpush1.msra.mxu0 %v4720
    %4741 = vmatprep.subr.mxu0 0.0
    %4742 = vmatpush1.msra.mxu0 %v4721
    %4743 = vmatprep.subr.mxu0 0.0
    %4744 = vmatpush1.msra.mxu0 %v4722
    %4745 = vmatprep.subr.mxu0 0.0
    %4746 = vmatpush1.msra.mxu0 %v4723
    %4747 = vmatprep.subr.mxu0 0.0
    %4748 = vmatpush1.msra.mxu0 %v4733
    %4749 = vmatprep.subr.mxu0 0.0
    %4750 = vmatpush1.msra.mxu0 0.0
    %4751 = vmatprep.subr.mxu0 0.0
    %4752 = vmatpush1.msra.mxu0 0.0
    %4753 = vmatprep.subr.mxu0 0.0
    %4754 = vmatpush1.msra.mxu0 0.0
    %4755 = vmatprep.subr.mxu0 0.0
    %4756 = vmatpush1.msra.mxu0 0.0
    %4757 = vmatprep.subr.mxu0 0.0
    %4758 = vmatpush1.msra.mxu0 0.0
    %4759 = vmatprep.subr.mxu0 0.0
    %4760 = vmatpush1.msra.mxu0 0.0
    %4761 = vmatprep.subr.mxu0 0.0
    %4762 = vmatpush1.msra.mxu0 0.0
    %4763 = vmatprep.subr.mxu0 0.0
    %4764 = vmatpush1.msra.mxu0 0.0
    %4765 = vmatprep.subr.mxu0 0.0
    %4766 = vmatpush1.msra.mxu0 0.0
    %4767 = vmatprep.subr.mxu0 0.0
    %4768 = vmatpush1.msra.mxu0 0.0
    %4769 = vmatprep.subr.mxu0 0.0
    %4770 = vmatpush1.msra.mxu0 0.0
    %4771 = vmatprep.subr.mxu0 0.0
    %4772 = vmatpush1.msra.mxu0 0.0
    %4773 = vmatprep.subr.mxu0 0.0
    %4774 = vmatpush1.msra.mxu0 0.0
    %4775 = vmatprep.subr.mxu0 0.0
    %4776 = vmatpush1.msra.mxu0 0.0
    %4777 = vmatprep.subr.mxu0 0.0
    %4778 = vmatpush1.msra.mxu0 0.0
    %4779 = vmatprep.subr.mxu0 0.0
    %4780 = vmatpush1.msra.mxu0 0.0
    %4781 = vmatprep.subr.mxu0 0.0
    %4782 = vmatpush1.msra.mxu0 0.0
    %4783 = vmatprep.subr.mxu0 0.0
    %4784 = vmatpush1.msra.mxu0 0.0
    %4785 = vmatprep.subr.mxu0 0.0
    %4786 = vmatpush1.msra.mxu0 0.0
    %4787 = vmatprep.subr.mxu0 0.0
    %4788 = vmatpush1.msra.mxu0 0.0
    %4789 = vmatprep.subr.mxu0 0.0
    %4790 = vmatpush1.msra.mxu0 0.0
    %4791 = vmatprep.subr.mxu0 0.0
    %4792 = vmatpush1.msra.mxu0 0.0
    %4793 = vmatprep.subr.mxu0 0.0
    %4794 = vmatpush1.msra.mxu0 0.0
    %4795 = vmatprep.subr.mxu0 0.0
    %4796 = vmatpush1.msra.mxu0 0.0
    %4797 = vmatprep.subr.mxu0 0.0
    %4798 = vmatpush1.msra.mxu0 0.0
    %4799 = vmatprep.mubr.f32.mxu0 0.0
    %4800 = vmatmul.mubr.f32.gmra.mrb[0].mxu0 %v4469
    %v4801 = vpop.f32.mrb[0].mxu0
    %v4802 = vadd.f32 %v4730, %v4801
    %v4803 = vpop.f32.mrb[0].mxu0
    %4804 = vdwg.mxu0
    %v4805 = vmax.f32 %v4802, 0.0
    %v4806 = vld [vmem:[%s22] sm:$0xff]
    %v4807 = vld [vmem:[%s22 + $0x8] sm:$0xff]
    %v4808 = vld [vmem:[%s22 + $0x10] sm:$0xff]
    %v4809 = vld [vmem:[%s22 + $0x18] sm:$0xff]
    %v4810 = vld [vmem:[%s22 + $0x20] sm:$0xff]
    %v4811 = vld [vmem:[%s22 + $0x28] sm:$0xff]
    %v4812 = vld [vmem:[%s22 + $0x30] sm:$0xff]
    %v4813 = vld [vmem:[%s22 + $0x38] sm:$0xff]
    %v4814 = vld [vmem:[%s22 + $0x40] sm:$0xff]
    %v4815 = vld [vmem:[%s22 + $0x48] sm:$0xff]
    %v4816 = vld [vmem:[%s22 + $0x50] sm:$0xff]
    %v4817 = vld [vmem:[%s22 + $0x58] sm:$0xff]
    %v4818 = vld [vmem:[%s22 + $0x60] sm:$0xff]
    %v4819 = vld [vmem:[%s22 + $0x68] sm:$0xff]
    %v4820 = vld [vmem:[%s22 + $0x70] sm:$0xff]
    %v4821 = vld [vmem:[%s22 + $0x78] sm:$0xff]
    %v4822 = vld [vmem:[#allocation5] sm:$0x1]
    %v4824 = vlaneseq
    %v4825 = vshrl.u32 %v4824, 7
    %v4826 = vsub.s32 0, %v4825
    %v4827 = vrot.slane %v4822, %v4826
    %4829 = vmatprep.subr.mxu0 0.0
    %4830 = vmatpush1.msra.mxu0 %v4806
    %4831 = vmatprep.subr.mxu0 0.0
    %4832 = vmatpush1.msra.mxu0 %v4807
    %4833 = vmatprep.subr.mxu0 0.0
    %4834 = vmatpush1.msra.mxu0 %v4808
    %4835 = vmatprep.subr.mxu0 0.0
    %4836 = vmatpush1.msra.mxu0 %v4809
    %4837 = vmatprep.subr.mxu0 0.0
    %4838 = vmatpush1.msra.mxu0 %v4810
    %4839 = vmatprep.subr.mxu0 0.0
    %4840 = vmatpush1.msra.mxu0 %v4811
    %4841 = vmatprep.subr.mxu0 0.0
    %4842 = vmatpush1.msra.mxu0 %v4812
    %4843 = vmatprep.subr.mxu0 0.0
    %4844 = vmatpush1.msra.mxu0 %v4813
    %4845 = vmatprep.subr.mxu0 0.0
    %4846 = vmatpush1.msra.mxu0 %v4814
    %4847 = vmatprep.subr.mxu0 0.0
    %4848 = vmatpush1.msra.mxu0 %v4815
    %4849 = vmatprep.subr.mxu0 0.0
    %4850 = vmatpush1.msra.mxu0 %v4816
    %4851 = vmatprep.subr.mxu0 0.0
    %4852 = vmatpush1.msra.mxu0 %v4817
    %4853 = vmatprep.subr.mxu0 0.0
    %4854 = vmatpush1.msra.mxu0 %v4818
    %4855 = vmatprep.subr.mxu0 0.0
    %4856 = vmatpush1.msra.mxu0 %v4819
    %4857 = vmatprep.subr.mxu0 0.0
    %4858 = vmatpush1.msra.mxu0 %v4820
    %4859 = vmatprep.subr.mxu0 0.0
    %4860 = vmatpush1.msra.mxu0 %v4821
    %4861 = vmatprep.subr.mxu0 0.0
    %4862 = vmatpush1.msra.mxu0 0.0
    %4863 = vmatprep.subr.mxu0 0.0
    %4864 = vmatpush1.msra.mxu0 0.0
    %4865 = vmatprep.subr.mxu0 0.0
    %4866 = vmatpush1.msra.mxu0 0.0
    %4867 = vmatprep.subr.mxu0 0.0
    %4868 = vmatpush1.msra.mxu0 0.0
    %4869 = vmatprep.subr.mxu0 0.0
    %4870 = vmatpush1.msra.mxu0 0.0
    %4871 = vmatprep.subr.mxu0 0.0
    %4872 = vmatpush1.msra.mxu0 0.0
    %4873 = vmatprep.subr.mxu0 0.0
    %4874 = vmatpush1.msra.mxu0 0.0
    %4875 = vmatprep.subr.mxu0 0.0
    %4876 = vmatpush1.msra.mxu0 0.0
    %4877 = vmatprep.subr.mxu0 0.0
    %4878 = vmatpush1.msra.mxu0 0.0
    %4879 = vmatprep.subr.mxu0 0.0
    %4880 = vmatpush1.msra.mxu0 0.0
    %4881 = vmatprep.subr.mxu0 0.0
    %4882 = vmatpush1.msra.mxu0 0.0
    %4883 = vmatprep.subr.mxu0 0.0
    %4884 = vmatpush1.msra.mxu0 0.0
    %4885 = vmatprep.subr.mxu0 0.0
    %4886 = vmatpush1.msra.mxu0 0.0
    %4887 = vmatprep.subr.mxu0 0.0
    %4888 = vmatpush1.msra.mxu0 0.0
    %4889 = vmatprep.subr.mxu0 0.0
    %4890 = vmatpush1.msra.mxu0 0.0
    %4891 = vmatprep.subr.mxu0 0.0
    %4892 = vmatpush1.msra.mxu0 0.0
    %4893 = vmatprep.mubr.f32.mxu0 0.0
    %4894 = vmatmul.mubr.f32.gmra.mrb[0].mxu0 %v4805
    %v4895 = vpop.f32.mrb[0].mxu0
    %v4896 = vadd.f32 %v4827, %v4895
    %v4897 = vpop.f32.mrb[0].mxu0
    %4898 = vdwg.mxu0
    %v4899 = vtanh.pop %v4896
    %vm4900 = vcmask 1024
    %4901 = vst.msk [vmem:[%s25] sm:$0x3] %vm4900, %v4899
    // Predicated region
    $region110: #{alphazero_forward.1} parent=1 // pred_check
      _
    $region111: #{alphazero_forward.1} parent=1 // pred_check_branch
      %4903 = sbr.rel (0) target = $region113
    $region112: #{alphazero_forward.1} parent=1 // pred_region
      %s4905 = ssub.s32 32, 32
      %4906 = vsyncadd [#allocation8], %s4905
      %s4908 = sshll.u32 [#allocation12], 4
      %s4909 = int_to_ptr.vmem [resolvable:$true] %s4908
      %4911 = dma.vmem_to_hbm [thread:$0]  %s4909, 32, %s24, [#allocation8]
    $region113: #{alphazero_forward.1} parent=1 // pred_fallthru
      _
    // Predicated region
    $region114: #{alphazero_forward.1} parent=1 // pred_check
      _
    $region115: #{alphazero_forward.1} parent=1 // pred_check_branch
      %4913 = sbr.rel (0) target = $region117
    $region116: #{alphazero_forward.1} parent=1 // pred_region
      _
    $region117: #{alphazero_forward.1} parent=1 // pred_fallthru
      _
    // Predicated region
    $region118: #{alphazero_forward.1} parent=1 // pred_check
      _
    $region119: #{alphazero_forward.1} parent=1 // pred_check_branch
      %4915 = sbr.rel (0) target = $region121
    $region120: #{alphazero_forward.1} parent=1 // pred_region
      %4916 = dma.done [#allocation8], 32
    $region121: #{alphazero_forward.1} parent=1 // pred_fallthru
      _
    // Predicated region
    $region122: #{alphazero_forward.1} parent=1 // pred_check
      _
    $region123: #{alphazero_forward.1} parent=1 // pred_check_branch
      %4918 = sbr.rel (0) target = $region125
    $region124: #{alphazero_forward.1} parent=1 // pred_region
      _
    $region125: #{alphazero_forward.1} parent=1 // pred_fallthru
      _
    %4919 = vsyncpa [#allocation7], 1
    %4920 = vsyncpa [#allocation10], 1
    %4921 = vsyncpa [#allocation8], 1

</llo_original>
